<compile_context>
chip_gen: v7x
topology: tpu7x:2x2x1
jax: 0.10.0
libtpu: 0.0.40
codegen_flags: <defaults>
</compile_context>

<pallas_src>
import functools

import jax
import jax.numpy as jnp
from jax import lax
from jax.experimental import pallas as pl
from jax.experimental.pallas import tpu as pltpu

F32 = jnp.float32
BF16 = jnp.bfloat16
BN_EPS = 1e-5
BN_SCALE = float(1.0 / (1.0 + BN_EPS) ** 0.5)  # eval-mode BN, default init


def _round_up(x, m):
    return (x + m - 1) // m * m


# ----------------------------------------------------------------------------
# Pallas kernels: tap-fused conv matmul with fused bias / residual / activation
# ----------------------------------------------------------------------------

def _conv_kernel(a_ref, w_ref, b_ref, o_ref, *, taps, ho, wo, act):
    cin = a_ref.shape[-1]
    acc = None
    for t, roff, coff in taps:               # static unrolled k*k tap loop
        lhs = a_ref[pl.ds(roff, ho), pl.ds(coff, wo), :].reshape(ho * wo, cin)
        part = jnp.dot(lhs, w_ref[t], preferred_element_type=jnp.float32)
        acc = part if acc is None else acc + part
    out = acc + b_ref[...]
    if act == "relu":
        out = jnp.maximum(out, 0.0)
    o_ref[...] = out.astype(o_ref.dtype)


def _conv_res_kernel(a_ref, w_ref, b_ref, r_ref, o_ref, *, taps, ho, wo, act):
    cin = a_ref.shape[-1]
    acc = None
    for t, roff, coff in taps:
        lhs = a_ref[pl.ds(roff, ho), pl.ds(coff, wo), :].reshape(ho * wo, cin)
        part = jnp.dot(lhs, w_ref[t], preferred_element_type=jnp.float32)
        acc = part if acc is None else acc + part
    out = acc + b_ref[...] + r_ref[...].astype(jnp.float32)
    if act == "relu":
        out = jnp.maximum(out, 0.0)
    o_ref[...] = out.astype(o_ref.dtype)


# ----------------------------------------------------------------------------
# Conv wrapper: stride-phase decomposition + pallas_call (no im2col in HBM)
# ----------------------------------------------------------------------------

def conv_bn_act(x, w_taps, bias, k, stride, pad, residual=None, act="relu"):
    """k x k conv (eval-BN scale pre-folded into w_taps) + bias (+ residual) + act.

    x:        (N, H, W, Cinp)   bf16, channels already padded to a 128 multiple.
    w_taps:   (k*k, Cinp, Coutp) bf16, tap-major.
    bias:     (1, Coutp)        f32.
    residual: optional (N, Ho, Wo, Coutp) bf16.
    Returns   (N, Ho, Wo, Coutp) bf16.
    """
    N, H, W, cin = x.shape
    kk, cin_w, cout = w_taps.shape
    assert kk == k * k and cin_w == cin
    s = stride
    Ho = (H + 2 * pad - k) // s + 1
    Wo = (W + 2 * pad - k) // s + 1
    Hpp = _round_up(H + 2 * pad, s)
    Wpp = _round_up(W + 2 * pad, s)
    xp = jnp.pad(x, ((0, 0), (pad, Hpp - H - pad), (pad, Wpp - W - pad), (0, 0)))
    Hph, Wph = Hpp // s, Wpp // s

    if s == 1:
        a = xp                                  # single phase, zero extra movement
    else:
        # a[n, (ry*s+rx)*Hph + i, j, c] == xp[n, s*i+ry, s*j+rx, c]
        a = xp.reshape(N, Hph, s, Wph, s, cin).transpose(0, 2, 4, 1, 3, 5)
        a = a.reshape(N, s * s * Hph, Wph, cin)
    SH = s * s * Hph

    # per-tap (weight index, row offset, col offset) into the phase slab
    taps = tuple((dy * k + dx,
                  ((dy % s) * s + (dx % s)) * Hph + dy // s,
                  dx // s)
                 for dy in range(k) for dx in range(k))

    M = Ho * Wo
    if cout <= 256:
        cnt = cout                              # cout is a multiple of 128
    elif cout % 256 == 0:
        cnt = 256
    else:
        cnt = 128
    nj = cout // cnt

    in_specs = [
        pl.BlockSpec((None, SH, Wph, cin), lambda n, j: (n, 0, 0, 0)),
        pl.BlockSpec((kk, cin, cnt), lambda n, j: (0, 0, j)),
        pl.BlockSpec((1, cnt), lambda n, j: (0, j)),
    ]
    args = [a, w_taps, bias]
    if residual is not None:
        args.append(residual.reshape(N, M, cout))
        in_specs.append(pl.BlockSpec((None, M, cnt), lambda n, j: (n, 0, j)))
        kernel = functools.partial(_conv_res_kernel, taps=taps, ho=Ho, wo=Wo, act=act)
    else:
        kernel = functools.partial(_conv_kernel, taps=taps, ho=Ho, wo=Wo, act=act)

    # VMEM budget: double-buffered inputs/output + f32 accumulator + margin.
    vmem_bytes = 2 * (SH * Wph * cin * 2 + kk * cin * cnt * 2 + cnt * 4 + M * cnt * 2)
    if residual is not None:
        vmem_bytes += 2 * M * cnt * 2
    vmem_bytes += M * cnt * 4
    vmem_limit = int(min(max(vmem_bytes + (4 << 20), 16 << 20), 100 << 20))

    out = pl.pallas_call(
        kernel,
        out_shape=jax.ShapeDtypeStruct((N, M, cout), BF16),
        grid=(N, nj),                           # leading 'parallel' axis has N>=2 blocks
        in_specs=in_specs,
        out_specs=pl.BlockSpec((None, M, cnt), lambda n, j: (n, 0, j)),
        compiler_params=pltpu.CompilerParams(
            dimension_semantics=("parallel", "parallel"),
            vmem_limit_bytes=vmem_limit,
        ),
    )(*args)
    return out.reshape(N, Ho, Wo, cout)


# ----------------------------------------------------------------------------
# BasicBlock parameters + forward (lane-dense padded channels between layers)
# ----------------------------------------------------------------------------

def kaiming(key, shape_hwio):
    kh, kw, cin, cout = shape_hwio
    fan_out = kh * kw * cout
    std = (2.0 / fan_out) ** 0.5
    return std * jax.random.normal(key, shape_hwio, F32)


def _prep_conv(w_hwio, cinp, coutp):
    """Fold eval-mode BN scale, pad channels to 128 multiples, tap-major bf16."""
    kh, kw, cin, cout = w_hwio.shape
    w = w_hwio * BN_SCALE
    w = jnp.pad(w, ((0, 0), (0, 0), (0, cinp - cin), (0, coutp - cout)))
    return w.reshape(kh * kw, cinp, coutp).astype(BF16)


def init_basic_block(key, inplanes, planes, stride=1):
    keys = jax.random.split(key, 3)
    cinp, coutp = _round_up(inplanes, 128), _round_up(planes, 128)
    downsample = (stride != 1) or (inplanes != planes)
    w1 = kaiming(keys[0], (3, 3, inplanes, planes))
    w2 = kaiming(keys[1], (3, 3, planes, planes))
    blk = {
        "conv1_w": _prep_conv(w1, cinp, coutp),
        "bn1_b": jnp.zeros((1, coutp), F32),
        "conv2_w": _prep_conv(w2, coutp, coutp),
        "bn2_b": jnp.zeros((1, coutp), F32),
        # unpadded BN-folded HWIO copies, used only by the pure-JAX reference
        "ref_conv1_w": w1 * BN_SCALE,
        "ref_conv2_w": w2 * BN_SCALE,
    }
    if downsample:
        wd = kaiming(keys[2], (1, 1, inplanes, planes))
        blk["down_w"] = _prep_conv(wd, cinp, coutp)
        blk["dbn_b"] = jnp.zeros((1, coutp), F32)
        blk["ref_down_w"] = wd * BN_SCALE
    return blk


def basic_block_forward(blk, x, stride):
    """conv3x3-bn-relu -> conv3x3-bn -> (+ downsample residual) -> relu (NHWC bf16)."""
    identity = x
    out = conv_bn_act(x, blk["conv1_w"], blk["bn1_b"], 3, stride, 1, act="relu")
    if "down_w" in blk:
        identity = conv_bn_act(x, blk["down_w"], blk["dbn_b"], 1, stride, 0, act="none")
    out = conv_bn_act(out, blk["conv2_w"], blk["bn2_b"], 3, 1, 1,
                      residual=identity, act="relu")
    return out


# ----------------------------------------------------------------------------
# Pure-JAX reference (same bf16 storage precision) for correctness checking
# ----------------------------------------------------------------------------

def _ref_conv(x, w_hwio, stride, pad):
    return lax.conv_general_dilated(
        x.astype(BF16), w_hwio.astype(BF16),
        window_strides=(stride, stride),
        padding=[(pad, pad), (pad, pad)],
        dimension_numbers=("NHWC", "HWIO", "NHWC"),
        preferred_element_type=jnp.float32)


def ref_basic_block(blk, x, stride, planes):
    identity = x.astype(F32)
    out = jnp.maximum(_ref_conv(x, blk["ref_conv1_w"], stride, 1)
                      + blk["bn1_b"][:, :planes], 0.0).astype(BF16)
    if "ref_down_w" in blk:
        identity = (_ref_conv(x, blk["ref_down_w"], stride, 0)
                    + blk["dbn_b"][:, :planes]).astype(BF16).astype(F32)
    out = _ref_conv(out, blk["ref_conv2_w"], 1, 1) + blk["bn2_b"][:, :planes] + identity
    return jnp.maximum(out, 0.0).astype(BF16)


# ----------------------------------------------------------------------------
# Main
# ----------------------------------------------------------------------------

if __name__ == "__main__":
    key = jax.random.PRNGKey(0)
    k1, k2, kx = jax.random.split(key, 3)

    inplanes, planes = 16, 32
    cinp = _round_up(inplanes, 128)
    blk_down = init_basic_block(k1, inplanes, planes, stride=2)  # stride-2 + 1x1 downsample
    blk_id = init_basic_block(k2, planes, planes, stride=1)      # identity residual

    x_nchw = jax.random.normal(kx, (2, inplanes, 16, 16), F32)   # NCHW like PyTorch

    @jax.jit
    def forward(p_down, p_id, x):
        h = jnp.transpose(x, (0, 2, 3, 1))                       # NCHW -> NHWC
        h = jnp.pad(h, ((0, 0), (0, 0), (0, 0), (0, cinp - inplanes))).astype(BF16)
        h = basic_block_forward(p_down, h, stride=2)
        h = basic_block_forward(p_id, h, stride=1)
        h = h[..., :planes].astype(F32)                          # drop channel padding once
        return jnp.transpose(h, (0, 3, 1, 2))                    # NHWC -> NCHW

    out = forward(blk_down, blk_id, x_nchw)
    jax.block_until_ready(out)
    assert out.shape == (2, planes, 8, 8)

    # correctness check against a pure-JAX conv reference
    xh = jnp.transpose(x_nchw, (0, 2, 3, 1)).astype(BF16)
    ref = ref_basic_block(blk_id, ref_basic_block(blk_down, xh, 2, planes), 1, planes)
    ref = jnp.transpose(ref.astype(F32), (0, 3, 1, 2))
    max_err = float(jnp.max(jnp.abs(out - ref)))
    assert jnp.allclose(out, ref, rtol=2e-2, atol=2e-2), max_err

    print("KERNEL_OK")
</pallas_src>

<mosaic_0001>
module attributes {stable_mosaic.version = 11 : i64} {
  func.func @_conv_kernel(%arg0: i32, %arg1: i32, %arg2: memref<1x32x8x128xbf16, #tpu.memory_space<vmem>>, %arg3: memref<1x128x128xbf16, #tpu.memory_space<vmem>>, %arg4: memref<1x128xf32, #tpu.memory_space<vmem>>, %arg5: memref<1x64x128xbf16, #tpu.memory_space<vmem>>) attributes {dimension_semantics = [#tpu.dimension_semantics<parallel>, #tpu.dimension_semantics<parallel>], iteration_bounds = array<i64: 2, 1>, scalar_prefetch = 0 : i64, scratch_operands = 0 : i64, tpu.core_type = #tpu.core_type<tc>, window_params = [{transform_indices = @transform_0, window_bounds = array<i64: 1, 32, 8, 128>}, {transform_indices = @transform_1, window_bounds = array<i64: 1, 128, 128>}, {transform_indices = @transform_2, window_bounds = array<i64: 1, 128>}, {transform_indices = @transform_3, window_bounds = array<i64: 1, 64, 128>}]} {
    %c0 = arith.constant 0 : index
    %c0_0 = arith.constant 0 : index
    %c0_1 = arith.constant 0 : index
    %c0_2 = arith.constant 0 : index
    %0 = vector.load %arg2[%c0, %c0_0, %c0_1, %c0_2] : memref<1x32x8x128xbf16, #tpu.memory_space<vmem>>, vector<1x8x8x128xbf16>
    %1 = vector.shape_cast %0 : vector<1x8x8x128xbf16> to vector<8x8x128xbf16>
    %2 = vector.shape_cast %1 : vector<8x8x128xbf16> to vector<64x128xbf16>
    %c0_3 = arith.constant 0 : index
    %c0_4 = arith.constant 0 : index
    %c0_5 = arith.constant 0 : index
    %3 = vector.load %arg3[%c0_3, %c0_4, %c0_5] : memref<1x128x128xbf16, #tpu.memory_space<vmem>>, vector<1x128x128xbf16>
    %4 = vector.shape_cast %3 : vector<1x128x128xbf16> to vector<128x128xbf16>
    %cst = arith.constant dense<0.000000e+00> : vector<64x128xf32>
    %5 = tpu.matmul %2, %4, %cst {dimension_numbers = #tpu.dot_dimension_numbers<[1], [0], [0], [1], [0, 0, 1, 1], [], []>} : vector<64x128xbf16>, vector<128x128xbf16>, vector<64x128xf32> -> vector<64x128xf32>
    %c0_6 = arith.constant 0 : index
    %c0_7 = arith.constant 0 : index
    %6 = vector.load %arg4[%c0_6, %c0_7] : memref<1x128xf32, #tpu.memory_space<vmem>>, vector<1x128xf32>
    %7 = vector.broadcast %6 : vector<1x128xf32> to vector<64x128xf32>
    %8 = arith.addf %5, %7 : vector<64x128xf32>
    %9 = arith.truncf %8 : vector<64x128xf32> to vector<64x128xbf16>
    %c0_8 = arith.constant 0 : index
    %c0_9 = arith.constant 0 : index
    %c0_10 = arith.constant 0 : index
    %10 = vector.load %arg5[%c0_8, %c0_9, %c0_10] : memref<1x64x128xbf16, #tpu.memory_space<vmem>>, vector<1x64x128xbf16>
    %11 = vector.shape_cast %10 : vector<1x64x128xbf16> to vector<64x128xbf16>
    %12 = vector.shape_cast %9 : vector<64x128xbf16> to vector<1x64x128xbf16>
    tpu.vector_store %arg5[%c0_8, %c0_9, %c0_10], %12 {strides = array<i32>} : memref<1x64x128xbf16, #tpu.memory_space<vmem>>, vector<1x64x128xbf16>,
    return
  }
  func.func @transform_0(%arg0: i32, %arg1: i32) -> (i32, i32, i32, i32) {
    %c0_i32 = arith.constant 0 : i32
    %c0_i32_0 = arith.constant 0 : i32
    %c0_i32_1 = arith.constant 0 : i32
    %c0_i32_2 = arith.constant 0 : i32
    return %arg0, %c0_i32, %c0_i32_0, %c0_i32_1 : i32, i32, i32, i32
  }
  func.func @transform_1(%arg0: i32, %arg1: i32) -> (i32, i32, i32) {
    %c0_i32 = arith.constant 0 : i32
    %c0_i32_0 = arith.constant 0 : i32
    %c0_i32_1 = arith.constant 0 : i32
    return %c0_i32, %c0_i32_0, %arg1 : i32, i32, i32
  }
  func.func @transform_2(%arg0: i32, %arg1: i32) -> (i32, i32) {
    %c0_i32 = arith.constant 0 : i32
    %c0_i32_0 = arith.constant 0 : i32
    return %c0_i32, %arg1 : i32, i32
  }
  func.func @transform_3(%arg0: i32, %arg1: i32) -> (i32, i32, i32) {
    %c0_i32 = arith.constant 0 : i32
    %c0_i32_0 = arith.constant 0 : i32
    return %arg0, %c0_i32, %arg1 : i32, i32, i32
  }
}

module attributes {stable_mosaic.version = 11 : i64} {
  func.func @_conv_kernel(%arg0: i32, %arg1: i32, %arg2: memref<1x36x9x128xbf16, #tpu.memory_space<vmem>>, %arg3: memref<9x128x128xbf16, #tpu.memory_space<vmem>>, %arg4: memref<1x128xf32, #tpu.memory_space<vmem>>, %arg5: memref<1x64x128xbf16, #tpu.memory_space<vmem>>) attributes {dimension_semantics = [#tpu.dimension_semantics<parallel>, #tpu.dimension_semantics<parallel>], iteration_bounds = array<i64: 2, 1>, scalar_prefetch = 0 : i64, scratch_operands = 0 : i64, tpu.core_type = #tpu.core_type<tc>, window_params = [{transform_indices = @transform_0, window_bounds = array<i64: 1, 36, 9, 128>}, {transform_indices = @transform_1, window_bounds = array<i64: 9, 128, 128>}, {transform_indices = @transform_2, window_bounds = array<i64: 1, 128>}, {transform_indices = @transform_3, window_bounds = array<i64: 1, 64, 128>}]} {
    %c0 = arith.constant 0 : index
    %c0_0 = arith.constant 0 : index
    %c0_1 = arith.constant 0 : index
    %c0_2 = arith.constant 0 : index
    %0 = vector.load %arg2[%c0, %c0_0, %c0_1, %c0_2] : memref<1x36x9x128xbf16, #tpu.memory_space<vmem>>, vector<1x8x8x128xbf16>
    %1 = vector.shape_cast %0 : vector<1x8x8x128xbf16> to vector<8x8x128xbf16>
    %2 = vector.shape_cast %1 : vector<8x8x128xbf16> to vector<64x128xbf16>
    %c0_3 = arith.constant 0 : index
    %c0_4 = arith.constant 0 : index
    %c0_5 = arith.constant 0 : index
    %3 = vector.load %arg3[%c0_3, %c0_4, %c0_5] : memref<9x128x128xbf16, #tpu.memory_space<vmem>>, vector<1x128x128xbf16>
    %4 = vector.shape_cast %3 : vector<1x128x128xbf16> to vector<128x128xbf16>
    %cst = arith.constant dense<0.000000e+00> : vector<64x128xf32>
    %5 = tpu.matmul %2, %4, %cst {dimension_numbers = #tpu.dot_dimension_numbers<[1], [0], [0], [1], [0, 0, 1, 1], [], []>} : vector<64x128xbf16>, vector<128x128xbf16>, vector<64x128xf32> -> vector<64x128xf32>
    %c0_6 = arith.constant 0 : index
    %c9 = arith.constant 9 : index
    %c0_7 = arith.constant 0 : index
    %c0_8 = arith.constant 0 : index
    %6 = vector.load %arg2[%c0_6, %c9, %c0_7, %c0_8] : memref<1x36x9x128xbf16, #tpu.memory_space<vmem>>, vector<1x8x8x128xbf16>
    %7 = vector.shape_cast %6 : vector<1x8x8x128xbf16> to vector<8x8x128xbf16>
    %8 = vector.shape_cast %7 : vector<8x8x128xbf16> to vector<64x128xbf16>
    %c1 = arith.constant 1 : index
    %c0_9 = arith.constant 0 : index
    %c0_10 = arith.constant 0 : index
    %9 = vector.load %arg3[%c1, %c0_9, %c0_10] : memref<9x128x128xbf16, #tpu.memory_space<vmem>>, vector<1x128x128xbf16>
    %10 = vector.shape_cast %9 : vector<1x128x128xbf16> to vector<128x128xbf16>
    %cst_11 = arith.constant dense<0.000000e+00> : vector<64x128xf32>
    %11 = tpu.matmul %8, %10, %cst_11 {dimension_numbers = #tpu.dot_dimension_numbers<[1], [0], [0], [1], [0, 0, 1, 1], [], []>} : vector<64x128xbf16>, vector<128x128xbf16>, vector<64x128xf32> -> vector<64x128xf32>
    %12 = arith.addf %5, %11 : vector<64x128xf32>
    %c0_12 = arith.constant 0 : index
    %c0_13 = arith.constant 0 : index
    %c1_14 = arith.constant 1 : index
    %c0_15 = arith.constant 0 : index
    %13 = vector.load %arg2[%c0_12, %c0_13, %c1_14, %c0_15] : memref<1x36x9x128xbf16, #tpu.memory_space<vmem>>, vector<1x8x8x128xbf16>
    %14 = vector.shape_cast %13 : vector<1x8x8x128xbf16> to vector<8x8x128xbf16>
    %15 = vector.shape_cast %14 : vector<8x8x128xbf16> to vector<64x128xbf16>
    %c2 = arith.constant 2 : index
    %c0_16 = arith.constant 0 : index
    %c0_17 = arith.constant 0 : index
    %16 = vector.load %arg3[%c2, %c0_16, %c0_17] : memref<9x128x128xbf16, #tpu.memory_space<vmem>>, vector<1x128x128xbf16>
    %17 = vector.shape_cast %16 : vector<1x128x128xbf16> to vector<128x128xbf16>
    %cst_18 = arith.constant dense<0.000000e+00> : vector<64x128xf32>
    %18 = tpu.matmul %15, %17, %cst_18 {dimension_numbers = #tpu.dot_dimension_numbers<[1], [0], [0], [1], [0, 0, 1, 1], [], []>} : vector<64x128xbf16>, vector<128x128xbf16>, vector<64x128xf32> -> vector<64x128xf32>
    %19 = arith.addf %12, %18 : vector<64x128xf32>
    %c0_19 = arith.constant 0 : index
    %c18 = arith.constant 18 : index
    %c0_20 = arith.constant 0 : index
    %c0_21 = arith.constant 0 : index
    %20 = vector.load %arg2[%c0_19, %c18, %c0_20, %c0_21] : memref<1x36x9x128xbf16, #tpu.memory_space<vmem>>, vector<1x8x8x128xbf16>
    %21 = vector.shape_cast %20 : vector<1x8x8x128xbf16> to vector<8x8x128xbf16>
    %22 = vector.shape_cast %21 : vector<8x8x128xbf16> to vector<64x128xbf16>
    %c3 = arith.constant 3 : index
    %c0_22 = arith.constant 0 : index
    %c0_23 = arith.constant 0 : index
    %23 = vector.load %arg3[%c3, %c0_22, %c0_23] : memref<9x128x128xbf16, #tpu.memory_space<vmem>>, vector<1x128x128xbf16>
    %24 = vector.shape_cast %23 : vector<1x128x128xbf16> to vector<128x128xbf16>
    %cst_24 = arith.constant dense<0.000000e+00> : vector<64x128xf32>
    %25 = tpu.matmul %22, %24, %cst_24 {dimension_numbers = #tpu.dot_dimension_numbers<[1], [0], [0], [1], [0, 0, 1, 1], [], []>} : vector<64x128xbf16>, vector<128x128xbf16>, vector<64x128xf32> -> vector<64x128xf32>
    %26 = arith.addf %19, %25 : vector<64x128xf32>
    %c0_25 = arith.constant 0 : index
    %c27 = arith.constant 27 : index
    %c0_26 = arith.constant 0 : index
    %c0_27 = arith.constant 0 : index
    %27 = vector.load %arg2[%c0_25, %c27, %c0_26, %c0_27] : memref<1x36x9x128xbf16, #tpu.memory_space<vmem>>, vector<1x8x8x128xbf16>
    %28 = vector.shape_cast %27 : vector<1x8x8x128xbf16> to vector<8x8x128xbf16>
    %29 = vector.shape_cast %28 : vector<8x8x128xbf16> to vector<64x128xbf16>
    %c4 = arith.constant 4 : index
    %c0_28 = arith.constant 0 : index
    %c0_29 = arith.constant 0 : index
    %30 = vector.load %arg3[%c4, %c0_28, %c0_29] : memref<9x128x128xbf16, #tpu.memory_space<vmem>>, vector<1x128x128xbf16>
    %31 = vector.shape_cast %30 : vector<1x128x128xbf16> to vector<128x128xbf16>
    %cst_30 = arith.constant dense<0.000000e+00> : vector<64x128xf32>
    %32 = tpu.matmul %29, %31, %cst_30 {dimension_numbers = #tpu.dot_dimension_numbers<[1], [0], [0], [1], [0, 0, 1, 1], [], []>} : vector<64x128xbf16>, vector<128x128xbf16>, vector<64x128xf32> -> vector<64x128xf32>
    %33 = arith.addf %26, %32 : vector<64x128xf32>
    %c0_31 = arith.constant 0 : index
    %c18_32 = arith.constant 18 : index
    %c1_33 = arith.constant 1 : index
    %c0_34 = arith.constant 0 : index
    %34 = vector.load %arg2[%c0_31, %c18_32, %c1_33, %c0_34] : memref<1x36x9x128xbf16, #tpu.memory_space<vmem>>, vector<1x8x8x128xbf16>
    %35 = vector.shape_cast %34 : vector<1x8x8x128xbf16> to vector<8x8x128xbf16>
    %36 = vector.shape_cast %35 : vector<8x8x128xbf16> to vector<64x128xbf16>
    %c5 = arith.constant 5 : index
    %c0_35 = arith.constant 0 : index
    %c0_36 = arith.constant 0 : index
    %37 = vector.load %arg3[%c5, %c0_35, %c0_36] : memref<9x128x128xbf16, #tpu.memory_space<vmem>>, vector<1x128x128xbf16>
    %38 = vector.shape_cast %37 : vector<1x128x128xbf16> to vector<128x128xbf16>
    %cst_37 = arith.constant dense<0.000000e+00> : vector<64x128xf32>
    %39 = tpu.matmul %36, %38, %cst_37 {dimension_numbers = #tpu.dot_dimension_numbers<[1], [0], [0], [1], [0, 0, 1, 1], [], []>} : vector<64x128xbf16>, vector<128x128xbf16>, vector<64x128xf32> -> vector<64x128xf32>
    %40 = arith.addf %33, %39 : vector<64x128xf32>
    %c0_38 = arith.constant 0 : index
    %c1_39 = arith.constant 1 : index
    %c0_40 = arith.constant 0 : index
    %c0_41 = arith.constant 0 : index
    %41 = vector.load %arg2[%c0_38, %c1_39, %c0_40, %c0_41] : memref<1x36x9x128xbf16, #tpu.memory_space<vmem>>, vector<1x8x8x128xbf16>
    %42 = vector.shape_cast %41 : vector<1x8x8x128xbf16> to vector<8x8x128xbf16>
    %43 = vector.shape_cast %42 : vector<8x8x128xbf16> to vector<64x128xbf16>
    %c6 = arith.constant 6 : index
    %c0_42 = arith.constant 0 : index
    %c0_43 = arith.constant 0 : index
    %44 = vector.load %arg3[%c6, %c0_42, %c0_43] : memref<9x128x128xbf16, #tpu.memory_space<vmem>>, vector<1x128x128xbf16>
    %45 = vector.shape_cast %44 : vector<1x128x128xbf16> to vector<128x128xbf16>
    %cst_44 = arith.constant dense<0.000000e+00> : vector<64x128xf32>
    %46 = tpu.matmul %43, %45, %cst_44 {dimension_numbers = #tpu.dot_dimension_numbers<[1], [0], [0], [1], [0, 0, 1, 1], [], []>} : vector<64x128xbf16>, vector<128x128xbf16>, vector<64x128xf32> -> vector<64x128xf32>
    %47 = arith.addf %40, %46 : vector<64x128xf32>
    %c0_45 = arith.constant 0 : index
    %c10 = arith.constant 10 : index
    %c0_46 = arith.constant 0 : index
    %c0_47 = arith.constant 0 : index
    %48 = vector.load %arg2[%c0_45, %c10, %c0_46, %c0_47] : memref<1x36x9x128xbf16, #tpu.memory_space<vmem>>, vector<1x8x8x128xbf16>
    %49 = vector.shape_cast %48 : vector<1x8x8x128xbf16> to vector<8x8x128xbf16>
    %50 = vector.shape_cast %49 : vector<8x8x128xbf16> to vector<64x128xbf16>
    %c7 = arith.constant 7 : index
    %c0_48 = arith.constant 0 : index
    %c0_49 = arith.constant 0 : index
    %51 = vector.load %arg3[%c7, %c0_48, %c0_49] : memref<9x128x128xbf16, #tpu.memory_space<vmem>>, vector<1x128x128xbf16>
    %52 = vector.shape_cast %51 : vector<1x128x128xbf16> to vector<128x128xbf16>
    %cst_50 = arith.constant dense<0.000000e+00> : vector<64x128xf32>
    %53 = tpu.matmul %50, %52, %cst_50 {dimension_numbers = #tpu.dot_dimension_numbers<[1], [0], [0], [1], [0, 0, 1, 1], [], []>} : vector<64x128xbf16>, vector<128x128xbf16>, vector<64x128xf32> -> vector<64x128xf32>
    %54 = arith.addf %47, %53 : vector<64x128xf32>
    %c0_51 = arith.constant 0 : index
    %c1_52 = arith.constant 1 : index
    %c1_53 = arith.constant 1 : index
    %c0_54 = arith.constant 0 : index
    %55 = vector.load %arg2[%c0_51, %c1_52, %c1_53, %c0_54] : memref<1x36x9x128xbf16, #tpu.memory_space<vmem>>, vector<1x8x8x128xbf16>
    %56 = vector.shape_cast %55 : vector<1x8x8x128xbf16> to vector<8x8x128xbf16>
    %57 = vector.shape_cast %56 : vector<8x8x128xbf16> to vector<64x128xbf16>
    %c8 = arith.constant 8 : index
    %c0_55 = arith.constant 0 : index
    %c0_56 = arith.constant 0 : index
    %58 = vector.load %arg3[%c8, %c0_55, %c0_56] : memref<9x128x128xbf16, #tpu.memory_space<vmem>>, vector<1x128x128xbf16>
    %59 = vector.shape_cast %58 : vector<1x128x128xbf16> to vector<128x128xbf16>
    %cst_57 = arith.constant dense<0.000000e+00> : vector<64x128xf32>
    %60 = tpu.matmul %57, %59, %cst_57 {dimension_numbers = #tpu.dot_dimension_numbers<[1], [0], [0], [1], [0, 0, 1, 1], [], []>} : vector<64x128xbf16>, vector<128x128xbf16>, vector<64x128xf32> -> vector<64x128xf32>
    %61 = arith.addf %54, %60 : vector<64x128xf32>
    %c0_58 = arith.constant 0 : index
    %c0_59 = arith.constant 0 : index
    %62 = vector.load %arg4[%c0_58, %c0_59] : memref<1x128xf32, #tpu.memory_space<vmem>>, vector<1x128xf32>
    %63 = vector.broadcast %62 : vector<1x128xf32> to vector<64x128xf32>
    %64 = arith.addf %61, %63 : vector<64x128xf32>
    %cst_60 = arith.constant 0.000000e+00 : f32
    %65 = vector.broadcast %cst_60 : f32 to vector<64x128xf32>
    %66 = arith.maximumf %64, %65 : vector<64x128xf32>
    %67 = arith.truncf %66 : vector<64x128xf32> to vector<64x128xbf16>
    %c0_61 = arith.constant 0 : index
    %c0_62 = arith.constant 0 : index
    %c0_63 = arith.constant 0 : index
    %68 = vector.load %arg5[%c0_61, %c0_62, %c0_63] : memref<1x64x128xbf16, #tpu.memory_space<vmem>>, vector<1x64x128xbf16>
    %69 = vector.shape_cast %68 : vector<1x64x128xbf16> to vector<64x128xbf16>
    %70 = vector.shape_cast %67 : vector<64x128xbf16> to vector<1x64x128xbf16>
    tpu.vector_store %arg5[%c0_61, %c0_62, %c0_63], %70 {strides = array<i32>} : memref<1x64x128xbf16, #tpu.memory_space<vmem>>, vector<1x64x128xbf16>,
    return
  }
  func.func @transform_0(%arg0: i32, %arg1: i32) -> (i32, i32, i32, i32) {
    %c0_i32 = arith.constant 0 : i32
    %c0_i32_0 = arith.constant 0 : i32
    %c0_i32_1 = arith.constant 0 : i32
    %c0_i32_2 = arith.constant 0 : i32
    return %arg0, %c0_i32, %c0_i32_0, %c0_i32_1 : i32, i32, i32, i32
  }
  func.func @transform_1(%arg0: i32, %arg1: i32) -> (i32, i32, i32) {
    %c0_i32 = arith.constant 0 : i32
    %c0_i32_0 = arith.constant 0 : i32
    %c0_i32_1 = arith.constant 0 : i32
    return %c0_i32, %c0_i32_0, %arg1 : i32, i32, i32
  }
  func.func @transform_2(%arg0: i32, %arg1: i32) -> (i32, i32) {
    %c0_i32 = arith.constant 0 : i32
    %c0_i32_0 = arith.constant 0 : i32
    return %c0_i32, %arg1 : i32, i32
  }
  func.func @transform_3(%arg0: i32, %arg1: i32) -> (i32, i32, i32) {
    %c0_i32 = arith.constant 0 : i32
    %c0_i32_0 = arith.constant 0 : i32
    return %arg0, %c0_i32, %arg1 : i32, i32, i32
  }
}

module attributes {stable_mosaic.version = 11 : i64} {
  func.func @_conv_kernel(%arg0: i32, %arg1: i32, %arg2: memref<1x10x10x128xbf16, #tpu.memory_space<vmem>>, %arg3: memref<9x128x128xbf16, #tpu.memory_space<vmem>>, %arg4: memref<1x128xf32, #tpu.memory_space<vmem>>, %arg5: memref<1x64x128xbf16, #tpu.memory_space<vmem>>) attributes {dimension_semantics = [#tpu.dimension_semantics<parallel>, #tpu.dimension_semantics<parallel>], iteration_bounds = array<i64: 2, 1>, scalar_prefetch = 0 : i64, scratch_operands = 0 : i64, tpu.core_type = #tpu.core_type<tc>, window_params = [{transform_indices = @transform_0, window_bounds = array<i64: 1, 10, 10, 128>}, {transform_indices = @transform_1, window_bounds = array<i64: 9, 128, 128>}, {transform_indices = @transform_2, window_bounds = array<i64: 1, 128>}, {transform_indices = @transform_3, window_bounds = array<i64: 1, 64, 128>}]} {
    %c0 = arith.constant 0 : index
    %c0_0 = arith.constant 0 : index
    %c0_1 = arith.constant 0 : index
    %c0_2 = arith.constant 0 : index
    %0 = vector.load %arg2[%c0, %c0_0, %c0_1, %c0_2] : memref<1x10x10x128xbf16, #tpu.memory_space<vmem>>, vector<1x8x8x128xbf16>
    %1 = vector.shape_cast %0 : vector<1x8x8x128xbf16> to vector<8x8x128xbf16>
    %2 = vector.shape_cast %1 : vector<8x8x128xbf16> to vector<64x128xbf16>
    %c0_3 = arith.constant 0 : index
    %c0_4 = arith.constant 0 : index
    %c0_5 = arith.constant 0 : index
    %3 = vector.load %arg3[%c0_3, %c0_4, %c0_5] : memref<9x128x128xbf16, #tpu.memory_space<vmem>>, vector<1x128x128xbf16>
    %4 = vector.shape_cast %3 : vector<1x128x128xbf16> to vector<128x128xbf16>
    %cst = arith.constant dense<0.000000e+00> : vector<64x128xf32>
    %5 = tpu.matmul %2, %4, %cst {dimension_numbers = #tpu.dot_dimension_numbers<[1], [0], [0], [1], [0, 0, 1, 1], [], []>} : vector<64x128xbf16>, vector<128x128xbf16>, vector<64x128xf32> -> vector<64x128xf32>
    %c0_6 = arith.constant 0 : index
    %c0_7 = arith.constant 0 : index
    %c1 = arith.constant 1 : index
    %c0_8 = arith.constant 0 : index
    %6 = vector.load %arg2[%c0_6, %c0_7, %c1, %c0_8] : memref<1x10x10x128xbf16, #tpu.memory_space<vmem>>, vector<1x8x8x128xbf16>
    %7 = vector.shape_cast %6 : vector<1x8x8x128xbf16> to vector<8x8x128xbf16>
    %8 = vector.shape_cast %7 : vector<8x8x128xbf16> to vector<64x128xbf16>
    %c1_9 = arith.constant 1 : index
    %c0_10 = arith.constant 0 : index
    %c0_11 = arith.constant 0 : index
    %9 = vector.load %arg3[%c1_9, %c0_10, %c0_11] : memref<9x128x128xbf16, #tpu.memory_space<vmem>>, vector<1x128x128xbf16>
    %10 = vector.shape_cast %9 : vector<1x128x128xbf16> to vector<128x128xbf16>
    %cst_12 = arith.constant dense<0.000000e+00> : vector<64x128xf32>
    %11 = tpu.matmul %8, %10, %cst_12 {dimension_numbers = #tpu.dot_dimension_numbers<[1], [0], [0], [1], [0, 0, 1, 1], [], []>} : vector<64x128xbf16>, vector<128x128xbf16>, vector<64x128xf32> -> vector<64x128xf32>
    %12 = arith.addf %5, %11 : vector<64x128xf32>
    %c0_13 = arith.constant 0 : index
    %c0_14 = arith.constant 0 : index
    %c2 = arith.constant 2 : index
    %c0_15 = arith.constant 0 : index
    %13 = vector.load %arg2[%c0_13, %c0_14, %c2, %c0_15] : memref<1x10x10x128xbf16, #tpu.memory_space<vmem>>, vector<1x8x8x128xbf16>
    %14 = vector.shape_cast %13 : vector<1x8x8x128xbf16> to vector<8x8x128xbf16>
    %15 = vector.shape_cast %14 : vector<8x8x128xbf16> to vector<64x128xbf16>
    %c2_16 = arith.constant 2 : index
    %c0_17 = arith.constant 0 : index
    %c0_18 = arith.constant 0 : index
    %16 = vector.load %arg3[%c2_16, %c0_17, %c0_18] : memref<9x128x128xbf16, #tpu.memory_space<vmem>>, vector<1x128x128xbf16>
    %17 = vector.shape_cast %16 : vector<1x128x128xbf16> to vector<128x128xbf16>
    %cst_19 = arith.constant dense<0.000000e+00> : vector<64x128xf32>
    %18 = tpu.matmul %15, %17, %cst_19 {dimension_numbers = #tpu.dot_dimension_numbers<[1], [0], [0], [1], [0, 0, 1, 1], [], []>} : vector<64x128xbf16>, vector<128x128xbf16>, vector<64x128xf32> -> vector<64x128xf32>
    %19 = arith.addf %12, %18 : vector<64x128xf32>
    %c0_20 = arith.constant 0 : index
    %c1_21 = arith.constant 1 : index
    %c0_22 = arith.constant 0 : index
    %c0_23 = arith.constant 0 : index
    %20 = vector.load %arg2[%c0_20, %c1_21, %c0_22, %c0_23] : memref<1x10x10x128xbf16, #tpu.memory_space<vmem>>, vector<1x8x8x128xbf16>
    %21 = vector.shape_cast %20 : vector<1x8x8x128xbf16> to vector<8x8x128xbf16>
    %22 = vector.shape_cast %21 : vector<8x8x128xbf16> to vector<64x128xbf16>
    %c3 = arith.constant 3 : index
    %c0_24 = arith.constant 0 : index
    %c0_25 = arith.constant 0 : index
    %23 = vector.load %arg3[%c3, %c0_24, %c0_25] : memref<9x128x128xbf16, #tpu.memory_space<vmem>>, vector<1x128x128xbf16>
    %24 = vector.shape_cast %23 : vector<1x128x128xbf16> to vector<128x128xbf16>
    %cst_26 = arith.constant dense<0.000000e+00> : vector<64x128xf32>
    %25 = tpu.matmul %22, %24, %cst_26 {dimension_numbers = #tpu.dot_dimension_numbers<[1], [0], [0], [1], [0, 0, 1, 1], [], []>} : vector<64x128xbf16>, vector<128x128xbf16>, vector<64x128xf32> -> vector<64x128xf32>
    %26 = arith.addf %19, %25 : vector<64x128xf32>
    %c0_27 = arith.constant 0 : index
    %c1_28 = arith.constant 1 : index
    %c1_29 = arith.constant 1 : index
    %c0_30 = arith.constant 0 : index
    %27 = vector.load %arg2[%c0_27, %c1_28, %c1_29, %c0_30] : memref<1x10x10x128xbf16, #tpu.memory_space<vmem>>, vector<1x8x8x128xbf16>
    %28 = vector.shape_cast %27 : vector<1x8x8x128xbf16> to vector<8x8x128xbf16>
    %29 = vector.shape_cast %28 : vector<8x8x128xbf16> to vector<64x128xbf16>
    %c4 = arith.constant 4 : index
    %c0_31 = arith.constant 0 : index
    %c0_32 = arith.constant 0 : index
    %30 = vector.load %arg3[%c4, %c0_31, %c0_32] : memref<9x128x128xbf16, #tpu.memory_space<vmem>>, vector<1x128x128xbf16>
    %31 = vector.shape_cast %30 : vector<1x128x128xbf16> to vector<128x128xbf16>
    %cst_33 = arith.constant dense<0.000000e+00> : vector<64x128xf32>
    %32 = tpu.matmul %29, %31, %cst_33 {dimension_numbers = #tpu.dot_dimension_numbers<[1], [0], [0], [1], [0, 0, 1, 1], [], []>} : vector<64x128xbf16>, vector<128x128xbf16>, vector<64x128xf32> -> vector<64x128xf32>
    %33 = arith.addf %26, %32 : vector<64x128xf32>
    %c0_34 = arith.constant 0 : index
    %c1_35 = arith.constant 1 : index
    %c2_36 = arith.constant 2 : index
    %c0_37 = arith.constant 0 : index
    %34 = vector.load %arg2[%c0_34, %c1_35, %c2_36, %c0_37] : memref<1x10x10x128xbf16, #tpu.memory_space<vmem>>, vector<1x8x8x128xbf16>
    %35 = vector.shape_cast %34 : vector<1x8x8x128xbf16> to vector<8x8x128xbf16>
    %36 = vector.shape_cast %35 : vector<8x8x128xbf16> to vector<64x128xbf16>
    %c5 = arith.constant 5 : index
    %c0_38 = arith.constant 0 : index
    %c0_39 = arith.constant 0 : index
    %37 = vector.load %arg3[%c5, %c0_38, %c0_39] : memref<9x128x128xbf16, #tpu.memory_space<vmem>>, vector<1x128x128xbf16>
    %38 = vector.shape_cast %37 : vector<1x128x128xbf16> to vector<128x128xbf16>
    %cst_40 = arith.constant dense<0.000000e+00> : vector<64x128xf32>
    %39 = tpu.matmul %36, %38, %cst_40 {dimension_numbers = #tpu.dot_dimension_numbers<[1], [0], [0], [1], [0, 0, 1, 1], [], []>} : vector<64x128xbf16>, vector<128x128xbf16>, vector<64x128xf32> -> vector<64x128xf32>
    %40 = arith.addf %33, %39 : vector<64x128xf32>
    %c0_41 = arith.constant 0 : index
    %c2_42 = arith.constant 2 : index
    %c0_43 = arith.constant 0 : index
    %c0_44 = arith.constant 0 : index
    %41 = vector.load %arg2[%c0_41, %c2_42, %c0_43, %c0_44] : memref<1x10x10x128xbf16, #tpu.memory_space<vmem>>, vector<1x8x8x128xbf16>
    %42 = vector.shape_cast %41 : vector<1x8x8x128xbf16> to vector<8x8x128xbf16>
    %43 = vector.shape_cast %42 : vector<8x8x128xbf16> to vector<64x128xbf16>
    %c6 = arith.constant 6 : index
    %c0_45 = arith.constant 0 : index
    %c0_46 = arith.constant 0 : index
    %44 = vector.load %arg3[%c6, %c0_45, %c0_46] : memref<9x128x128xbf16, #tpu.memory_space<vmem>>, vector<1x128x128xbf16>
    %45 = vector.shape_cast %44 : vector<1x128x128xbf16> to vector<128x128xbf16>
    %cst_47 = arith.constant dense<0.000000e+00> : vector<64x128xf32>
    %46 = tpu.matmul %43, %45, %cst_47 {dimension_numbers = #tpu.dot_dimension_numbers<[1], [0], [0], [1], [0, 0, 1, 1], [], []>} : vector<64x128xbf16>, vector<128x128xbf16>, vector<64x128xf32> -> vector<64x128xf32>
    %47 = arith.addf %40, %46 : vector<64x128xf32>
    %c0_48 = arith.constant 0 : index
    %c2_49 = arith.constant 2 : index
    %c1_50 = arith.constant 1 : index
    %c0_51 = arith.constant 0 : index
    %48 = vector.load %arg2[%c0_48, %c2_49, %c1_50, %c0_51] : memref<1x10x10x128xbf16, #tpu.memory_space<vmem>>, vector<1x8x8x128xbf16>
    %49 = vector.shape_cast %48 : vector<1x8x8x128xbf16> to vector<8x8x128xbf16>
    %50 = vector.shape_cast %49 : vector<8x8x128xbf16> to vector<64x128xbf16>
    %c7 = arith.constant 7 : index
    %c0_52 = arith.constant 0 : index
    %c0_53 = arith.constant 0 : index
    %51 = vector.load %arg3[%c7, %c0_52, %c0_53] : memref<9x128x128xbf16, #tpu.memory_space<vmem>>, vector<1x128x128xbf16>
    %52 = vector.shape_cast %51 : vector<1x128x128xbf16> to vector<128x128xbf16>
    %cst_54 = arith.constant dense<0.000000e+00> : vector<64x128xf32>
    %53 = tpu.matmul %50, %52, %cst_54 {dimension_numbers = #tpu.dot_dimension_numbers<[1], [0], [0], [1], [0, 0, 1, 1], [], []>} : vector<64x128xbf16>, vector<128x128xbf16>, vector<64x128xf32> -> vector<64x128xf32>
    %54 = arith.addf %47, %53 : vector<64x128xf32>
    %c0_55 = arith.constant 0 : index
    %c2_56 = arith.constant 2 : index
    %c2_57 = arith.constant 2 : index
    %c0_58 = arith.constant 0 : index
    %55 = vector.load %arg2[%c0_55, %c2_56, %c2_57, %c0_58] : memref<1x10x10x128xbf16, #tpu.memory_space<vmem>>, vector<1x8x8x128xbf16>
    %56 = vector.shape_cast %55 : vector<1x8x8x128xbf16> to vector<8x8x128xbf16>
    %57 = vector.shape_cast %56 : vector<8x8x128xbf16> to vector<64x128xbf16>
    %c8 = arith.constant 8 : index
    %c0_59 = arith.constant 0 : index
    %c0_60 = arith.constant 0 : index
    %58 = vector.load %arg3[%c8, %c0_59, %c0_60] : memref<9x128x128xbf16, #tpu.memory_space<vmem>>, vector<1x128x128xbf16>
    %59 = vector.shape_cast %58 : vector<1x128x128xbf16> to vector<128x128xbf16>
    %cst_61 = arith.constant dense<0.000000e+00> : vector<64x128xf32>
    %60 = tpu.matmul %57, %59, %cst_61 {dimension_numbers = #tpu.dot_dimension_numbers<[1], [0], [0], [1], [0, 0, 1, 1], [], []>} : vector<64x128xbf16>, vector<128x128xbf16>, vector<64x128xf32> -> vector<64x128xf32>
    %61 = arith.addf %54, %60 : vector<64x128xf32>
    %c0_62 = arith.constant 0 : index
    %c0_63 = arith.constant 0 : index
    %62 = vector.load %arg4[%c0_62, %c0_63] : memref<1x128xf32, #tpu.memory_space<vmem>>, vector<1x128xf32>
    %63 = vector.broadcast %62 : vector<1x128xf32> to vector<64x128xf32>
    %64 = arith.addf %61, %63 : vector<64x128xf32>
    %cst_64 = arith.constant 0.000000e+00 : f32
    %65 = vector.broadcast %cst_64 : f32 to vector<64x128xf32>
    %66 = arith.maximumf %64, %65 : vector<64x128xf32>
    %67 = arith.truncf %66 : vector<64x128xf32> to vector<64x128xbf16>
    %c0_65 = arith.constant 0 : index
    %c0_66 = arith.constant 0 : index
    %c0_67 = arith.constant 0 : index
    %68 = vector.load %arg5[%c0_65, %c0_66, %c0_67] : memref<1x64x128xbf16, #tpu.memory_space<vmem>>, vector<1x64x128xbf16>
    %69 = vector.shape_cast %68 : vector<1x64x128xbf16> to vector<64x128xbf16>
    %70 = vector.shape_cast %67 : vector<64x128xbf16> to vector<1x64x128xbf16>
    tpu.vector_store %arg5[%c0_65, %c0_66, %c0_67], %70 {strides = array<i32>} : memref<1x64x128xbf16, #tpu.memory_space<vmem>>, vector<1x64x128xbf16>,
    return
  }
  func.func @transform_0(%arg0: i32, %arg1: i32) -> (i32, i32, i32, i32) {
    %c0_i32 = arith.constant 0 : i32
    %c0_i32_0 = arith.constant 0 : i32
    %c0_i32_1 = arith.constant 0 : i32
    %c0_i32_2 = arith.constant 0 : i32
    return %arg0, %c0_i32, %c0_i32_0, %c0_i32_1 : i32, i32, i32, i32
  }
  func.func @transform_1(%arg0: i32, %arg1: i32) -> (i32, i32, i32) {
    %c0_i32 = arith.constant 0 : i32
    %c0_i32_0 = arith.constant 0 : i32
    %c0_i32_1 = arith.constant 0 : i32
    return %c0_i32, %c0_i32_0, %arg1 : i32, i32, i32
  }
  func.func @transform_2(%arg0: i32, %arg1: i32) -> (i32, i32) {
    %c0_i32 = arith.constant 0 : i32
    %c0_i32_0 = arith.constant 0 : i32
    return %c0_i32, %arg1 : i32, i32
  }
  func.func @transform_3(%arg0: i32, %arg1: i32) -> (i32, i32, i32) {
    %c0_i32 = arith.constant 0 : i32
    %c0_i32_0 = arith.constant 0 : i32
    return %arg0, %c0_i32, %arg1 : i32, i32, i32
  }
}

module attributes {stable_mosaic.version = 11 : i64} {
  func.func @_conv_res_kernel(%arg0: i32, %arg1: i32, %arg2: memref<1x10x10x128xbf16, #tpu.memory_space<vmem>>, %arg3: memref<9x128x128xbf16, #tpu.memory_space<vmem>>, %arg4: memref<1x128xf32, #tpu.memory_space<vmem>>, %arg5: memref<1x64x128xbf16, #tpu.memory_space<vmem>>, %arg6: memref<1x64x128xbf16, #tpu.memory_space<vmem>>) attributes {dimension_semantics = [#tpu.dimension_semantics<parallel>, #tpu.dimension_semantics<parallel>], iteration_bounds = array<i64: 2, 1>, scalar_prefetch = 0 : i64, scratch_operands = 0 : i64, tpu.core_type = #tpu.core_type<tc>, window_params = [{transform_indices = @transform_0, window_bounds = array<i64: 1, 10, 10, 128>}, {transform_indices = @transform_1, window_bounds = array<i64: 9, 128, 128>}, {transform_indices = @transform_2, window_bounds = array<i64: 1, 128>}, {transform_indices = @transform_3, window_bounds = array<i64: 1, 64, 128>}, {transform_indices = @transform_4, window_bounds = array<i64: 1, 64, 128>}]} {
    %c0 = arith.constant 0 : index
    %c0_0 = arith.constant 0 : index
    %c0_1 = arith.constant 0 : index
    %c0_2 = arith.constant 0 : index
    %0 = vector.load %arg2[%c0, %c0_0, %c0_1, %c0_2] : memref<1x10x10x128xbf16, #tpu.memory_space<vmem>>, vector<1x8x8x128xbf16>
    %1 = vector.shape_cast %0 : vector<1x8x8x128xbf16> to vector<8x8x128xbf16>
    %2 = vector.shape_cast %1 : vector<8x8x128xbf16> to vector<64x128xbf16>
    %c0_3 = arith.constant 0 : index
    %c0_4 = arith.constant 0 : index
    %c0_5 = arith.constant 0 : index
    %3 = vector.load %arg3[%c0_3, %c0_4, %c0_5] : memref<9x128x128xbf16, #tpu.memory_space<vmem>>, vector<1x128x128xbf16>
    %4 = vector.shape_cast %3 : vector<1x128x128xbf16> to vector<128x128xbf16>
    %cst = arith.constant dense<0.000000e+00> : vector<64x128xf32>
    %5 = tpu.matmul %2, %4, %cst {dimension_numbers = #tpu.dot_dimension_numbers<[1], [0], [0], [1], [0, 0, 1, 1], [], []>} : vector<64x128xbf16>, vector<128x128xbf16>, vector<64x128xf32> -> vector<64x128xf32>
    %c0_6 = arith.constant 0 : index
    %c0_7 = arith.constant 0 : index
    %c1 = arith.constant 1 : index
    %c0_8 = arith.constant 0 : index
    %6 = vector.load %arg2[%c0_6, %c0_7, %c1, %c0_8] : memref<1x10x10x128xbf16, #tpu.memory_space<vmem>>, vector<1x8x8x128xbf16>
    %7 = vector.shape_cast %6 : vector<1x8x8x128xbf16> to vector<8x8x128xbf16>
    %8 = vector.shape_cast %7 : vector<8x8x128xbf16> to vector<64x128xbf16>
    %c1_9 = arith.constant 1 : index
    %c0_10 = arith.constant 0 : index
    %c0_11 = arith.constant 0 : index
    %9 = vector.load %arg3[%c1_9, %c0_10, %c0_11] : memref<9x128x128xbf16, #tpu.memory_space<vmem>>, vector<1x128x128xbf16>
    %10 = vector.shape_cast %9 : vector<1x128x128xbf16> to vector<128x128xbf16>
    %cst_12 = arith.constant dense<0.000000e+00> : vector<64x128xf32>
    %11 = tpu.matmul %8, %10, %cst_12 {dimension_numbers = #tpu.dot_dimension_numbers<[1], [0], [0], [1], [0, 0, 1, 1], [], []>} : vector<64x128xbf16>, vector<128x128xbf16>, vector<64x128xf32> -> vector<64x128xf32>
    %12 = arith.addf %5, %11 : vector<64x128xf32>
    %c0_13 = arith.constant 0 : index
    %c0_14 = arith.constant 0 : index
    %c2 = arith.constant 2 : index
    %c0_15 = arith.constant 0 : index
    %13 = vector.load %arg2[%c0_13, %c0_14, %c2, %c0_15] : memref<1x10x10x128xbf16, #tpu.memory_space<vmem>>, vector<1x8x8x128xbf16>
    %14 = vector.shape_cast %13 : vector<1x8x8x128xbf16> to vector<8x8x128xbf16>
    %15 = vector.shape_cast %14 : vector<8x8x128xbf16> to vector<64x128xbf16>
    %c2_16 = arith.constant 2 : index
    %c0_17 = arith.constant 0 : index
    %c0_18 = arith.constant 0 : index
    %16 = vector.load %arg3[%c2_16, %c0_17, %c0_18] : memref<9x128x128xbf16, #tpu.memory_space<vmem>>, vector<1x128x128xbf16>
    %17 = vector.shape_cast %16 : vector<1x128x128xbf16> to vector<128x128xbf16>
    %cst_19 = arith.constant dense<0.000000e+00> : vector<64x128xf32>
    %18 = tpu.matmul %15, %17, %cst_19 {dimension_numbers = #tpu.dot_dimension_numbers<[1], [0], [0], [1], [0, 0, 1, 1], [], []>} : vector<64x128xbf16>, vector<128x128xbf16>, vector<64x128xf32> -> vector<64x128xf32>
    %19 = arith.addf %12, %18 : vector<64x128xf32>
    %c0_20 = arith.constant 0 : index
    %c1_21 = arith.constant 1 : index
    %c0_22 = arith.constant 0 : index
    %c0_23 = arith.constant 0 : index
    %20 = vector.load %arg2[%c0_20, %c1_21, %c0_22, %c0_23] : memref<1x10x10x128xbf16, #tpu.memory_space<vmem>>, vector<1x8x8x128xbf16>
    %21 = vector.shape_cast %20 : vector<1x8x8x128xbf16> to vector<8x8x128xbf16>
    %22 = vector.shape_cast %21 : vector<8x8x128xbf16> to vector<64x128xbf16>
    %c3 = arith.constant 3 : index
    %c0_24 = arith.constant 0 : index
    %c0_25 = arith.constant 0 : index
    %23 = vector.load %arg3[%c3, %c0_24, %c0_25] : memref<9x128x128xbf16, #tpu.memory_space<vmem>>, vector<1x128x128xbf16>
    %24 = vector.shape_cast %23 : vector<1x128x128xbf16> to vector<128x128xbf16>
    %cst_26 = arith.constant dense<0.000000e+00> : vector<64x128xf32>
    %25 = tpu.matmul %22, %24, %cst_26 {dimension_numbers = #tpu.dot_dimension_numbers<[1], [0], [0], [1], [0, 0, 1, 1], [], []>} : vector<64x128xbf16>, vector<128x128xbf16>, vector<64x128xf32> -> vector<64x128xf32>
    %26 = arith.addf %19, %25 : vector<64x128xf32>
    %c0_27 = arith.constant 0 : index
    %c1_28 = arith.constant 1 : index
    %c1_29 = arith.constant 1 : index
    %c0_30 = arith.constant 0 : index
    %27 = vector.load %arg2[%c0_27, %c1_28, %c1_29, %c0_30] : memref<1x10x10x128xbf16, #tpu.memory_space<vmem>>, vector<1x8x8x128xbf16>
    %28 = vector.shape_cast %27 : vector<1x8x8x128xbf16> to vector<8x8x128xbf16>
    %29 = vector.shape_cast %28 : vector<8x8x128xbf16> to vector<64x128xbf16>
    %c4 = arith.constant 4 : index
    %c0_31 = arith.constant 0 : index
    %c0_32 = arith.constant 0 : index
    %30 = vector.load %arg3[%c4, %c0_31, %c0_32] : memref<9x128x128xbf16, #tpu.memory_space<vmem>>, vector<1x128x128xbf16>
    %31 = vector.shape_cast %30 : vector<1x128x128xbf16> to vector<128x128xbf16>
    %cst_33 = arith.constant dense<0.000000e+00> : vector<64x128xf32>
    %32 = tpu.matmul %29, %31, %cst_33 {dimension_numbers = #tpu.dot_dimension_numbers<[1], [0], [0], [1], [0, 0, 1, 1], [], []>} : vector<64x128xbf16>, vector<128x128xbf16>, vector<64x128xf32> -> vector<64x128xf32>
    %33 = arith.addf %26, %32 : vector<64x128xf32>
    %c0_34 = arith.constant 0 : index
    %c1_35 = arith.constant 1 : index
    %c2_36 = arith.constant 2 : index
    %c0_37 = arith.constant 0 : index
    %34 = vector.load %arg2[%c0_34, %c1_35, %c2_36, %c0_37] : memref<1x10x10x128xbf16, #tpu.memory_space<vmem>>, vector<1x8x8x128xbf16>
    %35 = vector.shape_cast %34 : vector<1x8x8x128xbf16> to vector<8x8x128xbf16>
    %36 = vector.shape_cast %35 : vector<8x8x128xbf16> to vector<64x128xbf16>
    %c5 = arith.constant 5 : index
    %c0_38 = arith.constant 0 : index
    %c0_39 = arith.constant 0 : index
    %37 = vector.load %arg3[%c5, %c0_38, %c0_39] : memref<9x128x128xbf16, #tpu.memory_space<vmem>>, vector<1x128x128xbf16>
    %38 = vector.shape_cast %37 : vector<1x128x128xbf16> to vector<128x128xbf16>
    %cst_40 = arith.constant dense<0.000000e+00> : vector<64x128xf32>
    %39 = tpu.matmul %36, %38, %cst_40 {dimension_numbers = #tpu.dot_dimension_numbers<[1], [0], [0], [1], [0, 0, 1, 1], [], []>} : vector<64x128xbf16>, vector<128x128xbf16>, vector<64x128xf32> -> vector<64x128xf32>
    %40 = arith.addf %33, %39 : vector<64x128xf32>
    %c0_41 = arith.constant 0 : index
    %c2_42 = arith.constant 2 : index
    %c0_43 = arith.constant 0 : index
    %c0_44 = arith.constant 0 : index
    %41 = vector.load %arg2[%c0_41, %c2_42, %c0_43, %c0_44] : memref<1x10x10x128xbf16, #tpu.memory_space<vmem>>, vector<1x8x8x128xbf16>
    %42 = vector.shape_cast %41 : vector<1x8x8x128xbf16> to vector<8x8x128xbf16>
    %43 = vector.shape_cast %42 : vector<8x8x128xbf16> to vector<64x128xbf16>
    %c6 = arith.constant 6 : index
    %c0_45 = arith.constant 0 : index
    %c0_46 = arith.constant 0 : index
    %44 = vector.load %arg3[%c6, %c0_45, %c0_46] : memref<9x128x128xbf16, #tpu.memory_space<vmem>>, vector<1x128x128xbf16>
    %45 = vector.shape_cast %44 : vector<1x128x128xbf16> to vector<128x128xbf16>
    %cst_47 = arith.constant dense<0.000000e+00> : vector<64x128xf32>
    %46 = tpu.matmul %43, %45, %cst_47 {dimension_numbers = #tpu.dot_dimension_numbers<[1], [0], [0], [1], [0, 0, 1, 1], [], []>} : vector<64x128xbf16>, vector<128x128xbf16>, vector<64x128xf32> -> vector<64x128xf32>
    %47 = arith.addf %40, %46 : vector<64x128xf32>
    %c0_48 = arith.constant 0 : index
    %c2_49 = arith.constant 2 : index
    %c1_50 = arith.constant 1 : index
    %c0_51 = arith.constant 0 : index
    %48 = vector.load %arg2[%c0_48, %c2_49, %c1_50, %c0_51] : memref<1x10x10x128xbf16, #tpu.memory_space<vmem>>, vector<1x8x8x128xbf16>
    %49 = vector.shape_cast %48 : vector<1x8x8x128xbf16> to vector<8x8x128xbf16>
    %50 = vector.shape_cast %49 : vector<8x8x128xbf16> to vector<64x128xbf16>
    %c7 = arith.constant 7 : index
    %c0_52 = arith.constant 0 : index
    %c0_53 = arith.constant 0 : index
    %51 = vector.load %arg3[%c7, %c0_52, %c0_53] : memref<9x128x128xbf16, #tpu.memory_space<vmem>>, vector<1x128x128xbf16>
    %52 = vector.shape_cast %51 : vector<1x128x128xbf16> to vector<128x128xbf16>
    %cst_54 = arith.constant dense<0.000000e+00> : vector<64x128xf32>
    %53 = tpu.matmul %50, %52, %cst_54 {dimension_numbers = #tpu.dot_dimension_numbers<[1], [0], [0], [1], [0, 0, 1, 1], [], []>} : vector<64x128xbf16>, vector<128x128xbf16>, vector<64x128xf32> -> vector<64x128xf32>
    %54 = arith.addf %47, %53 : vector<64x128xf32>
    %c0_55 = arith.constant 0 : index
    %c2_56 = arith.constant 2 : index
    %c2_57 = arith.constant 2 : index
    %c0_58 = arith.constant 0 : index
    %55 = vector.load %arg2[%c0_55, %c2_56, %c2_57, %c0_58] : memref<1x10x10x128xbf16, #tpu.memory_space<vmem>>, vector<1x8x8x128xbf16>
    %56 = vector.shape_cast %55 : vector<1x8x8x128xbf16> to vector<8x8x128xbf16>
    %57 = vector.shape_cast %56 : vector<8x8x128xbf16> to vector<64x128xbf16>
    %c8 = arith.constant 8 : index
    %c0_59 = arith.constant 0 : index
    %c0_60 = arith.constant 0 : index
    %58 = vector.load %arg3[%c8, %c0_59, %c0_60] : memref<9x128x128xbf16, #tpu.memory_space<vmem>>, vector<1x128x128xbf16>
    %59 = vector.shape_cast %58 : vector<1x128x128xbf16> to vector<128x128xbf16>
    %cst_61 = arith.constant dense<0.000000e+00> : vector<64x128xf32>
    %60 = tpu.matmul %57, %59, %cst_61 {dimension_numbers = #tpu.dot_dimension_numbers<[1], [0], [0], [1], [0, 0, 1, 1], [], []>} : vector<64x128xbf16>, vector<128x128xbf16>, vector<64x128xf32> -> vector<64x128xf32>
    %61 = arith.addf %54, %60 : vector<64x128xf32>
    %c0_62 = arith.constant 0 : index
    %c0_63 = arith.constant 0 : index
    %62 = vector.load %arg4[%c0_62, %c0_63] : memref<1x128xf32, #tpu.memory_space<vmem>>, vector<1x128xf32>
    %63 = vector.broadcast %62 : vector<1x128xf32> to vector<64x128xf32>
    %64 = arith.addf %61, %63 : vector<64x128xf32>
    %c0_64 = arith.constant 0 : index
    %c0_65 = arith.constant 0 : index
    %c0_66 = arith.constant 0 : index
    %65 = vector.load %arg5[%c0_64, %c0_65, %c0_66] : memref<1x64x128xbf16, #tpu.memory_space<vmem>>, vector<1x64x128xbf16>
    %66 = vector.shape_cast %65 : vector<1x64x128xbf16> to vector<64x128xbf16>
    %67 = arith.extf %66 : vector<64x128xbf16> to vector<64x128xf32>
    %68 = arith.addf %64, %67 : vector<64x128xf32>
    %cst_67 = arith.constant 0.000000e+00 : f32
    %69 = vector.broadcast %cst_67 : f32 to vector<64x128xf32>
    %70 = arith.maximumf %68, %69 : vector<64x128xf32>
    %71 = arith.truncf %70 : vector<64x128xf32> to vector<64x128xbf16>
    %c0_68 = arith.constant 0 : index
    %c0_69 = arith.constant 0 : index
    %c0_70 = arith.constant 0 : index
    %72 = vector.load %arg6[%c0_68, %c0_69, %c0_70] : memref<1x64x128xbf16, #tpu.memory_space<vmem>>, vector<1x64x128xbf16>
    %73 = vector.shape_cast %72 : vector<1x64x128xbf16> to vector<64x128xbf16>
    %74 = vector.shape_cast %71 : vector<64x128xbf16> to vector<1x64x128xbf16>
    tpu.vector_store %arg6[%c0_68, %c0_69, %c0_70], %74 {strides = array<i32>} : memref<1x64x128xbf16, #tpu.memory_space<vmem>>, vector<1x64x128xbf16>,
    return
  }
  func.func @transform_0(%arg0: i32, %arg1: i32) -> (i32, i32, i32, i32) {
    %c0_i32 = arith.constant 0 : i32
    %c0_i32_0 = arith.constant 0 : i32
    %c0_i32_1 = arith.constant 0 : i32
    %c0_i32_2 = arith.constant 0 : i32
    return %arg0, %c0_i32, %c0_i32_0, %c0_i32_1 : i32, i32, i32, i32
  }
  func.func @transform_1(%arg0: i32, %arg1: i32) -> (i32, i32, i32) {
    %c0_i32 = arith.constant 0 : i32
    %c0_i32_0 = arith.constant 0 : i32
    %c0_i32_1 = arith.constant 0 : i32
    return %c0_i32, %c0_i32_0, %arg1 : i32, i32, i32
  }
  func.func @transform_2(%arg0: i32, %arg1: i32) -> (i32, i32) {
    %c0_i32 = arith.constant 0 : i32
    %c0_i32_0 = arith.constant 0 : i32
    return %c0_i32, %arg1 : i32, i32
  }
  func.func @transform_3(%arg0: i32, %arg1: i32) -> (i32, i32, i32) {
    %c0_i32 = arith.constant 0 : i32
    %c0_i32_0 = arith.constant 0 : i32
    return %arg0, %c0_i32, %arg1 : i32, i32, i32
  }
  func.func @transform_4(%arg0: i32, %arg1: i32) -> (i32, i32, i32) {
    %c0_i32 = arith.constant 0 : i32
    %c0_i32_0 = arith.constant 0 : i32
    return %arg0, %c0_i32, %arg1 : i32, i32, i32
  }
}

</mosaic_0001>

<llo_original>
// kernel: forward.6
$region0: #{forward.6}
  #allocation0 [shape = 'u32[]', space=smem, size = 0x4, offset = 0x4, fixed_abs, tag = 'smem constant byte address 0x4 - core index']
  #allocation1 [shape = 'u32[144,128]{1,0:T(1,128)}', space=vmem, size = 0x12000, scoped, tag = 'internal scratch']
  %s0 = inlined_call_operand.vmem [shape: bf16[2,32,8,128], index: 0, kind: input, shape index: {}]
  %s1 = inlined_call_operand.vmem [shape: bf16[1,128,128], index: 1, kind: input, shape index: {}]
  %s2 = inlined_call_operand.vmem [shape: f32[1,128], index: 2, kind: input, shape index: {}]
  %s3 = inlined_call_operand.vmem [shape: bf16[2,64,128], index: 3, kind: output, shape index: {}]
  %s4 = sld [smem:[#allocation0]]
  $region45: #{forward.6} parent=0
    _
  %s6 = ssub.s32 1, %s4
  %s7 = scalar_select 0, %s6, %s4
  loop: start=0, step=1, limit=4
  $region2: #{forward.6} parent=0 // loop_pre_header
    _
  $region3: #{forward.6} parent=0 // loop_header
    %s9 = sphi 0, %s13
    %p10 = scmp.ge.s32.totalorder %s9, 4
    %s16 = sphi 0, %s28
    %s17 = sphi 0, %s24
    %s18 = sphi 0, %s16
    %s19 = sphi 0, %s17
    %s20 = sphi 0, %s18
    %s21 = sphi 0, %s19
    %s31 = sphi 0, %s33
    %s34 = sphi 0, %s31
    %s35 = sphi 0, %s34
    %s51 = sphi 0, %s35
    %s57 = sphi 0, %s59
    %s60 = sphi 0, %s57
    %s61 = sphi 0, %s60
    %s77 = sphi 0, %s61
    %s83 = sphi 0, %s85
    %s86 = sphi 0, %s83
    %s87 = sphi 0, %s86
    %s103 = sphi 0, %s87
    %s111 = sphi 0, %s113
    %s114 = sphi 0, %s111
    %s115 = sphi 0, %s114
    %s131 = sphi 0, %s115
  $region4: #{forward.6} parent=0 // loop_header_branch
    %12 = sbr.rel (%p10) target = $region8
  $region5: #{forward.6} parent=0 // loop_body
    %s14 = ssub.s32 %s9, 1
    %s15 = ssub.s32 %s9, 2
    %s22 = sadd.s32 1, %s17
    %p23 = scmp.ge.s32.totalorder %s22, 1
    %s24 = scalar_select %p23, 0, %s22
    %s25 = sadd.s32 1, %s16
    %s26 = scalar_select %p23, %s25, %s16
    %p27 = scmp.ge.s32.totalorder %s26, 2
    %s28 = scalar_select %p27, 0, %s26
    %s29 = ssub.s32 %s16, %s28
    %p30 = scmp.eq.s32.totalorder %s29, 0
    %s32 = sadd.s32 %s31, 1
    %s33 = scalar_select %p30, %s31, %s32
    %p36 = pneg %p30
    %p37 = scmp.eq.s32.totalorder %s9, 1
    %p38 = por %p36, %p37
    %p39 = scmp.ne.s32.totalorder %s31, %s34
    %p40 = scmp.eq.s32.totalorder %s9, 0
    %p41 = por %p39, %p40
    %p42 = scmp.ne.s32.totalorder %s31, %s34
    %p43 = scmp.eq.s32.totalorder %s14, 1
    %p44 = por %p42, %p43
    %p45 = scmp.ne.s32.totalorder %s34, %s35
    %p46 = scmp.eq.s32.totalorder %s14, 0
    %p47 = por %p45, %p46
    %p48 = scmp.ne.s32.totalorder %s34, %s35
    %p49 = scmp.eq.s32.totalorder %s15, 1
    %p50 = por %p48, %p49
    %p52 = scmp.ne.s32.totalorder %s35, %s51
    %p53 = scmp.eq.s32.totalorder %s15, 0
    %p54 = por %p52, %p53
    %s55 = ssub.s32 %s17, %s24
    %p56 = scmp.eq.s32.totalorder %s55, 0
    %s58 = sadd.s32 %s57, 1
    %s59 = scalar_select %p56, %s57, %s58
    %p62 = pneg %p56
    %p63 = scmp.eq.s32.totalorder %s9, 1
    %p64 = por %p62, %p63
    %p65 = scmp.ne.s32.totalorder %s57, %s60
    %p66 = scmp.eq.s32.totalorder %s9, 0
    %p67 = por %p65, %p66
    %p68 = scmp.ne.s32.totalorder %s57, %s60
    %p69 = scmp.eq.s32.totalorder %s14, 1
    %p70 = por %p68, %p69
    %p71 = scmp.ne.s32.totalorder %s60, %s61
    %p72 = scmp.eq.s32.totalorder %s14, 0
    %p73 = por %p71, %p72
    %p74 = scmp.ne.s32.totalorder %s60, %s61
    %p75 = scmp.eq.s32.totalorder %s15, 1
    %p76 = por %p74, %p75
    %p78 = scmp.ne.s32.totalorder %s61, %s77
    %p79 = scmp.eq.s32.totalorder %s15, 0
    %p80 = por %p78, %p79
    %s81 = ssub.s32 %s17, %s24
    %p82 = scmp.eq.s32.totalorder %s81, 0
    %s84 = sadd.s32 %s83, 1
    %s85 = scalar_select %p82, %s83, %s84
    %p88 = pneg %p82
    %p89 = scmp.eq.s32.totalorder %s9, 1
    %p90 = por %p88, %p89
    %p91 = scmp.ne.s32.totalorder %s83, %s86
    %p92 = scmp.eq.s32.totalorder %s9, 0
    %p93 = por %p91, %p92
    %p94 = scmp.ne.s32.totalorder %s83, %s86
    %p95 = scmp.eq.s32.totalorder %s14, 1
    %p96 = por %p94, %p95
    %p97 = scmp.ne.s32.totalorder %s86, %s87
    %p98 = scmp.eq.s32.totalorder %s14, 0
    %p99 = por %p97, %p98
    %p100 = scmp.ne.s32.totalorder %s86, %s87
    %p101 = scmp.eq.s32.totalorder %s15, 1
    %p102 = por %p100, %p101
    %p104 = scmp.ne.s32.totalorder %s87, %s103
    %p105 = scmp.eq.s32.totalorder %s15, 0
    %p106 = por %p104, %p105
    %s107 = ssub.s32 %s16, %s28
    %s108 = ssub.s32 %s17, %s24
    %s109 = sor.u32 %s107, %s108
    %p110 = scmp.eq.s32.totalorder %s109, 0
    %s112 = sadd.s32 %s111, 1
    %s113 = scalar_select %p110, %s111, %s112
    %p116 = pneg %p110
    %p117 = scmp.eq.s32.totalorder %s9, 1
    %p118 = por %p116, %p117
    %p119 = scmp.ne.s32.totalorder %s111, %s114
    %p120 = scmp.eq.s32.totalorder %s9, 0
    %p121 = por %p119, %p120
    %p122 = scmp.ne.s32.totalorder %s111, %s114
    %p123 = scmp.eq.s32.totalorder %s14, 1
    %p124 = por %p122, %p123
    %p125 = scmp.ne.s32.totalorder %s114, %s115
    %p126 = scmp.eq.s32.totalorder %s14, 0
    %p127 = por %p125, %p126
    %p128 = scmp.ne.s32.totalorder %s114, %s115
    %p129 = scmp.eq.s32.totalorder %s15, 1
    %p130 = por %p128, %p129
    %p132 = scmp.ne.s32.totalorder %s115, %s131
    %p133 = scmp.eq.s32.totalorder %s15, 0
    %p134 = por %p132, %p133
    %p135 = scmp.le.s32.totalorder 1, %s9
    %p136 = scmp.lt.s32.totalorder %s9, 3
    %p137 = pnand %p135, %p136
    %p138 = pneg %p137
    // Predicated region
    $region9: #{forward.6} parent=5 // pred_check
      _
    $region10: #{forward.6} parent=5 // pred_check_branch
      %140 = sbr.rel (%p137) target = $region12
    $region11: #{forward.6} parent=5 // pred_region
      %s141 = ssub.s32 %s9, 1
      // Predicated region
      $region13: #{forward.6} parent=11 // pred_check
        %p142 = pneg %p73
      $region14: #{forward.6} parent=11 // pred_check_branch
        %144 = sbr.rel (%p142) target = $region16
      $region15: #{forward.6} parent=11 // pred_region
        %p145 = scmp.lt.s32.totalorder %s19, 0
        %s146 = scalar_select %p145, %s19, 0
        %s147 = smul.addr %s146, 4
        %s148 = scalar_lea.vmem %s1, %s147
      $region16: #{forward.6} parent=11 // pred_fallthru
        _
      // Predicated region
      $region17: #{forward.6} parent=11 // pred_check
        %p149 = pneg %p99
      $region18: #{forward.6} parent=11 // pred_check_branch
        %151 = sbr.rel (%p149) target = $region20
      $region19: #{forward.6} parent=11 // pred_region
        %p152 = scmp.lt.s32.totalorder %s19, 0
        %s153 = scalar_select %p152, %s19, 0
        %s154 = scalar_lea.vmem %s2, %s153
      $region20: #{forward.6} parent=11 // pred_fallthru
        _
    $region12: #{forward.6} parent=5 // pred_fallthru
      _
    %p155 = scmp.lt.s32.totalorder %s9, 2
    // Predicated region
    $region21: #{forward.6} parent=5 // pred_check
      %p156 = pneg %p155
    $region22: #{forward.6} parent=5 // pred_check_branch
      %158 = sbr.rel (%p156) target = $region24
    $region23: #{forward.6} parent=5 // pred_region
      // Predicated region
      $region25: #{forward.6} parent=23 // pred_check
        %p159 = pneg %p41
      $region26: #{forward.6} parent=23 // pred_check_branch
        %161 = sbr.rel (%p159) target = $region28
      $region27: #{forward.6} parent=23 // pred_region
        %p162 = scmp.lt.s32.totalorder %s16, 1
        %s163 = scalar_select %p162, %s16, 1
        %s164 = smul.addr %s163, 32
        %s165 = smul.addr %s164, 4
        %s166 = scalar_lea.vmem %s0, %s165
      $region28: #{forward.6} parent=23 // pred_fallthru
        _
    $region24: #{forward.6} parent=5 // pred_fallthru
      _
    %p167 = scmp.le.s32.totalorder 1, %s9
    %p168 = scmp.lt.s32.totalorder %s9, 3
    %p169 = pnand %p167, %p168
    %p170 = pneg %p169
    // Predicated region
    $region29: #{forward.6} parent=5 // pred_check
      _
    $region30: #{forward.6} parent=5 // pred_check_branch
      %172 = sbr.rel (%p169) target = $region32
    $region31: #{forward.6} parent=5 // pred_region
      %s173 = ssub.s32 %s9, 1
      %p174 = scmp.lt.s32.totalorder %s18, 1
      %s175 = scalar_select %p174, %s18, 1
      %s176 = smul.addr %s175, 32
      %s177 = smul.addr %s176, 4
      %s178 = scalar_lea.vmem %s0, %s177
      %p179 = pneg %p47
      %p180 = pneg %p44
      %p181 = scmp.lt.s32.totalorder %s19, 0
      %s182 = scalar_select %p181, %s19, 0
      %s183 = smul.addr %s182, 4
      %s184 = scalar_lea.vmem %s1, %s183
      %p185 = pneg %p73
      %p186 = pneg %p70
      %p187 = scmp.lt.s32.totalorder %s19, 0
      %s188 = scalar_select %p187, %s19, 0
      %s189 = scalar_lea.vmem %s2, %s188
      %p190 = pneg %p99
      %p191 = pneg %p96
      %p192 = pneg %p127
      %p193 = pneg %p124
      %p194 = scmp.lt.s32.totalorder %s18, 1
      %s195 = scalar_select %p194, %s18, 1
      %p196 = scmp.lt.s32.totalorder %s19, 0
      %s197 = scalar_select %p196, %s19, 0
      %s198 = smul.addr %s195, 8
      %s199 = sadd.s32 %s197, %s198
      %s200 = smul.addr %s199, 4
      %s201 = scalar_lea.vmem %s3, %s200
      %p202 = scmp.lt.s32.totalorder %s18, 1
      %s203 = scalar_select %p202, %s18, 1
      %s204 = smul.addr %s203, 32
      %s205 = smul.addr %s204, 4
      %s206 = scalar_lea.vmem %s0, %s205
      %p207 = scmp.lt.s32.totalorder %s19, 0
      %s208 = scalar_select %p207, %s19, 0
      %s209 = smul.addr %s208, 4
      %s210 = scalar_lea.vmem %s1, %s209
      %p211 = scmp.lt.s32.totalorder %s19, 0
      %s212 = scalar_select %p211, %s19, 0
      %s213 = scalar_lea.vmem %s2, %s212
      %p214 = scmp.lt.s32.totalorder %s18, 1
      %s215 = scalar_select %p214, %s18, 1
      %p216 = scmp.lt.s32.totalorder %s19, 0
      %s217 = scalar_select %p216, %s19, 0
      %s218 = smul.addr %s215, 8
      %s219 = sadd.s32 %s217, %s218
      %s220 = smul.addr %s219, 4
      %s221 = scalar_lea.vmem %s3, %s220
      %v223 = vld [vmem:[%s206] sm:$0xf]
      %v224 = vld [vmem:[%s206 + $0x4] sm:$0xf]
      %v225 = vld [vmem:[%s206 + $0x8] sm:$0xf]
      %v226 = vld [vmem:[%s206 + $0xc] sm:$0xf]
      %v227 = vld [vmem:[%s206 + $0x10] sm:$0xf]
      %v228 = vld [vmem:[%s206 + $0x14] sm:$0xf]
      %v229 = vld [vmem:[%s206 + $0x18] sm:$0xf]
      %v230 = vld [vmem:[%s206 + $0x1c] sm:$0xf]
      %v231 = vld [vmem:[%s210] sm:$0xf]
      %v232 = vld [vmem:[%s210 + $0x4] sm:$0xf]
      %v233 = vld [vmem:[%s210 + $0x8] sm:$0xf]
      %v234 = vld [vmem:[%s210 + $0xc] sm:$0xf]
      %v235 = vld [vmem:[%s210 + $0x10] sm:$0xf]
      %v236 = vld [vmem:[%s210 + $0x14] sm:$0xf]
      %v237 = vld [vmem:[%s210 + $0x18] sm:$0xf]
      %v238 = vld [vmem:[%s210 + $0x1c] sm:$0xf]
      %v239 = vld [vmem:[%s210 + $0x20] sm:$0xf]
      %v240 = vld [vmem:[%s210 + $0x24] sm:$0xf]
      %v241 = vld [vmem:[%s210 + $0x28] sm:$0xf]
      %v242 = vld [vmem:[%s210 + $0x2c] sm:$0xf]
      %v243 = vld [vmem:[%s210 + $0x30] sm:$0xf]
      %v244 = vld [vmem:[%s210 + $0x34] sm:$0xf]
      %v245 = vld [vmem:[%s210 + $0x38] sm:$0xf]
      %v246 = vld [vmem:[%s210 + $0x3c] sm:$0xf]
      %v247 = vld [vmem:[%s213] sm:$0x1]
      %v249 = vlaneseq
      %v250 = vshrl.u32 %v249, 7
      %v251 = vsub.s32 0, %v250
      %v252 = vrot.slane %v247, %v251
      %v262 = vunpack.c.l.b16 %v223
      %v263 = vunpack.c.l.b16 %v224
      %v264 = vunpack.c.l.b16 %v225
      %v265 = vunpack.c.l.b16 %v226
      %v266 = vunpack.c.l.b16 %v227
      %v267 = vunpack.c.l.b16 %v228
      %v268 = vunpack.c.l.b16 %v229
      %v269 = vunpack.c.l.b16 %v230
      %v270 = vpack.c.b16 %v263, %v262
      %v271 = vpack.c.b16 %v265, %v264
      %v272 = vpack.c.b16 %v267, %v266
      %v273 = vpack.c.b16 %v269, %v268
      %v294 = vunpack.c.l.b16 %v231
      %v295 = vunpack.c.l.b16 %v232
      %v296 = vunpack.c.l.b16 %v233
      %v297 = vunpack.c.l.b16 %v234
      %v298 = vunpack.c.l.b16 %v235
      %v299 = vunpack.c.l.b16 %v236
      %v300 = vunpack.c.l.b16 %v237
      %v301 = vunpack.c.l.b16 %v238
      %v302 = vunpack.c.l.b16 %v239
      %v303 = vunpack.c.l.b16 %v240
      %v304 = vunpack.c.l.b16 %v241
      %v305 = vunpack.c.l.b16 %v242
      %v306 = vunpack.c.l.b16 %v243
      %v307 = vunpack.c.l.b16 %v244
      %v308 = vunpack.c.l.b16 %v245
      %v309 = vunpack.c.l.b16 %v246
      %v310 = vpack.c.b16 %v295, %v294
      %v311 = vpack.c.b16 %v297, %v296
      %v312 = vpack.c.b16 %v299, %v298
      %v313 = vpack.c.b16 %v301, %v300
      %v314 = vpack.c.b16 %v303, %v302
      %v315 = vpack.c.b16 %v305, %v304
      %v316 = vpack.c.b16 %v307, %v306
      %v317 = vpack.c.b16 %v309, %v308
      %326 = vmatprep.subr.bf16.mxu0 0
      %327 = vmatpush1.bf16.msra.mxu0 %v310
      %328 = vmatprep.subr.bf16.mxu0 0
      %329 = vmatpush1.bf16.msra.mxu0 %v311
      %330 = vmatprep.subr.bf16.mxu0 0
      %331 = vmatpush1.bf16.msra.mxu0 %v312
      %332 = vmatprep.subr.bf16.mxu0 0
      %333 = vmatpush1.bf16.msra.mxu0 %v313
      %334 = vmatprep.subr.bf16.mxu0 0
      %335 = vmatpush1.bf16.msra.mxu0 %v314
      %336 = vmatprep.subr.bf16.mxu0 0
      %337 = vmatpush1.bf16.msra.mxu0 %v315
      %338 = vmatprep.subr.bf16.mxu0 0
      %339 = vmatpush1.bf16.msra.mxu0 %v316
      %340 = vmatprep.subr.bf16.mxu0 0
      %341 = vmatpush1.bf16.msra.mxu0 %v317
      %342 = vmatprep.subr.bf16.mxu0 0
      %343 = vmatpush1.bf16.msra.mxu0 0
      %344 = vmatprep.subr.bf16.mxu0 0
      %345 = vmatpush1.bf16.msra.mxu0 0
      %346 = vmatprep.subr.bf16.mxu0 0
      %347 = vmatpush1.bf16.msra.mxu0 0
      %348 = vmatprep.subr.bf16.mxu0 0
      %349 = vmatpush1.bf16.msra.mxu0 0
      %350 = vmatprep.subr.bf16.mxu0 0
      %351 = vmatpush1.bf16.msra.mxu0 0
      %352 = vmatprep.subr.bf16.mxu0 0
      %353 = vmatpush1.bf16.msra.mxu0 0
      %354 = vmatprep.subr.bf16.mxu0 0
      %355 = vmatpush1.bf16.msra.mxu0 0
      %356 = vmatprep.subr.bf16.mxu0 0
      %357 = vmatpush1.bf16.msra.mxu0 0
      %358 = vmatprep.mubr.bf16.mxu0 0
      %359 = vmatmul.mubr.bf16.gmra.mrb[0].mxu0 %v270
      %v360 = vpop.f32.mrb[0].mxu0
      %v361 = vadd.f32 %v252, %v360
      %v362 = vpop.f32.mrb[0].mxu0
      %v363 = vpop.f32.mrb[0].mxu0
      %v364 = vadd.f32 %v252, %v363
      %v365 = vpop.f32.mrb[0].mxu0
      %366 = vmatprep.mubr.bf16.mxu0 0
      %367 = vmatmul.mubr.bf16.gmra.mrb[0].mxu0 %v271
      %v368 = vpop.f32.mrb[0].mxu0
      %v369 = vadd.f32 %v252, %v368
      %v370 = vpop.f32.mrb[0].mxu0
      %v371 = vpop.f32.mrb[0].mxu0
      %v372 = vadd.f32 %v252, %v371
      %v373 = vpop.f32.mrb[0].mxu0
      %374 = vmatprep.mubr.bf16.mxu0 0
      %375 = vmatmul.mubr.bf16.gmra.mrb[0].mxu0 %v272
      %v376 = vpop.f32.mrb[0].mxu0
      %v377 = vadd.f32 %v252, %v376
      %v378 = vpop.f32.mrb[0].mxu0
      %v379 = vpop.f32.mrb[0].mxu0
      %v380 = vadd.f32 %v252, %v379
      %v381 = vpop.f32.mrb[0].mxu0
      %382 = vmatprep.mubr.bf16.mxu0 0
      %383 = vmatmul.mubr.bf16.gmra.mrb[0].mxu0 %v273
      %v384 = vpop.f32.mrb[0].mxu0
      %v385 = vadd.f32 %v252, %v384
      %v386 = vpop.f32.mrb[0].mxu0
      %v387 = vpop.f32.mrb[0].mxu0
      %v388 = vadd.f32 %v252, %v387
      %v389 = vpop.f32.mrb[0].mxu0
      %390 = vdwg.mxu0
      %v391 = vpack.c.bf16 %v364, %v361
      %v392 = vpack.c.bf16 %v372, %v369
      %v393 = vpack.c.bf16 %v380, %v377
      %v394 = vpack.c.bf16 %v388, %v385
      %v399 = vunpack.c.l.b16 %v391
      %v400 = vunpack.c.h.b16 %v391
      %v401 = vunpack.c.l.b16 %v392
      %v402 = vunpack.c.h.b16 %v392
      %v403 = vunpack.c.l.b16 %v393
      %v404 = vunpack.c.h.b16 %v393
      %v405 = vunpack.c.l.b16 %v394
      %v406 = vunpack.c.h.b16 %v394
      %v407 = vpack.c.b16 %v399, %v399
      %v408 = vpack.c.b16 %v400, %v400
      %v409 = vpack.c.b16 %v401, %v401
      %v410 = vpack.c.b16 %v402, %v402
      %v411 = vpack.c.b16 %v403, %v403
      %v412 = vpack.c.b16 %v404, %v404
      %v413 = vpack.c.b16 %v405, %v405
      %v414 = vpack.c.b16 %v406, %v406
      %423 = vst [vmem:[%s221] sm:$0xf] %v407
      %424 = vst [vmem:[%s221 + $0x4] sm:$0xf] %v408
      %425 = vst [vmem:[%s221 + $0x8] sm:$0xf] %v409
      %426 = vst [vmem:[%s221 + $0xc] sm:$0xf] %v410
      %427 = vst [vmem:[%s221 + $0x10] sm:$0xf] %v411
      %428 = vst [vmem:[%s221 + $0x14] sm:$0xf] %v412
      %429 = vst [vmem:[%s221 + $0x18] sm:$0xf] %v413
      %430 = vst [vmem:[%s221 + $0x1c] sm:$0xf] %v414
      %p431 = scmp.lt.s32.totalorder %s18, 1
      %s432 = scalar_select %p431, %s18, 1
      %p433 = scmp.lt.s32.totalorder %s19, 0
      %s434 = scalar_select %p433, %s19, 0
      %s435 = smul.addr %s432, 8
      %s436 = sadd.s32 %s434, %s435
      %s437 = smul.addr %s436, 4
      %s438 = scalar_lea.vmem %s3, %s437
      // Predicated region
      $region33: #{forward.6} parent=31 // pred_check
        %p439 = pneg %p124
      $region34: #{forward.6} parent=31 // pred_check_branch
        %441 = sbr.rel (%p439) target = $region36
      $region35: #{forward.6} parent=31 // pred_region
        _
      $region36: #{forward.6} parent=31 // pred_fallthru
        _
    $region32: #{forward.6} parent=5 // pred_fallthru
      _
    %p442 = scmp.le.s32.totalorder 2, %s9
    // Predicated region
    $region37: #{forward.6} parent=5 // pred_check
      %p443 = pneg %p442
    $region38: #{forward.6} parent=5 // pred_check_branch
      %445 = sbr.rel (%p443) target = $region40
    $region39: #{forward.6} parent=5 // pred_region
      %s446 = ssub.s32 %s9, 2
      // Predicated region
      $region41: #{forward.6} parent=39 // pred_check
        %p447 = pneg %p130
      $region42: #{forward.6} parent=39 // pred_check_branch
        %449 = sbr.rel (%p447) target = $region44
      $region43: #{forward.6} parent=39 // pred_region
        %p450 = scmp.lt.s32.totalorder %s20, 1
        %s451 = scalar_select %p450, %s20, 1
        %p452 = scmp.lt.s32.totalorder %s21, 0
        %s453 = scalar_select %p452, %s21, 0
        %s454 = smul.addr %s451, 8
        %s455 = sadd.s32 %s453, %s454
        %s456 = smul.addr %s455, 4
        %s457 = scalar_lea.vmem %s3, %s456
      $region44: #{forward.6} parent=39 // pred_fallthru
        _
    $region40: #{forward.6} parent=5 // pred_fallthru
      _
  $region6: #{forward.6} parent=0 // loop_footer
    %s13 = sadd.s32 1, %s9
  $region7: #{forward.6} parent=0 // loop_footer_branch
    %8 = sbr.rel target = $region3
  $region8: #{forward.6} parent=0 // loop_exit
    _

// kernel: forward.5
$region0: #{forward.5}
  #allocation0 [shape = 'u32[]', space=smem, size = 0x4, offset = 0x4, fixed_abs, tag = 'smem constant byte address 0x4 - core index']
  #allocation1 [shape = 'u32[144,128]{1,0:T(1,128)}', space=vmem, size = 0x12000, scoped, tag = 'internal scratch']
  %s0 = inlined_call_operand.vmem [shape: bf16[2,36,9,128], index: 0, kind: input, shape index: {}]
  %s1 = inlined_call_operand.vmem [shape: bf16[9,128,128], index: 1, kind: input, shape index: {}]
  %s2 = inlined_call_operand.vmem [shape: f32[1,128], index: 2, kind: input, shape index: {}]
  %s3 = inlined_call_operand.vmem [shape: bf16[2,64,128], index: 3, kind: output, shape index: {}]
  %s4 = sld [smem:[#allocation0]]
  $region45: #{forward.5} parent=0
    _
  %s6 = ssub.s32 1, %s4
  %s7 = scalar_select 0, %s6, %s4
  loop: start=0, step=1, limit=4
  $region2: #{forward.5} parent=0 // loop_pre_header
    _
  $region3: #{forward.5} parent=0 // loop_header
    %s9 = sphi 0, %s13
    %p10 = scmp.ge.s32.totalorder %s9, 4
    %s16 = sphi 0, %s28
    %s17 = sphi 0, %s24
    %s18 = sphi 0, %s16
    %s19 = sphi 0, %s17
    %s20 = sphi 0, %s18
    %s21 = sphi 0, %s19
    %s31 = sphi 0, %s33
    %s34 = sphi 0, %s31
    %s35 = sphi 0, %s34
    %s51 = sphi 0, %s35
    %s57 = sphi 0, %s59
    %s60 = sphi 0, %s57
    %s61 = sphi 0, %s60
    %s77 = sphi 0, %s61
    %s83 = sphi 0, %s85
    %s86 = sphi 0, %s83
    %s87 = sphi 0, %s86
    %s103 = sphi 0, %s87
    %s111 = sphi 0, %s113
    %s114 = sphi 0, %s111
    %s115 = sphi 0, %s114
    %s131 = sphi 0, %s115
  $region4: #{forward.5} parent=0 // loop_header_branch
    %12 = sbr.rel (%p10) target = $region8
  $region5: #{forward.5} parent=0 // loop_body
    %s14 = ssub.s32 %s9, 1
    %s15 = ssub.s32 %s9, 2
    %s22 = sadd.s32 1, %s17
    %p23 = scmp.ge.s32.totalorder %s22, 1
    %s24 = scalar_select %p23, 0, %s22
    %s25 = sadd.s32 1, %s16
    %s26 = scalar_select %p23, %s25, %s16
    %p27 = scmp.ge.s32.totalorder %s26, 2
    %s28 = scalar_select %p27, 0, %s26
    %s29 = ssub.s32 %s16, %s28
    %p30 = scmp.eq.s32.totalorder %s29, 0
    %s32 = sadd.s32 %s31, 1
    %s33 = scalar_select %p30, %s31, %s32
    %p36 = pneg %p30
    %p37 = scmp.eq.s32.totalorder %s9, 1
    %p38 = por %p36, %p37
    %p39 = scmp.ne.s32.totalorder %s31, %s34
    %p40 = scmp.eq.s32.totalorder %s9, 0
    %p41 = por %p39, %p40
    %p42 = scmp.ne.s32.totalorder %s31, %s34
    %p43 = scmp.eq.s32.totalorder %s14, 1
    %p44 = por %p42, %p43
    %p45 = scmp.ne.s32.totalorder %s34, %s35
    %p46 = scmp.eq.s32.totalorder %s14, 0
    %p47 = por %p45, %p46
    %p48 = scmp.ne.s32.totalorder %s34, %s35
    %p49 = scmp.eq.s32.totalorder %s15, 1
    %p50 = por %p48, %p49
    %p52 = scmp.ne.s32.totalorder %s35, %s51
    %p53 = scmp.eq.s32.totalorder %s15, 0
    %p54 = por %p52, %p53
    %s55 = ssub.s32 %s17, %s24
    %p56 = scmp.eq.s32.totalorder %s55, 0
    %s58 = sadd.s32 %s57, 1
    %s59 = scalar_select %p56, %s57, %s58
    %p62 = pneg %p56
    %p63 = scmp.eq.s32.totalorder %s9, 1
    %p64 = por %p62, %p63
    %p65 = scmp.ne.s32.totalorder %s57, %s60
    %p66 = scmp.eq.s32.totalorder %s9, 0
    %p67 = por %p65, %p66
    %p68 = scmp.ne.s32.totalorder %s57, %s60
    %p69 = scmp.eq.s32.totalorder %s14, 1
    %p70 = por %p68, %p69
    %p71 = scmp.ne.s32.totalorder %s60, %s61
    %p72 = scmp.eq.s32.totalorder %s14, 0
    %p73 = por %p71, %p72
    %p74 = scmp.ne.s32.totalorder %s60, %s61
    %p75 = scmp.eq.s32.totalorder %s15, 1
    %p76 = por %p74, %p75
    %p78 = scmp.ne.s32.totalorder %s61, %s77
    %p79 = scmp.eq.s32.totalorder %s15, 0
    %p80 = por %p78, %p79
    %s81 = ssub.s32 %s17, %s24
    %p82 = scmp.eq.s32.totalorder %s81, 0
    %s84 = sadd.s32 %s83, 1
    %s85 = scalar_select %p82, %s83, %s84
    %p88 = pneg %p82
    %p89 = scmp.eq.s32.totalorder %s9, 1
    %p90 = por %p88, %p89
    %p91 = scmp.ne.s32.totalorder %s83, %s86
    %p92 = scmp.eq.s32.totalorder %s9, 0
    %p93 = por %p91, %p92
    %p94 = scmp.ne.s32.totalorder %s83, %s86
    %p95 = scmp.eq.s32.totalorder %s14, 1
    %p96 = por %p94, %p95
    %p97 = scmp.ne.s32.totalorder %s86, %s87
    %p98 = scmp.eq.s32.totalorder %s14, 0
    %p99 = por %p97, %p98
    %p100 = scmp.ne.s32.totalorder %s86, %s87
    %p101 = scmp.eq.s32.totalorder %s15, 1
    %p102 = por %p100, %p101
    %p104 = scmp.ne.s32.totalorder %s87, %s103
    %p105 = scmp.eq.s32.totalorder %s15, 0
    %p106 = por %p104, %p105
    %s107 = ssub.s32 %s16, %s28
    %s108 = ssub.s32 %s17, %s24
    %s109 = sor.u32 %s107, %s108
    %p110 = scmp.eq.s32.totalorder %s109, 0
    %s112 = sadd.s32 %s111, 1
    %s113 = scalar_select %p110, %s111, %s112
    %p116 = pneg %p110
    %p117 = scmp.eq.s32.totalorder %s9, 1
    %p118 = por %p116, %p117
    %p119 = scmp.ne.s32.totalorder %s111, %s114
    %p120 = scmp.eq.s32.totalorder %s9, 0
    %p121 = por %p119, %p120
    %p122 = scmp.ne.s32.totalorder %s111, %s114
    %p123 = scmp.eq.s32.totalorder %s14, 1
    %p124 = por %p122, %p123
    %p125 = scmp.ne.s32.totalorder %s114, %s115
    %p126 = scmp.eq.s32.totalorder %s14, 0
    %p127 = por %p125, %p126
    %p128 = scmp.ne.s32.totalorder %s114, %s115
    %p129 = scmp.eq.s32.totalorder %s15, 1
    %p130 = por %p128, %p129
    %p132 = scmp.ne.s32.totalorder %s115, %s131
    %p133 = scmp.eq.s32.totalorder %s15, 0
    %p134 = por %p132, %p133
    %p135 = scmp.le.s32.totalorder 1, %s9
    %p136 = scmp.lt.s32.totalorder %s9, 3
    %p137 = pnand %p135, %p136
    %p138 = pneg %p137
    // Predicated region
    $region9: #{forward.5} parent=5 // pred_check
      _
    $region10: #{forward.5} parent=5 // pred_check_branch
      %140 = sbr.rel (%p137) target = $region12
    $region11: #{forward.5} parent=5 // pred_region
      %s141 = ssub.s32 %s9, 1
      // Predicated region
      $region13: #{forward.5} parent=11 // pred_check
        %p142 = pneg %p73
      $region14: #{forward.5} parent=11 // pred_check_branch
        %144 = sbr.rel (%p142) target = $region16
      $region15: #{forward.5} parent=11 // pred_region
        %p145 = scmp.lt.s32.totalorder %s19, 0
        %s146 = scalar_select %p145, %s19, 0
        %s147 = smul.addr %s146, 4
        %s148 = scalar_lea.vmem %s1, %s147
      $region16: #{forward.5} parent=11 // pred_fallthru
        _
      // Predicated region
      $region17: #{forward.5} parent=11 // pred_check
        %p149 = pneg %p99
      $region18: #{forward.5} parent=11 // pred_check_branch
        %151 = sbr.rel (%p149) target = $region20
      $region19: #{forward.5} parent=11 // pred_region
        %p152 = scmp.lt.s32.totalorder %s19, 0
        %s153 = scalar_select %p152, %s19, 0
        %s154 = scalar_lea.vmem %s2, %s153
      $region20: #{forward.5} parent=11 // pred_fallthru
        _
    $region12: #{forward.5} parent=5 // pred_fallthru
      _
    %p155 = scmp.lt.s32.totalorder %s9, 2
    // Predicated region
    $region21: #{forward.5} parent=5 // pred_check
      %p156 = pneg %p155
    $region22: #{forward.5} parent=5 // pred_check_branch
      %158 = sbr.rel (%p156) target = $region24
    $region23: #{forward.5} parent=5 // pred_region
      // Predicated region
      $region25: #{forward.5} parent=23 // pred_check
        %p159 = pneg %p41
      $region26: #{forward.5} parent=23 // pred_check_branch
        %161 = sbr.rel (%p159) target = $region28
      $region27: #{forward.5} parent=23 // pred_region
        %p162 = scmp.lt.s32.totalorder %s16, 1
        %s163 = scalar_select %p162, %s16, 1
        %s164 = smul.addr %s163, 72
        %s165 = smul.addr %s164, 4
        %s166 = scalar_lea.vmem %s0, %s165
      $region28: #{forward.5} parent=23 // pred_fallthru
        _
    $region24: #{forward.5} parent=5 // pred_fallthru
      _
    %p167 = scmp.le.s32.totalorder 1, %s9
    %p168 = scmp.lt.s32.totalorder %s9, 3
    %p169 = pnand %p167, %p168
    %p170 = pneg %p169
    // Predicated region
    $region29: #{forward.5} parent=5 // pred_check
      _
    $region30: #{forward.5} parent=5 // pred_check_branch
      %172 = sbr.rel (%p169) target = $region32
    $region31: #{forward.5} parent=5 // pred_region
      %s173 = ssub.s32 %s9, 1
      %p174 = scmp.lt.s32.totalorder %s18, 1
      %s175 = scalar_select %p174, %s18, 1
      %s176 = smul.addr %s175, 72
      %s177 = smul.addr %s176, 4
      %s178 = scalar_lea.vmem %s0, %s177
      %p179 = pneg %p47
      %p180 = pneg %p44
      %p181 = scmp.lt.s32.totalorder %s19, 0
      %s182 = scalar_select %p181, %s19, 0
      %s183 = smul.addr %s182, 4
      %s184 = scalar_lea.vmem %s1, %s183
      %p185 = pneg %p73
      %p186 = pneg %p70
      %p187 = scmp.lt.s32.totalorder %s19, 0
      %s188 = scalar_select %p187, %s19, 0
      %s189 = scalar_lea.vmem %s2, %s188
      %p190 = pneg %p99
      %p191 = pneg %p96
      %p192 = pneg %p127
      %p193 = pneg %p124
      %p194 = scmp.lt.s32.totalorder %s18, 1
      %s195 = scalar_select %p194, %s18, 1
      %p196 = scmp.lt.s32.totalorder %s19, 0
      %s197 = scalar_select %p196, %s19, 0
      %s198 = smul.addr %s195, 8
      %s199 = sadd.s32 %s197, %s198
      %s200 = smul.addr %s199, 4
      %s201 = scalar_lea.vmem %s3, %s200
      %p202 = scmp.lt.s32.totalorder %s18, 1
      %s203 = scalar_select %p202, %s18, 1
      %s204 = smul.addr %s203, 72
      %s205 = smul.addr %s204, 4
      %s206 = scalar_lea.vmem %s0, %s205
      %p207 = scmp.lt.s32.totalorder %s19, 0
      %s208 = scalar_select %p207, %s19, 0
      %s209 = smul.addr %s208, 4
      %s210 = scalar_lea.vmem %s1, %s209
      %p211 = scmp.lt.s32.totalorder %s19, 0
      %s212 = scalar_select %p211, %s19, 0
      %s213 = scalar_lea.vmem %s2, %s212
      %p214 = scmp.lt.s32.totalorder %s18, 1
      %s215 = scalar_select %p214, %s18, 1
      %p216 = scmp.lt.s32.totalorder %s19, 0
      %s217 = scalar_select %p216, %s19, 0
      %s218 = smul.addr %s215, 8
      %s219 = sadd.s32 %s217, %s218
      %s220 = smul.addr %s219, 4
      %s221 = scalar_lea.vmem %s3, %s220
      %v223 = vld [vmem:[%s206] sm:$0xf]
      %v224 = vld [vmem:[%s206 + $0x8] sm:$0xf]
      %v225 = vld [vmem:[%s206 + $0x10] sm:$0xf]
      %v226 = vld [vmem:[%s206 + $0x18] sm:$0xf]
      %v227 = vld [vmem:[%s206 + $0x20] sm:$0xf]
      %v228 = vld [vmem:[%s206 + $0x28] sm:$0xf]
      %v229 = vld [vmem:[%s206 + $0x30] sm:$0xf]
      %v230 = vld [vmem:[%s206 + $0x38] sm:$0xf]
      %v231 = vld [vmem:[%s210] sm:$0xf]
      %v232 = vld [vmem:[%s210 + $0x4] sm:$0xf]
      %v233 = vld [vmem:[%s210 + $0x8] sm:$0xf]
      %v234 = vld [vmem:[%s210 + $0xc] sm:$0xf]
      %v235 = vld [vmem:[%s210 + $0x10] sm:$0xf]
      %v236 = vld [vmem:[%s210 + $0x14] sm:$0xf]
      %v237 = vld [vmem:[%s210 + $0x18] sm:$0xf]
      %v238 = vld [vmem:[%s210 + $0x1c] sm:$0xf]
      %v239 = vld [vmem:[%s210 + $0x20] sm:$0xf]
      %v240 = vld [vmem:[%s210 + $0x24] sm:$0xf]
      %v241 = vld [vmem:[%s210 + $0x28] sm:$0xf]
      %v242 = vld [vmem:[%s210 + $0x2c] sm:$0xf]
      %v243 = vld [vmem:[%s210 + $0x30] sm:$0xf]
      %v244 = vld [vmem:[%s210 + $0x34] sm:$0xf]
      %v245 = vld [vmem:[%s210 + $0x38] sm:$0xf]
      %v246 = vld [vmem:[%s210 + $0x3c] sm:$0xf]
      %s247 = scalar_lea.vmem %s206, 72
      %v248 = vld [vmem:[%s247] sm:$0xf]
      %v249 = vld [vmem:[%s247 + $0x8] sm:$0xf]
      %v250 = vld [vmem:[%s247 + $0x10] sm:$0xf]
      %v251 = vld [vmem:[%s247 + $0x18] sm:$0xf]
      %v252 = vld [vmem:[%s247 + $0x20] sm:$0xf]
      %v253 = vld [vmem:[%s247 + $0x28] sm:$0xf]
      %v254 = vld [vmem:[%s247 + $0x30] sm:$0xf]
      %v255 = vld [vmem:[%s247 + $0x38] sm:$0xf]
      %s256 = scalar_lea.vmem %s210, 64
      %v257 = vld [vmem:[%s256] sm:$0xf]
      %v258 = vld [vmem:[%s256 + $0x4] sm:$0xf]
      %v259 = vld [vmem:[%s256 + $0x8] sm:$0xf]
      %v260 = vld [vmem:[%s256 + $0xc] sm:$0xf]
      %v261 = vld [vmem:[%s256 + $0x10] sm:$0xf]
      %v262 = vld [vmem:[%s256 + $0x14] sm:$0xf]
      %v263 = vld [vmem:[%s256 + $0x18] sm:$0xf]
      %v264 = vld [vmem:[%s256 + $0x1c] sm:$0xf]
      %v265 = vld [vmem:[%s256 + $0x20] sm:$0xf]
      %v266 = vld [vmem:[%s256 + $0x24] sm:$0xf]
      %v267 = vld [vmem:[%s256 + $0x28] sm:$0xf]
      %v268 = vld [vmem:[%s256 + $0x2c] sm:$0xf]
      %v269 = vld [vmem:[%s256 + $0x30] sm:$0xf]
      %v270 = vld [vmem:[%s256 + $0x34] sm:$0xf]
      %v271 = vld [vmem:[%s256 + $0x38] sm:$0xf]
      %v272 = vld [vmem:[%s256 + $0x3c] sm:$0xf]
      %v281 = vunpack.c.l.b16 %v248
      %v282 = vunpack.c.l.b16 %v249
      %v283 = vunpack.c.l.b16 %v250
      %v284 = vunpack.c.l.b16 %v251
      %v285 = vunpack.c.l.b16 %v252
      %v286 = vunpack.c.l.b16 %v253
      %v287 = vunpack.c.l.b16 %v254
      %v288 = vunpack.c.l.b16 %v255
      %v289 = vpack.c.b16 %v282, %v281
      %v290 = vpack.c.b16 %v284, %v283
      %v291 = vpack.c.b16 %v286, %v285
      %v292 = vpack.c.b16 %v288, %v287
      %v313 = vunpack.c.l.b16 %v257
      %v314 = vunpack.c.l.b16 %v258
      %v315 = vunpack.c.l.b16 %v259
      %v316 = vunpack.c.l.b16 %v260
      %v317 = vunpack.c.l.b16 %v261
      %v318 = vunpack.c.l.b16 %v262
      %v319 = vunpack.c.l.b16 %v263
      %v320 = vunpack.c.l.b16 %v264
      %v321 = vunpack.c.l.b16 %v265
      %v322 = vunpack.c.l.b16 %v266
      %v323 = vunpack.c.l.b16 %v267
      %v324 = vunpack.c.l.b16 %v268
      %v325 = vunpack.c.l.b16 %v269
      %v326 = vunpack.c.l.b16 %v270
      %v327 = vunpack.c.l.b16 %v271
      %v328 = vunpack.c.l.b16 %v272
      %v329 = vpack.c.b16 %v314, %v313
      %v330 = vpack.c.b16 %v316, %v315
      %v331 = vpack.c.b16 %v318, %v317
      %v332 = vpack.c.b16 %v320, %v319
      %v333 = vpack.c.b16 %v322, %v321
      %v334 = vpack.c.b16 %v324, %v323
      %v335 = vpack.c.b16 %v326, %v325
      %v336 = vpack.c.b16 %v328, %v327
      %345 = vmatprep.subr.bf16.mxu0 0
      %346 = vmatpush1.bf16.msra.mxu0 %v329
      %347 = vmatprep.subr.bf16.mxu0 0
      %348 = vmatpush1.bf16.msra.mxu0 %v330
      %349 = vmatprep.subr.bf16.mxu0 0
      %350 = vmatpush1.bf16.msra.mxu0 %v331
      %351 = vmatprep.subr.bf16.mxu0 0
      %352 = vmatpush1.bf16.msra.mxu0 %v332
      %353 = vmatprep.subr.bf16.mxu0 0
      %354 = vmatpush1.bf16.msra.mxu0 %v333
      %355 = vmatprep.subr.bf16.mxu0 0
      %356 = vmatpush1.bf16.msra.mxu0 %v334
      %357 = vmatprep.subr.bf16.mxu0 0
      %358 = vmatpush1.bf16.msra.mxu0 %v335
      %359 = vmatprep.subr.bf16.mxu0 0
      %360 = vmatpush1.bf16.msra.mxu0 %v336
      %361 = vmatprep.subr.bf16.mxu0 0
      %362 = vmatpush1.bf16.msra.mxu0 0
      %363 = vmatprep.subr.bf16.mxu0 0
      %364 = vmatpush1.bf16.msra.mxu0 0
      %365 = vmatprep.subr.bf16.mxu0 0
      %366 = vmatpush1.bf16.msra.mxu0 0
      %367 = vmatprep.subr.bf16.mxu0 0
      %368 = vmatpush1.bf16.msra.mxu0 0
      %369 = vmatprep.subr.bf16.mxu0 0
      %370 = vmatpush1.bf16.msra.mxu0 0
      %371 = vmatprep.subr.bf16.mxu0 0
      %372 = vmatpush1.bf16.msra.mxu0 0
      %373 = vmatprep.subr.bf16.mxu0 0
      %374 = vmatpush1.bf16.msra.mxu0 0
      %375 = vmatprep.subr.bf16.mxu0 0
      %376 = vmatpush1.bf16.msra.mxu0 0
      %377 = vmatprep.mubr.bf16.mxu0 0
      %378 = vmatmul.mubr.bf16.gmra.mrb[0].mxu0 %v289
      %v379 = vpop.f32.mrb[0].mxu0
      %v380 = vadd.f32 0.0, %v379
      %v381 = vpop.f32.mrb[0].mxu0
      %v382 = vpop.f32.mrb[0].mxu0
      %v383 = vadd.f32 0.0, %v382
      %v384 = vpop.f32.mrb[0].mxu0
      %385 = vmatprep.mubr.bf16.mxu0 0
      %386 = vmatmul.mubr.bf16.gmra.mrb[0].mxu0 %v290
      %v387 = vpop.f32.mrb[0].mxu0
      %v388 = vadd.f32 0.0, %v387
      %v389 = vpop.f32.mrb[0].mxu0
      %v390 = vpop.f32.mrb[0].mxu0
      %v391 = vadd.f32 0.0, %v390
      %v392 = vpop.f32.mrb[0].mxu0
      %393 = vmatprep.mubr.bf16.mxu0 0
      %394 = vmatmul.mubr.bf16.gmra.mrb[0].mxu0 %v291
      %v395 = vpop.f32.mrb[0].mxu0
      %v396 = vadd.f32 0.0, %v395
      %v397 = vpop.f32.mrb[0].mxu0
      %v398 = vpop.f32.mrb[0].mxu0
      %v399 = vadd.f32 0.0, %v398
      %v400 = vpop.f32.mrb[0].mxu0
      %401 = vmatprep.mubr.bf16.mxu0 0
      %402 = vmatmul.mubr.bf16.gmra.mrb[0].mxu0 %v292
      %v403 = vpop.f32.mrb[0].mxu0
      %v404 = vadd.f32 0.0, %v403
      %v405 = vpop.f32.mrb[0].mxu0
      %v406 = vpop.f32.mrb[0].mxu0
      %v407 = vadd.f32 0.0, %v406
      %v408 = vpop.f32.mrb[0].mxu0
      %409 = vdwg.mxu0
      %v418 = vunpack.c.l.b16 %v223
      %v419 = vunpack.c.l.b16 %v224
      %v420 = vunpack.c.l.b16 %v225
      %v421 = vunpack.c.l.b16 %v226
      %v422 = vunpack.c.l.b16 %v227
      %v423 = vunpack.c.l.b16 %v228
      %v424 = vunpack.c.l.b16 %v229
      %v425 = vunpack.c.l.b16 %v230
      %v426 = vpack.c.b16 %v419, %v418
      %v427 = vpack.c.b16 %v421, %v420
      %v428 = vpack.c.b16 %v423, %v422
      %v429 = vpack.c.b16 %v425, %v424
      %v450 = vunpack.c.l.b16 %v231
      %v451 = vunpack.c.l.b16 %v232
      %v452 = vunpack.c.l.b16 %v233
      %v453 = vunpack.c.l.b16 %v234
      %v454 = vunpack.c.l.b16 %v235
      %v455 = vunpack.c.l.b16 %v236
      %v456 = vunpack.c.l.b16 %v237
      %v457 = vunpack.c.l.b16 %v238
      %v458 = vunpack.c.l.b16 %v239
      %v459 = vunpack.c.l.b16 %v240
      %v460 = vunpack.c.l.b16 %v241
      %v461 = vunpack.c.l.b16 %v242
      %v462 = vunpack.c.l.b16 %v243
      %v463 = vunpack.c.l.b16 %v244
      %v464 = vunpack.c.l.b16 %v245
      %v465 = vunpack.c.l.b16 %v246
      %v466 = vpack.c.b16 %v451, %v450
      %v467 = vpack.c.b16 %v453, %v452
      %v468 = vpack.c.b16 %v455, %v454
      %v469 = vpack.c.b16 %v457, %v456
      %v470 = vpack.c.b16 %v459, %v458
      %v471 = vpack.c.b16 %v461, %v460
      %v472 = vpack.c.b16 %v463, %v462
      %v473 = vpack.c.b16 %v465, %v464
      %482 = vmatprep.subr.bf16.mxu0 0
      %483 = vmatpush1.bf16.msra.mxu0 %v466
      %484 = vmatprep.subr.bf16.mxu0 0
      %485 = vmatpush1.bf16.msra.mxu0 %v467
      %486 = vmatprep.subr.bf16.mxu0 0
      %487 = vmatpush1.bf16.msra.mxu0 %v468
      %488 = vmatprep.subr.bf16.mxu0 0
      %489 = vmatpush1.bf16.msra.mxu0 %v469
      %490 = vmatprep.subr.bf16.mxu0 0
      %491 = vmatpush1.bf16.msra.mxu0 %v470
      %492 = vmatprep.subr.bf16.mxu0 0
      %493 = vmatpush1.bf16.msra.mxu0 %v471
      %494 = vmatprep.subr.bf16.mxu0 0
      %495 = vmatpush1.bf16.msra.mxu0 %v472
      %496 = vmatprep.subr.bf16.mxu0 0
      %497 = vmatpush1.bf16.msra.mxu0 %v473
      %498 = vmatprep.subr.bf16.mxu0 0
      %499 = vmatpush1.bf16.msra.mxu0 0
      %500 = vmatprep.subr.bf16.mxu0 0
      %501 = vmatpush1.bf16.msra.mxu0 0
      %502 = vmatprep.subr.bf16.mxu0 0
      %503 = vmatpush1.bf16.msra.mxu0 0
      %504 = vmatprep.subr.bf16.mxu0 0
      %505 = vmatpush1.bf16.msra.mxu0 0
      %506 = vmatprep.subr.bf16.mxu0 0
      %507 = vmatpush1.bf16.msra.mxu0 0
      %508 = vmatprep.subr.bf16.mxu0 0
      %509 = vmatpush1.bf16.msra.mxu0 0
      %510 = vmatprep.subr.bf16.mxu0 0
      %511 = vmatpush1.bf16.msra.mxu0 0
      %512 = vmatprep.subr.bf16.mxu0 0
      %513 = vmatpush1.bf16.msra.mxu0 0
      %514 = vmatprep.mubr.bf16.mxu0 0
      %515 = vmatmul.mubr.bf16.gmra.mrb[0].mxu0 %v426
      %v516 = vpop.f32.mrb[0].mxu0
      %v517 = vadd.f32 %v380, %v516
      %v518 = vpop.f32.mrb[0].mxu0
      %v519 = vpop.f32.mrb[0].mxu0
      %v520 = vadd.f32 %v383, %v519
      %v521 = vpop.f32.mrb[0].mxu0
      %522 = vmatprep.mubr.bf16.mxu0 0
      %523 = vmatmul.mubr.bf16.gmra.mrb[0].mxu0 %v427
      %v524 = vpop.f32.mrb[0].mxu0
      %v525 = vadd.f32 %v388, %v524
      %v526 = vpop.f32.mrb[0].mxu0
      %v527 = vpop.f32.mrb[0].mxu0
      %v528 = vadd.f32 %v391, %v527
      %v529 = vpop.f32.mrb[0].mxu0
      %530 = vmatprep.mubr.bf16.mxu0 0
      %531 = vmatmul.mubr.bf16.gmra.mrb[0].mxu0 %v428
      %v532 = vpop.f32.mrb[0].mxu0
      %v533 = vadd.f32 %v396, %v532
      %v534 = vpop.f32.mrb[0].mxu0
      %v535 = vpop.f32.mrb[0].mxu0
      %v536 = vadd.f32 %v399, %v535
      %v537 = vpop.f32.mrb[0].mxu0
      %538 = vmatprep.mubr.bf16.mxu0 0
      %539 = vmatmul.mubr.bf16.gmra.mrb[0].mxu0 %v429
      %v540 = vpop.f32.mrb[0].mxu0
      %v541 = vadd.f32 %v404, %v540
      %v542 = vpop.f32.mrb[0].mxu0
      %v543 = vpop.f32.mrb[0].mxu0
      %v544 = vadd.f32 %v407, %v543
      %v545 = vpop.f32.mrb[0].mxu0
      %546 = vdwg.mxu0
      %v547 = vld [vmem:[%s206] sm:$0xf]
      %v548 = vld [vmem:[%s206 + $0x4] sm:$0x1]
      %v549 = vld [vmem:[%s206 + $0x8] sm:$0xf]
      %v550 = vld [vmem:[%s206 + $0xc] sm:$0x1]
      %v551 = vld [vmem:[%s206 + $0x10] sm:$0xf]
      %v552 = vld [vmem:[%s206 + $0x14] sm:$0x1]
      %v553 = vld [vmem:[%s206 + $0x18] sm:$0xf]
      %v554 = vld [vmem:[%s206 + $0x1c] sm:$0x1]
      %v555 = vld [vmem:[%s206 + $0x20] sm:$0xf]
      %v556 = vld [vmem:[%s206 + $0x24] sm:$0x1]
      %v557 = vld [vmem:[%s206 + $0x28] sm:$0xf]
      %v558 = vld [vmem:[%s206 + $0x2c] sm:$0x1]
      %v559 = vld [vmem:[%s206 + $0x30] sm:$0xf]
      %v560 = vld [vmem:[%s206 + $0x34] sm:$0x1]
      %v561 = vld [vmem:[%s206 + $0x38] sm:$0xf]
      %v562 = vld [vmem:[%s206 + $0x3c] sm:$0x1]
      %vm563 = vsmask.f32 3328
      %vm564 = vsmask.f32 7440
      %vm565 = vmor %vm563, %vm564
      %v567 = vshrl.u32 %v547, 16
      %v569 = vrot.slane %v567, 4
      %v570 = vshll.u32 %v547, 16
      %v572 = vrot.slane %v570, 5
      %v573 = vor.u32 %v569, %v572
      %v574 = vrot.slane %v573, 4
      %v576 = vshll.u32 %v548, 16
      %v578 = vrot.slane %v576, 5
      %v579 = vsel %vm565, %v574, %v578
      %v581 = vshrl.u32 %v549, 16
      %v583 = vrot.slane %v581, 4
      %v584 = vshll.u32 %v549, 16
      %v586 = vrot.slane %v584, 5
      %v587 = vor.u32 %v583, %v586
      %v588 = vrot.slane %v587, 4
      %v590 = vshll.u32 %v550, 16
      %v592 = vrot.slane %v590, 5
      %v593 = vsel %vm565, %v588, %v592
      %v595 = vshrl.u32 %v551, 16
      %v597 = vrot.slane %v595, 4
      %v598 = vshll.u32 %v551, 16
      %v600 = vrot.slane %v598, 5
      %v601 = vor.u32 %v597, %v600
      %v602 = vrot.slane %v601, 4
      %v604 = vshll.u32 %v552, 16
      %v606 = vrot.slane %v604, 5
      %v607 = vsel %vm565, %v602, %v606
      %v609 = vshrl.u32 %v553, 16
      %v611 = vrot.slane %v609, 4
      %v612 = vshll.u32 %v553, 16
      %v614 = vrot.slane %v612, 5
      %v615 = vor.u32 %v611, %v614
      %v616 = vrot.slane %v615, 4
      %v618 = vshll.u32 %v554, 16
      %v620 = vrot.slane %v618, 5
      %v621 = vsel %vm565, %v616, %v620
      %v623 = vshrl.u32 %v555, 16
      %v625 = vrot.slane %v623, 4
      %v626 = vshll.u32 %v555, 16
      %v628 = vrot.slane %v626, 5
      %v629 = vor.u32 %v625, %v628
      %v630 = vrot.slane %v629, 4
      %v632 = vshll.u32 %v556, 16
      %v634 = vrot.slane %v632, 5
      %v635 = vsel %vm565, %v630, %v634
      %v637 = vshrl.u32 %v557, 16
      %v639 = vrot.slane %v637, 4
      %v640 = vshll.u32 %v557, 16
      %v642 = vrot.slane %v640, 5
      %v643 = vor.u32 %v639, %v642
      %v644 = vrot.slane %v643, 4
      %v646 = vshll.u32 %v558, 16
      %v648 = vrot.slane %v646, 5
      %v649 = vsel %vm565, %v644, %v648
      %v651 = vshrl.u32 %v559, 16
      %v653 = vrot.slane %v651, 4
      %v654 = vshll.u32 %v559, 16
      %v656 = vrot.slane %v654, 5
      %v657 = vor.u32 %v653, %v656
      %v658 = vrot.slane %v657, 4
      %v660 = vshll.u32 %v560, 16
      %v662 = vrot.slane %v660, 5
      %v663 = vsel %vm565, %v658, %v662
      %v665 = vshrl.u32 %v561, 16
      %v667 = vrot.slane %v665, 4
      %v668 = vshll.u32 %v561, 16
      %v670 = vrot.slane %v668, 5
      %v671 = vor.u32 %v667, %v670
      %v672 = vrot.slane %v671, 4
      %v674 = vshll.u32 %v562, 16
      %v676 = vrot.slane %v674, 5
      %v677 = vsel %vm565, %v672, %v676
      %s678 = scalar_lea.vmem %s210, 128
      %v679 = vld [vmem:[%s678] sm:$0xf]
      %v680 = vld [vmem:[%s678 + $0x4] sm:$0xf]
      %v681 = vld [vmem:[%s678 + $0x8] sm:$0xf]
      %v682 = vld [vmem:[%s678 + $0xc] sm:$0xf]
      %v683 = vld [vmem:[%s678 + $0x10] sm:$0xf]
      %v684 = vld [vmem:[%s678 + $0x14] sm:$0xf]
      %v685 = vld [vmem:[%s678 + $0x18] sm:$0xf]
      %v686 = vld [vmem:[%s678 + $0x1c] sm:$0xf]
      %v687 = vld [vmem:[%s678 + $0x20] sm:$0xf]
      %v688 = vld [vmem:[%s678 + $0x24] sm:$0xf]
      %v689 = vld [vmem:[%s678 + $0x28] sm:$0xf]
      %v690 = vld [vmem:[%s678 + $0x2c] sm:$0xf]
      %v691 = vld [vmem:[%s678 + $0x30] sm:$0xf]
      %v692 = vld [vmem:[%s678 + $0x34] sm:$0xf]
      %v693 = vld [vmem:[%s678 + $0x38] sm:$0xf]
      %v694 = vld [vmem:[%s678 + $0x3c] sm:$0xf]
      %v695 = vunpack.c.l.b16 %v579
      %v696 = vunpack.c.l.b16 %v593
      %v697 = vunpack.c.l.b16 %v607
      %v698 = vunpack.c.l.b16 %v621
      %v699 = vunpack.c.l.b16 %v635
      %v700 = vunpack.c.l.b16 %v649
      %v701 = vunpack.c.l.b16 %v663
      %v702 = vunpack.c.l.b16 %v677
      %v703 = vpack.c.b16 %v696, %v695
      %v704 = vpack.c.b16 %v698, %v697
      %v705 = vpack.c.b16 %v700, %v699
      %v706 = vpack.c.b16 %v702, %v701
      %v727 = vunpack.c.l.b16 %v679
      %v728 = vunpack.c.l.b16 %v680
      %v729 = vunpack.c.l.b16 %v681
      %v730 = vunpack.c.l.b16 %v682
      %v731 = vunpack.c.l.b16 %v683
      %v732 = vunpack.c.l.b16 %v684
      %v733 = vunpack.c.l.b16 %v685
      %v734 = vunpack.c.l.b16 %v686
      %v735 = vunpack.c.l.b16 %v687
      %v736 = vunpack.c.l.b16 %v688
      %v737 = vunpack.c.l.b16 %v689
      %v738 = vunpack.c.l.b16 %v690
      %v739 = vunpack.c.l.b16 %v691
      %v740 = vunpack.c.l.b16 %v692
      %v741 = vunpack.c.l.b16 %v693
      %v742 = vunpack.c.l.b16 %v694
      %v743 = vpack.c.b16 %v728, %v727
      %v744 = vpack.c.b16 %v730, %v729
      %v745 = vpack.c.b16 %v732, %v731
      %v746 = vpack.c.b16 %v734, %v733
      %v747 = vpack.c.b16 %v736, %v735
      %v748 = vpack.c.b16 %v738, %v737
      %v749 = vpack.c.b16 %v740, %v739
      %v750 = vpack.c.b16 %v742, %v741
      %759 = vmatprep.subr.bf16.mxu0 0
      %760 = vmatpush1.bf16.msra.mxu0 %v743
      %761 = vmatprep.subr.bf16.mxu0 0
      %762 = vmatpush1.bf16.msra.mxu0 %v744
      %763 = vmatprep.subr.bf16.mxu0 0
      %764 = vmatpush1.bf16.msra.mxu0 %v745
      %765 = vmatprep.subr.bf16.mxu0 0
      %766 = vmatpush1.bf16.msra.mxu0 %v746
      %767 = vmatprep.subr.bf16.mxu0 0
      %768 = vmatpush1.bf16.msra.mxu0 %v747
      %769 = vmatprep.subr.bf16.mxu0 0
      %770 = vmatpush1.bf16.msra.mxu0 %v748
      %771 = vmatprep.subr.bf16.mxu0 0
      %772 = vmatpush1.bf16.msra.mxu0 %v749
      %773 = vmatprep.subr.bf16.mxu0 0
      %774 = vmatpush1.bf16.msra.mxu0 %v750
      %775 = vmatprep.subr.bf16.mxu0 0
      %776 = vmatpush1.bf16.msra.mxu0 0
      %777 = vmatprep.subr.bf16.mxu0 0
      %778 = vmatpush1.bf16.msra.mxu0 0
      %779 = vmatprep.subr.bf16.mxu0 0
      %780 = vmatpush1.bf16.msra.mxu0 0
      %781 = vmatprep.subr.bf16.mxu0 0
      %782 = vmatpush1.bf16.msra.mxu0 0
      %783 = vmatprep.subr.bf16.mxu0 0
      %784 = vmatpush1.bf16.msra.mxu0 0
      %785 = vmatprep.subr.bf16.mxu0 0
      %786 = vmatpush1.bf16.msra.mxu0 0
      %787 = vmatprep.subr.bf16.mxu0 0
      %788 = vmatpush1.bf16.msra.mxu0 0
      %789 = vmatprep.subr.bf16.mxu0 0
      %790 = vmatpush1.bf16.msra.mxu0 0
      %791 = vmatprep.mubr.bf16.mxu0 0
      %792 = vmatmul.mubr.bf16.gmra.mrb[0].mxu0 %v703
      %v793 = vpop.f32.mrb[0].mxu0
      %v794 = vadd.f32 0.0, %v793
      %v795 = vpop.f32.mrb[0].mxu0
      %v796 = vpop.f32.mrb[0].mxu0
      %v797 = vadd.f32 0.0, %v796
      %v798 = vpop.f32.mrb[0].mxu0
      %799 = vmatprep.mubr.bf16.mxu0 0
      %800 = vmatmul.mubr.bf16.gmra.mrb[0].mxu0 %v704
      %v801 = vpop.f32.mrb[0].mxu0
      %v802 = vadd.f32 0.0, %v801
      %v803 = vpop.f32.mrb[0].mxu0
      %v804 = vpop.f32.mrb[0].mxu0
      %v805 = vadd.f32 0.0, %v804
      %v806 = vpop.f32.mrb[0].mxu0
      %807 = vmatprep.mubr.bf16.mxu0 0
      %808 = vmatmul.mubr.bf16.gmra.mrb[0].mxu0 %v705
      %v809 = vpop.f32.mrb[0].mxu0
      %v810 = vadd.f32 0.0, %v809
      %v811 = vpop.f32.mrb[0].mxu0
      %v812 = vpop.f32.mrb[0].mxu0
      %v813 = vadd.f32 0.0, %v812
      %v814 = vpop.f32.mrb[0].mxu0
      %815 = vmatprep.mubr.bf16.mxu0 0
      %816 = vmatmul.mubr.bf16.gmra.mrb[0].mxu0 %v706
      %v817 = vpop.f32.mrb[0].mxu0
      %v818 = vadd.f32 0.0, %v817
      %v819 = vpop.f32.mrb[0].mxu0
      %v820 = vpop.f32.mrb[0].mxu0
      %v821 = vadd.f32 0.0, %v820
      %v822 = vpop.f32.mrb[0].mxu0
      %823 = vdwg.mxu0
      %v824 = vadd.f32 %v517, %v794
      %v825 = vadd.f32 %v520, %v797
      %v826 = vadd.f32 %v525, %v802
      %v827 = vadd.f32 %v528, %v805
      %v828 = vadd.f32 %v533, %v810
      %v829 = vadd.f32 %v536, %v813
      %v830 = vadd.f32 %v541, %v818
      %v831 = vadd.f32 %v544, %v821
      %s832 = scalar_lea.vmem %s206, 144
      %v833 = vld [vmem:[%s832] sm:$0xf]
      %v834 = vld [vmem:[%s832 + $0x8] sm:$0xf]
      %v835 = vld [vmem:[%s832 + $0x10] sm:$0xf]
      %v836 = vld [vmem:[%s832 + $0x18] sm:$0xf]
      %v837 = vld [vmem:[%s832 + $0x20] sm:$0xf]
      %v838 = vld [vmem:[%s832 + $0x28] sm:$0xf]
      %v839 = vld [vmem:[%s832 + $0x30] sm:$0xf]
      %v840 = vld [vmem:[%s832 + $0x38] sm:$0xf]
      %s841 = scalar_lea.vmem %s210, 192
      %v842 = vld [vmem:[%s841] sm:$0xf]
      %v843 = vld [vmem:[%s841 + $0x4] sm:$0xf]
      %v844 = vld [vmem:[%s841 + $0x8] sm:$0xf]
      %v845 = vld [vmem:[%s841 + $0xc] sm:$0xf]
      %v846 = vld [vmem:[%s841 + $0x10] sm:$0xf]
      %v847 = vld [vmem:[%s841 + $0x14] sm:$0xf]
      %v848 = vld [vmem:[%s841 + $0x18] sm:$0xf]
      %v849 = vld [vmem:[%s841 + $0x1c] sm:$0xf]
      %v850 = vld [vmem:[%s841 + $0x20] sm:$0xf]
      %v851 = vld [vmem:[%s841 + $0x24] sm:$0xf]
      %v852 = vld [vmem:[%s841 + $0x28] sm:$0xf]
      %v853 = vld [vmem:[%s841 + $0x2c] sm:$0xf]
      %v854 = vld [vmem:[%s841 + $0x30] sm:$0xf]
      %v855 = vld [vmem:[%s841 + $0x34] sm:$0xf]
      %v856 = vld [vmem:[%s841 + $0x38] sm:$0xf]
      %v857 = vld [vmem:[%s841 + $0x3c] sm:$0xf]
      %v866 = vunpack.c.l.b16 %v833
      %v867 = vunpack.c.l.b16 %v834
      %v868 = vunpack.c.l.b16 %v835
      %v869 = vunpack.c.l.b16 %v836
      %v870 = vunpack.c.l.b16 %v837
      %v871 = vunpack.c.l.b16 %v838
      %v872 = vunpack.c.l.b16 %v839
      %v873 = vunpack.c.l.b16 %v840
      %v874 = vpack.c.b16 %v867, %v866
      %v875 = vpack.c.b16 %v869, %v868
      %v876 = vpack.c.b16 %v871, %v870
      %v877 = vpack.c.b16 %v873, %v872
      %v898 = vunpack.c.l.b16 %v842
      %v899 = vunpack.c.l.b16 %v843
      %v900 = vunpack.c.l.b16 %v844
      %v901 = vunpack.c.l.b16 %v845
      %v902 = vunpack.c.l.b16 %v846
      %v903 = vunpack.c.l.b16 %v847
      %v904 = vunpack.c.l.b16 %v848
      %v905 = vunpack.c.l.b16 %v849
      %v906 = vunpack.c.l.b16 %v850
      %v907 = vunpack.c.l.b16 %v851
      %v908 = vunpack.c.l.b16 %v852
      %v909 = vunpack.c.l.b16 %v853
      %v910 = vunpack.c.l.b16 %v854
      %v911 = vunpack.c.l.b16 %v855
      %v912 = vunpack.c.l.b16 %v856
      %v913 = vunpack.c.l.b16 %v857
      %v914 = vpack.c.b16 %v899, %v898
      %v915 = vpack.c.b16 %v901, %v900
      %v916 = vpack.c.b16 %v903, %v902
      %v917 = vpack.c.b16 %v905, %v904
      %v918 = vpack.c.b16 %v907, %v906
      %v919 = vpack.c.b16 %v909, %v908
      %v920 = vpack.c.b16 %v911, %v910
      %v921 = vpack.c.b16 %v913, %v912
      %930 = vmatprep.subr.bf16.mxu0 0
      %931 = vmatpush1.bf16.msra.mxu0 %v914
      %932 = vmatprep.subr.bf16.mxu0 0
      %933 = vmatpush1.bf16.msra.mxu0 %v915
      %934 = vmatprep.subr.bf16.mxu0 0
      %935 = vmatpush1.bf16.msra.mxu0 %v916
      %936 = vmatprep.subr.bf16.mxu0 0
      %937 = vmatpush1.bf16.msra.mxu0 %v917
      %938 = vmatprep.subr.bf16.mxu0 0
      %939 = vmatpush1.bf16.msra.mxu0 %v918
      %940 = vmatprep.subr.bf16.mxu0 0
      %941 = vmatpush1.bf16.msra.mxu0 %v919
      %942 = vmatprep.subr.bf16.mxu0 0
      %943 = vmatpush1.bf16.msra.mxu0 %v920
      %944 = vmatprep.subr.bf16.mxu0 0
      %945 = vmatpush1.bf16.msra.mxu0 %v921
      %946 = vmatprep.subr.bf16.mxu0 0
      %947 = vmatpush1.bf16.msra.mxu0 0
      %948 = vmatprep.subr.bf16.mxu0 0
      %949 = vmatpush1.bf16.msra.mxu0 0
      %950 = vmatprep.subr.bf16.mxu0 0
      %951 = vmatpush1.bf16.msra.mxu0 0
      %952 = vmatprep.subr.bf16.mxu0 0
      %953 = vmatpush1.bf16.msra.mxu0 0
      %954 = vmatprep.subr.bf16.mxu0 0
      %955 = vmatpush1.bf16.msra.mxu0 0
      %956 = vmatprep.subr.bf16.mxu0 0
      %957 = vmatpush1.bf16.msra.mxu0 0
      %958 = vmatprep.subr.bf16.mxu0 0
      %959 = vmatpush1.bf16.msra.mxu0 0
      %960 = vmatprep.subr.bf16.mxu0 0
      %961 = vmatpush1.bf16.msra.mxu0 0
      %962 = vmatprep.mubr.bf16.mxu0 0
      %963 = vmatmul.mubr.bf16.gmra.mrb[0].mxu0 %v874
      %v964 = vpop.f32.mrb[0].mxu0
      %v965 = vadd.f32 0.0, %v964
      %v966 = vpop.f32.mrb[0].mxu0
      %v967 = vpop.f32.mrb[0].mxu0
      %v968 = vadd.f32 0.0, %v967
      %v969 = vpop.f32.mrb[0].mxu0
      %970 = vmatprep.mubr.bf16.mxu0 0
      %971 = vmatmul.mubr.bf16.gmra.mrb[0].mxu0 %v875
      %v972 = vpop.f32.mrb[0].mxu0
      %v973 = vadd.f32 0.0, %v972
      %v974 = vpop.f32.mrb[0].mxu0
      %v975 = vpop.f32.mrb[0].mxu0
      %v976 = vadd.f32 0.0, %v975
      %v977 = vpop.f32.mrb[0].mxu0
      %978 = vmatprep.mubr.bf16.mxu0 0
      %979 = vmatmul.mubr.bf16.gmra.mrb[0].mxu0 %v876
      %v980 = vpop.f32.mrb[0].mxu0
      %v981 = vadd.f32 0.0, %v980
      %v982 = vpop.f32.mrb[0].mxu0
      %v983 = vpop.f32.mrb[0].mxu0
      %v984 = vadd.f32 0.0, %v983
      %v985 = vpop.f32.mrb[0].mxu0
      %986 = vmatprep.mubr.bf16.mxu0 0
      %987 = vmatmul.mubr.bf16.gmra.mrb[0].mxu0 %v877
      %v988 = vpop.f32.mrb[0].mxu0
      %v989 = vadd.f32 0.0, %v988
      %v990 = vpop.f32.mrb[0].mxu0
      %v991 = vpop.f32.mrb[0].mxu0
      %v992 = vadd.f32 0.0, %v991
      %v993 = vpop.f32.mrb[0].mxu0
      %994 = vdwg.mxu0
      %v995 = vadd.f32 %v824, %v965
      %v996 = vadd.f32 %v825, %v968
      %v997 = vadd.f32 %v826, %v973
      %v998 = vadd.f32 %v827, %v976
      %v999 = vadd.f32 %v828, %v981
      %v1000 = vadd.f32 %v829, %v984
      %v1001 = vadd.f32 %v830, %v989
      %v1002 = vadd.f32 %v831, %v992
      %s1003 = scalar_lea.vmem %s206, 216
      %v1004 = vld [vmem:[%s1003] sm:$0xf]
      %v1005 = vld [vmem:[%s1003 + $0x8] sm:$0xf]
      %v1006 = vld [vmem:[%s1003 + $0x10] sm:$0xf]
      %v1007 = vld [vmem:[%s1003 + $0x18] sm:$0xf]
      %v1008 = vld [vmem:[%s1003 + $0x20] sm:$0xf]
      %v1009 = vld [vmem:[%s1003 + $0x28] sm:$0xf]
      %v1010 = vld [vmem:[%s1003 + $0x30] sm:$0xf]
      %v1011 = vld [vmem:[%s1003 + $0x38] sm:$0xf]
      %s1012 = scalar_lea.vmem %s210, 256
      %v1013 = vld [vmem:[%s1012] sm:$0xf]
      %v1014 = vld [vmem:[%s1012 + $0x4] sm:$0xf]
      %v1015 = vld [vmem:[%s1012 + $0x8] sm:$0xf]
      %v1016 = vld [vmem:[%s1012 + $0xc] sm:$0xf]
      %v1017 = vld [vmem:[%s1012 + $0x10] sm:$0xf]
      %v1018 = vld [vmem:[%s1012 + $0x14] sm:$0xf]
      %v1019 = vld [vmem:[%s1012 + $0x18] sm:$0xf]
      %v1020 = vld [vmem:[%s1012 + $0x1c] sm:$0xf]
      %v1021 = vld [vmem:[%s1012 + $0x20] sm:$0xf]
      %v1022 = vld [vmem:[%s1012 + $0x24] sm:$0xf]
      %v1023 = vld [vmem:[%s1012 + $0x28] sm:$0xf]
      %v1024 = vld [vmem:[%s1012 + $0x2c] sm:$0xf]
      %v1025 = vld [vmem:[%s1012 + $0x30] sm:$0xf]
      %v1026 = vld [vmem:[%s1012 + $0x34] sm:$0xf]
      %v1027 = vld [vmem:[%s1012 + $0x38] sm:$0xf]
      %v1028 = vld [vmem:[%s1012 + $0x3c] sm:$0xf]
      %v1037 = vunpack.c.l.b16 %v1004
      %v1038 = vunpack.c.l.b16 %v1005
      %v1039 = vunpack.c.l.b16 %v1006
      %v1040 = vunpack.c.l.b16 %v1007
      %v1041 = vunpack.c.l.b16 %v1008
      %v1042 = vunpack.c.l.b16 %v1009
      %v1043 = vunpack.c.l.b16 %v1010
      %v1044 = vunpack.c.l.b16 %v1011
      %v1045 = vpack.c.b16 %v1038, %v1037
      %v1046 = vpack.c.b16 %v1040, %v1039
      %v1047 = vpack.c.b16 %v1042, %v1041
      %v1048 = vpack.c.b16 %v1044, %v1043
      %v1069 = vunpack.c.l.b16 %v1013
      %v1070 = vunpack.c.l.b16 %v1014
      %v1071 = vunpack.c.l.b16 %v1015
      %v1072 = vunpack.c.l.b16 %v1016
      %v1073 = vunpack.c.l.b16 %v1017
      %v1074 = vunpack.c.l.b16 %v1018
      %v1075 = vunpack.c.l.b16 %v1019
      %v1076 = vunpack.c.l.b16 %v1020
      %v1077 = vunpack.c.l.b16 %v1021
      %v1078 = vunpack.c.l.b16 %v1022
      %v1079 = vunpack.c.l.b16 %v1023
      %v1080 = vunpack.c.l.b16 %v1024
      %v1081 = vunpack.c.l.b16 %v1025
      %v1082 = vunpack.c.l.b16 %v1026
      %v1083 = vunpack.c.l.b16 %v1027
      %v1084 = vunpack.c.l.b16 %v1028
      %v1085 = vpack.c.b16 %v1070, %v1069
      %v1086 = vpack.c.b16 %v1072, %v1071
      %v1087 = vpack.c.b16 %v1074, %v1073
      %v1088 = vpack.c.b16 %v1076, %v1075
      %v1089 = vpack.c.b16 %v1078, %v1077
      %v1090 = vpack.c.b16 %v1080, %v1079
      %v1091 = vpack.c.b16 %v1082, %v1081
      %v1092 = vpack.c.b16 %v1084, %v1083
      %1101 = vmatprep.subr.bf16.mxu0 0
      %1102 = vmatpush1.bf16.msra.mxu0 %v1085
      %1103 = vmatprep.subr.bf16.mxu0 0
      %1104 = vmatpush1.bf16.msra.mxu0 %v1086
      %1105 = vmatprep.subr.bf16.mxu0 0
      %1106 = vmatpush1.bf16.msra.mxu0 %v1087
      %1107 = vmatprep.subr.bf16.mxu0 0
      %1108 = vmatpush1.bf16.msra.mxu0 %v1088
      %1109 = vmatprep.subr.bf16.mxu0 0
      %1110 = vmatpush1.bf16.msra.mxu0 %v1089
      %1111 = vmatprep.subr.bf16.mxu0 0
      %1112 = vmatpush1.bf16.msra.mxu0 %v1090
      %1113 = vmatprep.subr.bf16.mxu0 0
      %1114 = vmatpush1.bf16.msra.mxu0 %v1091
      %1115 = vmatprep.subr.bf16.mxu0 0
      %1116 = vmatpush1.bf16.msra.mxu0 %v1092
      %1117 = vmatprep.subr.bf16.mxu0 0
      %1118 = vmatpush1.bf16.msra.mxu0 0
      %1119 = vmatprep.subr.bf16.mxu0 0
      %1120 = vmatpush1.bf16.msra.mxu0 0
      %1121 = vmatprep.subr.bf16.mxu0 0
      %1122 = vmatpush1.bf16.msra.mxu0 0
      %1123 = vmatprep.subr.bf16.mxu0 0
      %1124 = vmatpush1.bf16.msra.mxu0 0
      %1125 = vmatprep.subr.bf16.mxu0 0
      %1126 = vmatpush1.bf16.msra.mxu0 0
      %1127 = vmatprep.subr.bf16.mxu0 0
      %1128 = vmatpush1.bf16.msra.mxu0 0
      %1129 = vmatprep.subr.bf16.mxu0 0
      %1130 = vmatpush1.bf16.msra.mxu0 0
      %1131 = vmatprep.subr.bf16.mxu0 0
      %1132 = vmatpush1.bf16.msra.mxu0 0
      %1133 = vmatprep.mubr.bf16.mxu0 0
      %1134 = vmatmul.mubr.bf16.gmra.mrb[0].mxu0 %v1045
      %v1135 = vpop.f32.mrb[0].mxu0
      %v1136 = vadd.f32 0.0, %v1135
      %v1137 = vpop.f32.mrb[0].mxu0
      %v1138 = vpop.f32.mrb[0].mxu0
      %v1139 = vadd.f32 0.0, %v1138
      %v1140 = vpop.f32.mrb[0].mxu0
      %1141 = vmatprep.mubr.bf16.mxu0 0
      %1142 = vmatmul.mubr.bf16.gmra.mrb[0].mxu0 %v1046
      %v1143 = vpop.f32.mrb[0].mxu0
      %v1144 = vadd.f32 0.0, %v1143
      %v1145 = vpop.f32.mrb[0].mxu0
      %v1146 = vpop.f32.mrb[0].mxu0
      %v1147 = vadd.f32 0.0, %v1146
      %v1148 = vpop.f32.mrb[0].mxu0
      %1149 = vmatprep.mubr.bf16.mxu0 0
      %1150 = vmatmul.mubr.bf16.gmra.mrb[0].mxu0 %v1047
      %v1151 = vpop.f32.mrb[0].mxu0
      %v1152 = vadd.f32 0.0, %v1151
      %v1153 = vpop.f32.mrb[0].mxu0
      %v1154 = vpop.f32.mrb[0].mxu0
      %v1155 = vadd.f32 0.0, %v1154
      %v1156 = vpop.f32.mrb[0].mxu0
      %1157 = vmatprep.mubr.bf16.mxu0 0
      %1158 = vmatmul.mubr.bf16.gmra.mrb[0].mxu0 %v1048
      %v1159 = vpop.f32.mrb[0].mxu0
      %v1160 = vadd.f32 0.0, %v1159
      %v1161 = vpop.f32.mrb[0].mxu0
      %v1162 = vpop.f32.mrb[0].mxu0
      %v1163 = vadd.f32 0.0, %v1162
      %v1164 = vpop.f32.mrb[0].mxu0
      %1165 = vdwg.mxu0
      %v1166 = vadd.f32 %v995, %v1136
      %v1167 = vadd.f32 %v996, %v1139
      %v1168 = vadd.f32 %v997, %v1144
      %v1169 = vadd.f32 %v998, %v1147
      %v1170 = vadd.f32 %v999, %v1152
      %v1171 = vadd.f32 %v1000, %v1155
      %v1172 = vadd.f32 %v1001, %v1160
      %v1173 = vadd.f32 %v1002, %v1163
      %v1174 = vld [vmem:[%s832] sm:$0xf]
      %v1175 = vld [vmem:[%s832 + $0x4] sm:$0x1]
      %v1176 = vld [vmem:[%s832 + $0x8] sm:$0xf]
      %v1177 = vld [vmem:[%s832 + $0xc] sm:$0x1]
      %v1178 = vld [vmem:[%s832 + $0x10] sm:$0xf]
      %v1179 = vld [vmem:[%s832 + $0x14] sm:$0x1]
      %v1180 = vld [vmem:[%s832 + $0x18] sm:$0xf]
      %v1181 = vld [vmem:[%s832 + $0x1c] sm:$0x1]
      %v1182 = vld [vmem:[%s832 + $0x20] sm:$0xf]
      %v1183 = vld [vmem:[%s832 + $0x24] sm:$0x1]
      %v1184 = vld [vmem:[%s832 + $0x28] sm:$0xf]
      %v1185 = vld [vmem:[%s832 + $0x2c] sm:$0x1]
      %v1186 = vld [vmem:[%s832 + $0x30] sm:$0xf]
      %v1187 = vld [vmem:[%s832 + $0x34] sm:$0x1]
      %v1188 = vld [vmem:[%s832 + $0x38] sm:$0xf]
      %v1189 = vld [vmem:[%s832 + $0x3c] sm:$0x1]
      %v1191 = vshrl.u32 %v1174, 16
      %v1193 = vrot.slane %v1191, 4
      %v1194 = vshll.u32 %v1174, 16
      %v1196 = vrot.slane %v1194, 5
      %v1197 = vor.u32 %v1193, %v1196
      %v1198 = vrot.slane %v1197, 4
      %v1200 = vshll.u32 %v1175, 16
      %v1202 = vrot.slane %v1200, 5
      %v1203 = vsel %vm565, %v1198, %v1202
      %v1205 = vshrl.u32 %v1176, 16
      %v1207 = vrot.slane %v1205, 4
      %v1208 = vshll.u32 %v1176, 16
      %v1210 = vrot.slane %v1208, 5
      %v1211 = vor.u32 %v1207, %v1210
      %v1212 = vrot.slane %v1211, 4
      %v1214 = vshll.u32 %v1177, 16
      %v1216 = vrot.slane %v1214, 5
      %v1217 = vsel %vm565, %v1212, %v1216
      %v1219 = vshrl.u32 %v1178, 16
      %v1221 = vrot.slane %v1219, 4
      %v1222 = vshll.u32 %v1178, 16
      %v1224 = vrot.slane %v1222, 5
      %v1225 = vor.u32 %v1221, %v1224
      %v1226 = vrot.slane %v1225, 4
      %v1228 = vshll.u32 %v1179, 16
      %v1230 = vrot.slane %v1228, 5
      %v1231 = vsel %vm565, %v1226, %v1230
      %v1233 = vshrl.u32 %v1180, 16
      %v1235 = vrot.slane %v1233, 4
      %v1236 = vshll.u32 %v1180, 16
      %v1238 = vrot.slane %v1236, 5
      %v1239 = vor.u32 %v1235, %v1238
      %v1240 = vrot.slane %v1239, 4
      %v1242 = vshll.u32 %v1181, 16
      %v1244 = vrot.slane %v1242, 5
      %v1245 = vsel %vm565, %v1240, %v1244
      %v1247 = vshrl.u32 %v1182, 16
      %v1249 = vrot.slane %v1247, 4
      %v1250 = vshll.u32 %v1182, 16
      %v1252 = vrot.slane %v1250, 5
      %v1253 = vor.u32 %v1249, %v1252
      %v1254 = vrot.slane %v1253, 4
      %v1256 = vshll.u32 %v1183, 16
      %v1258 = vrot.slane %v1256, 5
      %v1259 = vsel %vm565, %v1254, %v1258
      %v1261 = vshrl.u32 %v1184, 16
      %v1263 = vrot.slane %v1261, 4
      %v1264 = vshll.u32 %v1184, 16
      %v1266 = vrot.slane %v1264, 5
      %v1267 = vor.u32 %v1263, %v1266
      %v1268 = vrot.slane %v1267, 4
      %v1270 = vshll.u32 %v1185, 16
      %v1272 = vrot.slane %v1270, 5
      %v1273 = vsel %vm565, %v1268, %v1272
      %v1275 = vshrl.u32 %v1186, 16
      %v1277 = vrot.slane %v1275, 4
      %v1278 = vshll.u32 %v1186, 16
      %v1280 = vrot.slane %v1278, 5
      %v1281 = vor.u32 %v1277, %v1280
      %v1282 = vrot.slane %v1281, 4
      %v1284 = vshll.u32 %v1187, 16
      %v1286 = vrot.slane %v1284, 5
      %v1287 = vsel %vm565, %v1282, %v1286
      %v1289 = vshrl.u32 %v1188, 16
      %v1291 = vrot.slane %v1289, 4
      %v1292 = vshll.u32 %v1188, 16
      %v1294 = vrot.slane %v1292, 5
      %v1295 = vor.u32 %v1291, %v1294
      %v1296 = vrot.slane %v1295, 4
      %v1298 = vshll.u32 %v1189, 16
      %v1300 = vrot.slane %v1298, 5
      %v1301 = vsel %vm565, %v1296, %v1300
      %s1302 = scalar_lea.vmem %s210, 320
      %v1303 = vld [vmem:[%s1302] sm:$0xf]
      %v1304 = vld [vmem:[%s1302 + $0x4] sm:$0xf]
      %v1305 = vld [vmem:[%s1302 + $0x8] sm:$0xf]
      %v1306 = vld [vmem:[%s1302 + $0xc] sm:$0xf]
      %v1307 = vld [vmem:[%s1302 + $0x10] sm:$0xf]
      %v1308 = vld [vmem:[%s1302 + $0x14] sm:$0xf]
      %v1309 = vld [vmem:[%s1302 + $0x18] sm:$0xf]
      %v1310 = vld [vmem:[%s1302 + $0x1c] sm:$0xf]
      %v1311 = vld [vmem:[%s1302 + $0x20] sm:$0xf]
      %v1312 = vld [vmem:[%s1302 + $0x24] sm:$0xf]
      %v1313 = vld [vmem:[%s1302 + $0x28] sm:$0xf]
      %v1314 = vld [vmem:[%s1302 + $0x2c] sm:$0xf]
      %v1315 = vld [vmem:[%s1302 + $0x30] sm:$0xf]
      %v1316 = vld [vmem:[%s1302 + $0x34] sm:$0xf]
      %v1317 = vld [vmem:[%s1302 + $0x38] sm:$0xf]
      %v1318 = vld [vmem:[%s1302 + $0x3c] sm:$0xf]
      %v1319 = vunpack.c.l.b16 %v1203
      %v1320 = vunpack.c.l.b16 %v1217
      %v1321 = vunpack.c.l.b16 %v1231
      %v1322 = vunpack.c.l.b16 %v1245
      %v1323 = vunpack.c.l.b16 %v1259
      %v1324 = vunpack.c.l.b16 %v1273
      %v1325 = vunpack.c.l.b16 %v1287
      %v1326 = vunpack.c.l.b16 %v1301
      %v1327 = vpack.c.b16 %v1320, %v1319
      %v1328 = vpack.c.b16 %v1322, %v1321
      %v1329 = vpack.c.b16 %v1324, %v1323
      %v1330 = vpack.c.b16 %v1326, %v1325
      %v1351 = vunpack.c.l.b16 %v1303
      %v1352 = vunpack.c.l.b16 %v1304
      %v1353 = vunpack.c.l.b16 %v1305
      %v1354 = vunpack.c.l.b16 %v1306
      %v1355 = vunpack.c.l.b16 %v1307
      %v1356 = vunpack.c.l.b16 %v1308
      %v1357 = vunpack.c.l.b16 %v1309
      %v1358 = vunpack.c.l.b16 %v1310
      %v1359 = vunpack.c.l.b16 %v1311
      %v1360 = vunpack.c.l.b16 %v1312
      %v1361 = vunpack.c.l.b16 %v1313
      %v1362 = vunpack.c.l.b16 %v1314
      %v1363 = vunpack.c.l.b16 %v1315
      %v1364 = vunpack.c.l.b16 %v1316
      %v1365 = vunpack.c.l.b16 %v1317
      %v1366 = vunpack.c.l.b16 %v1318
      %v1367 = vpack.c.b16 %v1352, %v1351
      %v1368 = vpack.c.b16 %v1354, %v1353
      %v1369 = vpack.c.b16 %v1356, %v1355
      %v1370 = vpack.c.b16 %v1358, %v1357
      %v1371 = vpack.c.b16 %v1360, %v1359
      %v1372 = vpack.c.b16 %v1362, %v1361
      %v1373 = vpack.c.b16 %v1364, %v1363
      %v1374 = vpack.c.b16 %v1366, %v1365
      %1383 = vmatprep.subr.bf16.mxu0 0
      %1384 = vmatpush1.bf16.msra.mxu0 %v1367
      %1385 = vmatprep.subr.bf16.mxu0 0
      %1386 = vmatpush1.bf16.msra.mxu0 %v1368
      %1387 = vmatprep.subr.bf16.mxu0 0
      %1388 = vmatpush1.bf16.msra.mxu0 %v1369
      %1389 = vmatprep.subr.bf16.mxu0 0
      %1390 = vmatpush1.bf16.msra.mxu0 %v1370
      %1391 = vmatprep.subr.bf16.mxu0 0
      %1392 = vmatpush1.bf16.msra.mxu0 %v1371
      %1393 = vmatprep.subr.bf16.mxu0 0
      %1394 = vmatpush1.bf16.msra.mxu0 %v1372
      %1395 = vmatprep.subr.bf16.mxu0 0
      %1396 = vmatpush1.bf16.msra.mxu0 %v1373
      %1397 = vmatprep.subr.bf16.mxu0 0
      %1398 = vmatpush1.bf16.msra.mxu0 %v1374
      %1399 = vmatprep.subr.bf16.mxu0 0
      %1400 = vmatpush1.bf16.msra.mxu0 0
      %1401 = vmatprep.subr.bf16.mxu0 0
      %1402 = vmatpush1.bf16.msra.mxu0 0
      %1403 = vmatprep.subr.bf16.mxu0 0
      %1404 = vmatpush1.bf16.msra.mxu0 0
      %1405 = vmatprep.subr.bf16.mxu0 0
      %1406 = vmatpush1.bf16.msra.mxu0 0
      %1407 = vmatprep.subr.bf16.mxu0 0
      %1408 = vmatpush1.bf16.msra.mxu0 0
      %1409 = vmatprep.subr.bf16.mxu0 0
      %1410 = vmatpush1.bf16.msra.mxu0 0
      %1411 = vmatprep.subr.bf16.mxu0 0
      %1412 = vmatpush1.bf16.msra.mxu0 0
      %1413 = vmatprep.subr.bf16.mxu0 0
      %1414 = vmatpush1.bf16.msra.mxu0 0
      %1415 = vmatprep.mubr.bf16.mxu0 0
      %1416 = vmatmul.mubr.bf16.gmra.mrb[0].mxu0 %v1327
      %v1417 = vpop.f32.mrb[0].mxu0
      %v1418 = vadd.f32 0.0, %v1417
      %v1419 = vpop.f32.mrb[0].mxu0
      %v1420 = vpop.f32.mrb[0].mxu0
      %v1421 = vadd.f32 0.0, %v1420
      %v1422 = vpop.f32.mrb[0].mxu0
      %1423 = vmatprep.mubr.bf16.mxu0 0
      %1424 = vmatmul.mubr.bf16.gmra.mrb[0].mxu0 %v1328
      %v1425 = vpop.f32.mrb[0].mxu0
      %v1426 = vadd.f32 0.0, %v1425
      %v1427 = vpop.f32.mrb[0].mxu0
      %v1428 = vpop.f32.mrb[0].mxu0
      %v1429 = vadd.f32 0.0, %v1428
      %v1430 = vpop.f32.mrb[0].mxu0
      %1431 = vmatprep.mubr.bf16.mxu0 0
      %1432 = vmatmul.mubr.bf16.gmra.mrb[0].mxu0 %v1329
      %v1433 = vpop.f32.mrb[0].mxu0
      %v1434 = vadd.f32 0.0, %v1433
      %v1435 = vpop.f32.mrb[0].mxu0
      %v1436 = vpop.f32.mrb[0].mxu0
      %v1437 = vadd.f32 0.0, %v1436
      %v1438 = vpop.f32.mrb[0].mxu0
      %1439 = vmatprep.mubr.bf16.mxu0 0
      %1440 = vmatmul.mubr.bf16.gmra.mrb[0].mxu0 %v1330
      %v1441 = vpop.f32.mrb[0].mxu0
      %v1442 = vadd.f32 0.0, %v1441
      %v1443 = vpop.f32.mrb[0].mxu0
      %v1444 = vpop.f32.mrb[0].mxu0
      %v1445 = vadd.f32 0.0, %v1444
      %v1446 = vpop.f32.mrb[0].mxu0
      %1447 = vdwg.mxu0
      %v1448 = vadd.f32 %v1166, %v1418
      %v1449 = vadd.f32 %v1167, %v1421
      %v1450 = vadd.f32 %v1168, %v1426
      %v1451 = vadd.f32 %v1169, %v1429
      %v1452 = vadd.f32 %v1170, %v1434
      %v1453 = vadd.f32 %v1171, %v1437
      %v1454 = vadd.f32 %v1172, %v1442
      %v1455 = vadd.f32 %v1173, %v1445
      %s1456 = scalar_lea.vmem %s206, 8
      %v1457 = vld [vmem:[%s1456] sm:$0xf]
      %v1458 = vld [vmem:[%s1456 + $0x8] sm:$0xf]
      %v1459 = vld [vmem:[%s1456 + $0x10] sm:$0xf]
      %v1460 = vld [vmem:[%s1456 + $0x18] sm:$0xf]
      %v1461 = vld [vmem:[%s1456 + $0x20] sm:$0xf]
      %v1462 = vld [vmem:[%s1456 + $0x28] sm:$0xf]
      %v1463 = vld [vmem:[%s1456 + $0x30] sm:$0xf]
      %v1464 = vld [vmem:[%s1456 + $0x38] sm:$0xf]
      %s1465 = scalar_lea.vmem %s210, 384
      %v1466 = vld [vmem:[%s1465] sm:$0xf]
      %v1467 = vld [vmem:[%s1465 + $0x4] sm:$0xf]
      %v1468 = vld [vmem:[%s1465 + $0x8] sm:$0xf]
      %v1469 = vld [vmem:[%s1465 + $0xc] sm:$0xf]
      %v1470 = vld [vmem:[%s1465 + $0x10] sm:$0xf]
      %v1471 = vld [vmem:[%s1465 + $0x14] sm:$0xf]
      %v1472 = vld [vmem:[%s1465 + $0x18] sm:$0xf]
      %v1473 = vld [vmem:[%s1465 + $0x1c] sm:$0xf]
      %v1474 = vld [vmem:[%s1465 + $0x20] sm:$0xf]
      %v1475 = vld [vmem:[%s1465 + $0x24] sm:$0xf]
      %v1476 = vld [vmem:[%s1465 + $0x28] sm:$0xf]
      %v1477 = vld [vmem:[%s1465 + $0x2c] sm:$0xf]
      %v1478 = vld [vmem:[%s1465 + $0x30] sm:$0xf]
      %v1479 = vld [vmem:[%s1465 + $0x34] sm:$0xf]
      %v1480 = vld [vmem:[%s1465 + $0x38] sm:$0xf]
      %v1481 = vld [vmem:[%s1465 + $0x3c] sm:$0xf]
      %v1490 = vunpack.c.l.b16 %v1457
      %v1491 = vunpack.c.l.b16 %v1458
      %v1492 = vunpack.c.l.b16 %v1459
      %v1493 = vunpack.c.l.b16 %v1460
      %v1494 = vunpack.c.l.b16 %v1461
      %v1495 = vunpack.c.l.b16 %v1462
      %v1496 = vunpack.c.l.b16 %v1463
      %v1497 = vunpack.c.l.b16 %v1464
      %v1498 = vpack.c.b16 %v1491, %v1490
      %v1499 = vpack.c.b16 %v1493, %v1492
      %v1500 = vpack.c.b16 %v1495, %v1494
      %v1501 = vpack.c.b16 %v1497, %v1496
      %v1522 = vunpack.c.l.b16 %v1466
      %v1523 = vunpack.c.l.b16 %v1467
      %v1524 = vunpack.c.l.b16 %v1468
      %v1525 = vunpack.c.l.b16 %v1469
      %v1526 = vunpack.c.l.b16 %v1470
      %v1527 = vunpack.c.l.b16 %v1471
      %v1528 = vunpack.c.l.b16 %v1472
      %v1529 = vunpack.c.l.b16 %v1473
      %v1530 = vunpack.c.l.b16 %v1474
      %v1531 = vunpack.c.l.b16 %v1475
      %v1532 = vunpack.c.l.b16 %v1476
      %v1533 = vunpack.c.l.b16 %v1477
      %v1534 = vunpack.c.l.b16 %v1478
      %v1535 = vunpack.c.l.b16 %v1479
      %v1536 = vunpack.c.l.b16 %v1480
      %v1537 = vunpack.c.l.b16 %v1481
      %v1538 = vpack.c.b16 %v1523, %v1522
      %v1539 = vpack.c.b16 %v1525, %v1524
      %v1540 = vpack.c.b16 %v1527, %v1526
      %v1541 = vpack.c.b16 %v1529, %v1528
      %v1542 = vpack.c.b16 %v1531, %v1530
      %v1543 = vpack.c.b16 %v1533, %v1532
      %v1544 = vpack.c.b16 %v1535, %v1534
      %v1545 = vpack.c.b16 %v1537, %v1536
      %1554 = vmatprep.subr.bf16.mxu0 0
      %1555 = vmatpush1.bf16.msra.mxu0 %v1538
      %1556 = vmatprep.subr.bf16.mxu0 0
      %1557 = vmatpush1.bf16.msra.mxu0 %v1539
      %1558 = vmatprep.subr.bf16.mxu0 0
      %1559 = vmatpush1.bf16.msra.mxu0 %v1540
      %1560 = vmatprep.subr.bf16.mxu0 0
      %1561 = vmatpush1.bf16.msra.mxu0 %v1541
      %1562 = vmatprep.subr.bf16.mxu0 0
      %1563 = vmatpush1.bf16.msra.mxu0 %v1542
      %1564 = vmatprep.subr.bf16.mxu0 0
      %1565 = vmatpush1.bf16.msra.mxu0 %v1543
      %1566 = vmatprep.subr.bf16.mxu0 0
      %1567 = vmatpush1.bf16.msra.mxu0 %v1544
      %1568 = vmatprep.subr.bf16.mxu0 0
      %1569 = vmatpush1.bf16.msra.mxu0 %v1545
      %1570 = vmatprep.subr.bf16.mxu0 0
      %1571 = vmatpush1.bf16.msra.mxu0 0
      %1572 = vmatprep.subr.bf16.mxu0 0
      %1573 = vmatpush1.bf16.msra.mxu0 0
      %1574 = vmatprep.subr.bf16.mxu0 0
      %1575 = vmatpush1.bf16.msra.mxu0 0
      %1576 = vmatprep.subr.bf16.mxu0 0
      %1577 = vmatpush1.bf16.msra.mxu0 0
      %1578 = vmatprep.subr.bf16.mxu0 0
      %1579 = vmatpush1.bf16.msra.mxu0 0
      %1580 = vmatprep.subr.bf16.mxu0 0
      %1581 = vmatpush1.bf16.msra.mxu0 0
      %1582 = vmatprep.subr.bf16.mxu0 0
      %1583 = vmatpush1.bf16.msra.mxu0 0
      %1584 = vmatprep.subr.bf16.mxu0 0
      %1585 = vmatpush1.bf16.msra.mxu0 0
      %1586 = vmatprep.mubr.bf16.mxu0 0
      %1587 = vmatmul.mubr.bf16.gmra.mrb[0].mxu0 %v1498
      %v1588 = vpop.f32.mrb[0].mxu0
      %v1589 = vadd.f32 0.0, %v1588
      %v1590 = vpop.f32.mrb[0].mxu0
      %v1591 = vpop.f32.mrb[0].mxu0
      %v1592 = vadd.f32 0.0, %v1591
      %v1593 = vpop.f32.mrb[0].mxu0
      %1594 = vmatprep.mubr.bf16.mxu0 0
      %1595 = vmatmul.mubr.bf16.gmra.mrb[0].mxu0 %v1499
      %v1596 = vpop.f32.mrb[0].mxu0
      %v1597 = vadd.f32 0.0, %v1596
      %v1598 = vpop.f32.mrb[0].mxu0
      %v1599 = vpop.f32.mrb[0].mxu0
      %v1600 = vadd.f32 0.0, %v1599
      %v1601 = vpop.f32.mrb[0].mxu0
      %1602 = vmatprep.mubr.bf16.mxu0 0
      %1603 = vmatmul.mubr.bf16.gmra.mrb[0].mxu0 %v1500
      %v1604 = vpop.f32.mrb[0].mxu0
      %v1605 = vadd.f32 0.0, %v1604
      %v1606 = vpop.f32.mrb[0].mxu0
      %v1607 = vpop.f32.mrb[0].mxu0
      %v1608 = vadd.f32 0.0, %v1607
      %v1609 = vpop.f32.mrb[0].mxu0
      %1610 = vmatprep.mubr.bf16.mxu0 0
      %1611 = vmatmul.mubr.bf16.gmra.mrb[0].mxu0 %v1501
      %v1612 = vpop.f32.mrb[0].mxu0
      %v1613 = vadd.f32 0.0, %v1612
      %v1614 = vpop.f32.mrb[0].mxu0
      %v1615 = vpop.f32.mrb[0].mxu0
      %v1616 = vadd.f32 0.0, %v1615
      %v1617 = vpop.f32.mrb[0].mxu0
      %1618 = vdwg.mxu0
      %v1619 = vadd.f32 %v1448, %v1589
      %v1620 = vadd.f32 %v1449, %v1592
      %v1621 = vadd.f32 %v1450, %v1597
      %v1622 = vadd.f32 %v1451, %v1600
      %v1623 = vadd.f32 %v1452, %v1605
      %v1624 = vadd.f32 %v1453, %v1608
      %v1625 = vadd.f32 %v1454, %v1613
      %v1626 = vadd.f32 %v1455, %v1616
      %s1627 = scalar_lea.vmem %s206, 80
      %v1628 = vld [vmem:[%s1627] sm:$0xf]
      %v1629 = vld [vmem:[%s1627 + $0x8] sm:$0xf]
      %v1630 = vld [vmem:[%s1627 + $0x10] sm:$0xf]
      %v1631 = vld [vmem:[%s1627 + $0x18] sm:$0xf]
      %v1632 = vld [vmem:[%s1627 + $0x20] sm:$0xf]
      %v1633 = vld [vmem:[%s1627 + $0x28] sm:$0xf]
      %v1634 = vld [vmem:[%s1627 + $0x30] sm:$0xf]
      %v1635 = vld [vmem:[%s1627 + $0x38] sm:$0xf]
      %s1636 = scalar_lea.vmem %s210, 448
      %v1637 = vld [vmem:[%s1636] sm:$0xf]
      %v1638 = vld [vmem:[%s1636 + $0x4] sm:$0xf]
      %v1639 = vld [vmem:[%s1636 + $0x8] sm:$0xf]
      %v1640 = vld [vmem:[%s1636 + $0xc] sm:$0xf]
      %v1641 = vld [vmem:[%s1636 + $0x10] sm:$0xf]
      %v1642 = vld [vmem:[%s1636 + $0x14] sm:$0xf]
      %v1643 = vld [vmem:[%s1636 + $0x18] sm:$0xf]
      %v1644 = vld [vmem:[%s1636 + $0x1c] sm:$0xf]
      %v1645 = vld [vmem:[%s1636 + $0x20] sm:$0xf]
      %v1646 = vld [vmem:[%s1636 + $0x24] sm:$0xf]
      %v1647 = vld [vmem:[%s1636 + $0x28] sm:$0xf]
      %v1648 = vld [vmem:[%s1636 + $0x2c] sm:$0xf]
      %v1649 = vld [vmem:[%s1636 + $0x30] sm:$0xf]
      %v1650 = vld [vmem:[%s1636 + $0x34] sm:$0xf]
      %v1651 = vld [vmem:[%s1636 + $0x38] sm:$0xf]
      %v1652 = vld [vmem:[%s1636 + $0x3c] sm:$0xf]
      %v1661 = vunpack.c.l.b16 %v1628
      %v1662 = vunpack.c.l.b16 %v1629
      %v1663 = vunpack.c.l.b16 %v1630
      %v1664 = vunpack.c.l.b16 %v1631
      %v1665 = vunpack.c.l.b16 %v1632
      %v1666 = vunpack.c.l.b16 %v1633
      %v1667 = vunpack.c.l.b16 %v1634
      %v1668 = vunpack.c.l.b16 %v1635
      %v1669 = vpack.c.b16 %v1662, %v1661
      %v1670 = vpack.c.b16 %v1664, %v1663
      %v1671 = vpack.c.b16 %v1666, %v1665
      %v1672 = vpack.c.b16 %v1668, %v1667
      %v1693 = vunpack.c.l.b16 %v1637
      %v1694 = vunpack.c.l.b16 %v1638
      %v1695 = vunpack.c.l.b16 %v1639
      %v1696 = vunpack.c.l.b16 %v1640
      %v1697 = vunpack.c.l.b16 %v1641
      %v1698 = vunpack.c.l.b16 %v1642
      %v1699 = vunpack.c.l.b16 %v1643
      %v1700 = vunpack.c.l.b16 %v1644
      %v1701 = vunpack.c.l.b16 %v1645
      %v1702 = vunpack.c.l.b16 %v1646
      %v1703 = vunpack.c.l.b16 %v1647
      %v1704 = vunpack.c.l.b16 %v1648
      %v1705 = vunpack.c.l.b16 %v1649
      %v1706 = vunpack.c.l.b16 %v1650
      %v1707 = vunpack.c.l.b16 %v1651
      %v1708 = vunpack.c.l.b16 %v1652
      %v1709 = vpack.c.b16 %v1694, %v1693
      %v1710 = vpack.c.b16 %v1696, %v1695
      %v1711 = vpack.c.b16 %v1698, %v1697
      %v1712 = vpack.c.b16 %v1700, %v1699
      %v1713 = vpack.c.b16 %v1702, %v1701
      %v1714 = vpack.c.b16 %v1704, %v1703
      %v1715 = vpack.c.b16 %v1706, %v1705
      %v1716 = vpack.c.b16 %v1708, %v1707
      %1725 = vmatprep.subr.bf16.mxu0 0
      %1726 = vmatpush1.bf16.msra.mxu0 %v1709
      %1727 = vmatprep.subr.bf16.mxu0 0
      %1728 = vmatpush1.bf16.msra.mxu0 %v1710
      %1729 = vmatprep.subr.bf16.mxu0 0
      %1730 = vmatpush1.bf16.msra.mxu0 %v1711
      %1731 = vmatprep.subr.bf16.mxu0 0
      %1732 = vmatpush1.bf16.msra.mxu0 %v1712
      %1733 = vmatprep.subr.bf16.mxu0 0
      %1734 = vmatpush1.bf16.msra.mxu0 %v1713
      %1735 = vmatprep.subr.bf16.mxu0 0
      %1736 = vmatpush1.bf16.msra.mxu0 %v1714
      %1737 = vmatprep.subr.bf16.mxu0 0
      %1738 = vmatpush1.bf16.msra.mxu0 %v1715
      %1739 = vmatprep.subr.bf16.mxu0 0
      %1740 = vmatpush1.bf16.msra.mxu0 %v1716
      %1741 = vmatprep.subr.bf16.mxu0 0
      %1742 = vmatpush1.bf16.msra.mxu0 0
      %1743 = vmatprep.subr.bf16.mxu0 0
      %1744 = vmatpush1.bf16.msra.mxu0 0
      %1745 = vmatprep.subr.bf16.mxu0 0
      %1746 = vmatpush1.bf16.msra.mxu0 0
      %1747 = vmatprep.subr.bf16.mxu0 0
      %1748 = vmatpush1.bf16.msra.mxu0 0
      %1749 = vmatprep.subr.bf16.mxu0 0
      %1750 = vmatpush1.bf16.msra.mxu0 0
      %1751 = vmatprep.subr.bf16.mxu0 0
      %1752 = vmatpush1.bf16.msra.mxu0 0
      %1753 = vmatprep.subr.bf16.mxu0 0
      %1754 = vmatpush1.bf16.msra.mxu0 0
      %1755 = vmatprep.subr.bf16.mxu0 0
      %1756 = vmatpush1.bf16.msra.mxu0 0
      %1757 = vmatprep.mubr.bf16.mxu0 0
      %1758 = vmatmul.mubr.bf16.gmra.mrb[0].mxu0 %v1669
      %v1759 = vpop.f32.mrb[0].mxu0
      %v1760 = vadd.f32 0.0, %v1759
      %v1761 = vpop.f32.mrb[0].mxu0
      %v1762 = vpop.f32.mrb[0].mxu0
      %v1763 = vadd.f32 0.0, %v1762
      %v1764 = vpop.f32.mrb[0].mxu0
      %1765 = vmatprep.mubr.bf16.mxu0 0
      %1766 = vmatmul.mubr.bf16.gmra.mrb[0].mxu0 %v1670
      %v1767 = vpop.f32.mrb[0].mxu0
      %v1768 = vadd.f32 0.0, %v1767
      %v1769 = vpop.f32.mrb[0].mxu0
      %v1770 = vpop.f32.mrb[0].mxu0
      %v1771 = vadd.f32 0.0, %v1770
      %v1772 = vpop.f32.mrb[0].mxu0
      %1773 = vmatprep.mubr.bf16.mxu0 0
      %1774 = vmatmul.mubr.bf16.gmra.mrb[0].mxu0 %v1671
      %v1775 = vpop.f32.mrb[0].mxu0
      %v1776 = vadd.f32 0.0, %v1775
      %v1777 = vpop.f32.mrb[0].mxu0
      %v1778 = vpop.f32.mrb[0].mxu0
      %v1779 = vadd.f32 0.0, %v1778
      %v1780 = vpop.f32.mrb[0].mxu0
      %1781 = vmatprep.mubr.bf16.mxu0 0
      %1782 = vmatmul.mubr.bf16.gmra.mrb[0].mxu0 %v1672
      %v1783 = vpop.f32.mrb[0].mxu0
      %v1784 = vadd.f32 0.0, %v1783
      %v1785 = vpop.f32.mrb[0].mxu0
      %v1786 = vpop.f32.mrb[0].mxu0
      %v1787 = vadd.f32 0.0, %v1786
      %v1788 = vpop.f32.mrb[0].mxu0
      %1789 = vdwg.mxu0
      %v1790 = vadd.f32 %v1619, %v1760
      %v1791 = vadd.f32 %v1620, %v1763
      %v1792 = vadd.f32 %v1621, %v1768
      %v1793 = vadd.f32 %v1622, %v1771
      %v1794 = vadd.f32 %v1623, %v1776
      %v1795 = vadd.f32 %v1624, %v1779
      %v1796 = vadd.f32 %v1625, %v1784
      %v1797 = vadd.f32 %v1626, %v1787
      %v1798 = vld [vmem:[%s1456] sm:$0xf]
      %v1799 = vld [vmem:[%s1456 + $0x4] sm:$0x1]
      %v1800 = vld [vmem:[%s1456 + $0x8] sm:$0xf]
      %v1801 = vld [vmem:[%s1456 + $0xc] sm:$0x1]
      %v1802 = vld [vmem:[%s1456 + $0x10] sm:$0xf]
      %v1803 = vld [vmem:[%s1456 + $0x14] sm:$0x1]
      %v1804 = vld [vmem:[%s1456 + $0x18] sm:$0xf]
      %v1805 = vld [vmem:[%s1456 + $0x1c] sm:$0x1]
      %v1806 = vld [vmem:[%s1456 + $0x20] sm:$0xf]
      %v1807 = vld [vmem:[%s1456 + $0x24] sm:$0x1]
      %v1808 = vld [vmem:[%s1456 + $0x28] sm:$0xf]
      %v1809 = vld [vmem:[%s1456 + $0x2c] sm:$0x1]
      %v1810 = vld [vmem:[%s1456 + $0x30] sm:$0xf]
      %v1811 = vld [vmem:[%s1456 + $0x34] sm:$0x1]
      %v1812 = vld [vmem:[%s1456 + $0x38] sm:$0xf]
      %v1813 = vld [vmem:[%s1456 + $0x3c] sm:$0x1]
      %v1815 = vshrl.u32 %v1798, 16
      %v1817 = vrot.slane %v1815, 4
      %v1818 = vshll.u32 %v1798, 16
      %v1820 = vrot.slane %v1818, 5
      %v1821 = vor.u32 %v1817, %v1820
      %v1822 = vrot.slane %v1821, 4
      %v1824 = vshll.u32 %v1799, 16
      %v1826 = vrot.slane %v1824, 5
      %v1827 = vsel %vm565, %v1822, %v1826
      %v1829 = vshrl.u32 %v1800, 16
      %v1831 = vrot.slane %v1829, 4
      %v1832 = vshll.u32 %v1800, 16
      %v1834 = vrot.slane %v1832, 5
      %v1835 = vor.u32 %v1831, %v1834
      %v1836 = vrot.slane %v1835, 4
      %v1838 = vshll.u32 %v1801, 16
      %v1840 = vrot.slane %v1838, 5
      %v1841 = vsel %vm565, %v1836, %v1840
      %v1843 = vshrl.u32 %v1802, 16
      %v1845 = vrot.slane %v1843, 4
      %v1846 = vshll.u32 %v1802, 16
      %v1848 = vrot.slane %v1846, 5
      %v1849 = vor.u32 %v1845, %v1848
      %v1850 = vrot.slane %v1849, 4
      %v1852 = vshll.u32 %v1803, 16
      %v1854 = vrot.slane %v1852, 5
      %v1855 = vsel %vm565, %v1850, %v1854
      %v1857 = vshrl.u32 %v1804, 16
      %v1859 = vrot.slane %v1857, 4
      %v1860 = vshll.u32 %v1804, 16
      %v1862 = vrot.slane %v1860, 5
      %v1863 = vor.u32 %v1859, %v1862
      %v1864 = vrot.slane %v1863, 4
      %v1866 = vshll.u32 %v1805, 16
      %v1868 = vrot.slane %v1866, 5
      %v1869 = vsel %vm565, %v1864, %v1868
      %v1871 = vshrl.u32 %v1806, 16
      %v1873 = vrot.slane %v1871, 4
      %v1874 = vshll.u32 %v1806, 16
      %v1876 = vrot.slane %v1874, 5
      %v1877 = vor.u32 %v1873, %v1876
      %v1878 = vrot.slane %v1877, 4
      %v1880 = vshll.u32 %v1807, 16
      %v1882 = vrot.slane %v1880, 5
      %v1883 = vsel %vm565, %v1878, %v1882
      %v1885 = vshrl.u32 %v1808, 16
      %v1887 = vrot.slane %v1885, 4
      %v1888 = vshll.u32 %v1808, 16
      %v1890 = vrot.slane %v1888, 5
      %v1891 = vor.u32 %v1887, %v1890
      %v1892 = vrot.slane %v1891, 4
      %v1894 = vshll.u32 %v1809, 16
      %v1896 = vrot.slane %v1894, 5
      %v1897 = vsel %vm565, %v1892, %v1896
      %v1899 = vshrl.u32 %v1810, 16
      %v1901 = vrot.slane %v1899, 4
      %v1902 = vshll.u32 %v1810, 16
      %v1904 = vrot.slane %v1902, 5
      %v1905 = vor.u32 %v1901, %v1904
      %v1906 = vrot.slane %v1905, 4
      %v1908 = vshll.u32 %v1811, 16
      %v1910 = vrot.slane %v1908, 5
      %v1911 = vsel %vm565, %v1906, %v1910
      %v1913 = vshrl.u32 %v1812, 16
      %v1915 = vrot.slane %v1913, 4
      %v1916 = vshll.u32 %v1812, 16
      %v1918 = vrot.slane %v1916, 5
      %v1919 = vor.u32 %v1915, %v1918
      %v1920 = vrot.slane %v1919, 4
      %v1922 = vshll.u32 %v1813, 16
      %v1924 = vrot.slane %v1922, 5
      %v1925 = vsel %vm565, %v1920, %v1924
      %s1926 = scalar_lea.vmem %s210, 512
      %v1927 = vld [vmem:[%s1926] sm:$0xf]
      %v1928 = vld [vmem:[%s1926 + $0x4] sm:$0xf]
      %v1929 = vld [vmem:[%s1926 + $0x8] sm:$0xf]
      %v1930 = vld [vmem:[%s1926 + $0xc] sm:$0xf]
      %v1931 = vld [vmem:[%s1926 + $0x10] sm:$0xf]
      %v1932 = vld [vmem:[%s1926 + $0x14] sm:$0xf]
      %v1933 = vld [vmem:[%s1926 + $0x18] sm:$0xf]
      %v1934 = vld [vmem:[%s1926 + $0x1c] sm:$0xf]
      %v1935 = vld [vmem:[%s1926 + $0x20] sm:$0xf]
      %v1936 = vld [vmem:[%s1926 + $0x24] sm:$0xf]
      %v1937 = vld [vmem:[%s1926 + $0x28] sm:$0xf]
      %v1938 = vld [vmem:[%s1926 + $0x2c] sm:$0xf]
      %v1939 = vld [vmem:[%s1926 + $0x30] sm:$0xf]
      %v1940 = vld [vmem:[%s1926 + $0x34] sm:$0xf]
      %v1941 = vld [vmem:[%s1926 + $0x38] sm:$0xf]
      %v1942 = vld [vmem:[%s1926 + $0x3c] sm:$0xf]
      %v1943 = vunpack.c.l.b16 %v1827
      %v1944 = vunpack.c.l.b16 %v1841
      %v1945 = vunpack.c.l.b16 %v1855
      %v1946 = vunpack.c.l.b16 %v1869
      %v1947 = vunpack.c.l.b16 %v1883
      %v1948 = vunpack.c.l.b16 %v1897
      %v1949 = vunpack.c.l.b16 %v1911
      %v1950 = vunpack.c.l.b16 %v1925
      %v1951 = vpack.c.b16 %v1944, %v1943
      %v1952 = vpack.c.b16 %v1946, %v1945
      %v1953 = vpack.c.b16 %v1948, %v1947
      %v1954 = vpack.c.b16 %v1950, %v1949
      %v1975 = vunpack.c.l.b16 %v1927
      %v1976 = vunpack.c.l.b16 %v1928
      %v1977 = vunpack.c.l.b16 %v1929
      %v1978 = vunpack.c.l.b16 %v1930
      %v1979 = vunpack.c.l.b16 %v1931
      %v1980 = vunpack.c.l.b16 %v1932
      %v1981 = vunpack.c.l.b16 %v1933
      %v1982 = vunpack.c.l.b16 %v1934
      %v1983 = vunpack.c.l.b16 %v1935
      %v1984 = vunpack.c.l.b16 %v1936
      %v1985 = vunpack.c.l.b16 %v1937
      %v1986 = vunpack.c.l.b16 %v1938
      %v1987 = vunpack.c.l.b16 %v1939
      %v1988 = vunpack.c.l.b16 %v1940
      %v1989 = vunpack.c.l.b16 %v1941
      %v1990 = vunpack.c.l.b16 %v1942
      %v1991 = vpack.c.b16 %v1976, %v1975
      %v1992 = vpack.c.b16 %v1978, %v1977
      %v1993 = vpack.c.b16 %v1980, %v1979
      %v1994 = vpack.c.b16 %v1982, %v1981
      %v1995 = vpack.c.b16 %v1984, %v1983
      %v1996 = vpack.c.b16 %v1986, %v1985
      %v1997 = vpack.c.b16 %v1988, %v1987
      %v1998 = vpack.c.b16 %v1990, %v1989
      %2007 = vmatprep.subr.bf16.mxu0 0
      %2008 = vmatpush1.bf16.msra.mxu0 %v1991
      %2009 = vmatprep.subr.bf16.mxu0 0
      %2010 = vmatpush1.bf16.msra.mxu0 %v1992
      %2011 = vmatprep.subr.bf16.mxu0 0
      %2012 = vmatpush1.bf16.msra.mxu0 %v1993
      %2013 = vmatprep.subr.bf16.mxu0 0
      %2014 = vmatpush1.bf16.msra.mxu0 %v1994
      %2015 = vmatprep.subr.bf16.mxu0 0
      %2016 = vmatpush1.bf16.msra.mxu0 %v1995
      %2017 = vmatprep.subr.bf16.mxu0 0
      %2018 = vmatpush1.bf16.msra.mxu0 %v1996
      %2019 = vmatprep.subr.bf16.mxu0 0
      %2020 = vmatpush1.bf16.msra.mxu0 %v1997
      %2021 = vmatprep.subr.bf16.mxu0 0
      %2022 = vmatpush1.bf16.msra.mxu0 %v1998
      %2023 = vmatprep.subr.bf16.mxu0 0
      %2024 = vmatpush1.bf16.msra.mxu0 0
      %2025 = vmatprep.subr.bf16.mxu0 0
      %2026 = vmatpush1.bf16.msra.mxu0 0
      %2027 = vmatprep.subr.bf16.mxu0 0
      %2028 = vmatpush1.bf16.msra.mxu0 0
      %2029 = vmatprep.subr.bf16.mxu0 0
      %2030 = vmatpush1.bf16.msra.mxu0 0
      %2031 = vmatprep.subr.bf16.mxu0 0
      %2032 = vmatpush1.bf16.msra.mxu0 0
      %2033 = vmatprep.subr.bf16.mxu0 0
      %2034 = vmatpush1.bf16.msra.mxu0 0
      %2035 = vmatprep.subr.bf16.mxu0 0
      %2036 = vmatpush1.bf16.msra.mxu0 0
      %2037 = vmatprep.subr.bf16.mxu0 0
      %2038 = vmatpush1.bf16.msra.mxu0 0
      %2039 = vmatprep.mubr.bf16.mxu0 0
      %2040 = vmatmul.mubr.bf16.gmra.mrb[0].mxu0 %v1951
      %v2041 = vpop.f32.mrb[0].mxu0
      %v2042 = vadd.f32 0.0, %v2041
      %v2043 = vpop.f32.mrb[0].mxu0
      %v2044 = vpop.f32.mrb[0].mxu0
      %v2045 = vadd.f32 0.0, %v2044
      %v2046 = vpop.f32.mrb[0].mxu0
      %2047 = vmatprep.mubr.bf16.mxu0 0
      %2048 = vmatmul.mubr.bf16.gmra.mrb[0].mxu0 %v1952
      %v2049 = vpop.f32.mrb[0].mxu0
      %v2050 = vadd.f32 0.0, %v2049
      %v2051 = vpop.f32.mrb[0].mxu0
      %v2052 = vpop.f32.mrb[0].mxu0
      %v2053 = vadd.f32 0.0, %v2052
      %v2054 = vpop.f32.mrb[0].mxu0
      %2055 = vmatprep.mubr.bf16.mxu0 0
      %2056 = vmatmul.mubr.bf16.gmra.mrb[0].mxu0 %v1953
      %v2057 = vpop.f32.mrb[0].mxu0
      %v2058 = vadd.f32 0.0, %v2057
      %v2059 = vpop.f32.mrb[0].mxu0
      %v2060 = vpop.f32.mrb[0].mxu0
      %v2061 = vadd.f32 0.0, %v2060
      %v2062 = vpop.f32.mrb[0].mxu0
      %2063 = vmatprep.mubr.bf16.mxu0 0
      %2064 = vmatmul.mubr.bf16.gmra.mrb[0].mxu0 %v1954
      %v2065 = vpop.f32.mrb[0].mxu0
      %v2066 = vadd.f32 0.0, %v2065
      %v2067 = vpop.f32.mrb[0].mxu0
      %v2068 = vpop.f32.mrb[0].mxu0
      %v2069 = vadd.f32 0.0, %v2068
      %v2070 = vpop.f32.mrb[0].mxu0
      %2071 = vdwg.mxu0
      %v2072 = vadd.f32 %v1790, %v2042
      %v2073 = vadd.f32 %v1791, %v2045
      %v2074 = vadd.f32 %v1792, %v2050
      %v2075 = vadd.f32 %v1793, %v2053
      %v2076 = vadd.f32 %v1794, %v2058
      %v2077 = vadd.f32 %v1795, %v2061
      %v2078 = vadd.f32 %v1796, %v2066
      %v2079 = vadd.f32 %v1797, %v2069
      %v2080 = vld [vmem:[%s213] sm:$0x1]
      %v2082 = vlaneseq
      %v2083 = vshrl.u32 %v2082, 7
      %v2084 = vsub.s32 0, %v2083
      %v2085 = vrot.slane %v2080, %v2084
      %v2087 = vadd.f32 %v2072, %v2085
      %v2088 = vadd.f32 %v2073, %v2085
      %v2089 = vadd.f32 %v2074, %v2085
      %v2090 = vadd.f32 %v2075, %v2085
      %v2091 = vadd.f32 %v2076, %v2085
      %v2092 = vadd.f32 %v2077, %v2085
      %v2093 = vadd.f32 %v2078, %v2085
      %v2094 = vadd.f32 %v2079, %v2085
      %v2095 = vmax.f32 %v2087, 0.0
      %v2096 = vmax.f32 %v2088, 0.0
      %v2097 = vmax.f32 %v2089, 0.0
      %v2098 = vmax.f32 %v2090, 0.0
      %v2099 = vmax.f32 %v2091, 0.0
      %v2100 = vmax.f32 %v2092, 0.0
      %v2101 = vmax.f32 %v2093, 0.0
      %v2102 = vmax.f32 %v2094, 0.0
      %v2103 = vpack.c.bf16 %v2096, %v2095
      %v2104 = vpack.c.bf16 %v2098, %v2097
      %v2105 = vpack.c.bf16 %v2100, %v2099
      %v2106 = vpack.c.bf16 %v2102, %v2101
      %v2111 = vunpack.c.l.b16 %v2103
      %v2112 = vunpack.c.h.b16 %v2103
      %v2113 = vunpack.c.l.b16 %v2104
      %v2114 = vunpack.c.h.b16 %v2104
      %v2115 = vunpack.c.l.b16 %v2105
      %v2116 = vunpack.c.h.b16 %v2105
      %v2117 = vunpack.c.l.b16 %v2106
      %v2118 = vunpack.c.h.b16 %v2106
      %v2119 = vpack.c.b16 %v2111, %v2111
      %v2120 = vpack.c.b16 %v2112, %v2112
      %v2121 = vpack.c.b16 %v2113, %v2113
      %v2122 = vpack.c.b16 %v2114, %v2114
      %v2123 = vpack.c.b16 %v2115, %v2115
      %v2124 = vpack.c.b16 %v2116, %v2116
      %v2125 = vpack.c.b16 %v2117, %v2117
      %v2126 = vpack.c.b16 %v2118, %v2118
      %2135 = vst [vmem:[%s221] sm:$0xf] %v2119
      %2136 = vst [vmem:[%s221 + $0x4] sm:$0xf] %v2120
      %2137 = vst [vmem:[%s221 + $0x8] sm:$0xf] %v2121
      %2138 = vst [vmem:[%s221 + $0xc] sm:$0xf] %v2122
      %2139 = vst [vmem:[%s221 + $0x10] sm:$0xf] %v2123
      %2140 = vst [vmem:[%s221 + $0x14] sm:$0xf] %v2124
      %2141 = vst [vmem:[%s221 + $0x18] sm:$0xf] %v2125
      %2142 = vst [vmem:[%s221 + $0x1c] sm:$0xf] %v2126
      %p2143 = scmp.lt.s32.totalorder %s18, 1
      %s2144 = scalar_select %p2143, %s18, 1
      %p2145 = scmp.lt.s32.totalorder %s19, 0
      %s2146 = scalar_select %p2145, %s19, 0
      %s2147 = smul.addr %s2144, 8
      %s2148 = sadd.s32 %s2146, %s2147
      %s2149 = smul.addr %s2148, 4
      %s2150 = scalar_lea.vmem %s3, %s2149
      // Predicated region
      $region33: #{forward.5} parent=31 // pred_check
        %p2151 = pneg %p124
      $region34: #{forward.5} parent=31 // pred_check_branch
        %2153 = sbr.rel (%p2151) target = $region36
      $region35: #{forward.5} parent=31 // pred_region
        _
      $region36: #{forward.5} parent=31 // pred_fallthru
        _
    $region32: #{forward.5} parent=5 // pred_fallthru
      _
    %p2154 = scmp.le.s32.totalorder 2, %s9
    // Predicated region
    $region37: #{forward.5} parent=5 // pred_check
      %p2155 = pneg %p2154
    $region38: #{forward.5} parent=5 // pred_check_branch
      %2157 = sbr.rel (%p2155) target = $region40
    $region39: #{forward.5} parent=5 // pred_region
      %s2158 = ssub.s32 %s9, 2
      // Predicated region
      $region41: #{forward.5} parent=39 // pred_check
        %p2159 = pneg %p130
      $region42: #{forward.5} parent=39 // pred_check_branch
        %2161 = sbr.rel (%p2159) target = $region44
      $region43: #{forward.5} parent=39 // pred_region
        %p2162 = scmp.lt.s32.totalorder %s20, 1
        %s2163 = scalar_select %p2162, %s20, 1
        %p2164 = scmp.lt.s32.totalorder %s21, 0
        %s2165 = scalar_select %p2164, %s21, 0
        %s2166 = smul.addr %s2163, 8
        %s2167 = sadd.s32 %s2165, %s2166
        %s2168 = smul.addr %s2167, 4
        %s2169 = scalar_lea.vmem %s3, %s2168
      $region44: #{forward.5} parent=39 // pred_fallthru
        _
    $region40: #{forward.5} parent=5 // pred_fallthru
      _
  $region6: #{forward.5} parent=0 // loop_footer
    %s13 = sadd.s32 1, %s9
  $region7: #{forward.5} parent=0 // loop_footer_branch
    %8 = sbr.rel target = $region3
  $region8: #{forward.5} parent=0 // loop_exit
    _

// kernel: forward.8
$region0: #{forward.8}
  #allocation0 [shape = 'u32[]', space=smem, size = 0x4, offset = 0x4, fixed_abs, tag = 'smem constant byte address 0x4 - core index']
  #allocation1 [shape = 'u32[144,128]{1,0:T(1,128)}', space=vmem, size = 0x12000, scoped, tag = 'internal scratch']
  %s0 = inlined_call_operand.vmem [shape: bf16[2,10,10,128], index: 0, kind: input, shape index: {}]
  %s1 = inlined_call_operand.vmem [shape: bf16[9,128,128], index: 1, kind: input, shape index: {}]
  %s2 = inlined_call_operand.vmem [shape: f32[1,128], index: 2, kind: input, shape index: {}]
  %s3 = inlined_call_operand.vmem [shape: bf16[2,64,128], index: 3, kind: output, shape index: {}]
  %s4 = sld [smem:[#allocation0]]
  $region45: #{forward.8} parent=0
    _
  %s6 = ssub.s32 1, %s4
  %s7 = scalar_select 0, %s6, %s4
  loop: start=0, step=1, limit=4
  $region2: #{forward.8} parent=0 // loop_pre_header
    _
  $region3: #{forward.8} parent=0 // loop_header
    %s9 = sphi 0, %s13
    %p10 = scmp.ge.s32.totalorder %s9, 4
    %s16 = sphi 0, %s28
    %s17 = sphi 0, %s24
    %s18 = sphi 0, %s16
    %s19 = sphi 0, %s17
    %s20 = sphi 0, %s18
    %s21 = sphi 0, %s19
    %s31 = sphi 0, %s33
    %s34 = sphi 0, %s31
    %s35 = sphi 0, %s34
    %s51 = sphi 0, %s35
    %s57 = sphi 0, %s59
    %s60 = sphi 0, %s57
    %s61 = sphi 0, %s60
    %s77 = sphi 0, %s61
    %s83 = sphi 0, %s85
    %s86 = sphi 0, %s83
    %s87 = sphi 0, %s86
    %s103 = sphi 0, %s87
    %s111 = sphi 0, %s113
    %s114 = sphi 0, %s111
    %s115 = sphi 0, %s114
    %s131 = sphi 0, %s115
  $region4: #{forward.8} parent=0 // loop_header_branch
    %12 = sbr.rel (%p10) target = $region8
  $region5: #{forward.8} parent=0 // loop_body
    %s14 = ssub.s32 %s9, 1
    %s15 = ssub.s32 %s9, 2
    %s22 = sadd.s32 1, %s17
    %p23 = scmp.ge.s32.totalorder %s22, 1
    %s24 = scalar_select %p23, 0, %s22
    %s25 = sadd.s32 1, %s16
    %s26 = scalar_select %p23, %s25, %s16
    %p27 = scmp.ge.s32.totalorder %s26, 2
    %s28 = scalar_select %p27, 0, %s26
    %s29 = ssub.s32 %s16, %s28
    %p30 = scmp.eq.s32.totalorder %s29, 0
    %s32 = sadd.s32 %s31, 1
    %s33 = scalar_select %p30, %s31, %s32
    %p36 = pneg %p30
    %p37 = scmp.eq.s32.totalorder %s9, 1
    %p38 = por %p36, %p37
    %p39 = scmp.ne.s32.totalorder %s31, %s34
    %p40 = scmp.eq.s32.totalorder %s9, 0
    %p41 = por %p39, %p40
    %p42 = scmp.ne.s32.totalorder %s31, %s34
    %p43 = scmp.eq.s32.totalorder %s14, 1
    %p44 = por %p42, %p43
    %p45 = scmp.ne.s32.totalorder %s34, %s35
    %p46 = scmp.eq.s32.totalorder %s14, 0
    %p47 = por %p45, %p46
    %p48 = scmp.ne.s32.totalorder %s34, %s35
    %p49 = scmp.eq.s32.totalorder %s15, 1
    %p50 = por %p48, %p49
    %p52 = scmp.ne.s32.totalorder %s35, %s51
    %p53 = scmp.eq.s32.totalorder %s15, 0
    %p54 = por %p52, %p53
    %s55 = ssub.s32 %s17, %s24
    %p56 = scmp.eq.s32.totalorder %s55, 0
    %s58 = sadd.s32 %s57, 1
    %s59 = scalar_select %p56, %s57, %s58
    %p62 = pneg %p56
    %p63 = scmp.eq.s32.totalorder %s9, 1
    %p64 = por %p62, %p63
    %p65 = scmp.ne.s32.totalorder %s57, %s60
    %p66 = scmp.eq.s32.totalorder %s9, 0
    %p67 = por %p65, %p66
    %p68 = scmp.ne.s32.totalorder %s57, %s60
    %p69 = scmp.eq.s32.totalorder %s14, 1
    %p70 = por %p68, %p69
    %p71 = scmp.ne.s32.totalorder %s60, %s61
    %p72 = scmp.eq.s32.totalorder %s14, 0
    %p73 = por %p71, %p72
    %p74 = scmp.ne.s32.totalorder %s60, %s61
    %p75 = scmp.eq.s32.totalorder %s15, 1
    %p76 = por %p74, %p75
    %p78 = scmp.ne.s32.totalorder %s61, %s77
    %p79 = scmp.eq.s32.totalorder %s15, 0
    %p80 = por %p78, %p79
    %s81 = ssub.s32 %s17, %s24
    %p82 = scmp.eq.s32.totalorder %s81, 0
    %s84 = sadd.s32 %s83, 1
    %s85 = scalar_select %p82, %s83, %s84
    %p88 = pneg %p82
    %p89 = scmp.eq.s32.totalorder %s9, 1
    %p90 = por %p88, %p89
    %p91 = scmp.ne.s32.totalorder %s83, %s86
    %p92 = scmp.eq.s32.totalorder %s9, 0
    %p93 = por %p91, %p92
    %p94 = scmp.ne.s32.totalorder %s83, %s86
    %p95 = scmp.eq.s32.totalorder %s14, 1
    %p96 = por %p94, %p95
    %p97 = scmp.ne.s32.totalorder %s86, %s87
    %p98 = scmp.eq.s32.totalorder %s14, 0
    %p99 = por %p97, %p98
    %p100 = scmp.ne.s32.totalorder %s86, %s87
    %p101 = scmp.eq.s32.totalorder %s15, 1
    %p102 = por %p100, %p101
    %p104 = scmp.ne.s32.totalorder %s87, %s103
    %p105 = scmp.eq.s32.totalorder %s15, 0
    %p106 = por %p104, %p105
    %s107 = ssub.s32 %s16, %s28
    %s108 = ssub.s32 %s17, %s24
    %s109 = sor.u32 %s107, %s108
    %p110 = scmp.eq.s32.totalorder %s109, 0
    %s112 = sadd.s32 %s111, 1
    %s113 = scalar_select %p110, %s111, %s112
    %p116 = pneg %p110
    %p117 = scmp.eq.s32.totalorder %s9, 1
    %p118 = por %p116, %p117
    %p119 = scmp.ne.s32.totalorder %s111, %s114
    %p120 = scmp.eq.s32.totalorder %s9, 0
    %p121 = por %p119, %p120
    %p122 = scmp.ne.s32.totalorder %s111, %s114
    %p123 = scmp.eq.s32.totalorder %s14, 1
    %p124 = por %p122, %p123
    %p125 = scmp.ne.s32.totalorder %s114, %s115
    %p126 = scmp.eq.s32.totalorder %s14, 0
    %p127 = por %p125, %p126
    %p128 = scmp.ne.s32.totalorder %s114, %s115
    %p129 = scmp.eq.s32.totalorder %s15, 1
    %p130 = por %p128, %p129
    %p132 = scmp.ne.s32.totalorder %s115, %s131
    %p133 = scmp.eq.s32.totalorder %s15, 0
    %p134 = por %p132, %p133
    %p135 = scmp.le.s32.totalorder 1, %s9
    %p136 = scmp.lt.s32.totalorder %s9, 3
    %p137 = pnand %p135, %p136
    %p138 = pneg %p137
    // Predicated region
    $region9: #{forward.8} parent=5 // pred_check
      _
    $region10: #{forward.8} parent=5 // pred_check_branch
      %140 = sbr.rel (%p137) target = $region12
    $region11: #{forward.8} parent=5 // pred_region
      %s141 = ssub.s32 %s9, 1
      // Predicated region
      $region13: #{forward.8} parent=11 // pred_check
        %p142 = pneg %p73
      $region14: #{forward.8} parent=11 // pred_check_branch
        %144 = sbr.rel (%p142) target = $region16
      $region15: #{forward.8} parent=11 // pred_region
        %p145 = scmp.lt.s32.totalorder %s19, 0
        %s146 = scalar_select %p145, %s19, 0
        %s147 = smul.addr %s146, 4
        %s148 = scalar_lea.vmem %s1, %s147
      $region16: #{forward.8} parent=11 // pred_fallthru
        _
      // Predicated region
      $region17: #{forward.8} parent=11 // pred_check
        %p149 = pneg %p99
      $region18: #{forward.8} parent=11 // pred_check_branch
        %151 = sbr.rel (%p149) target = $region20
      $region19: #{forward.8} parent=11 // pred_region
        %p152 = scmp.lt.s32.totalorder %s19, 0
        %s153 = scalar_select %p152, %s19, 0
        %s154 = scalar_lea.vmem %s2, %s153
      $region20: #{forward.8} parent=11 // pred_fallthru
        _
    $region12: #{forward.8} parent=5 // pred_fallthru
      _
    %p155 = scmp.lt.s32.totalorder %s9, 2
    // Predicated region
    $region21: #{forward.8} parent=5 // pred_check
      %p156 = pneg %p155
    $region22: #{forward.8} parent=5 // pred_check_branch
      %158 = sbr.rel (%p156) target = $region24
    $region23: #{forward.8} parent=5 // pred_region
      // Predicated region
      $region25: #{forward.8} parent=23 // pred_check
        %p159 = pneg %p41
      $region26: #{forward.8} parent=23 // pred_check_branch
        %161 = sbr.rel (%p159) target = $region28
      $region27: #{forward.8} parent=23 // pred_region
        %p162 = scmp.lt.s32.totalorder %s16, 1
        %s163 = scalar_select %p162, %s16, 1
        %s164 = smul.addr %s163, 20
        %s165 = smul.addr %s164, 4
        %s166 = scalar_lea.vmem %s0, %s165
      $region28: #{forward.8} parent=23 // pred_fallthru
        _
    $region24: #{forward.8} parent=5 // pred_fallthru
      _
    %p167 = scmp.le.s32.totalorder 1, %s9
    %p168 = scmp.lt.s32.totalorder %s9, 3
    %p169 = pnand %p167, %p168
    %p170 = pneg %p169
    // Predicated region
    $region29: #{forward.8} parent=5 // pred_check
      _
    $region30: #{forward.8} parent=5 // pred_check_branch
      %172 = sbr.rel (%p169) target = $region32
    $region31: #{forward.8} parent=5 // pred_region
      %s173 = ssub.s32 %s9, 1
      %p174 = scmp.lt.s32.totalorder %s18, 1
      %s175 = scalar_select %p174, %s18, 1
      %s176 = smul.addr %s175, 20
      %s177 = smul.addr %s176, 4
      %s178 = scalar_lea.vmem %s0, %s177
      %p179 = pneg %p47
      %p180 = pneg %p44
      %p181 = scmp.lt.s32.totalorder %s19, 0
      %s182 = scalar_select %p181, %s19, 0
      %s183 = smul.addr %s182, 4
      %s184 = scalar_lea.vmem %s1, %s183
      %p185 = pneg %p73
      %p186 = pneg %p70
      %p187 = scmp.lt.s32.totalorder %s19, 0
      %s188 = scalar_select %p187, %s19, 0
      %s189 = scalar_lea.vmem %s2, %s188
      %p190 = pneg %p99
      %p191 = pneg %p96
      %p192 = pneg %p127
      %p193 = pneg %p124
      %p194 = scmp.lt.s32.totalorder %s18, 1
      %s195 = scalar_select %p194, %s18, 1
      %p196 = scmp.lt.s32.totalorder %s19, 0
      %s197 = scalar_select %p196, %s19, 0
      %s198 = smul.addr %s195, 8
      %s199 = sadd.s32 %s197, %s198
      %s200 = smul.addr %s199, 4
      %s201 = scalar_lea.vmem %s3, %s200
      %p202 = scmp.lt.s32.totalorder %s18, 1
      %s203 = scalar_select %p202, %s18, 1
      %s204 = smul.addr %s203, 20
      %s205 = smul.addr %s204, 4
      %s206 = scalar_lea.vmem %s0, %s205
      %p207 = scmp.lt.s32.totalorder %s19, 0
      %s208 = scalar_select %p207, %s19, 0
      %s209 = smul.addr %s208, 4
      %s210 = scalar_lea.vmem %s1, %s209
      %p211 = scmp.lt.s32.totalorder %s19, 0
      %s212 = scalar_select %p211, %s19, 0
      %s213 = scalar_lea.vmem %s2, %s212
      %p214 = scmp.lt.s32.totalorder %s18, 1
      %s215 = scalar_select %p214, %s18, 1
      %p216 = scmp.lt.s32.totalorder %s19, 0
      %s217 = scalar_select %p216, %s19, 0
      %s218 = smul.addr %s215, 8
      %s219 = sadd.s32 %s217, %s218
      %s220 = smul.addr %s219, 4
      %s221 = scalar_lea.vmem %s3, %s220
      %v223 = vld [vmem:[%s206] sm:$0xf]
      %v224 = vld [vmem:[%s206 + $0x8] sm:$0xf]
      %v225 = vld [vmem:[%s206 + $0x10] sm:$0xf]
      %v226 = vld [vmem:[%s206 + $0x18] sm:$0xf]
      %v227 = vld [vmem:[%s206 + $0x20] sm:$0xf]
      %v228 = vld [vmem:[%s206 + $0x28] sm:$0xf]
      %v229 = vld [vmem:[%s206 + $0x30] sm:$0xf]
      %v230 = vld [vmem:[%s206 + $0x38] sm:$0xf]
      %v231 = vld [vmem:[%s210] sm:$0xf]
      %v232 = vld [vmem:[%s210 + $0x4] sm:$0xf]
      %v233 = vld [vmem:[%s210 + $0x8] sm:$0xf]
      %v234 = vld [vmem:[%s210 + $0xc] sm:$0xf]
      %v235 = vld [vmem:[%s210 + $0x10] sm:$0xf]
      %v236 = vld [vmem:[%s210 + $0x14] sm:$0xf]
      %v237 = vld [vmem:[%s210 + $0x18] sm:$0xf]
      %v238 = vld [vmem:[%s210 + $0x1c] sm:$0xf]
      %v239 = vld [vmem:[%s210 + $0x20] sm:$0xf]
      %v240 = vld [vmem:[%s210 + $0x24] sm:$0xf]
      %v241 = vld [vmem:[%s210 + $0x28] sm:$0xf]
      %v242 = vld [vmem:[%s210 + $0x2c] sm:$0xf]
      %v243 = vld [vmem:[%s210 + $0x30] sm:$0xf]
      %v244 = vld [vmem:[%s210 + $0x34] sm:$0xf]
      %v245 = vld [vmem:[%s210 + $0x38] sm:$0xf]
      %v246 = vld [vmem:[%s210 + $0x3c] sm:$0xf]
      %v247 = vld [vmem:[%s206 + $0x4] sm:$0x1]
      %v248 = vld [vmem:[%s206 + $0xc] sm:$0x1]
      %v249 = vld [vmem:[%s206 + $0x14] sm:$0x1]
      %v250 = vld [vmem:[%s206 + $0x1c] sm:$0x1]
      %v251 = vld [vmem:[%s206 + $0x24] sm:$0x1]
      %v252 = vld [vmem:[%s206 + $0x2c] sm:$0x1]
      %v253 = vld [vmem:[%s206 + $0x34] sm:$0x1]
      %v254 = vld [vmem:[%s206 + $0x3c] sm:$0x1]
      %vm255 = vsmask.f32 3328
      %vm256 = vsmask.f32 7440
      %vm257 = vmor %vm255, %vm256
      %v259 = vshrl.u32 %v223, 16
      %v261 = vrot.slane %v259, 4
      %v262 = vshll.u32 %v223, 16
      %v264 = vrot.slane %v262, 5
      %v265 = vor.u32 %v261, %v264
      %v266 = vrot.slane %v265, 4
      %v268 = vshll.u32 %v247, 16
      %v270 = vrot.slane %v268, 5
      %v271 = vsel %vm257, %v266, %v270
      %v273 = vshrl.u32 %v224, 16
      %v275 = vrot.slane %v273, 4
      %v276 = vshll.u32 %v224, 16
      %v278 = vrot.slane %v276, 5
      %v279 = vor.u32 %v275, %v278
      %v280 = vrot.slane %v279, 4
      %v282 = vshll.u32 %v248, 16
      %v284 = vrot.slane %v282, 5
      %v285 = vsel %vm257, %v280, %v284
      %v287 = vshrl.u32 %v225, 16
      %v289 = vrot.slane %v287, 4
      %v290 = vshll.u32 %v225, 16
      %v292 = vrot.slane %v290, 5
      %v293 = vor.u32 %v289, %v292
      %v294 = vrot.slane %v293, 4
      %v296 = vshll.u32 %v249, 16
      %v298 = vrot.slane %v296, 5
      %v299 = vsel %vm257, %v294, %v298
      %v301 = vshrl.u32 %v226, 16
      %v303 = vrot.slane %v301, 4
      %v304 = vshll.u32 %v226, 16
      %v306 = vrot.slane %v304, 5
      %v307 = vor.u32 %v303, %v306
      %v308 = vrot.slane %v307, 4
      %v310 = vshll.u32 %v250, 16
      %v312 = vrot.slane %v310, 5
      %v313 = vsel %vm257, %v308, %v312
      %v315 = vshrl.u32 %v227, 16
      %v317 = vrot.slane %v315, 4
      %v318 = vshll.u32 %v227, 16
      %v320 = vrot.slane %v318, 5
      %v321 = vor.u32 %v317, %v320
      %v322 = vrot.slane %v321, 4
      %v324 = vshll.u32 %v251, 16
      %v326 = vrot.slane %v324, 5
      %v327 = vsel %vm257, %v322, %v326
      %v329 = vshrl.u32 %v228, 16
      %v331 = vrot.slane %v329, 4
      %v332 = vshll.u32 %v228, 16
      %v334 = vrot.slane %v332, 5
      %v335 = vor.u32 %v331, %v334
      %v336 = vrot.slane %v335, 4
      %v338 = vshll.u32 %v252, 16
      %v340 = vrot.slane %v338, 5
      %v341 = vsel %vm257, %v336, %v340
      %v343 = vshrl.u32 %v229, 16
      %v345 = vrot.slane %v343, 4
      %v346 = vshll.u32 %v229, 16
      %v348 = vrot.slane %v346, 5
      %v349 = vor.u32 %v345, %v348
      %v350 = vrot.slane %v349, 4
      %v352 = vshll.u32 %v253, 16
      %v354 = vrot.slane %v352, 5
      %v355 = vsel %vm257, %v350, %v354
      %v357 = vshrl.u32 %v230, 16
      %v359 = vrot.slane %v357, 4
      %v360 = vshll.u32 %v230, 16
      %v362 = vrot.slane %v360, 5
      %v363 = vor.u32 %v359, %v362
      %v364 = vrot.slane %v363, 4
      %v366 = vshll.u32 %v254, 16
      %v368 = vrot.slane %v366, 5
      %v369 = vsel %vm257, %v364, %v368
      %s370 = scalar_lea.vmem %s210, 64
      %v371 = vld [vmem:[%s370] sm:$0xf]
      %v372 = vld [vmem:[%s370 + $0x4] sm:$0xf]
      %v373 = vld [vmem:[%s370 + $0x8] sm:$0xf]
      %v374 = vld [vmem:[%s370 + $0xc] sm:$0xf]
      %v375 = vld [vmem:[%s370 + $0x10] sm:$0xf]
      %v376 = vld [vmem:[%s370 + $0x14] sm:$0xf]
      %v377 = vld [vmem:[%s370 + $0x18] sm:$0xf]
      %v378 = vld [vmem:[%s370 + $0x1c] sm:$0xf]
      %v379 = vld [vmem:[%s370 + $0x20] sm:$0xf]
      %v380 = vld [vmem:[%s370 + $0x24] sm:$0xf]
      %v381 = vld [vmem:[%s370 + $0x28] sm:$0xf]
      %v382 = vld [vmem:[%s370 + $0x2c] sm:$0xf]
      %v383 = vld [vmem:[%s370 + $0x30] sm:$0xf]
      %v384 = vld [vmem:[%s370 + $0x34] sm:$0xf]
      %v385 = vld [vmem:[%s370 + $0x38] sm:$0xf]
      %v386 = vld [vmem:[%s370 + $0x3c] sm:$0xf]
      %v387 = vunpack.c.l.b16 %v271
      %v388 = vunpack.c.l.b16 %v285
      %v389 = vunpack.c.l.b16 %v299
      %v390 = vunpack.c.l.b16 %v313
      %v391 = vunpack.c.l.b16 %v327
      %v392 = vunpack.c.l.b16 %v341
      %v393 = vunpack.c.l.b16 %v355
      %v394 = vunpack.c.l.b16 %v369
      %v395 = vpack.c.b16 %v388, %v387
      %v396 = vpack.c.b16 %v390, %v389
      %v397 = vpack.c.b16 %v392, %v391
      %v398 = vpack.c.b16 %v394, %v393
      %v419 = vunpack.c.l.b16 %v371
      %v420 = vunpack.c.l.b16 %v372
      %v421 = vunpack.c.l.b16 %v373
      %v422 = vunpack.c.l.b16 %v374
      %v423 = vunpack.c.l.b16 %v375
      %v424 = vunpack.c.l.b16 %v376
      %v425 = vunpack.c.l.b16 %v377
      %v426 = vunpack.c.l.b16 %v378
      %v427 = vunpack.c.l.b16 %v379
      %v428 = vunpack.c.l.b16 %v380
      %v429 = vunpack.c.l.b16 %v381
      %v430 = vunpack.c.l.b16 %v382
      %v431 = vunpack.c.l.b16 %v383
      %v432 = vunpack.c.l.b16 %v384
      %v433 = vunpack.c.l.b16 %v385
      %v434 = vunpack.c.l.b16 %v386
      %v435 = vpack.c.b16 %v420, %v419
      %v436 = vpack.c.b16 %v422, %v421
      %v437 = vpack.c.b16 %v424, %v423
      %v438 = vpack.c.b16 %v426, %v425
      %v439 = vpack.c.b16 %v428, %v427
      %v440 = vpack.c.b16 %v430, %v429
      %v441 = vpack.c.b16 %v432, %v431
      %v442 = vpack.c.b16 %v434, %v433
      %451 = vmatprep.subr.bf16.mxu0 0
      %452 = vmatpush1.bf16.msra.mxu0 %v435
      %453 = vmatprep.subr.bf16.mxu0 0
      %454 = vmatpush1.bf16.msra.mxu0 %v436
      %455 = vmatprep.subr.bf16.mxu0 0
      %456 = vmatpush1.bf16.msra.mxu0 %v437
      %457 = vmatprep.subr.bf16.mxu0 0
      %458 = vmatpush1.bf16.msra.mxu0 %v438
      %459 = vmatprep.subr.bf16.mxu0 0
      %460 = vmatpush1.bf16.msra.mxu0 %v439
      %461 = vmatprep.subr.bf16.mxu0 0
      %462 = vmatpush1.bf16.msra.mxu0 %v440
      %463 = vmatprep.subr.bf16.mxu0 0
      %464 = vmatpush1.bf16.msra.mxu0 %v441
      %465 = vmatprep.subr.bf16.mxu0 0
      %466 = vmatpush1.bf16.msra.mxu0 %v442
      %467 = vmatprep.subr.bf16.mxu0 0
      %468 = vmatpush1.bf16.msra.mxu0 0
      %469 = vmatprep.subr.bf16.mxu0 0
      %470 = vmatpush1.bf16.msra.mxu0 0
      %471 = vmatprep.subr.bf16.mxu0 0
      %472 = vmatpush1.bf16.msra.mxu0 0
      %473 = vmatprep.subr.bf16.mxu0 0
      %474 = vmatpush1.bf16.msra.mxu0 0
      %475 = vmatprep.subr.bf16.mxu0 0
      %476 = vmatpush1.bf16.msra.mxu0 0
      %477 = vmatprep.subr.bf16.mxu0 0
      %478 = vmatpush1.bf16.msra.mxu0 0
      %479 = vmatprep.subr.bf16.mxu0 0
      %480 = vmatpush1.bf16.msra.mxu0 0
      %481 = vmatprep.subr.bf16.mxu0 0
      %482 = vmatpush1.bf16.msra.mxu0 0
      %483 = vmatprep.mubr.bf16.mxu0 0
      %484 = vmatmul.mubr.bf16.gmra.mrb[0].mxu0 %v395
      %v485 = vpop.f32.mrb[0].mxu0
      %v486 = vadd.f32 0.0, %v485
      %v487 = vpop.f32.mrb[0].mxu0
      %v488 = vpop.f32.mrb[0].mxu0
      %v489 = vadd.f32 0.0, %v488
      %v490 = vpop.f32.mrb[0].mxu0
      %491 = vmatprep.mubr.bf16.mxu0 0
      %492 = vmatmul.mubr.bf16.gmra.mrb[0].mxu0 %v396
      %v493 = vpop.f32.mrb[0].mxu0
      %v494 = vadd.f32 0.0, %v493
      %v495 = vpop.f32.mrb[0].mxu0
      %v496 = vpop.f32.mrb[0].mxu0
      %v497 = vadd.f32 0.0, %v496
      %v498 = vpop.f32.mrb[0].mxu0
      %499 = vmatprep.mubr.bf16.mxu0 0
      %500 = vmatmul.mubr.bf16.gmra.mrb[0].mxu0 %v397
      %v501 = vpop.f32.mrb[0].mxu0
      %v502 = vadd.f32 0.0, %v501
      %v503 = vpop.f32.mrb[0].mxu0
      %v504 = vpop.f32.mrb[0].mxu0
      %v505 = vadd.f32 0.0, %v504
      %v506 = vpop.f32.mrb[0].mxu0
      %507 = vmatprep.mubr.bf16.mxu0 0
      %508 = vmatmul.mubr.bf16.gmra.mrb[0].mxu0 %v398
      %v509 = vpop.f32.mrb[0].mxu0
      %v510 = vadd.f32 0.0, %v509
      %v511 = vpop.f32.mrb[0].mxu0
      %v512 = vpop.f32.mrb[0].mxu0
      %v513 = vadd.f32 0.0, %v512
      %v514 = vpop.f32.mrb[0].mxu0
      %515 = vdwg.mxu0
      %v524 = vunpack.c.l.b16 %v223
      %v525 = vunpack.c.l.b16 %v224
      %v526 = vunpack.c.l.b16 %v225
      %v527 = vunpack.c.l.b16 %v226
      %v528 = vunpack.c.l.b16 %v227
      %v529 = vunpack.c.l.b16 %v228
      %v530 = vunpack.c.l.b16 %v229
      %v531 = vunpack.c.l.b16 %v230
      %v532 = vpack.c.b16 %v525, %v524
      %v533 = vpack.c.b16 %v527, %v526
      %v534 = vpack.c.b16 %v529, %v528
      %v535 = vpack.c.b16 %v531, %v530
      %v556 = vunpack.c.l.b16 %v231
      %v557 = vunpack.c.l.b16 %v232
      %v558 = vunpack.c.l.b16 %v233
      %v559 = vunpack.c.l.b16 %v234
      %v560 = vunpack.c.l.b16 %v235
      %v561 = vunpack.c.l.b16 %v236
      %v562 = vunpack.c.l.b16 %v237
      %v563 = vunpack.c.l.b16 %v238
      %v564 = vunpack.c.l.b16 %v239
      %v565 = vunpack.c.l.b16 %v240
      %v566 = vunpack.c.l.b16 %v241
      %v567 = vunpack.c.l.b16 %v242
      %v568 = vunpack.c.l.b16 %v243
      %v569 = vunpack.c.l.b16 %v244
      %v570 = vunpack.c.l.b16 %v245
      %v571 = vunpack.c.l.b16 %v246
      %v572 = vpack.c.b16 %v557, %v556
      %v573 = vpack.c.b16 %v559, %v558
      %v574 = vpack.c.b16 %v561, %v560
      %v575 = vpack.c.b16 %v563, %v562
      %v576 = vpack.c.b16 %v565, %v564
      %v577 = vpack.c.b16 %v567, %v566
      %v578 = vpack.c.b16 %v569, %v568
      %v579 = vpack.c.b16 %v571, %v570
      %588 = vmatprep.subr.bf16.mxu0 0
      %589 = vmatpush1.bf16.msra.mxu0 %v572
      %590 = vmatprep.subr.bf16.mxu0 0
      %591 = vmatpush1.bf16.msra.mxu0 %v573
      %592 = vmatprep.subr.bf16.mxu0 0
      %593 = vmatpush1.bf16.msra.mxu0 %v574
      %594 = vmatprep.subr.bf16.mxu0 0
      %595 = vmatpush1.bf16.msra.mxu0 %v575
      %596 = vmatprep.subr.bf16.mxu0 0
      %597 = vmatpush1.bf16.msra.mxu0 %v576
      %598 = vmatprep.subr.bf16.mxu0 0
      %599 = vmatpush1.bf16.msra.mxu0 %v577
      %600 = vmatprep.subr.bf16.mxu0 0
      %601 = vmatpush1.bf16.msra.mxu0 %v578
      %602 = vmatprep.subr.bf16.mxu0 0
      %603 = vmatpush1.bf16.msra.mxu0 %v579
      %604 = vmatprep.subr.bf16.mxu0 0
      %605 = vmatpush1.bf16.msra.mxu0 0
      %606 = vmatprep.subr.bf16.mxu0 0
      %607 = vmatpush1.bf16.msra.mxu0 0
      %608 = vmatprep.subr.bf16.mxu0 0
      %609 = vmatpush1.bf16.msra.mxu0 0
      %610 = vmatprep.subr.bf16.mxu0 0
      %611 = vmatpush1.bf16.msra.mxu0 0
      %612 = vmatprep.subr.bf16.mxu0 0
      %613 = vmatpush1.bf16.msra.mxu0 0
      %614 = vmatprep.subr.bf16.mxu0 0
      %615 = vmatpush1.bf16.msra.mxu0 0
      %616 = vmatprep.subr.bf16.mxu0 0
      %617 = vmatpush1.bf16.msra.mxu0 0
      %618 = vmatprep.subr.bf16.mxu0 0
      %619 = vmatpush1.bf16.msra.mxu0 0
      %620 = vmatprep.mubr.bf16.mxu0 0
      %621 = vmatmul.mubr.bf16.gmra.mrb[0].mxu0 %v532
      %v622 = vpop.f32.mrb[0].mxu0
      %v623 = vadd.f32 %v486, %v622
      %v624 = vpop.f32.mrb[0].mxu0
      %v625 = vpop.f32.mrb[0].mxu0
      %v626 = vadd.f32 %v489, %v625
      %v627 = vpop.f32.mrb[0].mxu0
      %628 = vmatprep.mubr.bf16.mxu0 0
      %629 = vmatmul.mubr.bf16.gmra.mrb[0].mxu0 %v533
      %v630 = vpop.f32.mrb[0].mxu0
      %v631 = vadd.f32 %v494, %v630
      %v632 = vpop.f32.mrb[0].mxu0
      %v633 = vpop.f32.mrb[0].mxu0
      %v634 = vadd.f32 %v497, %v633
      %v635 = vpop.f32.mrb[0].mxu0
      %636 = vmatprep.mubr.bf16.mxu0 0
      %637 = vmatmul.mubr.bf16.gmra.mrb[0].mxu0 %v534
      %v638 = vpop.f32.mrb[0].mxu0
      %v639 = vadd.f32 %v502, %v638
      %v640 = vpop.f32.mrb[0].mxu0
      %v641 = vpop.f32.mrb[0].mxu0
      %v642 = vadd.f32 %v505, %v641
      %v643 = vpop.f32.mrb[0].mxu0
      %644 = vmatprep.mubr.bf16.mxu0 0
      %645 = vmatmul.mubr.bf16.gmra.mrb[0].mxu0 %v535
      %v646 = vpop.f32.mrb[0].mxu0
      %v647 = vadd.f32 %v510, %v646
      %v648 = vpop.f32.mrb[0].mxu0
      %v649 = vpop.f32.mrb[0].mxu0
      %v650 = vadd.f32 %v513, %v649
      %v651 = vpop.f32.mrb[0].mxu0
      %652 = vdwg.mxu0
      %v653 = vld [vmem:[%s206] sm:$0xe]
      %v654 = vld [vmem:[%s206 + $0x8] sm:$0xe]
      %v655 = vld [vmem:[%s206 + $0x10] sm:$0xe]
      %v656 = vld [vmem:[%s206 + $0x18] sm:$0xe]
      %v657 = vld [vmem:[%s206 + $0x20] sm:$0xe]
      %v658 = vld [vmem:[%s206 + $0x28] sm:$0xe]
      %v659 = vld [vmem:[%s206 + $0x30] sm:$0xe]
      %v660 = vld [vmem:[%s206 + $0x38] sm:$0xe]
      %vm677 = vcmask 1042432
      %vm678 = vcmask 1046532
      %vm679 = vmor %vm677, %vm678
      %v680 = vrot.slane %v653, 5
      %v681 = vrot.slane %v680, 4
      %v682 = vrot.slane %v247, 5
      %v683 = vsel %vm679, %v681, %v682
      %v684 = vrot.slane %v654, 5
      %v685 = vrot.slane %v684, 4
      %v686 = vrot.slane %v248, 5
      %v687 = vsel %vm679, %v685, %v686
      %v688 = vrot.slane %v655, 5
      %v689 = vrot.slane %v688, 4
      %v690 = vrot.slane %v249, 5
      %v691 = vsel %vm679, %v689, %v690
      %v692 = vrot.slane %v656, 5
      %v693 = vrot.slane %v692, 4
      %v694 = vrot.slane %v250, 5
      %v695 = vsel %vm679, %v693, %v694
      %v696 = vrot.slane %v657, 5
      %v697 = vrot.slane %v696, 4
      %v698 = vrot.slane %v251, 5
      %v699 = vsel %vm679, %v697, %v698
      %v700 = vrot.slane %v658, 5
      %v701 = vrot.slane %v700, 4
      %v702 = vrot.slane %v252, 5
      %v703 = vsel %vm679, %v701, %v702
      %v704 = vrot.slane %v659, 5
      %v705 = vrot.slane %v704, 4
      %v706 = vrot.slane %v253, 5
      %v707 = vsel %vm679, %v705, %v706
      %v708 = vrot.slane %v660, 5
      %v709 = vrot.slane %v708, 4
      %v710 = vrot.slane %v254, 5
      %v711 = vsel %vm679, %v709, %v710
      %s712 = scalar_lea.vmem %s210, 128
      %v713 = vld [vmem:[%s712] sm:$0xf]
      %v714 = vld [vmem:[%s712 + $0x4] sm:$0xf]
      %v715 = vld [vmem:[%s712 + $0x8] sm:$0xf]
      %v716 = vld [vmem:[%s712 + $0xc] sm:$0xf]
      %v717 = vld [vmem:[%s712 + $0x10] sm:$0xf]
      %v718 = vld [vmem:[%s712 + $0x14] sm:$0xf]
      %v719 = vld [vmem:[%s712 + $0x18] sm:$0xf]
      %v720 = vld [vmem:[%s712 + $0x1c] sm:$0xf]
      %v721 = vld [vmem:[%s712 + $0x20] sm:$0xf]
      %v722 = vld [vmem:[%s712 + $0x24] sm:$0xf]
      %v723 = vld [vmem:[%s712 + $0x28] sm:$0xf]
      %v724 = vld [vmem:[%s712 + $0x2c] sm:$0xf]
      %v725 = vld [vmem:[%s712 + $0x30] sm:$0xf]
      %v726 = vld [vmem:[%s712 + $0x34] sm:$0xf]
      %v727 = vld [vmem:[%s712 + $0x38] sm:$0xf]
      %v728 = vld [vmem:[%s712 + $0x3c] sm:$0xf]
      %v729 = vunpack.c.l.b16 %v683
      %v730 = vunpack.c.l.b16 %v687
      %v731 = vunpack.c.l.b16 %v691
      %v732 = vunpack.c.l.b16 %v695
      %v733 = vunpack.c.l.b16 %v699
      %v734 = vunpack.c.l.b16 %v703
      %v735 = vunpack.c.l.b16 %v707
      %v736 = vunpack.c.l.b16 %v711
      %v737 = vpack.c.b16 %v730, %v729
      %v738 = vpack.c.b16 %v732, %v731
      %v739 = vpack.c.b16 %v734, %v733
      %v740 = vpack.c.b16 %v736, %v735
      %v761 = vunpack.c.l.b16 %v713
      %v762 = vunpack.c.l.b16 %v714
      %v763 = vunpack.c.l.b16 %v715
      %v764 = vunpack.c.l.b16 %v716
      %v765 = vunpack.c.l.b16 %v717
      %v766 = vunpack.c.l.b16 %v718
      %v767 = vunpack.c.l.b16 %v719
      %v768 = vunpack.c.l.b16 %v720
      %v769 = vunpack.c.l.b16 %v721
      %v770 = vunpack.c.l.b16 %v722
      %v771 = vunpack.c.l.b16 %v723
      %v772 = vunpack.c.l.b16 %v724
      %v773 = vunpack.c.l.b16 %v725
      %v774 = vunpack.c.l.b16 %v726
      %v775 = vunpack.c.l.b16 %v727
      %v776 = vunpack.c.l.b16 %v728
      %v777 = vpack.c.b16 %v762, %v761
      %v778 = vpack.c.b16 %v764, %v763
      %v779 = vpack.c.b16 %v766, %v765
      %v780 = vpack.c.b16 %v768, %v767
      %v781 = vpack.c.b16 %v770, %v769
      %v782 = vpack.c.b16 %v772, %v771
      %v783 = vpack.c.b16 %v774, %v773
      %v784 = vpack.c.b16 %v776, %v775
      %793 = vmatprep.subr.bf16.mxu0 0
      %794 = vmatpush1.bf16.msra.mxu0 %v777
      %795 = vmatprep.subr.bf16.mxu0 0
      %796 = vmatpush1.bf16.msra.mxu0 %v778
      %797 = vmatprep.subr.bf16.mxu0 0
      %798 = vmatpush1.bf16.msra.mxu0 %v779
      %799 = vmatprep.subr.bf16.mxu0 0
      %800 = vmatpush1.bf16.msra.mxu0 %v780
      %801 = vmatprep.subr.bf16.mxu0 0
      %802 = vmatpush1.bf16.msra.mxu0 %v781
      %803 = vmatprep.subr.bf16.mxu0 0
      %804 = vmatpush1.bf16.msra.mxu0 %v782
      %805 = vmatprep.subr.bf16.mxu0 0
      %806 = vmatpush1.bf16.msra.mxu0 %v783
      %807 = vmatprep.subr.bf16.mxu0 0
      %808 = vmatpush1.bf16.msra.mxu0 %v784
      %809 = vmatprep.subr.bf16.mxu0 0
      %810 = vmatpush1.bf16.msra.mxu0 0
      %811 = vmatprep.subr.bf16.mxu0 0
      %812 = vmatpush1.bf16.msra.mxu0 0
      %813 = vmatprep.subr.bf16.mxu0 0
      %814 = vmatpush1.bf16.msra.mxu0 0
      %815 = vmatprep.subr.bf16.mxu0 0
      %816 = vmatpush1.bf16.msra.mxu0 0
      %817 = vmatprep.subr.bf16.mxu0 0
      %818 = vmatpush1.bf16.msra.mxu0 0
      %819 = vmatprep.subr.bf16.mxu0 0
      %820 = vmatpush1.bf16.msra.mxu0 0
      %821 = vmatprep.subr.bf16.mxu0 0
      %822 = vmatpush1.bf16.msra.mxu0 0
      %823 = vmatprep.subr.bf16.mxu0 0
      %824 = vmatpush1.bf16.msra.mxu0 0
      %825 = vmatprep.mubr.bf16.mxu0 0
      %826 = vmatmul.mubr.bf16.gmra.mrb[0].mxu0 %v737
      %v827 = vpop.f32.mrb[0].mxu0
      %v828 = vadd.f32 0.0, %v827
      %v829 = vpop.f32.mrb[0].mxu0
      %v830 = vpop.f32.mrb[0].mxu0
      %v831 = vadd.f32 0.0, %v830
      %v832 = vpop.f32.mrb[0].mxu0
      %833 = vmatprep.mubr.bf16.mxu0 0
      %834 = vmatmul.mubr.bf16.gmra.mrb[0].mxu0 %v738
      %v835 = vpop.f32.mrb[0].mxu0
      %v836 = vadd.f32 0.0, %v835
      %v837 = vpop.f32.mrb[0].mxu0
      %v838 = vpop.f32.mrb[0].mxu0
      %v839 = vadd.f32 0.0, %v838
      %v840 = vpop.f32.mrb[0].mxu0
      %841 = vmatprep.mubr.bf16.mxu0 0
      %842 = vmatmul.mubr.bf16.gmra.mrb[0].mxu0 %v739
      %v843 = vpop.f32.mrb[0].mxu0
      %v844 = vadd.f32 0.0, %v843
      %v845 = vpop.f32.mrb[0].mxu0
      %v846 = vpop.f32.mrb[0].mxu0
      %v847 = vadd.f32 0.0, %v846
      %v848 = vpop.f32.mrb[0].mxu0
      %849 = vmatprep.mubr.bf16.mxu0 0
      %850 = vmatmul.mubr.bf16.gmra.mrb[0].mxu0 %v740
      %v851 = vpop.f32.mrb[0].mxu0
      %v852 = vadd.f32 0.0, %v851
      %v853 = vpop.f32.mrb[0].mxu0
      %v854 = vpop.f32.mrb[0].mxu0
      %v855 = vadd.f32 0.0, %v854
      %v856 = vpop.f32.mrb[0].mxu0
      %857 = vdwg.mxu0
      %v858 = vadd.f32 %v623, %v828
      %v859 = vadd.f32 %v626, %v831
      %v860 = vadd.f32 %v631, %v836
      %v861 = vadd.f32 %v634, %v839
      %v862 = vadd.f32 %v639, %v844
      %v863 = vadd.f32 %v642, %v847
      %v864 = vadd.f32 %v647, %v852
      %v865 = vadd.f32 %v650, %v855
      %s866 = scalar_lea.vmem %s206, 8
      %v867 = vld [vmem:[%s866] sm:$0xf]
      %v868 = vld [vmem:[%s866 + $0x8] sm:$0xf]
      %v869 = vld [vmem:[%s866 + $0x10] sm:$0xf]
      %v870 = vld [vmem:[%s866 + $0x18] sm:$0xf]
      %v871 = vld [vmem:[%s866 + $0x20] sm:$0xf]
      %v872 = vld [vmem:[%s866 + $0x28] sm:$0xf]
      %v873 = vld [vmem:[%s866 + $0x30] sm:$0xf]
      %v874 = vld [vmem:[%s866 + $0x38] sm:$0xf]
      %s875 = scalar_lea.vmem %s210, 192
      %v876 = vld [vmem:[%s875] sm:$0xf]
      %v877 = vld [vmem:[%s875 + $0x4] sm:$0xf]
      %v878 = vld [vmem:[%s875 + $0x8] sm:$0xf]
      %v879 = vld [vmem:[%s875 + $0xc] sm:$0xf]
      %v880 = vld [vmem:[%s875 + $0x10] sm:$0xf]
      %v881 = vld [vmem:[%s875 + $0x14] sm:$0xf]
      %v882 = vld [vmem:[%s875 + $0x18] sm:$0xf]
      %v883 = vld [vmem:[%s875 + $0x1c] sm:$0xf]
      %v884 = vld [vmem:[%s875 + $0x20] sm:$0xf]
      %v885 = vld [vmem:[%s875 + $0x24] sm:$0xf]
      %v886 = vld [vmem:[%s875 + $0x28] sm:$0xf]
      %v887 = vld [vmem:[%s875 + $0x2c] sm:$0xf]
      %v888 = vld [vmem:[%s875 + $0x30] sm:$0xf]
      %v889 = vld [vmem:[%s875 + $0x34] sm:$0xf]
      %v890 = vld [vmem:[%s875 + $0x38] sm:$0xf]
      %v891 = vld [vmem:[%s875 + $0x3c] sm:$0xf]
      %v900 = vunpack.c.l.b16 %v867
      %v901 = vunpack.c.l.b16 %v868
      %v902 = vunpack.c.l.b16 %v869
      %v903 = vunpack.c.l.b16 %v870
      %v904 = vunpack.c.l.b16 %v871
      %v905 = vunpack.c.l.b16 %v872
      %v906 = vunpack.c.l.b16 %v873
      %v907 = vunpack.c.l.b16 %v874
      %v908 = vpack.c.b16 %v901, %v900
      %v909 = vpack.c.b16 %v903, %v902
      %v910 = vpack.c.b16 %v905, %v904
      %v911 = vpack.c.b16 %v907, %v906
      %v932 = vunpack.c.l.b16 %v876
      %v933 = vunpack.c.l.b16 %v877
      %v934 = vunpack.c.l.b16 %v878
      %v935 = vunpack.c.l.b16 %v879
      %v936 = vunpack.c.l.b16 %v880
      %v937 = vunpack.c.l.b16 %v881
      %v938 = vunpack.c.l.b16 %v882
      %v939 = vunpack.c.l.b16 %v883
      %v940 = vunpack.c.l.b16 %v884
      %v941 = vunpack.c.l.b16 %v885
      %v942 = vunpack.c.l.b16 %v886
      %v943 = vunpack.c.l.b16 %v887
      %v944 = vunpack.c.l.b16 %v888
      %v945 = vunpack.c.l.b16 %v889
      %v946 = vunpack.c.l.b16 %v890
      %v947 = vunpack.c.l.b16 %v891
      %v948 = vpack.c.b16 %v933, %v932
      %v949 = vpack.c.b16 %v935, %v934
      %v950 = vpack.c.b16 %v937, %v936
      %v951 = vpack.c.b16 %v939, %v938
      %v952 = vpack.c.b16 %v941, %v940
      %v953 = vpack.c.b16 %v943, %v942
      %v954 = vpack.c.b16 %v945, %v944
      %v955 = vpack.c.b16 %v947, %v946
      %964 = vmatprep.subr.bf16.mxu0 0
      %965 = vmatpush1.bf16.msra.mxu0 %v948
      %966 = vmatprep.subr.bf16.mxu0 0
      %967 = vmatpush1.bf16.msra.mxu0 %v949
      %968 = vmatprep.subr.bf16.mxu0 0
      %969 = vmatpush1.bf16.msra.mxu0 %v950
      %970 = vmatprep.subr.bf16.mxu0 0
      %971 = vmatpush1.bf16.msra.mxu0 %v951
      %972 = vmatprep.subr.bf16.mxu0 0
      %973 = vmatpush1.bf16.msra.mxu0 %v952
      %974 = vmatprep.subr.bf16.mxu0 0
      %975 = vmatpush1.bf16.msra.mxu0 %v953
      %976 = vmatprep.subr.bf16.mxu0 0
      %977 = vmatpush1.bf16.msra.mxu0 %v954
      %978 = vmatprep.subr.bf16.mxu0 0
      %979 = vmatpush1.bf16.msra.mxu0 %v955
      %980 = vmatprep.subr.bf16.mxu0 0
      %981 = vmatpush1.bf16.msra.mxu0 0
      %982 = vmatprep.subr.bf16.mxu0 0
      %983 = vmatpush1.bf16.msra.mxu0 0
      %984 = vmatprep.subr.bf16.mxu0 0
      %985 = vmatpush1.bf16.msra.mxu0 0
      %986 = vmatprep.subr.bf16.mxu0 0
      %987 = vmatpush1.bf16.msra.mxu0 0
      %988 = vmatprep.subr.bf16.mxu0 0
      %989 = vmatpush1.bf16.msra.mxu0 0
      %990 = vmatprep.subr.bf16.mxu0 0
      %991 = vmatpush1.bf16.msra.mxu0 0
      %992 = vmatprep.subr.bf16.mxu0 0
      %993 = vmatpush1.bf16.msra.mxu0 0
      %994 = vmatprep.subr.bf16.mxu0 0
      %995 = vmatpush1.bf16.msra.mxu0 0
      %996 = vmatprep.mubr.bf16.mxu0 0
      %997 = vmatmul.mubr.bf16.gmra.mrb[0].mxu0 %v908
      %v998 = vpop.f32.mrb[0].mxu0
      %v999 = vadd.f32 0.0, %v998
      %v1000 = vpop.f32.mrb[0].mxu0
      %v1001 = vpop.f32.mrb[0].mxu0
      %v1002 = vadd.f32 0.0, %v1001
      %v1003 = vpop.f32.mrb[0].mxu0
      %1004 = vmatprep.mubr.bf16.mxu0 0
      %1005 = vmatmul.mubr.bf16.gmra.mrb[0].mxu0 %v909
      %v1006 = vpop.f32.mrb[0].mxu0
      %v1007 = vadd.f32 0.0, %v1006
      %v1008 = vpop.f32.mrb[0].mxu0
      %v1009 = vpop.f32.mrb[0].mxu0
      %v1010 = vadd.f32 0.0, %v1009
      %v1011 = vpop.f32.mrb[0].mxu0
      %1012 = vmatprep.mubr.bf16.mxu0 0
      %1013 = vmatmul.mubr.bf16.gmra.mrb[0].mxu0 %v910
      %v1014 = vpop.f32.mrb[0].mxu0
      %v1015 = vadd.f32 0.0, %v1014
      %v1016 = vpop.f32.mrb[0].mxu0
      %v1017 = vpop.f32.mrb[0].mxu0
      %v1018 = vadd.f32 0.0, %v1017
      %v1019 = vpop.f32.mrb[0].mxu0
      %1020 = vmatprep.mubr.bf16.mxu0 0
      %1021 = vmatmul.mubr.bf16.gmra.mrb[0].mxu0 %v911
      %v1022 = vpop.f32.mrb[0].mxu0
      %v1023 = vadd.f32 0.0, %v1022
      %v1024 = vpop.f32.mrb[0].mxu0
      %v1025 = vpop.f32.mrb[0].mxu0
      %v1026 = vadd.f32 0.0, %v1025
      %v1027 = vpop.f32.mrb[0].mxu0
      %1028 = vdwg.mxu0
      %v1029 = vadd.f32 %v858, %v999
      %v1030 = vadd.f32 %v859, %v1002
      %v1031 = vadd.f32 %v860, %v1007
      %v1032 = vadd.f32 %v861, %v1010
      %v1033 = vadd.f32 %v862, %v1015
      %v1034 = vadd.f32 %v863, %v1018
      %v1035 = vadd.f32 %v864, %v1023
      %v1036 = vadd.f32 %v865, %v1026
      %v1037 = vld [vmem:[%s866] sm:$0xf]
      %v1038 = vld [vmem:[%s866 + $0x4] sm:$0x1]
      %v1039 = vld [vmem:[%s866 + $0x8] sm:$0xf]
      %v1040 = vld [vmem:[%s866 + $0xc] sm:$0x1]
      %v1041 = vld [vmem:[%s866 + $0x10] sm:$0xf]
      %v1042 = vld [vmem:[%s866 + $0x14] sm:$0x1]
      %v1043 = vld [vmem:[%s866 + $0x18] sm:$0xf]
      %v1044 = vld [vmem:[%s866 + $0x1c] sm:$0x1]
      %v1045 = vld [vmem:[%s866 + $0x20] sm:$0xf]
      %v1046 = vld [vmem:[%s866 + $0x24] sm:$0x1]
      %v1047 = vld [vmem:[%s866 + $0x28] sm:$0xf]
      %v1048 = vld [vmem:[%s866 + $0x2c] sm:$0x1]
      %v1049 = vld [vmem:[%s866 + $0x30] sm:$0xf]
      %v1050 = vld [vmem:[%s866 + $0x34] sm:$0x1]
      %v1051 = vld [vmem:[%s866 + $0x38] sm:$0xf]
      %v1052 = vld [vmem:[%s866 + $0x3c] sm:$0x1]
      %v1054 = vshrl.u32 %v1037, 16
      %v1056 = vrot.slane %v1054, 4
      %v1057 = vshll.u32 %v1037, 16
      %v1059 = vrot.slane %v1057, 5
      %v1060 = vor.u32 %v1056, %v1059
      %v1061 = vrot.slane %v1060, 4
      %v1063 = vshll.u32 %v1038, 16
      %v1065 = vrot.slane %v1063, 5
      %v1066 = vsel %vm257, %v1061, %v1065
      %v1068 = vshrl.u32 %v1039, 16
      %v1070 = vrot.slane %v1068, 4
      %v1071 = vshll.u32 %v1039, 16
      %v1073 = vrot.slane %v1071, 5
      %v1074 = vor.u32 %v1070, %v1073
      %v1075 = vrot.slane %v1074, 4
      %v1077 = vshll.u32 %v1040, 16
      %v1079 = vrot.slane %v1077, 5
      %v1080 = vsel %vm257, %v1075, %v1079
      %v1082 = vshrl.u32 %v1041, 16
      %v1084 = vrot.slane %v1082, 4
      %v1085 = vshll.u32 %v1041, 16
      %v1087 = vrot.slane %v1085, 5
      %v1088 = vor.u32 %v1084, %v1087
      %v1089 = vrot.slane %v1088, 4
      %v1091 = vshll.u32 %v1042, 16
      %v1093 = vrot.slane %v1091, 5
      %v1094 = vsel %vm257, %v1089, %v1093
      %v1096 = vshrl.u32 %v1043, 16
      %v1098 = vrot.slane %v1096, 4
      %v1099 = vshll.u32 %v1043, 16
      %v1101 = vrot.slane %v1099, 5
      %v1102 = vor.u32 %v1098, %v1101
      %v1103 = vrot.slane %v1102, 4
      %v1105 = vshll.u32 %v1044, 16
      %v1107 = vrot.slane %v1105, 5
      %v1108 = vsel %vm257, %v1103, %v1107
      %v1110 = vshrl.u32 %v1045, 16
      %v1112 = vrot.slane %v1110, 4
      %v1113 = vshll.u32 %v1045, 16
      %v1115 = vrot.slane %v1113, 5
      %v1116 = vor.u32 %v1112, %v1115
      %v1117 = vrot.slane %v1116, 4
      %v1119 = vshll.u32 %v1046, 16
      %v1121 = vrot.slane %v1119, 5
      %v1122 = vsel %vm257, %v1117, %v1121
      %v1124 = vshrl.u32 %v1047, 16
      %v1126 = vrot.slane %v1124, 4
      %v1127 = vshll.u32 %v1047, 16
      %v1129 = vrot.slane %v1127, 5
      %v1130 = vor.u32 %v1126, %v1129
      %v1131 = vrot.slane %v1130, 4
      %v1133 = vshll.u32 %v1048, 16
      %v1135 = vrot.slane %v1133, 5
      %v1136 = vsel %vm257, %v1131, %v1135
      %v1138 = vshrl.u32 %v1049, 16
      %v1140 = vrot.slane %v1138, 4
      %v1141 = vshll.u32 %v1049, 16
      %v1143 = vrot.slane %v1141, 5
      %v1144 = vor.u32 %v1140, %v1143
      %v1145 = vrot.slane %v1144, 4
      %v1147 = vshll.u32 %v1050, 16
      %v1149 = vrot.slane %v1147, 5
      %v1150 = vsel %vm257, %v1145, %v1149
      %v1152 = vshrl.u32 %v1051, 16
      %v1154 = vrot.slane %v1152, 4
      %v1155 = vshll.u32 %v1051, 16
      %v1157 = vrot.slane %v1155, 5
      %v1158 = vor.u32 %v1154, %v1157
      %v1159 = vrot.slane %v1158, 4
      %v1161 = vshll.u32 %v1052, 16
      %v1163 = vrot.slane %v1161, 5
      %v1164 = vsel %vm257, %v1159, %v1163
      %s1165 = scalar_lea.vmem %s210, 256
      %v1166 = vld [vmem:[%s1165] sm:$0xf]
      %v1167 = vld [vmem:[%s1165 + $0x4] sm:$0xf]
      %v1168 = vld [vmem:[%s1165 + $0x8] sm:$0xf]
      %v1169 = vld [vmem:[%s1165 + $0xc] sm:$0xf]
      %v1170 = vld [vmem:[%s1165 + $0x10] sm:$0xf]
      %v1171 = vld [vmem:[%s1165 + $0x14] sm:$0xf]
      %v1172 = vld [vmem:[%s1165 + $0x18] sm:$0xf]
      %v1173 = vld [vmem:[%s1165 + $0x1c] sm:$0xf]
      %v1174 = vld [vmem:[%s1165 + $0x20] sm:$0xf]
      %v1175 = vld [vmem:[%s1165 + $0x24] sm:$0xf]
      %v1176 = vld [vmem:[%s1165 + $0x28] sm:$0xf]
      %v1177 = vld [vmem:[%s1165 + $0x2c] sm:$0xf]
      %v1178 = vld [vmem:[%s1165 + $0x30] sm:$0xf]
      %v1179 = vld [vmem:[%s1165 + $0x34] sm:$0xf]
      %v1180 = vld [vmem:[%s1165 + $0x38] sm:$0xf]
      %v1181 = vld [vmem:[%s1165 + $0x3c] sm:$0xf]
      %v1182 = vunpack.c.l.b16 %v1066
      %v1183 = vunpack.c.l.b16 %v1080
      %v1184 = vunpack.c.l.b16 %v1094
      %v1185 = vunpack.c.l.b16 %v1108
      %v1186 = vunpack.c.l.b16 %v1122
      %v1187 = vunpack.c.l.b16 %v1136
      %v1188 = vunpack.c.l.b16 %v1150
      %v1189 = vunpack.c.l.b16 %v1164
      %v1190 = vpack.c.b16 %v1183, %v1182
      %v1191 = vpack.c.b16 %v1185, %v1184
      %v1192 = vpack.c.b16 %v1187, %v1186
      %v1193 = vpack.c.b16 %v1189, %v1188
      %v1214 = vunpack.c.l.b16 %v1166
      %v1215 = vunpack.c.l.b16 %v1167
      %v1216 = vunpack.c.l.b16 %v1168
      %v1217 = vunpack.c.l.b16 %v1169
      %v1218 = vunpack.c.l.b16 %v1170
      %v1219 = vunpack.c.l.b16 %v1171
      %v1220 = vunpack.c.l.b16 %v1172
      %v1221 = vunpack.c.l.b16 %v1173
      %v1222 = vunpack.c.l.b16 %v1174
      %v1223 = vunpack.c.l.b16 %v1175
      %v1224 = vunpack.c.l.b16 %v1176
      %v1225 = vunpack.c.l.b16 %v1177
      %v1226 = vunpack.c.l.b16 %v1178
      %v1227 = vunpack.c.l.b16 %v1179
      %v1228 = vunpack.c.l.b16 %v1180
      %v1229 = vunpack.c.l.b16 %v1181
      %v1230 = vpack.c.b16 %v1215, %v1214
      %v1231 = vpack.c.b16 %v1217, %v1216
      %v1232 = vpack.c.b16 %v1219, %v1218
      %v1233 = vpack.c.b16 %v1221, %v1220
      %v1234 = vpack.c.b16 %v1223, %v1222
      %v1235 = vpack.c.b16 %v1225, %v1224
      %v1236 = vpack.c.b16 %v1227, %v1226
      %v1237 = vpack.c.b16 %v1229, %v1228
      %1246 = vmatprep.subr.bf16.mxu0 0
      %1247 = vmatpush1.bf16.msra.mxu0 %v1230
      %1248 = vmatprep.subr.bf16.mxu0 0
      %1249 = vmatpush1.bf16.msra.mxu0 %v1231
      %1250 = vmatprep.subr.bf16.mxu0 0
      %1251 = vmatpush1.bf16.msra.mxu0 %v1232
      %1252 = vmatprep.subr.bf16.mxu0 0
      %1253 = vmatpush1.bf16.msra.mxu0 %v1233
      %1254 = vmatprep.subr.bf16.mxu0 0
      %1255 = vmatpush1.bf16.msra.mxu0 %v1234
      %1256 = vmatprep.subr.bf16.mxu0 0
      %1257 = vmatpush1.bf16.msra.mxu0 %v1235
      %1258 = vmatprep.subr.bf16.mxu0 0
      %1259 = vmatpush1.bf16.msra.mxu0 %v1236
      %1260 = vmatprep.subr.bf16.mxu0 0
      %1261 = vmatpush1.bf16.msra.mxu0 %v1237
      %1262 = vmatprep.subr.bf16.mxu0 0
      %1263 = vmatpush1.bf16.msra.mxu0 0
      %1264 = vmatprep.subr.bf16.mxu0 0
      %1265 = vmatpush1.bf16.msra.mxu0 0
      %1266 = vmatprep.subr.bf16.mxu0 0
      %1267 = vmatpush1.bf16.msra.mxu0 0
      %1268 = vmatprep.subr.bf16.mxu0 0
      %1269 = vmatpush1.bf16.msra.mxu0 0
      %1270 = vmatprep.subr.bf16.mxu0 0
      %1271 = vmatpush1.bf16.msra.mxu0 0
      %1272 = vmatprep.subr.bf16.mxu0 0
      %1273 = vmatpush1.bf16.msra.mxu0 0
      %1274 = vmatprep.subr.bf16.mxu0 0
      %1275 = vmatpush1.bf16.msra.mxu0 0
      %1276 = vmatprep.subr.bf16.mxu0 0
      %1277 = vmatpush1.bf16.msra.mxu0 0
      %1278 = vmatprep.mubr.bf16.mxu0 0
      %1279 = vmatmul.mubr.bf16.gmra.mrb[0].mxu0 %v1190
      %v1280 = vpop.f32.mrb[0].mxu0
      %v1281 = vadd.f32 0.0, %v1280
      %v1282 = vpop.f32.mrb[0].mxu0
      %v1283 = vpop.f32.mrb[0].mxu0
      %v1284 = vadd.f32 0.0, %v1283
      %v1285 = vpop.f32.mrb[0].mxu0
      %1286 = vmatprep.mubr.bf16.mxu0 0
      %1287 = vmatmul.mubr.bf16.gmra.mrb[0].mxu0 %v1191
      %v1288 = vpop.f32.mrb[0].mxu0
      %v1289 = vadd.f32 0.0, %v1288
      %v1290 = vpop.f32.mrb[0].mxu0
      %v1291 = vpop.f32.mrb[0].mxu0
      %v1292 = vadd.f32 0.0, %v1291
      %v1293 = vpop.f32.mrb[0].mxu0
      %1294 = vmatprep.mubr.bf16.mxu0 0
      %1295 = vmatmul.mubr.bf16.gmra.mrb[0].mxu0 %v1192
      %v1296 = vpop.f32.mrb[0].mxu0
      %v1297 = vadd.f32 0.0, %v1296
      %v1298 = vpop.f32.mrb[0].mxu0
      %v1299 = vpop.f32.mrb[0].mxu0
      %v1300 = vadd.f32 0.0, %v1299
      %v1301 = vpop.f32.mrb[0].mxu0
      %1302 = vmatprep.mubr.bf16.mxu0 0
      %1303 = vmatmul.mubr.bf16.gmra.mrb[0].mxu0 %v1193
      %v1304 = vpop.f32.mrb[0].mxu0
      %v1305 = vadd.f32 0.0, %v1304
      %v1306 = vpop.f32.mrb[0].mxu0
      %v1307 = vpop.f32.mrb[0].mxu0
      %v1308 = vadd.f32 0.0, %v1307
      %v1309 = vpop.f32.mrb[0].mxu0
      %1310 = vdwg.mxu0
      %v1311 = vadd.f32 %v1029, %v1281
      %v1312 = vadd.f32 %v1030, %v1284
      %v1313 = vadd.f32 %v1031, %v1289
      %v1314 = vadd.f32 %v1032, %v1292
      %v1315 = vadd.f32 %v1033, %v1297
      %v1316 = vadd.f32 %v1034, %v1300
      %v1317 = vadd.f32 %v1035, %v1305
      %v1318 = vadd.f32 %v1036, %v1308
      %v1319 = vld [vmem:[%s866] sm:$0xe]
      %v1320 = vld [vmem:[%s866 + $0x8] sm:$0xe]
      %v1321 = vld [vmem:[%s866 + $0x10] sm:$0xe]
      %v1322 = vld [vmem:[%s866 + $0x18] sm:$0xe]
      %v1323 = vld [vmem:[%s866 + $0x20] sm:$0xe]
      %v1324 = vld [vmem:[%s866 + $0x28] sm:$0xe]
      %v1325 = vld [vmem:[%s866 + $0x30] sm:$0xe]
      %v1326 = vld [vmem:[%s866 + $0x38] sm:$0xe]
      %v1343 = vrot.slane %v1319, 5
      %v1344 = vrot.slane %v1343, 4
      %v1345 = vrot.slane %v1038, 5
      %v1346 = vsel %vm679, %v1344, %v1345
      %v1347 = vrot.slane %v1320, 5
      %v1348 = vrot.slane %v1347, 4
      %v1349 = vrot.slane %v1040, 5
      %v1350 = vsel %vm679, %v1348, %v1349
      %v1351 = vrot.slane %v1321, 5
      %v1352 = vrot.slane %v1351, 4
      %v1353 = vrot.slane %v1042, 5
      %v1354 = vsel %vm679, %v1352, %v1353
      %v1355 = vrot.slane %v1322, 5
      %v1356 = vrot.slane %v1355, 4
      %v1357 = vrot.slane %v1044, 5
      %v1358 = vsel %vm679, %v1356, %v1357
      %v1359 = vrot.slane %v1323, 5
      %v1360 = vrot.slane %v1359, 4
      %v1361 = vrot.slane %v1046, 5
      %v1362 = vsel %vm679, %v1360, %v1361
      %v1363 = vrot.slane %v1324, 5
      %v1364 = vrot.slane %v1363, 4
      %v1365 = vrot.slane %v1048, 5
      %v1366 = vsel %vm679, %v1364, %v1365
      %v1367 = vrot.slane %v1325, 5
      %v1368 = vrot.slane %v1367, 4
      %v1369 = vrot.slane %v1050, 5
      %v1370 = vsel %vm679, %v1368, %v1369
      %v1371 = vrot.slane %v1326, 5
      %v1372 = vrot.slane %v1371, 4
      %v1373 = vrot.slane %v1052, 5
      %v1374 = vsel %vm679, %v1372, %v1373
      %s1375 = scalar_lea.vmem %s210, 320
      %v1376 = vld [vmem:[%s1375] sm:$0xf]
      %v1377 = vld [vmem:[%s1375 + $0x4] sm:$0xf]
      %v1378 = vld [vmem:[%s1375 + $0x8] sm:$0xf]
      %v1379 = vld [vmem:[%s1375 + $0xc] sm:$0xf]
      %v1380 = vld [vmem:[%s1375 + $0x10] sm:$0xf]
      %v1381 = vld [vmem:[%s1375 + $0x14] sm:$0xf]
      %v1382 = vld [vmem:[%s1375 + $0x18] sm:$0xf]
      %v1383 = vld [vmem:[%s1375 + $0x1c] sm:$0xf]
      %v1384 = vld [vmem:[%s1375 + $0x20] sm:$0xf]
      %v1385 = vld [vmem:[%s1375 + $0x24] sm:$0xf]
      %v1386 = vld [vmem:[%s1375 + $0x28] sm:$0xf]
      %v1387 = vld [vmem:[%s1375 + $0x2c] sm:$0xf]
      %v1388 = vld [vmem:[%s1375 + $0x30] sm:$0xf]
      %v1389 = vld [vmem:[%s1375 + $0x34] sm:$0xf]
      %v1390 = vld [vmem:[%s1375 + $0x38] sm:$0xf]
      %v1391 = vld [vmem:[%s1375 + $0x3c] sm:$0xf]
      %v1392 = vunpack.c.l.b16 %v1346
      %v1393 = vunpack.c.l.b16 %v1350
      %v1394 = vunpack.c.l.b16 %v1354
      %v1395 = vunpack.c.l.b16 %v1358
      %v1396 = vunpack.c.l.b16 %v1362
      %v1397 = vunpack.c.l.b16 %v1366
      %v1398 = vunpack.c.l.b16 %v1370
      %v1399 = vunpack.c.l.b16 %v1374
      %v1400 = vpack.c.b16 %v1393, %v1392
      %v1401 = vpack.c.b16 %v1395, %v1394
      %v1402 = vpack.c.b16 %v1397, %v1396
      %v1403 = vpack.c.b16 %v1399, %v1398
      %v1424 = vunpack.c.l.b16 %v1376
      %v1425 = vunpack.c.l.b16 %v1377
      %v1426 = vunpack.c.l.b16 %v1378
      %v1427 = vunpack.c.l.b16 %v1379
      %v1428 = vunpack.c.l.b16 %v1380
      %v1429 = vunpack.c.l.b16 %v1381
      %v1430 = vunpack.c.l.b16 %v1382
      %v1431 = vunpack.c.l.b16 %v1383
      %v1432 = vunpack.c.l.b16 %v1384
      %v1433 = vunpack.c.l.b16 %v1385
      %v1434 = vunpack.c.l.b16 %v1386
      %v1435 = vunpack.c.l.b16 %v1387
      %v1436 = vunpack.c.l.b16 %v1388
      %v1437 = vunpack.c.l.b16 %v1389
      %v1438 = vunpack.c.l.b16 %v1390
      %v1439 = vunpack.c.l.b16 %v1391
      %v1440 = vpack.c.b16 %v1425, %v1424
      %v1441 = vpack.c.b16 %v1427, %v1426
      %v1442 = vpack.c.b16 %v1429, %v1428
      %v1443 = vpack.c.b16 %v1431, %v1430
      %v1444 = vpack.c.b16 %v1433, %v1432
      %v1445 = vpack.c.b16 %v1435, %v1434
      %v1446 = vpack.c.b16 %v1437, %v1436
      %v1447 = vpack.c.b16 %v1439, %v1438
      %1456 = vmatprep.subr.bf16.mxu0 0
      %1457 = vmatpush1.bf16.msra.mxu0 %v1440
      %1458 = vmatprep.subr.bf16.mxu0 0
      %1459 = vmatpush1.bf16.msra.mxu0 %v1441
      %1460 = vmatprep.subr.bf16.mxu0 0
      %1461 = vmatpush1.bf16.msra.mxu0 %v1442
      %1462 = vmatprep.subr.bf16.mxu0 0
      %1463 = vmatpush1.bf16.msra.mxu0 %v1443
      %1464 = vmatprep.subr.bf16.mxu0 0
      %1465 = vmatpush1.bf16.msra.mxu0 %v1444
      %1466 = vmatprep.subr.bf16.mxu0 0
      %1467 = vmatpush1.bf16.msra.mxu0 %v1445
      %1468 = vmatprep.subr.bf16.mxu0 0
      %1469 = vmatpush1.bf16.msra.mxu0 %v1446
      %1470 = vmatprep.subr.bf16.mxu0 0
      %1471 = vmatpush1.bf16.msra.mxu0 %v1447
      %1472 = vmatprep.subr.bf16.mxu0 0
      %1473 = vmatpush1.bf16.msra.mxu0 0
      %1474 = vmatprep.subr.bf16.mxu0 0
      %1475 = vmatpush1.bf16.msra.mxu0 0
      %1476 = vmatprep.subr.bf16.mxu0 0
      %1477 = vmatpush1.bf16.msra.mxu0 0
      %1478 = vmatprep.subr.bf16.mxu0 0
      %1479 = vmatpush1.bf16.msra.mxu0 0
      %1480 = vmatprep.subr.bf16.mxu0 0
      %1481 = vmatpush1.bf16.msra.mxu0 0
      %1482 = vmatprep.subr.bf16.mxu0 0
      %1483 = vmatpush1.bf16.msra.mxu0 0
      %1484 = vmatprep.subr.bf16.mxu0 0
      %1485 = vmatpush1.bf16.msra.mxu0 0
      %1486 = vmatprep.subr.bf16.mxu0 0
      %1487 = vmatpush1.bf16.msra.mxu0 0
      %1488 = vmatprep.mubr.bf16.mxu0 0
      %1489 = vmatmul.mubr.bf16.gmra.mrb[0].mxu0 %v1400
      %v1490 = vpop.f32.mrb[0].mxu0
      %v1491 = vadd.f32 0.0, %v1490
      %v1492 = vpop.f32.mrb[0].mxu0
      %v1493 = vpop.f32.mrb[0].mxu0
      %v1494 = vadd.f32 0.0, %v1493
      %v1495 = vpop.f32.mrb[0].mxu0
      %1496 = vmatprep.mubr.bf16.mxu0 0
      %1497 = vmatmul.mubr.bf16.gmra.mrb[0].mxu0 %v1401
      %v1498 = vpop.f32.mrb[0].mxu0
      %v1499 = vadd.f32 0.0, %v1498
      %v1500 = vpop.f32.mrb[0].mxu0
      %v1501 = vpop.f32.mrb[0].mxu0
      %v1502 = vadd.f32 0.0, %v1501
      %v1503 = vpop.f32.mrb[0].mxu0
      %1504 = vmatprep.mubr.bf16.mxu0 0
      %1505 = vmatmul.mubr.bf16.gmra.mrb[0].mxu0 %v1402
      %v1506 = vpop.f32.mrb[0].mxu0
      %v1507 = vadd.f32 0.0, %v1506
      %v1508 = vpop.f32.mrb[0].mxu0
      %v1509 = vpop.f32.mrb[0].mxu0
      %v1510 = vadd.f32 0.0, %v1509
      %v1511 = vpop.f32.mrb[0].mxu0
      %1512 = vmatprep.mubr.bf16.mxu0 0
      %1513 = vmatmul.mubr.bf16.gmra.mrb[0].mxu0 %v1403
      %v1514 = vpop.f32.mrb[0].mxu0
      %v1515 = vadd.f32 0.0, %v1514
      %v1516 = vpop.f32.mrb[0].mxu0
      %v1517 = vpop.f32.mrb[0].mxu0
      %v1518 = vadd.f32 0.0, %v1517
      %v1519 = vpop.f32.mrb[0].mxu0
      %1520 = vdwg.mxu0
      %v1521 = vadd.f32 %v1311, %v1491
      %v1522 = vadd.f32 %v1312, %v1494
      %v1523 = vadd.f32 %v1313, %v1499
      %v1524 = vadd.f32 %v1314, %v1502
      %v1525 = vadd.f32 %v1315, %v1507
      %v1526 = vadd.f32 %v1316, %v1510
      %v1527 = vadd.f32 %v1317, %v1515
      %v1528 = vadd.f32 %v1318, %v1518
      %s1529 = scalar_lea.vmem %s206, 16
      %v1530 = vld [vmem:[%s1529] sm:$0xf]
      %v1531 = vld [vmem:[%s1529 + $0x8] sm:$0xf]
      %v1532 = vld [vmem:[%s1529 + $0x10] sm:$0xf]
      %v1533 = vld [vmem:[%s1529 + $0x18] sm:$0xf]
      %v1534 = vld [vmem:[%s1529 + $0x20] sm:$0xf]
      %v1535 = vld [vmem:[%s1529 + $0x28] sm:$0xf]
      %v1536 = vld [vmem:[%s1529 + $0x30] sm:$0xf]
      %v1537 = vld [vmem:[%s1529 + $0x38] sm:$0xf]
      %s1538 = scalar_lea.vmem %s210, 384
      %v1539 = vld [vmem:[%s1538] sm:$0xf]
      %v1540 = vld [vmem:[%s1538 + $0x4] sm:$0xf]
      %v1541 = vld [vmem:[%s1538 + $0x8] sm:$0xf]
      %v1542 = vld [vmem:[%s1538 + $0xc] sm:$0xf]
      %v1543 = vld [vmem:[%s1538 + $0x10] sm:$0xf]
      %v1544 = vld [vmem:[%s1538 + $0x14] sm:$0xf]
      %v1545 = vld [vmem:[%s1538 + $0x18] sm:$0xf]
      %v1546 = vld [vmem:[%s1538 + $0x1c] sm:$0xf]
      %v1547 = vld [vmem:[%s1538 + $0x20] sm:$0xf]
      %v1548 = vld [vmem:[%s1538 + $0x24] sm:$0xf]
      %v1549 = vld [vmem:[%s1538 + $0x28] sm:$0xf]
      %v1550 = vld [vmem:[%s1538 + $0x2c] sm:$0xf]
      %v1551 = vld [vmem:[%s1538 + $0x30] sm:$0xf]
      %v1552 = vld [vmem:[%s1538 + $0x34] sm:$0xf]
      %v1553 = vld [vmem:[%s1538 + $0x38] sm:$0xf]
      %v1554 = vld [vmem:[%s1538 + $0x3c] sm:$0xf]
      %v1563 = vunpack.c.l.b16 %v1530
      %v1564 = vunpack.c.l.b16 %v1531
      %v1565 = vunpack.c.l.b16 %v1532
      %v1566 = vunpack.c.l.b16 %v1533
      %v1567 = vunpack.c.l.b16 %v1534
      %v1568 = vunpack.c.l.b16 %v1535
      %v1569 = vunpack.c.l.b16 %v1536
      %v1570 = vunpack.c.l.b16 %v1537
      %v1571 = vpack.c.b16 %v1564, %v1563
      %v1572 = vpack.c.b16 %v1566, %v1565
      %v1573 = vpack.c.b16 %v1568, %v1567
      %v1574 = vpack.c.b16 %v1570, %v1569
      %v1595 = vunpack.c.l.b16 %v1539
      %v1596 = vunpack.c.l.b16 %v1540
      %v1597 = vunpack.c.l.b16 %v1541
      %v1598 = vunpack.c.l.b16 %v1542
      %v1599 = vunpack.c.l.b16 %v1543
      %v1600 = vunpack.c.l.b16 %v1544
      %v1601 = vunpack.c.l.b16 %v1545
      %v1602 = vunpack.c.l.b16 %v1546
      %v1603 = vunpack.c.l.b16 %v1547
      %v1604 = vunpack.c.l.b16 %v1548
      %v1605 = vunpack.c.l.b16 %v1549
      %v1606 = vunpack.c.l.b16 %v1550
      %v1607 = vunpack.c.l.b16 %v1551
      %v1608 = vunpack.c.l.b16 %v1552
      %v1609 = vunpack.c.l.b16 %v1553
      %v1610 = vunpack.c.l.b16 %v1554
      %v1611 = vpack.c.b16 %v1596, %v1595
      %v1612 = vpack.c.b16 %v1598, %v1597
      %v1613 = vpack.c.b16 %v1600, %v1599
      %v1614 = vpack.c.b16 %v1602, %v1601
      %v1615 = vpack.c.b16 %v1604, %v1603
      %v1616 = vpack.c.b16 %v1606, %v1605
      %v1617 = vpack.c.b16 %v1608, %v1607
      %v1618 = vpack.c.b16 %v1610, %v1609
      %1627 = vmatprep.subr.bf16.mxu0 0
      %1628 = vmatpush1.bf16.msra.mxu0 %v1611
      %1629 = vmatprep.subr.bf16.mxu0 0
      %1630 = vmatpush1.bf16.msra.mxu0 %v1612
      %1631 = vmatprep.subr.bf16.mxu0 0
      %1632 = vmatpush1.bf16.msra.mxu0 %v1613
      %1633 = vmatprep.subr.bf16.mxu0 0
      %1634 = vmatpush1.bf16.msra.mxu0 %v1614
      %1635 = vmatprep.subr.bf16.mxu0 0
      %1636 = vmatpush1.bf16.msra.mxu0 %v1615
      %1637 = vmatprep.subr.bf16.mxu0 0
      %1638 = vmatpush1.bf16.msra.mxu0 %v1616
      %1639 = vmatprep.subr.bf16.mxu0 0
      %1640 = vmatpush1.bf16.msra.mxu0 %v1617
      %1641 = vmatprep.subr.bf16.mxu0 0
      %1642 = vmatpush1.bf16.msra.mxu0 %v1618
      %1643 = vmatprep.subr.bf16.mxu0 0
      %1644 = vmatpush1.bf16.msra.mxu0 0
      %1645 = vmatprep.subr.bf16.mxu0 0
      %1646 = vmatpush1.bf16.msra.mxu0 0
      %1647 = vmatprep.subr.bf16.mxu0 0
      %1648 = vmatpush1.bf16.msra.mxu0 0
      %1649 = vmatprep.subr.bf16.mxu0 0
      %1650 = vmatpush1.bf16.msra.mxu0 0
      %1651 = vmatprep.subr.bf16.mxu0 0
      %1652 = vmatpush1.bf16.msra.mxu0 0
      %1653 = vmatprep.subr.bf16.mxu0 0
      %1654 = vmatpush1.bf16.msra.mxu0 0
      %1655 = vmatprep.subr.bf16.mxu0 0
      %1656 = vmatpush1.bf16.msra.mxu0 0
      %1657 = vmatprep.subr.bf16.mxu0 0
      %1658 = vmatpush1.bf16.msra.mxu0 0
      %1659 = vmatprep.mubr.bf16.mxu0 0
      %1660 = vmatmul.mubr.bf16.gmra.mrb[0].mxu0 %v1571
      %v1661 = vpop.f32.mrb[0].mxu0
      %v1662 = vadd.f32 0.0, %v1661
      %v1663 = vpop.f32.mrb[0].mxu0
      %v1664 = vpop.f32.mrb[0].mxu0
      %v1665 = vadd.f32 0.0, %v1664
      %v1666 = vpop.f32.mrb[0].mxu0
      %1667 = vmatprep.mubr.bf16.mxu0 0
      %1668 = vmatmul.mubr.bf16.gmra.mrb[0].mxu0 %v1572
      %v1669 = vpop.f32.mrb[0].mxu0
      %v1670 = vadd.f32 0.0, %v1669
      %v1671 = vpop.f32.mrb[0].mxu0
      %v1672 = vpop.f32.mrb[0].mxu0
      %v1673 = vadd.f32 0.0, %v1672
      %v1674 = vpop.f32.mrb[0].mxu0
      %1675 = vmatprep.mubr.bf16.mxu0 0
      %1676 = vmatmul.mubr.bf16.gmra.mrb[0].mxu0 %v1573
      %v1677 = vpop.f32.mrb[0].mxu0
      %v1678 = vadd.f32 0.0, %v1677
      %v1679 = vpop.f32.mrb[0].mxu0
      %v1680 = vpop.f32.mrb[0].mxu0
      %v1681 = vadd.f32 0.0, %v1680
      %v1682 = vpop.f32.mrb[0].mxu0
      %1683 = vmatprep.mubr.bf16.mxu0 0
      %1684 = vmatmul.mubr.bf16.gmra.mrb[0].mxu0 %v1574
      %v1685 = vpop.f32.mrb[0].mxu0
      %v1686 = vadd.f32 0.0, %v1685
      %v1687 = vpop.f32.mrb[0].mxu0
      %v1688 = vpop.f32.mrb[0].mxu0
      %v1689 = vadd.f32 0.0, %v1688
      %v1690 = vpop.f32.mrb[0].mxu0
      %1691 = vdwg.mxu0
      %v1692 = vadd.f32 %v1521, %v1662
      %v1693 = vadd.f32 %v1522, %v1665
      %v1694 = vadd.f32 %v1523, %v1670
      %v1695 = vadd.f32 %v1524, %v1673
      %v1696 = vadd.f32 %v1525, %v1678
      %v1697 = vadd.f32 %v1526, %v1681
      %v1698 = vadd.f32 %v1527, %v1686
      %v1699 = vadd.f32 %v1528, %v1689
      %v1700 = vld [vmem:[%s1529] sm:$0xf]
      %v1701 = vld [vmem:[%s1529 + $0x4] sm:$0x1]
      %v1702 = vld [vmem:[%s1529 + $0x8] sm:$0xf]
      %v1703 = vld [vmem:[%s1529 + $0xc] sm:$0x1]
      %v1704 = vld [vmem:[%s1529 + $0x10] sm:$0xf]
      %v1705 = vld [vmem:[%s1529 + $0x14] sm:$0x1]
      %v1706 = vld [vmem:[%s1529 + $0x18] sm:$0xf]
      %v1707 = vld [vmem:[%s1529 + $0x1c] sm:$0x1]
      %v1708 = vld [vmem:[%s1529 + $0x20] sm:$0xf]
      %v1709 = vld [vmem:[%s1529 + $0x24] sm:$0x1]
      %v1710 = vld [vmem:[%s1529 + $0x28] sm:$0xf]
      %v1711 = vld [vmem:[%s1529 + $0x2c] sm:$0x1]
      %v1712 = vld [vmem:[%s1529 + $0x30] sm:$0xf]
      %v1713 = vld [vmem:[%s1529 + $0x34] sm:$0x1]
      %v1714 = vld [vmem:[%s1529 + $0x38] sm:$0xf]
      %v1715 = vld [vmem:[%s1529 + $0x3c] sm:$0x1]
      %v1717 = vshrl.u32 %v1700, 16
      %v1719 = vrot.slane %v1717, 4
      %v1720 = vshll.u32 %v1700, 16
      %v1722 = vrot.slane %v1720, 5
      %v1723 = vor.u32 %v1719, %v1722
      %v1724 = vrot.slane %v1723, 4
      %v1726 = vshll.u32 %v1701, 16
      %v1728 = vrot.slane %v1726, 5
      %v1729 = vsel %vm257, %v1724, %v1728
      %v1731 = vshrl.u32 %v1702, 16
      %v1733 = vrot.slane %v1731, 4
      %v1734 = vshll.u32 %v1702, 16
      %v1736 = vrot.slane %v1734, 5
      %v1737 = vor.u32 %v1733, %v1736
      %v1738 = vrot.slane %v1737, 4
      %v1740 = vshll.u32 %v1703, 16
      %v1742 = vrot.slane %v1740, 5
      %v1743 = vsel %vm257, %v1738, %v1742
      %v1745 = vshrl.u32 %v1704, 16
      %v1747 = vrot.slane %v1745, 4
      %v1748 = vshll.u32 %v1704, 16
      %v1750 = vrot.slane %v1748, 5
      %v1751 = vor.u32 %v1747, %v1750
      %v1752 = vrot.slane %v1751, 4
      %v1754 = vshll.u32 %v1705, 16
      %v1756 = vrot.slane %v1754, 5
      %v1757 = vsel %vm257, %v1752, %v1756
      %v1759 = vshrl.u32 %v1706, 16
      %v1761 = vrot.slane %v1759, 4
      %v1762 = vshll.u32 %v1706, 16
      %v1764 = vrot.slane %v1762, 5
      %v1765 = vor.u32 %v1761, %v1764
      %v1766 = vrot.slane %v1765, 4
      %v1768 = vshll.u32 %v1707, 16
      %v1770 = vrot.slane %v1768, 5
      %v1771 = vsel %vm257, %v1766, %v1770
      %v1773 = vshrl.u32 %v1708, 16
      %v1775 = vrot.slane %v1773, 4
      %v1776 = vshll.u32 %v1708, 16
      %v1778 = vrot.slane %v1776, 5
      %v1779 = vor.u32 %v1775, %v1778
      %v1780 = vrot.slane %v1779, 4
      %v1782 = vshll.u32 %v1709, 16
      %v1784 = vrot.slane %v1782, 5
      %v1785 = vsel %vm257, %v1780, %v1784
      %v1787 = vshrl.u32 %v1710, 16
      %v1789 = vrot.slane %v1787, 4
      %v1790 = vshll.u32 %v1710, 16
      %v1792 = vrot.slane %v1790, 5
      %v1793 = vor.u32 %v1789, %v1792
      %v1794 = vrot.slane %v1793, 4
      %v1796 = vshll.u32 %v1711, 16
      %v1798 = vrot.slane %v1796, 5
      %v1799 = vsel %vm257, %v1794, %v1798
      %v1801 = vshrl.u32 %v1712, 16
      %v1803 = vrot.slane %v1801, 4
      %v1804 = vshll.u32 %v1712, 16
      %v1806 = vrot.slane %v1804, 5
      %v1807 = vor.u32 %v1803, %v1806
      %v1808 = vrot.slane %v1807, 4
      %v1810 = vshll.u32 %v1713, 16
      %v1812 = vrot.slane %v1810, 5
      %v1813 = vsel %vm257, %v1808, %v1812
      %v1815 = vshrl.u32 %v1714, 16
      %v1817 = vrot.slane %v1815, 4
      %v1818 = vshll.u32 %v1714, 16
      %v1820 = vrot.slane %v1818, 5
      %v1821 = vor.u32 %v1817, %v1820
      %v1822 = vrot.slane %v1821, 4
      %v1824 = vshll.u32 %v1715, 16
      %v1826 = vrot.slane %v1824, 5
      %v1827 = vsel %vm257, %v1822, %v1826
      %s1828 = scalar_lea.vmem %s210, 448
      %v1829 = vld [vmem:[%s1828] sm:$0xf]
      %v1830 = vld [vmem:[%s1828 + $0x4] sm:$0xf]
      %v1831 = vld [vmem:[%s1828 + $0x8] sm:$0xf]
      %v1832 = vld [vmem:[%s1828 + $0xc] sm:$0xf]
      %v1833 = vld [vmem:[%s1828 + $0x10] sm:$0xf]
      %v1834 = vld [vmem:[%s1828 + $0x14] sm:$0xf]
      %v1835 = vld [vmem:[%s1828 + $0x18] sm:$0xf]
      %v1836 = vld [vmem:[%s1828 + $0x1c] sm:$0xf]
      %v1837 = vld [vmem:[%s1828 + $0x20] sm:$0xf]
      %v1838 = vld [vmem:[%s1828 + $0x24] sm:$0xf]
      %v1839 = vld [vmem:[%s1828 + $0x28] sm:$0xf]
      %v1840 = vld [vmem:[%s1828 + $0x2c] sm:$0xf]
      %v1841 = vld [vmem:[%s1828 + $0x30] sm:$0xf]
      %v1842 = vld [vmem:[%s1828 + $0x34] sm:$0xf]
      %v1843 = vld [vmem:[%s1828 + $0x38] sm:$0xf]
      %v1844 = vld [vmem:[%s1828 + $0x3c] sm:$0xf]
      %v1845 = vunpack.c.l.b16 %v1729
      %v1846 = vunpack.c.l.b16 %v1743
      %v1847 = vunpack.c.l.b16 %v1757
      %v1848 = vunpack.c.l.b16 %v1771
      %v1849 = vunpack.c.l.b16 %v1785
      %v1850 = vunpack.c.l.b16 %v1799
      %v1851 = vunpack.c.l.b16 %v1813
      %v1852 = vunpack.c.l.b16 %v1827
      %v1853 = vpack.c.b16 %v1846, %v1845
      %v1854 = vpack.c.b16 %v1848, %v1847
      %v1855 = vpack.c.b16 %v1850, %v1849
      %v1856 = vpack.c.b16 %v1852, %v1851
      %v1877 = vunpack.c.l.b16 %v1829
      %v1878 = vunpack.c.l.b16 %v1830
      %v1879 = vunpack.c.l.b16 %v1831
      %v1880 = vunpack.c.l.b16 %v1832
      %v1881 = vunpack.c.l.b16 %v1833
      %v1882 = vunpack.c.l.b16 %v1834
      %v1883 = vunpack.c.l.b16 %v1835
      %v1884 = vunpack.c.l.b16 %v1836
      %v1885 = vunpack.c.l.b16 %v1837
      %v1886 = vunpack.c.l.b16 %v1838
      %v1887 = vunpack.c.l.b16 %v1839
      %v1888 = vunpack.c.l.b16 %v1840
      %v1889 = vunpack.c.l.b16 %v1841
      %v1890 = vunpack.c.l.b16 %v1842
      %v1891 = vunpack.c.l.b16 %v1843
      %v1892 = vunpack.c.l.b16 %v1844
      %v1893 = vpack.c.b16 %v1878, %v1877
      %v1894 = vpack.c.b16 %v1880, %v1879
      %v1895 = vpack.c.b16 %v1882, %v1881
      %v1896 = vpack.c.b16 %v1884, %v1883
      %v1897 = vpack.c.b16 %v1886, %v1885
      %v1898 = vpack.c.b16 %v1888, %v1887
      %v1899 = vpack.c.b16 %v1890, %v1889
      %v1900 = vpack.c.b16 %v1892, %v1891
      %1909 = vmatprep.subr.bf16.mxu0 0
      %1910 = vmatpush1.bf16.msra.mxu0 %v1893
      %1911 = vmatprep.subr.bf16.mxu0 0
      %1912 = vmatpush1.bf16.msra.mxu0 %v1894
      %1913 = vmatprep.subr.bf16.mxu0 0
      %1914 = vmatpush1.bf16.msra.mxu0 %v1895
      %1915 = vmatprep.subr.bf16.mxu0 0
      %1916 = vmatpush1.bf16.msra.mxu0 %v1896
      %1917 = vmatprep.subr.bf16.mxu0 0
      %1918 = vmatpush1.bf16.msra.mxu0 %v1897
      %1919 = vmatprep.subr.bf16.mxu0 0
      %1920 = vmatpush1.bf16.msra.mxu0 %v1898
      %1921 = vmatprep.subr.bf16.mxu0 0
      %1922 = vmatpush1.bf16.msra.mxu0 %v1899
      %1923 = vmatprep.subr.bf16.mxu0 0
      %1924 = vmatpush1.bf16.msra.mxu0 %v1900
      %1925 = vmatprep.subr.bf16.mxu0 0
      %1926 = vmatpush1.bf16.msra.mxu0 0
      %1927 = vmatprep.subr.bf16.mxu0 0
      %1928 = vmatpush1.bf16.msra.mxu0 0
      %1929 = vmatprep.subr.bf16.mxu0 0
      %1930 = vmatpush1.bf16.msra.mxu0 0
      %1931 = vmatprep.subr.bf16.mxu0 0
      %1932 = vmatpush1.bf16.msra.mxu0 0
      %1933 = vmatprep.subr.bf16.mxu0 0
      %1934 = vmatpush1.bf16.msra.mxu0 0
      %1935 = vmatprep.subr.bf16.mxu0 0
      %1936 = vmatpush1.bf16.msra.mxu0 0
      %1937 = vmatprep.subr.bf16.mxu0 0
      %1938 = vmatpush1.bf16.msra.mxu0 0
      %1939 = vmatprep.subr.bf16.mxu0 0
      %1940 = vmatpush1.bf16.msra.mxu0 0
      %1941 = vmatprep.mubr.bf16.mxu0 0
      %1942 = vmatmul.mubr.bf16.gmra.mrb[0].mxu0 %v1853
      %v1943 = vpop.f32.mrb[0].mxu0
      %v1944 = vadd.f32 0.0, %v1943
      %v1945 = vpop.f32.mrb[0].mxu0
      %v1946 = vpop.f32.mrb[0].mxu0
      %v1947 = vadd.f32 0.0, %v1946
      %v1948 = vpop.f32.mrb[0].mxu0
      %1949 = vmatprep.mubr.bf16.mxu0 0
      %1950 = vmatmul.mubr.bf16.gmra.mrb[0].mxu0 %v1854
      %v1951 = vpop.f32.mrb[0].mxu0
      %v1952 = vadd.f32 0.0, %v1951
      %v1953 = vpop.f32.mrb[0].mxu0
      %v1954 = vpop.f32.mrb[0].mxu0
      %v1955 = vadd.f32 0.0, %v1954
      %v1956 = vpop.f32.mrb[0].mxu0
      %1957 = vmatprep.mubr.bf16.mxu0 0
      %1958 = vmatmul.mubr.bf16.gmra.mrb[0].mxu0 %v1855
      %v1959 = vpop.f32.mrb[0].mxu0
      %v1960 = vadd.f32 0.0, %v1959
      %v1961 = vpop.f32.mrb[0].mxu0
      %v1962 = vpop.f32.mrb[0].mxu0
      %v1963 = vadd.f32 0.0, %v1962
      %v1964 = vpop.f32.mrb[0].mxu0
      %1965 = vmatprep.mubr.bf16.mxu0 0
      %1966 = vmatmul.mubr.bf16.gmra.mrb[0].mxu0 %v1856
      %v1967 = vpop.f32.mrb[0].mxu0
      %v1968 = vadd.f32 0.0, %v1967
      %v1969 = vpop.f32.mrb[0].mxu0
      %v1970 = vpop.f32.mrb[0].mxu0
      %v1971 = vadd.f32 0.0, %v1970
      %v1972 = vpop.f32.mrb[0].mxu0
      %1973 = vdwg.mxu0
      %v1974 = vadd.f32 %v1692, %v1944
      %v1975 = vadd.f32 %v1693, %v1947
      %v1976 = vadd.f32 %v1694, %v1952
      %v1977 = vadd.f32 %v1695, %v1955
      %v1978 = vadd.f32 %v1696, %v1960
      %v1979 = vadd.f32 %v1697, %v1963
      %v1980 = vadd.f32 %v1698, %v1968
      %v1981 = vadd.f32 %v1699, %v1971
      %v1982 = vld [vmem:[%s1529] sm:$0xe]
      %v1983 = vld [vmem:[%s1529 + $0x8] sm:$0xe]
      %v1984 = vld [vmem:[%s1529 + $0x10] sm:$0xe]
      %v1985 = vld [vmem:[%s1529 + $0x18] sm:$0xe]
      %v1986 = vld [vmem:[%s1529 + $0x20] sm:$0xe]
      %v1987 = vld [vmem:[%s1529 + $0x28] sm:$0xe]
      %v1988 = vld [vmem:[%s1529 + $0x30] sm:$0xe]
      %v1989 = vld [vmem:[%s1529 + $0x38] sm:$0xe]
      %v2006 = vrot.slane %v1982, 5
      %v2007 = vrot.slane %v2006, 4
      %v2008 = vrot.slane %v1701, 5
      %v2009 = vsel %vm679, %v2007, %v2008
      %v2010 = vrot.slane %v1983, 5
      %v2011 = vrot.slane %v2010, 4
      %v2012 = vrot.slane %v1703, 5
      %v2013 = vsel %vm679, %v2011, %v2012
      %v2014 = vrot.slane %v1984, 5
      %v2015 = vrot.slane %v2014, 4
      %v2016 = vrot.slane %v1705, 5
      %v2017 = vsel %vm679, %v2015, %v2016
      %v2018 = vrot.slane %v1985, 5
      %v2019 = vrot.slane %v2018, 4
      %v2020 = vrot.slane %v1707, 5
      %v2021 = vsel %vm679, %v2019, %v2020
      %v2022 = vrot.slane %v1986, 5
      %v2023 = vrot.slane %v2022, 4
      %v2024 = vrot.slane %v1709, 5
      %v2025 = vsel %vm679, %v2023, %v2024
      %v2026 = vrot.slane %v1987, 5
      %v2027 = vrot.slane %v2026, 4
      %v2028 = vrot.slane %v1711, 5
      %v2029 = vsel %vm679, %v2027, %v2028
      %v2030 = vrot.slane %v1988, 5
      %v2031 = vrot.slane %v2030, 4
      %v2032 = vrot.slane %v1713, 5
      %v2033 = vsel %vm679, %v2031, %v2032
      %v2034 = vrot.slane %v1989, 5
      %v2035 = vrot.slane %v2034, 4
      %v2036 = vrot.slane %v1715, 5
      %v2037 = vsel %vm679, %v2035, %v2036
      %s2038 = scalar_lea.vmem %s210, 512
      %v2039 = vld [vmem:[%s2038] sm:$0xf]
      %v2040 = vld [vmem:[%s2038 + $0x4] sm:$0xf]
      %v2041 = vld [vmem:[%s2038 + $0x8] sm:$0xf]
      %v2042 = vld [vmem:[%s2038 + $0xc] sm:$0xf]
      %v2043 = vld [vmem:[%s2038 + $0x10] sm:$0xf]
      %v2044 = vld [vmem:[%s2038 + $0x14] sm:$0xf]
      %v2045 = vld [vmem:[%s2038 + $0x18] sm:$0xf]
      %v2046 = vld [vmem:[%s2038 + $0x1c] sm:$0xf]
      %v2047 = vld [vmem:[%s2038 + $0x20] sm:$0xf]
      %v2048 = vld [vmem:[%s2038 + $0x24] sm:$0xf]
      %v2049 = vld [vmem:[%s2038 + $0x28] sm:$0xf]
      %v2050 = vld [vmem:[%s2038 + $0x2c] sm:$0xf]
      %v2051 = vld [vmem:[%s2038 + $0x30] sm:$0xf]
      %v2052 = vld [vmem:[%s2038 + $0x34] sm:$0xf]
      %v2053 = vld [vmem:[%s2038 + $0x38] sm:$0xf]
      %v2054 = vld [vmem:[%s2038 + $0x3c] sm:$0xf]
      %v2055 = vunpack.c.l.b16 %v2009
      %v2056 = vunpack.c.l.b16 %v2013
      %v2057 = vunpack.c.l.b16 %v2017
      %v2058 = vunpack.c.l.b16 %v2021
      %v2059 = vunpack.c.l.b16 %v2025
      %v2060 = vunpack.c.l.b16 %v2029
      %v2061 = vunpack.c.l.b16 %v2033
      %v2062 = vunpack.c.l.b16 %v2037
      %v2063 = vpack.c.b16 %v2056, %v2055
      %v2064 = vpack.c.b16 %v2058, %v2057
      %v2065 = vpack.c.b16 %v2060, %v2059
      %v2066 = vpack.c.b16 %v2062, %v2061
      %v2087 = vunpack.c.l.b16 %v2039
      %v2088 = vunpack.c.l.b16 %v2040
      %v2089 = vunpack.c.l.b16 %v2041
      %v2090 = vunpack.c.l.b16 %v2042
      %v2091 = vunpack.c.l.b16 %v2043
      %v2092 = vunpack.c.l.b16 %v2044
      %v2093 = vunpack.c.l.b16 %v2045
      %v2094 = vunpack.c.l.b16 %v2046
      %v2095 = vunpack.c.l.b16 %v2047
      %v2096 = vunpack.c.l.b16 %v2048
      %v2097 = vunpack.c.l.b16 %v2049
      %v2098 = vunpack.c.l.b16 %v2050
      %v2099 = vunpack.c.l.b16 %v2051
      %v2100 = vunpack.c.l.b16 %v2052
      %v2101 = vunpack.c.l.b16 %v2053
      %v2102 = vunpack.c.l.b16 %v2054
      %v2103 = vpack.c.b16 %v2088, %v2087
      %v2104 = vpack.c.b16 %v2090, %v2089
      %v2105 = vpack.c.b16 %v2092, %v2091
      %v2106 = vpack.c.b16 %v2094, %v2093
      %v2107 = vpack.c.b16 %v2096, %v2095
      %v2108 = vpack.c.b16 %v2098, %v2097
      %v2109 = vpack.c.b16 %v2100, %v2099
      %v2110 = vpack.c.b16 %v2102, %v2101
      %2119 = vmatprep.subr.bf16.mxu0 0
      %2120 = vmatpush1.bf16.msra.mxu0 %v2103
      %2121 = vmatprep.subr.bf16.mxu0 0
      %2122 = vmatpush1.bf16.msra.mxu0 %v2104
      %2123 = vmatprep.subr.bf16.mxu0 0
      %2124 = vmatpush1.bf16.msra.mxu0 %v2105
      %2125 = vmatprep.subr.bf16.mxu0 0
      %2126 = vmatpush1.bf16.msra.mxu0 %v2106
      %2127 = vmatprep.subr.bf16.mxu0 0
      %2128 = vmatpush1.bf16.msra.mxu0 %v2107
      %2129 = vmatprep.subr.bf16.mxu0 0
      %2130 = vmatpush1.bf16.msra.mxu0 %v2108
      %2131 = vmatprep.subr.bf16.mxu0 0
      %2132 = vmatpush1.bf16.msra.mxu0 %v2109
      %2133 = vmatprep.subr.bf16.mxu0 0
      %2134 = vmatpush1.bf16.msra.mxu0 %v2110
      %2135 = vmatprep.subr.bf16.mxu0 0
      %2136 = vmatpush1.bf16.msra.mxu0 0
      %2137 = vmatprep.subr.bf16.mxu0 0
      %2138 = vmatpush1.bf16.msra.mxu0 0
      %2139 = vmatprep.subr.bf16.mxu0 0
      %2140 = vmatpush1.bf16.msra.mxu0 0
      %2141 = vmatprep.subr.bf16.mxu0 0
      %2142 = vmatpush1.bf16.msra.mxu0 0
      %2143 = vmatprep.subr.bf16.mxu0 0
      %2144 = vmatpush1.bf16.msra.mxu0 0
      %2145 = vmatprep.subr.bf16.mxu0 0
      %2146 = vmatpush1.bf16.msra.mxu0 0
      %2147 = vmatprep.subr.bf16.mxu0 0
      %2148 = vmatpush1.bf16.msra.mxu0 0
      %2149 = vmatprep.subr.bf16.mxu0 0
      %2150 = vmatpush1.bf16.msra.mxu0 0
      %2151 = vmatprep.mubr.bf16.mxu0 0
      %2152 = vmatmul.mubr.bf16.gmra.mrb[0].mxu0 %v2063
      %v2153 = vpop.f32.mrb[0].mxu0
      %v2154 = vadd.f32 0.0, %v2153
      %v2155 = vpop.f32.mrb[0].mxu0
      %v2156 = vpop.f32.mrb[0].mxu0
      %v2157 = vadd.f32 0.0, %v2156
      %v2158 = vpop.f32.mrb[0].mxu0
      %2159 = vmatprep.mubr.bf16.mxu0 0
      %2160 = vmatmul.mubr.bf16.gmra.mrb[0].mxu0 %v2064
      %v2161 = vpop.f32.mrb[0].mxu0
      %v2162 = vadd.f32 0.0, %v2161
      %v2163 = vpop.f32.mrb[0].mxu0
      %v2164 = vpop.f32.mrb[0].mxu0
      %v2165 = vadd.f32 0.0, %v2164
      %v2166 = vpop.f32.mrb[0].mxu0
      %2167 = vmatprep.mubr.bf16.mxu0 0
      %2168 = vmatmul.mubr.bf16.gmra.mrb[0].mxu0 %v2065
      %v2169 = vpop.f32.mrb[0].mxu0
      %v2170 = vadd.f32 0.0, %v2169
      %v2171 = vpop.f32.mrb[0].mxu0
      %v2172 = vpop.f32.mrb[0].mxu0
      %v2173 = vadd.f32 0.0, %v2172
      %v2174 = vpop.f32.mrb[0].mxu0
      %2175 = vmatprep.mubr.bf16.mxu0 0
      %2176 = vmatmul.mubr.bf16.gmra.mrb[0].mxu0 %v2066
      %v2177 = vpop.f32.mrb[0].mxu0
      %v2178 = vadd.f32 0.0, %v2177
      %v2179 = vpop.f32.mrb[0].mxu0
      %v2180 = vpop.f32.mrb[0].mxu0
      %v2181 = vadd.f32 0.0, %v2180
      %v2182 = vpop.f32.mrb[0].mxu0
      %2183 = vdwg.mxu0
      %v2184 = vadd.f32 %v1974, %v2154
      %v2185 = vadd.f32 %v1975, %v2157
      %v2186 = vadd.f32 %v1976, %v2162
      %v2187 = vadd.f32 %v1977, %v2165
      %v2188 = vadd.f32 %v1978, %v2170
      %v2189 = vadd.f32 %v1979, %v2173
      %v2190 = vadd.f32 %v1980, %v2178
      %v2191 = vadd.f32 %v1981, %v2181
      %v2192 = vld [vmem:[%s213] sm:$0x1]
      %v2194 = vlaneseq
      %v2195 = vshrl.u32 %v2194, 7
      %v2196 = vsub.s32 0, %v2195
      %v2197 = vrot.slane %v2192, %v2196
      %v2199 = vadd.f32 %v2184, %v2197
      %v2200 = vadd.f32 %v2185, %v2197
      %v2201 = vadd.f32 %v2186, %v2197
      %v2202 = vadd.f32 %v2187, %v2197
      %v2203 = vadd.f32 %v2188, %v2197
      %v2204 = vadd.f32 %v2189, %v2197
      %v2205 = vadd.f32 %v2190, %v2197
      %v2206 = vadd.f32 %v2191, %v2197
      %v2207 = vmax.f32 %v2199, 0.0
      %v2208 = vmax.f32 %v2200, 0.0
      %v2209 = vmax.f32 %v2201, 0.0
      %v2210 = vmax.f32 %v2202, 0.0
      %v2211 = vmax.f32 %v2203, 0.0
      %v2212 = vmax.f32 %v2204, 0.0
      %v2213 = vmax.f32 %v2205, 0.0
      %v2214 = vmax.f32 %v2206, 0.0
      %v2215 = vpack.c.bf16 %v2208, %v2207
      %v2216 = vpack.c.bf16 %v2210, %v2209
      %v2217 = vpack.c.bf16 %v2212, %v2211
      %v2218 = vpack.c.bf16 %v2214, %v2213
      %v2223 = vunpack.c.l.b16 %v2215
      %v2224 = vunpack.c.h.b16 %v2215
      %v2225 = vunpack.c.l.b16 %v2216
      %v2226 = vunpack.c.h.b16 %v2216
      %v2227 = vunpack.c.l.b16 %v2217
      %v2228 = vunpack.c.h.b16 %v2217
      %v2229 = vunpack.c.l.b16 %v2218
      %v2230 = vunpack.c.h.b16 %v2218
      %v2231 = vpack.c.b16 %v2223, %v2223
      %v2232 = vpack.c.b16 %v2224, %v2224
      %v2233 = vpack.c.b16 %v2225, %v2225
      %v2234 = vpack.c.b16 %v2226, %v2226
      %v2235 = vpack.c.b16 %v2227, %v2227
      %v2236 = vpack.c.b16 %v2228, %v2228
      %v2237 = vpack.c.b16 %v2229, %v2229
      %v2238 = vpack.c.b16 %v2230, %v2230
      %2247 = vst [vmem:[%s221] sm:$0xf] %v2231
      %2248 = vst [vmem:[%s221 + $0x4] sm:$0xf] %v2232
      %2249 = vst [vmem:[%s221 + $0x8] sm:$0xf] %v2233
      %2250 = vst [vmem:[%s221 + $0xc] sm:$0xf] %v2234
      %2251 = vst [vmem:[%s221 + $0x10] sm:$0xf] %v2235
      %2252 = vst [vmem:[%s221 + $0x14] sm:$0xf] %v2236
      %2253 = vst [vmem:[%s221 + $0x18] sm:$0xf] %v2237
      %2254 = vst [vmem:[%s221 + $0x1c] sm:$0xf] %v2238
      %p2255 = scmp.lt.s32.totalorder %s18, 1
      %s2256 = scalar_select %p2255, %s18, 1
      %p2257 = scmp.lt.s32.totalorder %s19, 0
      %s2258 = scalar_select %p2257, %s19, 0
      %s2259 = smul.addr %s2256, 8
      %s2260 = sadd.s32 %s2258, %s2259
      %s2261 = smul.addr %s2260, 4
      %s2262 = scalar_lea.vmem %s3, %s2261
      // Predicated region
      $region33: #{forward.8} parent=31 // pred_check
        %p2263 = pneg %p124
      $region34: #{forward.8} parent=31 // pred_check_branch
        %2265 = sbr.rel (%p2263) target = $region36
      $region35: #{forward.8} parent=31 // pred_region
        _
      $region36: #{forward.8} parent=31 // pred_fallthru
        _
    $region32: #{forward.8} parent=5 // pred_fallthru
      _
    %p2266 = scmp.le.s32.totalorder 2, %s9
    // Predicated region
    $region37: #{forward.8} parent=5 // pred_check
      %p2267 = pneg %p2266
    $region38: #{forward.8} parent=5 // pred_check_branch
      %2269 = sbr.rel (%p2267) target = $region40
    $region39: #{forward.8} parent=5 // pred_region
      %s2270 = ssub.s32 %s9, 2
      // Predicated region
      $region41: #{forward.8} parent=39 // pred_check
        %p2271 = pneg %p130
      $region42: #{forward.8} parent=39 // pred_check_branch
        %2273 = sbr.rel (%p2271) target = $region44
      $region43: #{forward.8} parent=39 // pred_region
        %p2274 = scmp.lt.s32.totalorder %s20, 1
        %s2275 = scalar_select %p2274, %s20, 1
        %p2276 = scmp.lt.s32.totalorder %s21, 0
        %s2277 = scalar_select %p2276, %s21, 0
        %s2278 = smul.addr %s2275, 8
        %s2279 = sadd.s32 %s2277, %s2278
        %s2280 = smul.addr %s2279, 4
        %s2281 = scalar_lea.vmem %s3, %s2280
      $region44: #{forward.8} parent=39 // pred_fallthru
        _
    $region40: #{forward.8} parent=5 // pred_fallthru
      _
  $region6: #{forward.8} parent=0 // loop_footer
    %s13 = sadd.s32 1, %s9
  $region7: #{forward.8} parent=0 // loop_footer_branch
    %8 = sbr.rel target = $region3
  $region8: #{forward.8} parent=0 // loop_exit
    _

// kernel: forward.7
$region0: #{forward.7}
  #allocation0 [shape = 'u32[]', space=smem, size = 0x4, offset = 0x4, fixed_abs, tag = 'smem constant byte address 0x4 - core index']
  #allocation1 [shape = 'u32[144,128]{1,0:T(1,128)}', space=vmem, size = 0x12000, scoped, tag = 'internal scratch']
  %s0 = inlined_call_operand.vmem [shape: bf16[2,10,10,128], index: 0, kind: input, shape index: {}]
  %s1 = inlined_call_operand.vmem [shape: bf16[9,128,128], index: 1, kind: input, shape index: {}]
  %s2 = inlined_call_operand.vmem [shape: f32[1,128], index: 2, kind: input, shape index: {}]
  %s3 = inlined_call_operand.vmem [shape: bf16[2,64,128], index: 3, kind: input, shape index: {}]
  %s4 = inlined_call_operand.vmem [shape: bf16[2,64,128], index: 4, kind: output, shape index: {}]
  %s5 = sld [smem:[#allocation0]]
  $region49: #{forward.7} parent=0
    _
  %s7 = ssub.s32 1, %s5
  %s8 = scalar_select 0, %s7, %s5
  loop: start=0, step=1, limit=4
  $region2: #{forward.7} parent=0 // loop_pre_header
    _
  $region3: #{forward.7} parent=0 // loop_header
    %s10 = sphi 0, %s14
    %p11 = scmp.ge.s32.totalorder %s10, 4
    %s17 = sphi 0, %s29
    %s18 = sphi 0, %s25
    %s19 = sphi 0, %s17
    %s20 = sphi 0, %s18
    %s21 = sphi 0, %s19
    %s22 = sphi 0, %s20
    %s32 = sphi 0, %s34
    %s35 = sphi 0, %s32
    %s36 = sphi 0, %s35
    %s52 = sphi 0, %s36
    %s58 = sphi 0, %s60
    %s61 = sphi 0, %s58
    %s62 = sphi 0, %s61
    %s78 = sphi 0, %s62
    %s84 = sphi 0, %s86
    %s87 = sphi 0, %s84
    %s88 = sphi 0, %s87
    %s104 = sphi 0, %s88
    %s112 = sphi 0, %s114
    %s115 = sphi 0, %s112
    %s116 = sphi 0, %s115
    %s132 = sphi 0, %s116
    %s140 = sphi 0, %s142
    %s143 = sphi 0, %s140
    %s144 = sphi 0, %s143
    %s160 = sphi 0, %s144
  $region4: #{forward.7} parent=0 // loop_header_branch
    %13 = sbr.rel (%p11) target = $region8
  $region5: #{forward.7} parent=0 // loop_body
    %s15 = ssub.s32 %s10, 1
    %s16 = ssub.s32 %s10, 2
    %s23 = sadd.s32 1, %s18
    %p24 = scmp.ge.s32.totalorder %s23, 1
    %s25 = scalar_select %p24, 0, %s23
    %s26 = sadd.s32 1, %s17
    %s27 = scalar_select %p24, %s26, %s17
    %p28 = scmp.ge.s32.totalorder %s27, 2
    %s29 = scalar_select %p28, 0, %s27
    %s30 = ssub.s32 %s17, %s29
    %p31 = scmp.eq.s32.totalorder %s30, 0
    %s33 = sadd.s32 %s32, 1
    %s34 = scalar_select %p31, %s32, %s33
    %p37 = pneg %p31
    %p38 = scmp.eq.s32.totalorder %s10, 1
    %p39 = por %p37, %p38
    %p40 = scmp.ne.s32.totalorder %s32, %s35
    %p41 = scmp.eq.s32.totalorder %s10, 0
    %p42 = por %p40, %p41
    %p43 = scmp.ne.s32.totalorder %s32, %s35
    %p44 = scmp.eq.s32.totalorder %s15, 1
    %p45 = por %p43, %p44
    %p46 = scmp.ne.s32.totalorder %s35, %s36
    %p47 = scmp.eq.s32.totalorder %s15, 0
    %p48 = por %p46, %p47
    %p49 = scmp.ne.s32.totalorder %s35, %s36
    %p50 = scmp.eq.s32.totalorder %s16, 1
    %p51 = por %p49, %p50
    %p53 = scmp.ne.s32.totalorder %s36, %s52
    %p54 = scmp.eq.s32.totalorder %s16, 0
    %p55 = por %p53, %p54
    %s56 = ssub.s32 %s18, %s25
    %p57 = scmp.eq.s32.totalorder %s56, 0
    %s59 = sadd.s32 %s58, 1
    %s60 = scalar_select %p57, %s58, %s59
    %p63 = pneg %p57
    %p64 = scmp.eq.s32.totalorder %s10, 1
    %p65 = por %p63, %p64
    %p66 = scmp.ne.s32.totalorder %s58, %s61
    %p67 = scmp.eq.s32.totalorder %s10, 0
    %p68 = por %p66, %p67
    %p69 = scmp.ne.s32.totalorder %s58, %s61
    %p70 = scmp.eq.s32.totalorder %s15, 1
    %p71 = por %p69, %p70
    %p72 = scmp.ne.s32.totalorder %s61, %s62
    %p73 = scmp.eq.s32.totalorder %s15, 0
    %p74 = por %p72, %p73
    %p75 = scmp.ne.s32.totalorder %s61, %s62
    %p76 = scmp.eq.s32.totalorder %s16, 1
    %p77 = por %p75, %p76
    %p79 = scmp.ne.s32.totalorder %s62, %s78
    %p80 = scmp.eq.s32.totalorder %s16, 0
    %p81 = por %p79, %p80
    %s82 = ssub.s32 %s18, %s25
    %p83 = scmp.eq.s32.totalorder %s82, 0
    %s85 = sadd.s32 %s84, 1
    %s86 = scalar_select %p83, %s84, %s85
    %p89 = pneg %p83
    %p90 = scmp.eq.s32.totalorder %s10, 1
    %p91 = por %p89, %p90
    %p92 = scmp.ne.s32.totalorder %s84, %s87
    %p93 = scmp.eq.s32.totalorder %s10, 0
    %p94 = por %p92, %p93
    %p95 = scmp.ne.s32.totalorder %s84, %s87
    %p96 = scmp.eq.s32.totalorder %s15, 1
    %p97 = por %p95, %p96
    %p98 = scmp.ne.s32.totalorder %s87, %s88
    %p99 = scmp.eq.s32.totalorder %s15, 0
    %p100 = por %p98, %p99
    %p101 = scmp.ne.s32.totalorder %s87, %s88
    %p102 = scmp.eq.s32.totalorder %s16, 1
    %p103 = por %p101, %p102
    %p105 = scmp.ne.s32.totalorder %s88, %s104
    %p106 = scmp.eq.s32.totalorder %s16, 0
    %p107 = por %p105, %p106
    %s108 = ssub.s32 %s17, %s29
    %s109 = ssub.s32 %s18, %s25
    %s110 = sor.u32 %s108, %s109
    %p111 = scmp.eq.s32.totalorder %s110, 0
    %s113 = sadd.s32 %s112, 1
    %s114 = scalar_select %p111, %s112, %s113
    %p117 = pneg %p111
    %p118 = scmp.eq.s32.totalorder %s10, 1
    %p119 = por %p117, %p118
    %p120 = scmp.ne.s32.totalorder %s112, %s115
    %p121 = scmp.eq.s32.totalorder %s10, 0
    %p122 = por %p120, %p121
    %p123 = scmp.ne.s32.totalorder %s112, %s115
    %p124 = scmp.eq.s32.totalorder %s15, 1
    %p125 = por %p123, %p124
    %p126 = scmp.ne.s32.totalorder %s115, %s116
    %p127 = scmp.eq.s32.totalorder %s15, 0
    %p128 = por %p126, %p127
    %p129 = scmp.ne.s32.totalorder %s115, %s116
    %p130 = scmp.eq.s32.totalorder %s16, 1
    %p131 = por %p129, %p130
    %p133 = scmp.ne.s32.totalorder %s116, %s132
    %p134 = scmp.eq.s32.totalorder %s16, 0
    %p135 = por %p133, %p134
    %s136 = ssub.s32 %s17, %s29
    %s137 = ssub.s32 %s18, %s25
    %s138 = sor.u32 %s136, %s137
    %p139 = scmp.eq.s32.totalorder %s138, 0
    %s141 = sadd.s32 %s140, 1
    %s142 = scalar_select %p139, %s140, %s141
    %p145 = pneg %p139
    %p146 = scmp.eq.s32.totalorder %s10, 1
    %p147 = por %p145, %p146
    %p148 = scmp.ne.s32.totalorder %s140, %s143
    %p149 = scmp.eq.s32.totalorder %s10, 0
    %p150 = por %p148, %p149
    %p151 = scmp.ne.s32.totalorder %s140, %s143
    %p152 = scmp.eq.s32.totalorder %s15, 1
    %p153 = por %p151, %p152
    %p154 = scmp.ne.s32.totalorder %s143, %s144
    %p155 = scmp.eq.s32.totalorder %s15, 0
    %p156 = por %p154, %p155
    %p157 = scmp.ne.s32.totalorder %s143, %s144
    %p158 = scmp.eq.s32.totalorder %s16, 1
    %p159 = por %p157, %p158
    %p161 = scmp.ne.s32.totalorder %s144, %s160
    %p162 = scmp.eq.s32.totalorder %s16, 0
    %p163 = por %p161, %p162
    %p164 = scmp.le.s32.totalorder 1, %s10
    %p165 = scmp.lt.s32.totalorder %s10, 3
    %p166 = pnand %p164, %p165
    %p167 = pneg %p166
    // Predicated region
    $region9: #{forward.7} parent=5 // pred_check
      _
    $region10: #{forward.7} parent=5 // pred_check_branch
      %169 = sbr.rel (%p166) target = $region12
    $region11: #{forward.7} parent=5 // pred_region
      %s170 = ssub.s32 %s10, 1
      // Predicated region
      $region13: #{forward.7} parent=11 // pred_check
        %p171 = pneg %p74
      $region14: #{forward.7} parent=11 // pred_check_branch
        %173 = sbr.rel (%p171) target = $region16
      $region15: #{forward.7} parent=11 // pred_region
        %p174 = scmp.lt.s32.totalorder %s20, 0
        %s175 = scalar_select %p174, %s20, 0
        %s176 = smul.addr %s175, 4
        %s177 = scalar_lea.vmem %s1, %s176
      $region16: #{forward.7} parent=11 // pred_fallthru
        _
      // Predicated region
      $region17: #{forward.7} parent=11 // pred_check
        %p178 = pneg %p100
      $region18: #{forward.7} parent=11 // pred_check_branch
        %180 = sbr.rel (%p178) target = $region20
      $region19: #{forward.7} parent=11 // pred_region
        %p181 = scmp.lt.s32.totalorder %s20, 0
        %s182 = scalar_select %p181, %s20, 0
        %s183 = scalar_lea.vmem %s2, %s182
      $region20: #{forward.7} parent=11 // pred_fallthru
        _
    $region12: #{forward.7} parent=5 // pred_fallthru
      _
    %p184 = scmp.lt.s32.totalorder %s10, 2
    // Predicated region
    $region21: #{forward.7} parent=5 // pred_check
      %p185 = pneg %p184
    $region22: #{forward.7} parent=5 // pred_check_branch
      %187 = sbr.rel (%p185) target = $region24
    $region23: #{forward.7} parent=5 // pred_region
      // Predicated region
      $region25: #{forward.7} parent=23 // pred_check
        %p188 = pneg %p42
      $region26: #{forward.7} parent=23 // pred_check_branch
        %190 = sbr.rel (%p188) target = $region28
      $region27: #{forward.7} parent=23 // pred_region
        %p191 = scmp.lt.s32.totalorder %s17, 1
        %s192 = scalar_select %p191, %s17, 1
        %s193 = smul.addr %s192, 20
        %s194 = smul.addr %s193, 4
        %s195 = scalar_lea.vmem %s0, %s194
      $region28: #{forward.7} parent=23 // pred_fallthru
        _
      // Predicated region
      $region29: #{forward.7} parent=23 // pred_check
        %p196 = pneg %p122
      $region30: #{forward.7} parent=23 // pred_check_branch
        %198 = sbr.rel (%p196) target = $region32
      $region31: #{forward.7} parent=23 // pred_region
        %p199 = scmp.lt.s32.totalorder %s17, 1
        %s200 = scalar_select %p199, %s17, 1
        %p201 = scmp.lt.s32.totalorder %s18, 0
        %s202 = scalar_select %p201, %s18, 0
        %s203 = smul.addr %s200, 8
        %s204 = sadd.s32 %s202, %s203
        %s205 = smul.addr %s204, 4
        %s206 = scalar_lea.vmem %s3, %s205
      $region32: #{forward.7} parent=23 // pred_fallthru
        _
    $region24: #{forward.7} parent=5 // pred_fallthru
      _
    %p207 = scmp.le.s32.totalorder 1, %s10
    %p208 = scmp.lt.s32.totalorder %s10, 3
    %p209 = pnand %p207, %p208
    %p210 = pneg %p209
    // Predicated region
    $region33: #{forward.7} parent=5 // pred_check
      _
    $region34: #{forward.7} parent=5 // pred_check_branch
      %212 = sbr.rel (%p209) target = $region36
    $region35: #{forward.7} parent=5 // pred_region
      %s213 = ssub.s32 %s10, 1
      %p214 = scmp.lt.s32.totalorder %s19, 1
      %s215 = scalar_select %p214, %s19, 1
      %s216 = smul.addr %s215, 20
      %s217 = smul.addr %s216, 4
      %s218 = scalar_lea.vmem %s0, %s217
      %p219 = pneg %p48
      %p220 = pneg %p45
      %p221 = scmp.lt.s32.totalorder %s20, 0
      %s222 = scalar_select %p221, %s20, 0
      %s223 = smul.addr %s222, 4
      %s224 = scalar_lea.vmem %s1, %s223
      %p225 = pneg %p74
      %p226 = pneg %p71
      %p227 = scmp.lt.s32.totalorder %s20, 0
      %s228 = scalar_select %p227, %s20, 0
      %s229 = scalar_lea.vmem %s2, %s228
      %p230 = pneg %p100
      %p231 = pneg %p97
      %p232 = scmp.lt.s32.totalorder %s19, 1
      %s233 = scalar_select %p232, %s19, 1
      %p234 = scmp.lt.s32.totalorder %s20, 0
      %s235 = scalar_select %p234, %s20, 0
      %s236 = smul.addr %s233, 8
      %s237 = sadd.s32 %s235, %s236
      %s238 = smul.addr %s237, 4
      %s239 = scalar_lea.vmem %s3, %s238
      %p240 = pneg %p128
      %p241 = pneg %p125
      %p242 = pneg %p156
      %p243 = pneg %p153
      %p244 = scmp.lt.s32.totalorder %s19, 1
      %s245 = scalar_select %p244, %s19, 1
      %p246 = scmp.lt.s32.totalorder %s20, 0
      %s247 = scalar_select %p246, %s20, 0
      %s248 = smul.addr %s245, 8
      %s249 = sadd.s32 %s247, %s248
      %s250 = smul.addr %s249, 4
      %s251 = scalar_lea.vmem %s4, %s250
      %p252 = scmp.lt.s32.totalorder %s19, 1
      %s253 = scalar_select %p252, %s19, 1
      %s254 = smul.addr %s253, 20
      %s255 = smul.addr %s254, 4
      %s256 = scalar_lea.vmem %s0, %s255
      %p257 = scmp.lt.s32.totalorder %s20, 0
      %s258 = scalar_select %p257, %s20, 0
      %s259 = smul.addr %s258, 4
      %s260 = scalar_lea.vmem %s1, %s259
      %p261 = scmp.lt.s32.totalorder %s20, 0
      %s262 = scalar_select %p261, %s20, 0
      %s263 = scalar_lea.vmem %s2, %s262
      %p264 = scmp.lt.s32.totalorder %s19, 1
      %s265 = scalar_select %p264, %s19, 1
      %p266 = scmp.lt.s32.totalorder %s20, 0
      %s267 = scalar_select %p266, %s20, 0
      %s268 = smul.addr %s265, 8
      %s269 = sadd.s32 %s267, %s268
      %s270 = smul.addr %s269, 4
      %s271 = scalar_lea.vmem %s3, %s270
      %p272 = scmp.lt.s32.totalorder %s19, 1
      %s273 = scalar_select %p272, %s19, 1
      %p274 = scmp.lt.s32.totalorder %s20, 0
      %s275 = scalar_select %p274, %s20, 0
      %s276 = smul.addr %s273, 8
      %s277 = sadd.s32 %s275, %s276
      %s278 = smul.addr %s277, 4
      %s279 = scalar_lea.vmem %s4, %s278
      %v281 = vld [vmem:[%s256] sm:$0xf]
      %v282 = vld [vmem:[%s256 + $0x8] sm:$0xf]
      %v283 = vld [vmem:[%s256 + $0x10] sm:$0xf]
      %v284 = vld [vmem:[%s256 + $0x18] sm:$0xf]
      %v285 = vld [vmem:[%s256 + $0x20] sm:$0xf]
      %v286 = vld [vmem:[%s256 + $0x28] sm:$0xf]
      %v287 = vld [vmem:[%s256 + $0x30] sm:$0xf]
      %v288 = vld [vmem:[%s256 + $0x38] sm:$0xf]
      %v289 = vld [vmem:[%s260] sm:$0xf]
      %v290 = vld [vmem:[%s260 + $0x4] sm:$0xf]
      %v291 = vld [vmem:[%s260 + $0x8] sm:$0xf]
      %v292 = vld [vmem:[%s260 + $0xc] sm:$0xf]
      %v293 = vld [vmem:[%s260 + $0x10] sm:$0xf]
      %v294 = vld [vmem:[%s260 + $0x14] sm:$0xf]
      %v295 = vld [vmem:[%s260 + $0x18] sm:$0xf]
      %v296 = vld [vmem:[%s260 + $0x1c] sm:$0xf]
      %v297 = vld [vmem:[%s260 + $0x20] sm:$0xf]
      %v298 = vld [vmem:[%s260 + $0x24] sm:$0xf]
      %v299 = vld [vmem:[%s260 + $0x28] sm:$0xf]
      %v300 = vld [vmem:[%s260 + $0x2c] sm:$0xf]
      %v301 = vld [vmem:[%s260 + $0x30] sm:$0xf]
      %v302 = vld [vmem:[%s260 + $0x34] sm:$0xf]
      %v303 = vld [vmem:[%s260 + $0x38] sm:$0xf]
      %v304 = vld [vmem:[%s260 + $0x3c] sm:$0xf]
      %v305 = vld [vmem:[%s256 + $0x4] sm:$0x1]
      %v306 = vld [vmem:[%s256 + $0xc] sm:$0x1]
      %v307 = vld [vmem:[%s256 + $0x14] sm:$0x1]
      %v308 = vld [vmem:[%s256 + $0x1c] sm:$0x1]
      %v309 = vld [vmem:[%s256 + $0x24] sm:$0x1]
      %v310 = vld [vmem:[%s256 + $0x2c] sm:$0x1]
      %v311 = vld [vmem:[%s256 + $0x34] sm:$0x1]
      %v312 = vld [vmem:[%s256 + $0x3c] sm:$0x1]
      %vm313 = vsmask.f32 3328
      %vm314 = vsmask.f32 7440
      %vm315 = vmor %vm313, %vm314
      %v317 = vshrl.u32 %v281, 16
      %v319 = vrot.slane %v317, 4
      %v320 = vshll.u32 %v281, 16
      %v322 = vrot.slane %v320, 5
      %v323 = vor.u32 %v319, %v322
      %v324 = vrot.slane %v323, 4
      %v326 = vshll.u32 %v305, 16
      %v328 = vrot.slane %v326, 5
      %v329 = vsel %vm315, %v324, %v328
      %v331 = vshrl.u32 %v282, 16
      %v333 = vrot.slane %v331, 4
      %v334 = vshll.u32 %v282, 16
      %v336 = vrot.slane %v334, 5
      %v337 = vor.u32 %v333, %v336
      %v338 = vrot.slane %v337, 4
      %v340 = vshll.u32 %v306, 16
      %v342 = vrot.slane %v340, 5
      %v343 = vsel %vm315, %v338, %v342
      %v345 = vshrl.u32 %v283, 16
      %v347 = vrot.slane %v345, 4
      %v348 = vshll.u32 %v283, 16
      %v350 = vrot.slane %v348, 5
      %v351 = vor.u32 %v347, %v350
      %v352 = vrot.slane %v351, 4
      %v354 = vshll.u32 %v307, 16
      %v356 = vrot.slane %v354, 5
      %v357 = vsel %vm315, %v352, %v356
      %v359 = vshrl.u32 %v284, 16
      %v361 = vrot.slane %v359, 4
      %v362 = vshll.u32 %v284, 16
      %v364 = vrot.slane %v362, 5
      %v365 = vor.u32 %v361, %v364
      %v366 = vrot.slane %v365, 4
      %v368 = vshll.u32 %v308, 16
      %v370 = vrot.slane %v368, 5
      %v371 = vsel %vm315, %v366, %v370
      %v373 = vshrl.u32 %v285, 16
      %v375 = vrot.slane %v373, 4
      %v376 = vshll.u32 %v285, 16
      %v378 = vrot.slane %v376, 5
      %v379 = vor.u32 %v375, %v378
      %v380 = vrot.slane %v379, 4
      %v382 = vshll.u32 %v309, 16
      %v384 = vrot.slane %v382, 5
      %v385 = vsel %vm315, %v380, %v384
      %v387 = vshrl.u32 %v286, 16
      %v389 = vrot.slane %v387, 4
      %v390 = vshll.u32 %v286, 16
      %v392 = vrot.slane %v390, 5
      %v393 = vor.u32 %v389, %v392
      %v394 = vrot.slane %v393, 4
      %v396 = vshll.u32 %v310, 16
      %v398 = vrot.slane %v396, 5
      %v399 = vsel %vm315, %v394, %v398
      %v401 = vshrl.u32 %v287, 16
      %v403 = vrot.slane %v401, 4
      %v404 = vshll.u32 %v287, 16
      %v406 = vrot.slane %v404, 5
      %v407 = vor.u32 %v403, %v406
      %v408 = vrot.slane %v407, 4
      %v410 = vshll.u32 %v311, 16
      %v412 = vrot.slane %v410, 5
      %v413 = vsel %vm315, %v408, %v412
      %v415 = vshrl.u32 %v288, 16
      %v417 = vrot.slane %v415, 4
      %v418 = vshll.u32 %v288, 16
      %v420 = vrot.slane %v418, 5
      %v421 = vor.u32 %v417, %v420
      %v422 = vrot.slane %v421, 4
      %v424 = vshll.u32 %v312, 16
      %v426 = vrot.slane %v424, 5
      %v427 = vsel %vm315, %v422, %v426
      %s428 = scalar_lea.vmem %s260, 64
      %v429 = vld [vmem:[%s428] sm:$0xf]
      %v430 = vld [vmem:[%s428 + $0x4] sm:$0xf]
      %v431 = vld [vmem:[%s428 + $0x8] sm:$0xf]
      %v432 = vld [vmem:[%s428 + $0xc] sm:$0xf]
      %v433 = vld [vmem:[%s428 + $0x10] sm:$0xf]
      %v434 = vld [vmem:[%s428 + $0x14] sm:$0xf]
      %v435 = vld [vmem:[%s428 + $0x18] sm:$0xf]
      %v436 = vld [vmem:[%s428 + $0x1c] sm:$0xf]
      %v437 = vld [vmem:[%s428 + $0x20] sm:$0xf]
      %v438 = vld [vmem:[%s428 + $0x24] sm:$0xf]
      %v439 = vld [vmem:[%s428 + $0x28] sm:$0xf]
      %v440 = vld [vmem:[%s428 + $0x2c] sm:$0xf]
      %v441 = vld [vmem:[%s428 + $0x30] sm:$0xf]
      %v442 = vld [vmem:[%s428 + $0x34] sm:$0xf]
      %v443 = vld [vmem:[%s428 + $0x38] sm:$0xf]
      %v444 = vld [vmem:[%s428 + $0x3c] sm:$0xf]
      %v445 = vunpack.c.l.b16 %v329
      %v446 = vunpack.c.l.b16 %v343
      %v447 = vunpack.c.l.b16 %v357
      %v448 = vunpack.c.l.b16 %v371
      %v449 = vunpack.c.l.b16 %v385
      %v450 = vunpack.c.l.b16 %v399
      %v451 = vunpack.c.l.b16 %v413
      %v452 = vunpack.c.l.b16 %v427
      %v453 = vpack.c.b16 %v446, %v445
      %v454 = vpack.c.b16 %v448, %v447
      %v455 = vpack.c.b16 %v450, %v449
      %v456 = vpack.c.b16 %v452, %v451
      %v477 = vunpack.c.l.b16 %v429
      %v478 = vunpack.c.l.b16 %v430
      %v479 = vunpack.c.l.b16 %v431
      %v480 = vunpack.c.l.b16 %v432
      %v481 = vunpack.c.l.b16 %v433
      %v482 = vunpack.c.l.b16 %v434
      %v483 = vunpack.c.l.b16 %v435
      %v484 = vunpack.c.l.b16 %v436
      %v485 = vunpack.c.l.b16 %v437
      %v486 = vunpack.c.l.b16 %v438
      %v487 = vunpack.c.l.b16 %v439
      %v488 = vunpack.c.l.b16 %v440
      %v489 = vunpack.c.l.b16 %v441
      %v490 = vunpack.c.l.b16 %v442
      %v491 = vunpack.c.l.b16 %v443
      %v492 = vunpack.c.l.b16 %v444
      %v493 = vpack.c.b16 %v478, %v477
      %v494 = vpack.c.b16 %v480, %v479
      %v495 = vpack.c.b16 %v482, %v481
      %v496 = vpack.c.b16 %v484, %v483
      %v497 = vpack.c.b16 %v486, %v485
      %v498 = vpack.c.b16 %v488, %v487
      %v499 = vpack.c.b16 %v490, %v489
      %v500 = vpack.c.b16 %v492, %v491
      %509 = vmatprep.subr.bf16.mxu0 0
      %510 = vmatpush1.bf16.msra.mxu0 %v493
      %511 = vmatprep.subr.bf16.mxu0 0
      %512 = vmatpush1.bf16.msra.mxu0 %v494
      %513 = vmatprep.subr.bf16.mxu0 0
      %514 = vmatpush1.bf16.msra.mxu0 %v495
      %515 = vmatprep.subr.bf16.mxu0 0
      %516 = vmatpush1.bf16.msra.mxu0 %v496
      %517 = vmatprep.subr.bf16.mxu0 0
      %518 = vmatpush1.bf16.msra.mxu0 %v497
      %519 = vmatprep.subr.bf16.mxu0 0
      %520 = vmatpush1.bf16.msra.mxu0 %v498
      %521 = vmatprep.subr.bf16.mxu0 0
      %522 = vmatpush1.bf16.msra.mxu0 %v499
      %523 = vmatprep.subr.bf16.mxu0 0
      %524 = vmatpush1.bf16.msra.mxu0 %v500
      %525 = vmatprep.subr.bf16.mxu0 0
      %526 = vmatpush1.bf16.msra.mxu0 0
      %527 = vmatprep.subr.bf16.mxu0 0
      %528 = vmatpush1.bf16.msra.mxu0 0
      %529 = vmatprep.subr.bf16.mxu0 0
      %530 = vmatpush1.bf16.msra.mxu0 0
      %531 = vmatprep.subr.bf16.mxu0 0
      %532 = vmatpush1.bf16.msra.mxu0 0
      %533 = vmatprep.subr.bf16.mxu0 0
      %534 = vmatpush1.bf16.msra.mxu0 0
      %535 = vmatprep.subr.bf16.mxu0 0
      %536 = vmatpush1.bf16.msra.mxu0 0
      %537 = vmatprep.subr.bf16.mxu0 0
      %538 = vmatpush1.bf16.msra.mxu0 0
      %539 = vmatprep.subr.bf16.mxu0 0
      %540 = vmatpush1.bf16.msra.mxu0 0
      %541 = vmatprep.mubr.bf16.mxu0 0
      %542 = vmatmul.mubr.bf16.gmra.mrb[0].mxu0 %v453
      %v543 = vpop.f32.mrb[0].mxu0
      %v544 = vadd.f32 0.0, %v543
      %v545 = vpop.f32.mrb[0].mxu0
      %v546 = vpop.f32.mrb[0].mxu0
      %v547 = vadd.f32 0.0, %v546
      %v548 = vpop.f32.mrb[0].mxu0
      %549 = vmatprep.mubr.bf16.mxu0 0
      %550 = vmatmul.mubr.bf16.gmra.mrb[0].mxu0 %v454
      %v551 = vpop.f32.mrb[0].mxu0
      %v552 = vadd.f32 0.0, %v551
      %v553 = vpop.f32.mrb[0].mxu0
      %v554 = vpop.f32.mrb[0].mxu0
      %v555 = vadd.f32 0.0, %v554
      %v556 = vpop.f32.mrb[0].mxu0
      %557 = vmatprep.mubr.bf16.mxu0 0
      %558 = vmatmul.mubr.bf16.gmra.mrb[0].mxu0 %v455
      %v559 = vpop.f32.mrb[0].mxu0
      %v560 = vadd.f32 0.0, %v559
      %v561 = vpop.f32.mrb[0].mxu0
      %v562 = vpop.f32.mrb[0].mxu0
      %v563 = vadd.f32 0.0, %v562
      %v564 = vpop.f32.mrb[0].mxu0
      %565 = vmatprep.mubr.bf16.mxu0 0
      %566 = vmatmul.mubr.bf16.gmra.mrb[0].mxu0 %v456
      %v567 = vpop.f32.mrb[0].mxu0
      %v568 = vadd.f32 0.0, %v567
      %v569 = vpop.f32.mrb[0].mxu0
      %v570 = vpop.f32.mrb[0].mxu0
      %v571 = vadd.f32 0.0, %v570
      %v572 = vpop.f32.mrb[0].mxu0
      %573 = vdwg.mxu0
      %v582 = vunpack.c.l.b16 %v281
      %v583 = vunpack.c.l.b16 %v282
      %v584 = vunpack.c.l.b16 %v283
      %v585 = vunpack.c.l.b16 %v284
      %v586 = vunpack.c.l.b16 %v285
      %v587 = vunpack.c.l.b16 %v286
      %v588 = vunpack.c.l.b16 %v287
      %v589 = vunpack.c.l.b16 %v288
      %v590 = vpack.c.b16 %v583, %v582
      %v591 = vpack.c.b16 %v585, %v584
      %v592 = vpack.c.b16 %v587, %v586
      %v593 = vpack.c.b16 %v589, %v588
      %v614 = vunpack.c.l.b16 %v289
      %v615 = vunpack.c.l.b16 %v290
      %v616 = vunpack.c.l.b16 %v291
      %v617 = vunpack.c.l.b16 %v292
      %v618 = vunpack.c.l.b16 %v293
      %v619 = vunpack.c.l.b16 %v294
      %v620 = vunpack.c.l.b16 %v295
      %v621 = vunpack.c.l.b16 %v296
      %v622 = vunpack.c.l.b16 %v297
      %v623 = vunpack.c.l.b16 %v298
      %v624 = vunpack.c.l.b16 %v299
      %v625 = vunpack.c.l.b16 %v300
      %v626 = vunpack.c.l.b16 %v301
      %v627 = vunpack.c.l.b16 %v302
      %v628 = vunpack.c.l.b16 %v303
      %v629 = vunpack.c.l.b16 %v304
      %v630 = vpack.c.b16 %v615, %v614
      %v631 = vpack.c.b16 %v617, %v616
      %v632 = vpack.c.b16 %v619, %v618
      %v633 = vpack.c.b16 %v621, %v620
      %v634 = vpack.c.b16 %v623, %v622
      %v635 = vpack.c.b16 %v625, %v624
      %v636 = vpack.c.b16 %v627, %v626
      %v637 = vpack.c.b16 %v629, %v628
      %646 = vmatprep.subr.bf16.mxu0 0
      %647 = vmatpush1.bf16.msra.mxu0 %v630
      %648 = vmatprep.subr.bf16.mxu0 0
      %649 = vmatpush1.bf16.msra.mxu0 %v631
      %650 = vmatprep.subr.bf16.mxu0 0
      %651 = vmatpush1.bf16.msra.mxu0 %v632
      %652 = vmatprep.subr.bf16.mxu0 0
      %653 = vmatpush1.bf16.msra.mxu0 %v633
      %654 = vmatprep.subr.bf16.mxu0 0
      %655 = vmatpush1.bf16.msra.mxu0 %v634
      %656 = vmatprep.subr.bf16.mxu0 0
      %657 = vmatpush1.bf16.msra.mxu0 %v635
      %658 = vmatprep.subr.bf16.mxu0 0
      %659 = vmatpush1.bf16.msra.mxu0 %v636
      %660 = vmatprep.subr.bf16.mxu0 0
      %661 = vmatpush1.bf16.msra.mxu0 %v637
      %662 = vmatprep.subr.bf16.mxu0 0
      %663 = vmatpush1.bf16.msra.mxu0 0
      %664 = vmatprep.subr.bf16.mxu0 0
      %665 = vmatpush1.bf16.msra.mxu0 0
      %666 = vmatprep.subr.bf16.mxu0 0
      %667 = vmatpush1.bf16.msra.mxu0 0
      %668 = vmatprep.subr.bf16.mxu0 0
      %669 = vmatpush1.bf16.msra.mxu0 0
      %670 = vmatprep.subr.bf16.mxu0 0
      %671 = vmatpush1.bf16.msra.mxu0 0
      %672 = vmatprep.subr.bf16.mxu0 0
      %673 = vmatpush1.bf16.msra.mxu0 0
      %674 = vmatprep.subr.bf16.mxu0 0
      %675 = vmatpush1.bf16.msra.mxu0 0
      %676 = vmatprep.subr.bf16.mxu0 0
      %677 = vmatpush1.bf16.msra.mxu0 0
      %678 = vmatprep.mubr.bf16.mxu0 0
      %679 = vmatmul.mubr.bf16.gmra.mrb[0].mxu0 %v590
      %v680 = vpop.f32.mrb[0].mxu0
      %v681 = vadd.f32 %v544, %v680
      %v682 = vpop.f32.mrb[0].mxu0
      %v683 = vpop.f32.mrb[0].mxu0
      %v684 = vadd.f32 %v547, %v683
      %v685 = vpop.f32.mrb[0].mxu0
      %686 = vmatprep.mubr.bf16.mxu0 0
      %687 = vmatmul.mubr.bf16.gmra.mrb[0].mxu0 %v591
      %v688 = vpop.f32.mrb[0].mxu0
      %v689 = vadd.f32 %v552, %v688
      %v690 = vpop.f32.mrb[0].mxu0
      %v691 = vpop.f32.mrb[0].mxu0
      %v692 = vadd.f32 %v555, %v691
      %v693 = vpop.f32.mrb[0].mxu0
      %694 = vmatprep.mubr.bf16.mxu0 0
      %695 = vmatmul.mubr.bf16.gmra.mrb[0].mxu0 %v592
      %v696 = vpop.f32.mrb[0].mxu0
      %v697 = vadd.f32 %v560, %v696
      %v698 = vpop.f32.mrb[0].mxu0
      %v699 = vpop.f32.mrb[0].mxu0
      %v700 = vadd.f32 %v563, %v699
      %v701 = vpop.f32.mrb[0].mxu0
      %702 = vmatprep.mubr.bf16.mxu0 0
      %703 = vmatmul.mubr.bf16.gmra.mrb[0].mxu0 %v593
      %v704 = vpop.f32.mrb[0].mxu0
      %v705 = vadd.f32 %v568, %v704
      %v706 = vpop.f32.mrb[0].mxu0
      %v707 = vpop.f32.mrb[0].mxu0
      %v708 = vadd.f32 %v571, %v707
      %v709 = vpop.f32.mrb[0].mxu0
      %710 = vdwg.mxu0
      %v711 = vld [vmem:[%s256] sm:$0xe]
      %v712 = vld [vmem:[%s256 + $0x8] sm:$0xe]
      %v713 = vld [vmem:[%s256 + $0x10] sm:$0xe]
      %v714 = vld [vmem:[%s256 + $0x18] sm:$0xe]
      %v715 = vld [vmem:[%s256 + $0x20] sm:$0xe]
      %v716 = vld [vmem:[%s256 + $0x28] sm:$0xe]
      %v717 = vld [vmem:[%s256 + $0x30] sm:$0xe]
      %v718 = vld [vmem:[%s256 + $0x38] sm:$0xe]
      %vm735 = vcmask 1042432
      %vm736 = vcmask 1046532
      %vm737 = vmor %vm735, %vm736
      %v738 = vrot.slane %v711, 5
      %v739 = vrot.slane %v738, 4
      %v740 = vrot.slane %v305, 5
      %v741 = vsel %vm737, %v739, %v740
      %v742 = vrot.slane %v712, 5
      %v743 = vrot.slane %v742, 4
      %v744 = vrot.slane %v306, 5
      %v745 = vsel %vm737, %v743, %v744
      %v746 = vrot.slane %v713, 5
      %v747 = vrot.slane %v746, 4
      %v748 = vrot.slane %v307, 5
      %v749 = vsel %vm737, %v747, %v748
      %v750 = vrot.slane %v714, 5
      %v751 = vrot.slane %v750, 4
      %v752 = vrot.slane %v308, 5
      %v753 = vsel %vm737, %v751, %v752
      %v754 = vrot.slane %v715, 5
      %v755 = vrot.slane %v754, 4
      %v756 = vrot.slane %v309, 5
      %v757 = vsel %vm737, %v755, %v756
      %v758 = vrot.slane %v716, 5
      %v759 = vrot.slane %v758, 4
      %v760 = vrot.slane %v310, 5
      %v761 = vsel %vm737, %v759, %v760
      %v762 = vrot.slane %v717, 5
      %v763 = vrot.slane %v762, 4
      %v764 = vrot.slane %v311, 5
      %v765 = vsel %vm737, %v763, %v764
      %v766 = vrot.slane %v718, 5
      %v767 = vrot.slane %v766, 4
      %v768 = vrot.slane %v312, 5
      %v769 = vsel %vm737, %v767, %v768
      %s770 = scalar_lea.vmem %s260, 128
      %v771 = vld [vmem:[%s770] sm:$0xf]
      %v772 = vld [vmem:[%s770 + $0x4] sm:$0xf]
      %v773 = vld [vmem:[%s770 + $0x8] sm:$0xf]
      %v774 = vld [vmem:[%s770 + $0xc] sm:$0xf]
      %v775 = vld [vmem:[%s770 + $0x10] sm:$0xf]
      %v776 = vld [vmem:[%s770 + $0x14] sm:$0xf]
      %v777 = vld [vmem:[%s770 + $0x18] sm:$0xf]
      %v778 = vld [vmem:[%s770 + $0x1c] sm:$0xf]
      %v779 = vld [vmem:[%s770 + $0x20] sm:$0xf]
      %v780 = vld [vmem:[%s770 + $0x24] sm:$0xf]
      %v781 = vld [vmem:[%s770 + $0x28] sm:$0xf]
      %v782 = vld [vmem:[%s770 + $0x2c] sm:$0xf]
      %v783 = vld [vmem:[%s770 + $0x30] sm:$0xf]
      %v784 = vld [vmem:[%s770 + $0x34] sm:$0xf]
      %v785 = vld [vmem:[%s770 + $0x38] sm:$0xf]
      %v786 = vld [vmem:[%s770 + $0x3c] sm:$0xf]
      %v787 = vunpack.c.l.b16 %v741
      %v788 = vunpack.c.l.b16 %v745
      %v789 = vunpack.c.l.b16 %v749
      %v790 = vunpack.c.l.b16 %v753
      %v791 = vunpack.c.l.b16 %v757
      %v792 = vunpack.c.l.b16 %v761
      %v793 = vunpack.c.l.b16 %v765
      %v794 = vunpack.c.l.b16 %v769
      %v795 = vpack.c.b16 %v788, %v787
      %v796 = vpack.c.b16 %v790, %v789
      %v797 = vpack.c.b16 %v792, %v791
      %v798 = vpack.c.b16 %v794, %v793
      %v819 = vunpack.c.l.b16 %v771
      %v820 = vunpack.c.l.b16 %v772
      %v821 = vunpack.c.l.b16 %v773
      %v822 = vunpack.c.l.b16 %v774
      %v823 = vunpack.c.l.b16 %v775
      %v824 = vunpack.c.l.b16 %v776
      %v825 = vunpack.c.l.b16 %v777
      %v826 = vunpack.c.l.b16 %v778
      %v827 = vunpack.c.l.b16 %v779
      %v828 = vunpack.c.l.b16 %v780
      %v829 = vunpack.c.l.b16 %v781
      %v830 = vunpack.c.l.b16 %v782
      %v831 = vunpack.c.l.b16 %v783
      %v832 = vunpack.c.l.b16 %v784
      %v833 = vunpack.c.l.b16 %v785
      %v834 = vunpack.c.l.b16 %v786
      %v835 = vpack.c.b16 %v820, %v819
      %v836 = vpack.c.b16 %v822, %v821
      %v837 = vpack.c.b16 %v824, %v823
      %v838 = vpack.c.b16 %v826, %v825
      %v839 = vpack.c.b16 %v828, %v827
      %v840 = vpack.c.b16 %v830, %v829
      %v841 = vpack.c.b16 %v832, %v831
      %v842 = vpack.c.b16 %v834, %v833
      %851 = vmatprep.subr.bf16.mxu0 0
      %852 = vmatpush1.bf16.msra.mxu0 %v835
      %853 = vmatprep.subr.bf16.mxu0 0
      %854 = vmatpush1.bf16.msra.mxu0 %v836
      %855 = vmatprep.subr.bf16.mxu0 0
      %856 = vmatpush1.bf16.msra.mxu0 %v837
      %857 = vmatprep.subr.bf16.mxu0 0
      %858 = vmatpush1.bf16.msra.mxu0 %v838
      %859 = vmatprep.subr.bf16.mxu0 0
      %860 = vmatpush1.bf16.msra.mxu0 %v839
      %861 = vmatprep.subr.bf16.mxu0 0
      %862 = vmatpush1.bf16.msra.mxu0 %v840
      %863 = vmatprep.subr.bf16.mxu0 0
      %864 = vmatpush1.bf16.msra.mxu0 %v841
      %865 = vmatprep.subr.bf16.mxu0 0
      %866 = vmatpush1.bf16.msra.mxu0 %v842
      %867 = vmatprep.subr.bf16.mxu0 0
      %868 = vmatpush1.bf16.msra.mxu0 0
      %869 = vmatprep.subr.bf16.mxu0 0
      %870 = vmatpush1.bf16.msra.mxu0 0
      %871 = vmatprep.subr.bf16.mxu0 0
      %872 = vmatpush1.bf16.msra.mxu0 0
      %873 = vmatprep.subr.bf16.mxu0 0
      %874 = vmatpush1.bf16.msra.mxu0 0
      %875 = vmatprep.subr.bf16.mxu0 0
      %876 = vmatpush1.bf16.msra.mxu0 0
      %877 = vmatprep.subr.bf16.mxu0 0
      %878 = vmatpush1.bf16.msra.mxu0 0
      %879 = vmatprep.subr.bf16.mxu0 0
      %880 = vmatpush1.bf16.msra.mxu0 0
      %881 = vmatprep.subr.bf16.mxu0 0
      %882 = vmatpush1.bf16.msra.mxu0 0
      %883 = vmatprep.mubr.bf16.mxu0 0
      %884 = vmatmul.mubr.bf16.gmra.mrb[0].mxu0 %v795
      %v885 = vpop.f32.mrb[0].mxu0
      %v886 = vadd.f32 0.0, %v885
      %v887 = vpop.f32.mrb[0].mxu0
      %v888 = vpop.f32.mrb[0].mxu0
      %v889 = vadd.f32 0.0, %v888
      %v890 = vpop.f32.mrb[0].mxu0
      %891 = vmatprep.mubr.bf16.mxu0 0
      %892 = vmatmul.mubr.bf16.gmra.mrb[0].mxu0 %v796
      %v893 = vpop.f32.mrb[0].mxu0
      %v894 = vadd.f32 0.0, %v893
      %v895 = vpop.f32.mrb[0].mxu0
      %v896 = vpop.f32.mrb[0].mxu0
      %v897 = vadd.f32 0.0, %v896
      %v898 = vpop.f32.mrb[0].mxu0
      %899 = vmatprep.mubr.bf16.mxu0 0
      %900 = vmatmul.mubr.bf16.gmra.mrb[0].mxu0 %v797
      %v901 = vpop.f32.mrb[0].mxu0
      %v902 = vadd.f32 0.0, %v901
      %v903 = vpop.f32.mrb[0].mxu0
      %v904 = vpop.f32.mrb[0].mxu0
      %v905 = vadd.f32 0.0, %v904
      %v906 = vpop.f32.mrb[0].mxu0
      %907 = vmatprep.mubr.bf16.mxu0 0
      %908 = vmatmul.mubr.bf16.gmra.mrb[0].mxu0 %v798
      %v909 = vpop.f32.mrb[0].mxu0
      %v910 = vadd.f32 0.0, %v909
      %v911 = vpop.f32.mrb[0].mxu0
      %v912 = vpop.f32.mrb[0].mxu0
      %v913 = vadd.f32 0.0, %v912
      %v914 = vpop.f32.mrb[0].mxu0
      %915 = vdwg.mxu0
      %v916 = vadd.f32 %v681, %v886
      %v917 = vadd.f32 %v684, %v889
      %v918 = vadd.f32 %v689, %v894
      %v919 = vadd.f32 %v692, %v897
      %v920 = vadd.f32 %v697, %v902
      %v921 = vadd.f32 %v700, %v905
      %v922 = vadd.f32 %v705, %v910
      %v923 = vadd.f32 %v708, %v913
      %s924 = scalar_lea.vmem %s256, 8
      %v925 = vld [vmem:[%s924] sm:$0xf]
      %v926 = vld [vmem:[%s924 + $0x8] sm:$0xf]
      %v927 = vld [vmem:[%s924 + $0x10] sm:$0xf]
      %v928 = vld [vmem:[%s924 + $0x18] sm:$0xf]
      %v929 = vld [vmem:[%s924 + $0x20] sm:$0xf]
      %v930 = vld [vmem:[%s924 + $0x28] sm:$0xf]
      %v931 = vld [vmem:[%s924 + $0x30] sm:$0xf]
      %v932 = vld [vmem:[%s924 + $0x38] sm:$0xf]
      %s933 = scalar_lea.vmem %s260, 192
      %v934 = vld [vmem:[%s933] sm:$0xf]
      %v935 = vld [vmem:[%s933 + $0x4] sm:$0xf]
      %v936 = vld [vmem:[%s933 + $0x8] sm:$0xf]
      %v937 = vld [vmem:[%s933 + $0xc] sm:$0xf]
      %v938 = vld [vmem:[%s933 + $0x10] sm:$0xf]
      %v939 = vld [vmem:[%s933 + $0x14] sm:$0xf]
      %v940 = vld [vmem:[%s933 + $0x18] sm:$0xf]
      %v941 = vld [vmem:[%s933 + $0x1c] sm:$0xf]
      %v942 = vld [vmem:[%s933 + $0x20] sm:$0xf]
      %v943 = vld [vmem:[%s933 + $0x24] sm:$0xf]
      %v944 = vld [vmem:[%s933 + $0x28] sm:$0xf]
      %v945 = vld [vmem:[%s933 + $0x2c] sm:$0xf]
      %v946 = vld [vmem:[%s933 + $0x30] sm:$0xf]
      %v947 = vld [vmem:[%s933 + $0x34] sm:$0xf]
      %v948 = vld [vmem:[%s933 + $0x38] sm:$0xf]
      %v949 = vld [vmem:[%s933 + $0x3c] sm:$0xf]
      %v958 = vunpack.c.l.b16 %v925
      %v959 = vunpack.c.l.b16 %v926
      %v960 = vunpack.c.l.b16 %v927
      %v961 = vunpack.c.l.b16 %v928
      %v962 = vunpack.c.l.b16 %v929
      %v963 = vunpack.c.l.b16 %v930
      %v964 = vunpack.c.l.b16 %v931
      %v965 = vunpack.c.l.b16 %v932
      %v966 = vpack.c.b16 %v959, %v958
      %v967 = vpack.c.b16 %v961, %v960
      %v968 = vpack.c.b16 %v963, %v962
      %v969 = vpack.c.b16 %v965, %v964
      %v990 = vunpack.c.l.b16 %v934
      %v991 = vunpack.c.l.b16 %v935
      %v992 = vunpack.c.l.b16 %v936
      %v993 = vunpack.c.l.b16 %v937
      %v994 = vunpack.c.l.b16 %v938
      %v995 = vunpack.c.l.b16 %v939
      %v996 = vunpack.c.l.b16 %v940
      %v997 = vunpack.c.l.b16 %v941
      %v998 = vunpack.c.l.b16 %v942
      %v999 = vunpack.c.l.b16 %v943
      %v1000 = vunpack.c.l.b16 %v944
      %v1001 = vunpack.c.l.b16 %v945
      %v1002 = vunpack.c.l.b16 %v946
      %v1003 = vunpack.c.l.b16 %v947
      %v1004 = vunpack.c.l.b16 %v948
      %v1005 = vunpack.c.l.b16 %v949
      %v1006 = vpack.c.b16 %v991, %v990
      %v1007 = vpack.c.b16 %v993, %v992
      %v1008 = vpack.c.b16 %v995, %v994
      %v1009 = vpack.c.b16 %v997, %v996
      %v1010 = vpack.c.b16 %v999, %v998
      %v1011 = vpack.c.b16 %v1001, %v1000
      %v1012 = vpack.c.b16 %v1003, %v1002
      %v1013 = vpack.c.b16 %v1005, %v1004
      %1022 = vmatprep.subr.bf16.mxu0 0
      %1023 = vmatpush1.bf16.msra.mxu0 %v1006
      %1024 = vmatprep.subr.bf16.mxu0 0
      %1025 = vmatpush1.bf16.msra.mxu0 %v1007
      %1026 = vmatprep.subr.bf16.mxu0 0
      %1027 = vmatpush1.bf16.msra.mxu0 %v1008
      %1028 = vmatprep.subr.bf16.mxu0 0
      %1029 = vmatpush1.bf16.msra.mxu0 %v1009
      %1030 = vmatprep.subr.bf16.mxu0 0
      %1031 = vmatpush1.bf16.msra.mxu0 %v1010
      %1032 = vmatprep.subr.bf16.mxu0 0
      %1033 = vmatpush1.bf16.msra.mxu0 %v1011
      %1034 = vmatprep.subr.bf16.mxu0 0
      %1035 = vmatpush1.bf16.msra.mxu0 %v1012
      %1036 = vmatprep.subr.bf16.mxu0 0
      %1037 = vmatpush1.bf16.msra.mxu0 %v1013
      %1038 = vmatprep.subr.bf16.mxu0 0
      %1039 = vmatpush1.bf16.msra.mxu0 0
      %1040 = vmatprep.subr.bf16.mxu0 0
      %1041 = vmatpush1.bf16.msra.mxu0 0
      %1042 = vmatprep.subr.bf16.mxu0 0
      %1043 = vmatpush1.bf16.msra.mxu0 0
      %1044 = vmatprep.subr.bf16.mxu0 0
      %1045 = vmatpush1.bf16.msra.mxu0 0
      %1046 = vmatprep.subr.bf16.mxu0 0
      %1047 = vmatpush1.bf16.msra.mxu0 0
      %1048 = vmatprep.subr.bf16.mxu0 0
      %1049 = vmatpush1.bf16.msra.mxu0 0
      %1050 = vmatprep.subr.bf16.mxu0 0
      %1051 = vmatpush1.bf16.msra.mxu0 0
      %1052 = vmatprep.subr.bf16.mxu0 0
      %1053 = vmatpush1.bf16.msra.mxu0 0
      %1054 = vmatprep.mubr.bf16.mxu0 0
      %1055 = vmatmul.mubr.bf16.gmra.mrb[0].mxu0 %v966
      %v1056 = vpop.f32.mrb[0].mxu0
      %v1057 = vadd.f32 0.0, %v1056
      %v1058 = vpop.f32.mrb[0].mxu0
      %v1059 = vpop.f32.mrb[0].mxu0
      %v1060 = vadd.f32 0.0, %v1059
      %v1061 = vpop.f32.mrb[0].mxu0
      %1062 = vmatprep.mubr.bf16.mxu0 0
      %1063 = vmatmul.mubr.bf16.gmra.mrb[0].mxu0 %v967
      %v1064 = vpop.f32.mrb[0].mxu0
      %v1065 = vadd.f32 0.0, %v1064
      %v1066 = vpop.f32.mrb[0].mxu0
      %v1067 = vpop.f32.mrb[0].mxu0
      %v1068 = vadd.f32 0.0, %v1067
      %v1069 = vpop.f32.mrb[0].mxu0
      %1070 = vmatprep.mubr.bf16.mxu0 0
      %1071 = vmatmul.mubr.bf16.gmra.mrb[0].mxu0 %v968
      %v1072 = vpop.f32.mrb[0].mxu0
      %v1073 = vadd.f32 0.0, %v1072
      %v1074 = vpop.f32.mrb[0].mxu0
      %v1075 = vpop.f32.mrb[0].mxu0
      %v1076 = vadd.f32 0.0, %v1075
      %v1077 = vpop.f32.mrb[0].mxu0
      %1078 = vmatprep.mubr.bf16.mxu0 0
      %1079 = vmatmul.mubr.bf16.gmra.mrb[0].mxu0 %v969
      %v1080 = vpop.f32.mrb[0].mxu0
      %v1081 = vadd.f32 0.0, %v1080
      %v1082 = vpop.f32.mrb[0].mxu0
      %v1083 = vpop.f32.mrb[0].mxu0
      %v1084 = vadd.f32 0.0, %v1083
      %v1085 = vpop.f32.mrb[0].mxu0
      %1086 = vdwg.mxu0
      %v1087 = vadd.f32 %v916, %v1057
      %v1088 = vadd.f32 %v917, %v1060
      %v1089 = vadd.f32 %v918, %v1065
      %v1090 = vadd.f32 %v919, %v1068
      %v1091 = vadd.f32 %v920, %v1073
      %v1092 = vadd.f32 %v921, %v1076
      %v1093 = vadd.f32 %v922, %v1081
      %v1094 = vadd.f32 %v923, %v1084
      %v1095 = vld [vmem:[%s924] sm:$0xf]
      %v1096 = vld [vmem:[%s924 + $0x4] sm:$0x1]
      %v1097 = vld [vmem:[%s924 + $0x8] sm:$0xf]
      %v1098 = vld [vmem:[%s924 + $0xc] sm:$0x1]
      %v1099 = vld [vmem:[%s924 + $0x10] sm:$0xf]
      %v1100 = vld [vmem:[%s924 + $0x14] sm:$0x1]
      %v1101 = vld [vmem:[%s924 + $0x18] sm:$0xf]
      %v1102 = vld [vmem:[%s924 + $0x1c] sm:$0x1]
      %v1103 = vld [vmem:[%s924 + $0x20] sm:$0xf]
      %v1104 = vld [vmem:[%s924 + $0x24] sm:$0x1]
      %v1105 = vld [vmem:[%s924 + $0x28] sm:$0xf]
      %v1106 = vld [vmem:[%s924 + $0x2c] sm:$0x1]
      %v1107 = vld [vmem:[%s924 + $0x30] sm:$0xf]
      %v1108 = vld [vmem:[%s924 + $0x34] sm:$0x1]
      %v1109 = vld [vmem:[%s924 + $0x38] sm:$0xf]
      %v1110 = vld [vmem:[%s924 + $0x3c] sm:$0x1]
      %v1112 = vshrl.u32 %v1095, 16
      %v1114 = vrot.slane %v1112, 4
      %v1115 = vshll.u32 %v1095, 16
      %v1117 = vrot.slane %v1115, 5
      %v1118 = vor.u32 %v1114, %v1117
      %v1119 = vrot.slane %v1118, 4
      %v1121 = vshll.u32 %v1096, 16
      %v1123 = vrot.slane %v1121, 5
      %v1124 = vsel %vm315, %v1119, %v1123
      %v1126 = vshrl.u32 %v1097, 16
      %v1128 = vrot.slane %v1126, 4
      %v1129 = vshll.u32 %v1097, 16
      %v1131 = vrot.slane %v1129, 5
      %v1132 = vor.u32 %v1128, %v1131
      %v1133 = vrot.slane %v1132, 4
      %v1135 = vshll.u32 %v1098, 16
      %v1137 = vrot.slane %v1135, 5
      %v1138 = vsel %vm315, %v1133, %v1137
      %v1140 = vshrl.u32 %v1099, 16
      %v1142 = vrot.slane %v1140, 4
      %v1143 = vshll.u32 %v1099, 16
      %v1145 = vrot.slane %v1143, 5
      %v1146 = vor.u32 %v1142, %v1145
      %v1147 = vrot.slane %v1146, 4
      %v1149 = vshll.u32 %v1100, 16
      %v1151 = vrot.slane %v1149, 5
      %v1152 = vsel %vm315, %v1147, %v1151
      %v1154 = vshrl.u32 %v1101, 16
      %v1156 = vrot.slane %v1154, 4
      %v1157 = vshll.u32 %v1101, 16
      %v1159 = vrot.slane %v1157, 5
      %v1160 = vor.u32 %v1156, %v1159
      %v1161 = vrot.slane %v1160, 4
      %v1163 = vshll.u32 %v1102, 16
      %v1165 = vrot.slane %v1163, 5
      %v1166 = vsel %vm315, %v1161, %v1165
      %v1168 = vshrl.u32 %v1103, 16
      %v1170 = vrot.slane %v1168, 4
      %v1171 = vshll.u32 %v1103, 16
      %v1173 = vrot.slane %v1171, 5
      %v1174 = vor.u32 %v1170, %v1173
      %v1175 = vrot.slane %v1174, 4
      %v1177 = vshll.u32 %v1104, 16
      %v1179 = vrot.slane %v1177, 5
      %v1180 = vsel %vm315, %v1175, %v1179
      %v1182 = vshrl.u32 %v1105, 16
      %v1184 = vrot.slane %v1182, 4
      %v1185 = vshll.u32 %v1105, 16
      %v1187 = vrot.slane %v1185, 5
      %v1188 = vor.u32 %v1184, %v1187
      %v1189 = vrot.slane %v1188, 4
      %v1191 = vshll.u32 %v1106, 16
      %v1193 = vrot.slane %v1191, 5
      %v1194 = vsel %vm315, %v1189, %v1193
      %v1196 = vshrl.u32 %v1107, 16
      %v1198 = vrot.slane %v1196, 4
      %v1199 = vshll.u32 %v1107, 16
      %v1201 = vrot.slane %v1199, 5
      %v1202 = vor.u32 %v1198, %v1201
      %v1203 = vrot.slane %v1202, 4
      %v1205 = vshll.u32 %v1108, 16
      %v1207 = vrot.slane %v1205, 5
      %v1208 = vsel %vm315, %v1203, %v1207
      %v1210 = vshrl.u32 %v1109, 16
      %v1212 = vrot.slane %v1210, 4
      %v1213 = vshll.u32 %v1109, 16
      %v1215 = vrot.slane %v1213, 5
      %v1216 = vor.u32 %v1212, %v1215
      %v1217 = vrot.slane %v1216, 4
      %v1219 = vshll.u32 %v1110, 16
      %v1221 = vrot.slane %v1219, 5
      %v1222 = vsel %vm315, %v1217, %v1221
      %s1223 = scalar_lea.vmem %s260, 256
      %v1224 = vld [vmem:[%s1223] sm:$0xf]
      %v1225 = vld [vmem:[%s1223 + $0x4] sm:$0xf]
      %v1226 = vld [vmem:[%s1223 + $0x8] sm:$0xf]
      %v1227 = vld [vmem:[%s1223 + $0xc] sm:$0xf]
      %v1228 = vld [vmem:[%s1223 + $0x10] sm:$0xf]
      %v1229 = vld [vmem:[%s1223 + $0x14] sm:$0xf]
      %v1230 = vld [vmem:[%s1223 + $0x18] sm:$0xf]
      %v1231 = vld [vmem:[%s1223 + $0x1c] sm:$0xf]
      %v1232 = vld [vmem:[%s1223 + $0x20] sm:$0xf]
      %v1233 = vld [vmem:[%s1223 + $0x24] sm:$0xf]
      %v1234 = vld [vmem:[%s1223 + $0x28] sm:$0xf]
      %v1235 = vld [vmem:[%s1223 + $0x2c] sm:$0xf]
      %v1236 = vld [vmem:[%s1223 + $0x30] sm:$0xf]
      %v1237 = vld [vmem:[%s1223 + $0x34] sm:$0xf]
      %v1238 = vld [vmem:[%s1223 + $0x38] sm:$0xf]
      %v1239 = vld [vmem:[%s1223 + $0x3c] sm:$0xf]
      %v1240 = vunpack.c.l.b16 %v1124
      %v1241 = vunpack.c.l.b16 %v1138
      %v1242 = vunpack.c.l.b16 %v1152
      %v1243 = vunpack.c.l.b16 %v1166
      %v1244 = vunpack.c.l.b16 %v1180
      %v1245 = vunpack.c.l.b16 %v1194
      %v1246 = vunpack.c.l.b16 %v1208
      %v1247 = vunpack.c.l.b16 %v1222
      %v1248 = vpack.c.b16 %v1241, %v1240
      %v1249 = vpack.c.b16 %v1243, %v1242
      %v1250 = vpack.c.b16 %v1245, %v1244
      %v1251 = vpack.c.b16 %v1247, %v1246
      %v1272 = vunpack.c.l.b16 %v1224
      %v1273 = vunpack.c.l.b16 %v1225
      %v1274 = vunpack.c.l.b16 %v1226
      %v1275 = vunpack.c.l.b16 %v1227
      %v1276 = vunpack.c.l.b16 %v1228
      %v1277 = vunpack.c.l.b16 %v1229
      %v1278 = vunpack.c.l.b16 %v1230
      %v1279 = vunpack.c.l.b16 %v1231
      %v1280 = vunpack.c.l.b16 %v1232
      %v1281 = vunpack.c.l.b16 %v1233
      %v1282 = vunpack.c.l.b16 %v1234
      %v1283 = vunpack.c.l.b16 %v1235
      %v1284 = vunpack.c.l.b16 %v1236
      %v1285 = vunpack.c.l.b16 %v1237
      %v1286 = vunpack.c.l.b16 %v1238
      %v1287 = vunpack.c.l.b16 %v1239
      %v1288 = vpack.c.b16 %v1273, %v1272
      %v1289 = vpack.c.b16 %v1275, %v1274
      %v1290 = vpack.c.b16 %v1277, %v1276
      %v1291 = vpack.c.b16 %v1279, %v1278
      %v1292 = vpack.c.b16 %v1281, %v1280
      %v1293 = vpack.c.b16 %v1283, %v1282
      %v1294 = vpack.c.b16 %v1285, %v1284
      %v1295 = vpack.c.b16 %v1287, %v1286
      %1304 = vmatprep.subr.bf16.mxu0 0
      %1305 = vmatpush1.bf16.msra.mxu0 %v1288
      %1306 = vmatprep.subr.bf16.mxu0 0
      %1307 = vmatpush1.bf16.msra.mxu0 %v1289
      %1308 = vmatprep.subr.bf16.mxu0 0
      %1309 = vmatpush1.bf16.msra.mxu0 %v1290
      %1310 = vmatprep.subr.bf16.mxu0 0
      %1311 = vmatpush1.bf16.msra.mxu0 %v1291
      %1312 = vmatprep.subr.bf16.mxu0 0
      %1313 = vmatpush1.bf16.msra.mxu0 %v1292
      %1314 = vmatprep.subr.bf16.mxu0 0
      %1315 = vmatpush1.bf16.msra.mxu0 %v1293
      %1316 = vmatprep.subr.bf16.mxu0 0
      %1317 = vmatpush1.bf16.msra.mxu0 %v1294
      %1318 = vmatprep.subr.bf16.mxu0 0
      %1319 = vmatpush1.bf16.msra.mxu0 %v1295
      %1320 = vmatprep.subr.bf16.mxu0 0
      %1321 = vmatpush1.bf16.msra.mxu0 0
      %1322 = vmatprep.subr.bf16.mxu0 0
      %1323 = vmatpush1.bf16.msra.mxu0 0
      %1324 = vmatprep.subr.bf16.mxu0 0
      %1325 = vmatpush1.bf16.msra.mxu0 0
      %1326 = vmatprep.subr.bf16.mxu0 0
      %1327 = vmatpush1.bf16.msra.mxu0 0
      %1328 = vmatprep.subr.bf16.mxu0 0
      %1329 = vmatpush1.bf16.msra.mxu0 0
      %1330 = vmatprep.subr.bf16.mxu0 0
      %1331 = vmatpush1.bf16.msra.mxu0 0
      %1332 = vmatprep.subr.bf16.mxu0 0
      %1333 = vmatpush1.bf16.msra.mxu0 0
      %1334 = vmatprep.subr.bf16.mxu0 0
      %1335 = vmatpush1.bf16.msra.mxu0 0
      %1336 = vmatprep.mubr.bf16.mxu0 0
      %1337 = vmatmul.mubr.bf16.gmra.mrb[0].mxu0 %v1248
      %v1338 = vpop.f32.mrb[0].mxu0
      %v1339 = vadd.f32 0.0, %v1338
      %v1340 = vpop.f32.mrb[0].mxu0
      %v1341 = vpop.f32.mrb[0].mxu0
      %v1342 = vadd.f32 0.0, %v1341
      %v1343 = vpop.f32.mrb[0].mxu0
      %1344 = vmatprep.mubr.bf16.mxu0 0
      %1345 = vmatmul.mubr.bf16.gmra.mrb[0].mxu0 %v1249
      %v1346 = vpop.f32.mrb[0].mxu0
      %v1347 = vadd.f32 0.0, %v1346
      %v1348 = vpop.f32.mrb[0].mxu0
      %v1349 = vpop.f32.mrb[0].mxu0
      %v1350 = vadd.f32 0.0, %v1349
      %v1351 = vpop.f32.mrb[0].mxu0
      %1352 = vmatprep.mubr.bf16.mxu0 0
      %1353 = vmatmul.mubr.bf16.gmra.mrb[0].mxu0 %v1250
      %v1354 = vpop.f32.mrb[0].mxu0
      %v1355 = vadd.f32 0.0, %v1354
      %v1356 = vpop.f32.mrb[0].mxu0
      %v1357 = vpop.f32.mrb[0].mxu0
      %v1358 = vadd.f32 0.0, %v1357
      %v1359 = vpop.f32.mrb[0].mxu0
      %1360 = vmatprep.mubr.bf16.mxu0 0
      %1361 = vmatmul.mubr.bf16.gmra.mrb[0].mxu0 %v1251
      %v1362 = vpop.f32.mrb[0].mxu0
      %v1363 = vadd.f32 0.0, %v1362
      %v1364 = vpop.f32.mrb[0].mxu0
      %v1365 = vpop.f32.mrb[0].mxu0
      %v1366 = vadd.f32 0.0, %v1365
      %v1367 = vpop.f32.mrb[0].mxu0
      %1368 = vdwg.mxu0
      %v1369 = vadd.f32 %v1087, %v1339
      %v1370 = vadd.f32 %v1088, %v1342
      %v1371 = vadd.f32 %v1089, %v1347
      %v1372 = vadd.f32 %v1090, %v1350
      %v1373 = vadd.f32 %v1091, %v1355
      %v1374 = vadd.f32 %v1092, %v1358
      %v1375 = vadd.f32 %v1093, %v1363
      %v1376 = vadd.f32 %v1094, %v1366
      %v1377 = vld [vmem:[%s924] sm:$0xe]
      %v1378 = vld [vmem:[%s924 + $0x8] sm:$0xe]
      %v1379 = vld [vmem:[%s924 + $0x10] sm:$0xe]
      %v1380 = vld [vmem:[%s924 + $0x18] sm:$0xe]
      %v1381 = vld [vmem:[%s924 + $0x20] sm:$0xe]
      %v1382 = vld [vmem:[%s924 + $0x28] sm:$0xe]
      %v1383 = vld [vmem:[%s924 + $0x30] sm:$0xe]
      %v1384 = vld [vmem:[%s924 + $0x38] sm:$0xe]
      %v1401 = vrot.slane %v1377, 5
      %v1402 = vrot.slane %v1401, 4
      %v1403 = vrot.slane %v1096, 5
      %v1404 = vsel %vm737, %v1402, %v1403
      %v1405 = vrot.slane %v1378, 5
      %v1406 = vrot.slane %v1405, 4
      %v1407 = vrot.slane %v1098, 5
      %v1408 = vsel %vm737, %v1406, %v1407
      %v1409 = vrot.slane %v1379, 5
      %v1410 = vrot.slane %v1409, 4
      %v1411 = vrot.slane %v1100, 5
      %v1412 = vsel %vm737, %v1410, %v1411
      %v1413 = vrot.slane %v1380, 5
      %v1414 = vrot.slane %v1413, 4
      %v1415 = vrot.slane %v1102, 5
      %v1416 = vsel %vm737, %v1414, %v1415
      %v1417 = vrot.slane %v1381, 5
      %v1418 = vrot.slane %v1417, 4
      %v1419 = vrot.slane %v1104, 5
      %v1420 = vsel %vm737, %v1418, %v1419
      %v1421 = vrot.slane %v1382, 5
      %v1422 = vrot.slane %v1421, 4
      %v1423 = vrot.slane %v1106, 5
      %v1424 = vsel %vm737, %v1422, %v1423
      %v1425 = vrot.slane %v1383, 5
      %v1426 = vrot.slane %v1425, 4
      %v1427 = vrot.slane %v1108, 5
      %v1428 = vsel %vm737, %v1426, %v1427
      %v1429 = vrot.slane %v1384, 5
      %v1430 = vrot.slane %v1429, 4
      %v1431 = vrot.slane %v1110, 5
      %v1432 = vsel %vm737, %v1430, %v1431
      %s1433 = scalar_lea.vmem %s260, 320
      %v1434 = vld [vmem:[%s1433] sm:$0xf]
      %v1435 = vld [vmem:[%s1433 + $0x4] sm:$0xf]
      %v1436 = vld [vmem:[%s1433 + $0x8] sm:$0xf]
      %v1437 = vld [vmem:[%s1433 + $0xc] sm:$0xf]
      %v1438 = vld [vmem:[%s1433 + $0x10] sm:$0xf]
      %v1439 = vld [vmem:[%s1433 + $0x14] sm:$0xf]
      %v1440 = vld [vmem:[%s1433 + $0x18] sm:$0xf]
      %v1441 = vld [vmem:[%s1433 + $0x1c] sm:$0xf]
      %v1442 = vld [vmem:[%s1433 + $0x20] sm:$0xf]
      %v1443 = vld [vmem:[%s1433 + $0x24] sm:$0xf]
      %v1444 = vld [vmem:[%s1433 + $0x28] sm:$0xf]
      %v1445 = vld [vmem:[%s1433 + $0x2c] sm:$0xf]
      %v1446 = vld [vmem:[%s1433 + $0x30] sm:$0xf]
      %v1447 = vld [vmem:[%s1433 + $0x34] sm:$0xf]
      %v1448 = vld [vmem:[%s1433 + $0x38] sm:$0xf]
      %v1449 = vld [vmem:[%s1433 + $0x3c] sm:$0xf]
      %v1450 = vunpack.c.l.b16 %v1404
      %v1451 = vunpack.c.l.b16 %v1408
      %v1452 = vunpack.c.l.b16 %v1412
      %v1453 = vunpack.c.l.b16 %v1416
      %v1454 = vunpack.c.l.b16 %v1420
      %v1455 = vunpack.c.l.b16 %v1424
      %v1456 = vunpack.c.l.b16 %v1428
      %v1457 = vunpack.c.l.b16 %v1432
      %v1458 = vpack.c.b16 %v1451, %v1450
      %v1459 = vpack.c.b16 %v1453, %v1452
      %v1460 = vpack.c.b16 %v1455, %v1454
      %v1461 = vpack.c.b16 %v1457, %v1456
      %v1482 = vunpack.c.l.b16 %v1434
      %v1483 = vunpack.c.l.b16 %v1435
      %v1484 = vunpack.c.l.b16 %v1436
      %v1485 = vunpack.c.l.b16 %v1437
      %v1486 = vunpack.c.l.b16 %v1438
      %v1487 = vunpack.c.l.b16 %v1439
      %v1488 = vunpack.c.l.b16 %v1440
      %v1489 = vunpack.c.l.b16 %v1441
      %v1490 = vunpack.c.l.b16 %v1442
      %v1491 = vunpack.c.l.b16 %v1443
      %v1492 = vunpack.c.l.b16 %v1444
      %v1493 = vunpack.c.l.b16 %v1445
      %v1494 = vunpack.c.l.b16 %v1446
      %v1495 = vunpack.c.l.b16 %v1447
      %v1496 = vunpack.c.l.b16 %v1448
      %v1497 = vunpack.c.l.b16 %v1449
      %v1498 = vpack.c.b16 %v1483, %v1482
      %v1499 = vpack.c.b16 %v1485, %v1484
      %v1500 = vpack.c.b16 %v1487, %v1486
      %v1501 = vpack.c.b16 %v1489, %v1488
      %v1502 = vpack.c.b16 %v1491, %v1490
      %v1503 = vpack.c.b16 %v1493, %v1492
      %v1504 = vpack.c.b16 %v1495, %v1494
      %v1505 = vpack.c.b16 %v1497, %v1496
      %1514 = vmatprep.subr.bf16.mxu0 0
      %1515 = vmatpush1.bf16.msra.mxu0 %v1498
      %1516 = vmatprep.subr.bf16.mxu0 0
      %1517 = vmatpush1.bf16.msra.mxu0 %v1499
      %1518 = vmatprep.subr.bf16.mxu0 0
      %1519 = vmatpush1.bf16.msra.mxu0 %v1500
      %1520 = vmatprep.subr.bf16.mxu0 0
      %1521 = vmatpush1.bf16.msra.mxu0 %v1501
      %1522 = vmatprep.subr.bf16.mxu0 0
      %1523 = vmatpush1.bf16.msra.mxu0 %v1502
      %1524 = vmatprep.subr.bf16.mxu0 0
      %1525 = vmatpush1.bf16.msra.mxu0 %v1503
      %1526 = vmatprep.subr.bf16.mxu0 0
      %1527 = vmatpush1.bf16.msra.mxu0 %v1504
      %1528 = vmatprep.subr.bf16.mxu0 0
      %1529 = vmatpush1.bf16.msra.mxu0 %v1505
      %1530 = vmatprep.subr.bf16.mxu0 0
      %1531 = vmatpush1.bf16.msra.mxu0 0
      %1532 = vmatprep.subr.bf16.mxu0 0
      %1533 = vmatpush1.bf16.msra.mxu0 0
      %1534 = vmatprep.subr.bf16.mxu0 0
      %1535 = vmatpush1.bf16.msra.mxu0 0
      %1536 = vmatprep.subr.bf16.mxu0 0
      %1537 = vmatpush1.bf16.msra.mxu0 0
      %1538 = vmatprep.subr.bf16.mxu0 0
      %1539 = vmatpush1.bf16.msra.mxu0 0
      %1540 = vmatprep.subr.bf16.mxu0 0
      %1541 = vmatpush1.bf16.msra.mxu0 0
      %1542 = vmatprep.subr.bf16.mxu0 0
      %1543 = vmatpush1.bf16.msra.mxu0 0
      %1544 = vmatprep.subr.bf16.mxu0 0
      %1545 = vmatpush1.bf16.msra.mxu0 0
      %1546 = vmatprep.mubr.bf16.mxu0 0
      %1547 = vmatmul.mubr.bf16.gmra.mrb[0].mxu0 %v1458
      %v1548 = vpop.f32.mrb[0].mxu0
      %v1549 = vadd.f32 0.0, %v1548
      %v1550 = vpop.f32.mrb[0].mxu0
      %v1551 = vpop.f32.mrb[0].mxu0
      %v1552 = vadd.f32 0.0, %v1551
      %v1553 = vpop.f32.mrb[0].mxu0
      %1554 = vmatprep.mubr.bf16.mxu0 0
      %1555 = vmatmul.mubr.bf16.gmra.mrb[0].mxu0 %v1459
      %v1556 = vpop.f32.mrb[0].mxu0
      %v1557 = vadd.f32 0.0, %v1556
      %v1558 = vpop.f32.mrb[0].mxu0
      %v1559 = vpop.f32.mrb[0].mxu0
      %v1560 = vadd.f32 0.0, %v1559
      %v1561 = vpop.f32.mrb[0].mxu0
      %1562 = vmatprep.mubr.bf16.mxu0 0
      %1563 = vmatmul.mubr.bf16.gmra.mrb[0].mxu0 %v1460
      %v1564 = vpop.f32.mrb[0].mxu0
      %v1565 = vadd.f32 0.0, %v1564
      %v1566 = vpop.f32.mrb[0].mxu0
      %v1567 = vpop.f32.mrb[0].mxu0
      %v1568 = vadd.f32 0.0, %v1567
      %v1569 = vpop.f32.mrb[0].mxu0
      %1570 = vmatprep.mubr.bf16.mxu0 0
      %1571 = vmatmul.mubr.bf16.gmra.mrb[0].mxu0 %v1461
      %v1572 = vpop.f32.mrb[0].mxu0
      %v1573 = vadd.f32 0.0, %v1572
      %v1574 = vpop.f32.mrb[0].mxu0
      %v1575 = vpop.f32.mrb[0].mxu0
      %v1576 = vadd.f32 0.0, %v1575
      %v1577 = vpop.f32.mrb[0].mxu0
      %1578 = vdwg.mxu0
      %v1579 = vadd.f32 %v1369, %v1549
      %v1580 = vadd.f32 %v1370, %v1552
      %v1581 = vadd.f32 %v1371, %v1557
      %v1582 = vadd.f32 %v1372, %v1560
      %v1583 = vadd.f32 %v1373, %v1565
      %v1584 = vadd.f32 %v1374, %v1568
      %v1585 = vadd.f32 %v1375, %v1573
      %v1586 = vadd.f32 %v1376, %v1576
      %s1587 = scalar_lea.vmem %s256, 16
      %v1588 = vld [vmem:[%s1587] sm:$0xf]
      %v1589 = vld [vmem:[%s1587 + $0x8] sm:$0xf]
      %v1590 = vld [vmem:[%s1587 + $0x10] sm:$0xf]
      %v1591 = vld [vmem:[%s1587 + $0x18] sm:$0xf]
      %v1592 = vld [vmem:[%s1587 + $0x20] sm:$0xf]
      %v1593 = vld [vmem:[%s1587 + $0x28] sm:$0xf]
      %v1594 = vld [vmem:[%s1587 + $0x30] sm:$0xf]
      %v1595 = vld [vmem:[%s1587 + $0x38] sm:$0xf]
      %s1596 = scalar_lea.vmem %s260, 384
      %v1597 = vld [vmem:[%s1596] sm:$0xf]
      %v1598 = vld [vmem:[%s1596 + $0x4] sm:$0xf]
      %v1599 = vld [vmem:[%s1596 + $0x8] sm:$0xf]
      %v1600 = vld [vmem:[%s1596 + $0xc] sm:$0xf]
      %v1601 = vld [vmem:[%s1596 + $0x10] sm:$0xf]
      %v1602 = vld [vmem:[%s1596 + $0x14] sm:$0xf]
      %v1603 = vld [vmem:[%s1596 + $0x18] sm:$0xf]
      %v1604 = vld [vmem:[%s1596 + $0x1c] sm:$0xf]
      %v1605 = vld [vmem:[%s1596 + $0x20] sm:$0xf]
      %v1606 = vld [vmem:[%s1596 + $0x24] sm:$0xf]
      %v1607 = vld [vmem:[%s1596 + $0x28] sm:$0xf]
      %v1608 = vld [vmem:[%s1596 + $0x2c] sm:$0xf]
      %v1609 = vld [vmem:[%s1596 + $0x30] sm:$0xf]
      %v1610 = vld [vmem:[%s1596 + $0x34] sm:$0xf]
      %v1611 = vld [vmem:[%s1596 + $0x38] sm:$0xf]
      %v1612 = vld [vmem:[%s1596 + $0x3c] sm:$0xf]
      %v1621 = vunpack.c.l.b16 %v1588
      %v1622 = vunpack.c.l.b16 %v1589
      %v1623 = vunpack.c.l.b16 %v1590
      %v1624 = vunpack.c.l.b16 %v1591
      %v1625 = vunpack.c.l.b16 %v1592
      %v1626 = vunpack.c.l.b16 %v1593
      %v1627 = vunpack.c.l.b16 %v1594
      %v1628 = vunpack.c.l.b16 %v1595
      %v1629 = vpack.c.b16 %v1622, %v1621
      %v1630 = vpack.c.b16 %v1624, %v1623
      %v1631 = vpack.c.b16 %v1626, %v1625
      %v1632 = vpack.c.b16 %v1628, %v1627
      %v1653 = vunpack.c.l.b16 %v1597
      %v1654 = vunpack.c.l.b16 %v1598
      %v1655 = vunpack.c.l.b16 %v1599
      %v1656 = vunpack.c.l.b16 %v1600
      %v1657 = vunpack.c.l.b16 %v1601
      %v1658 = vunpack.c.l.b16 %v1602
      %v1659 = vunpack.c.l.b16 %v1603
      %v1660 = vunpack.c.l.b16 %v1604
      %v1661 = vunpack.c.l.b16 %v1605
      %v1662 = vunpack.c.l.b16 %v1606
      %v1663 = vunpack.c.l.b16 %v1607
      %v1664 = vunpack.c.l.b16 %v1608
      %v1665 = vunpack.c.l.b16 %v1609
      %v1666 = vunpack.c.l.b16 %v1610
      %v1667 = vunpack.c.l.b16 %v1611
      %v1668 = vunpack.c.l.b16 %v1612
      %v1669 = vpack.c.b16 %v1654, %v1653
      %v1670 = vpack.c.b16 %v1656, %v1655
      %v1671 = vpack.c.b16 %v1658, %v1657
      %v1672 = vpack.c.b16 %v1660, %v1659
      %v1673 = vpack.c.b16 %v1662, %v1661
      %v1674 = vpack.c.b16 %v1664, %v1663
      %v1675 = vpack.c.b16 %v1666, %v1665
      %v1676 = vpack.c.b16 %v1668, %v1667
      %1685 = vmatprep.subr.bf16.mxu0 0
      %1686 = vmatpush1.bf16.msra.mxu0 %v1669
      %1687 = vmatprep.subr.bf16.mxu0 0
      %1688 = vmatpush1.bf16.msra.mxu0 %v1670
      %1689 = vmatprep.subr.bf16.mxu0 0
      %1690 = vmatpush1.bf16.msra.mxu0 %v1671
      %1691 = vmatprep.subr.bf16.mxu0 0
      %1692 = vmatpush1.bf16.msra.mxu0 %v1672
      %1693 = vmatprep.subr.bf16.mxu0 0
      %1694 = vmatpush1.bf16.msra.mxu0 %v1673
      %1695 = vmatprep.subr.bf16.mxu0 0
      %1696 = vmatpush1.bf16.msra.mxu0 %v1674
      %1697 = vmatprep.subr.bf16.mxu0 0
      %1698 = vmatpush1.bf16.msra.mxu0 %v1675
      %1699 = vmatprep.subr.bf16.mxu0 0
      %1700 = vmatpush1.bf16.msra.mxu0 %v1676
      %1701 = vmatprep.subr.bf16.mxu0 0
      %1702 = vmatpush1.bf16.msra.mxu0 0
      %1703 = vmatprep.subr.bf16.mxu0 0
      %1704 = vmatpush1.bf16.msra.mxu0 0
      %1705 = vmatprep.subr.bf16.mxu0 0
      %1706 = vmatpush1.bf16.msra.mxu0 0
      %1707 = vmatprep.subr.bf16.mxu0 0
      %1708 = vmatpush1.bf16.msra.mxu0 0
      %1709 = vmatprep.subr.bf16.mxu0 0
      %1710 = vmatpush1.bf16.msra.mxu0 0
      %1711 = vmatprep.subr.bf16.mxu0 0
      %1712 = vmatpush1.bf16.msra.mxu0 0
      %1713 = vmatprep.subr.bf16.mxu0 0
      %1714 = vmatpush1.bf16.msra.mxu0 0
      %1715 = vmatprep.subr.bf16.mxu0 0
      %1716 = vmatpush1.bf16.msra.mxu0 0
      %1717 = vmatprep.mubr.bf16.mxu0 0
      %1718 = vmatmul.mubr.bf16.gmra.mrb[0].mxu0 %v1629
      %v1719 = vpop.f32.mrb[0].mxu0
      %v1720 = vadd.f32 0.0, %v1719
      %v1721 = vpop.f32.mrb[0].mxu0
      %v1722 = vpop.f32.mrb[0].mxu0
      %v1723 = vadd.f32 0.0, %v1722
      %v1724 = vpop.f32.mrb[0].mxu0
      %1725 = vmatprep.mubr.bf16.mxu0 0
      %1726 = vmatmul.mubr.bf16.gmra.mrb[0].mxu0 %v1630
      %v1727 = vpop.f32.mrb[0].mxu0
      %v1728 = vadd.f32 0.0, %v1727
      %v1729 = vpop.f32.mrb[0].mxu0
      %v1730 = vpop.f32.mrb[0].mxu0
      %v1731 = vadd.f32 0.0, %v1730
      %v1732 = vpop.f32.mrb[0].mxu0
      %1733 = vmatprep.mubr.bf16.mxu0 0
      %1734 = vmatmul.mubr.bf16.gmra.mrb[0].mxu0 %v1631
      %v1735 = vpop.f32.mrb[0].mxu0
      %v1736 = vadd.f32 0.0, %v1735
      %v1737 = vpop.f32.mrb[0].mxu0
      %v1738 = vpop.f32.mrb[0].mxu0
      %v1739 = vadd.f32 0.0, %v1738
      %v1740 = vpop.f32.mrb[0].mxu0
      %1741 = vmatprep.mubr.bf16.mxu0 0
      %1742 = vmatmul.mubr.bf16.gmra.mrb[0].mxu0 %v1632
      %v1743 = vpop.f32.mrb[0].mxu0
      %v1744 = vadd.f32 0.0, %v1743
      %v1745 = vpop.f32.mrb[0].mxu0
      %v1746 = vpop.f32.mrb[0].mxu0
      %v1747 = vadd.f32 0.0, %v1746
      %v1748 = vpop.f32.mrb[0].mxu0
      %1749 = vdwg.mxu0
      %v1750 = vadd.f32 %v1579, %v1720
      %v1751 = vadd.f32 %v1580, %v1723
      %v1752 = vadd.f32 %v1581, %v1728
      %v1753 = vadd.f32 %v1582, %v1731
      %v1754 = vadd.f32 %v1583, %v1736
      %v1755 = vadd.f32 %v1584, %v1739
      %v1756 = vadd.f32 %v1585, %v1744
      %v1757 = vadd.f32 %v1586, %v1747
      %v1758 = vld [vmem:[%s1587] sm:$0xf]
      %v1759 = vld [vmem:[%s1587 + $0x4] sm:$0x1]
      %v1760 = vld [vmem:[%s1587 + $0x8] sm:$0xf]
      %v1761 = vld [vmem:[%s1587 + $0xc] sm:$0x1]
      %v1762 = vld [vmem:[%s1587 + $0x10] sm:$0xf]
      %v1763 = vld [vmem:[%s1587 + $0x14] sm:$0x1]
      %v1764 = vld [vmem:[%s1587 + $0x18] sm:$0xf]
      %v1765 = vld [vmem:[%s1587 + $0x1c] sm:$0x1]
      %v1766 = vld [vmem:[%s1587 + $0x20] sm:$0xf]
      %v1767 = vld [vmem:[%s1587 + $0x24] sm:$0x1]
      %v1768 = vld [vmem:[%s1587 + $0x28] sm:$0xf]
      %v1769 = vld [vmem:[%s1587 + $0x2c] sm:$0x1]
      %v1770 = vld [vmem:[%s1587 + $0x30] sm:$0xf]
      %v1771 = vld [vmem:[%s1587 + $0x34] sm:$0x1]
      %v1772 = vld [vmem:[%s1587 + $0x38] sm:$0xf]
      %v1773 = vld [vmem:[%s1587 + $0x3c] sm:$0x1]
      %v1775 = vshrl.u32 %v1758, 16
      %v1777 = vrot.slane %v1775, 4
      %v1778 = vshll.u32 %v1758, 16
      %v1780 = vrot.slane %v1778, 5
      %v1781 = vor.u32 %v1777, %v1780
      %v1782 = vrot.slane %v1781, 4
      %v1784 = vshll.u32 %v1759, 16
      %v1786 = vrot.slane %v1784, 5
      %v1787 = vsel %vm315, %v1782, %v1786
      %v1789 = vshrl.u32 %v1760, 16
      %v1791 = vrot.slane %v1789, 4
      %v1792 = vshll.u32 %v1760, 16
      %v1794 = vrot.slane %v1792, 5
      %v1795 = vor.u32 %v1791, %v1794
      %v1796 = vrot.slane %v1795, 4
      %v1798 = vshll.u32 %v1761, 16
      %v1800 = vrot.slane %v1798, 5
      %v1801 = vsel %vm315, %v1796, %v1800
      %v1803 = vshrl.u32 %v1762, 16
      %v1805 = vrot.slane %v1803, 4
      %v1806 = vshll.u32 %v1762, 16
      %v1808 = vrot.slane %v1806, 5
      %v1809 = vor.u32 %v1805, %v1808
      %v1810 = vrot.slane %v1809, 4
      %v1812 = vshll.u32 %v1763, 16
      %v1814 = vrot.slane %v1812, 5
      %v1815 = vsel %vm315, %v1810, %v1814
      %v1817 = vshrl.u32 %v1764, 16
      %v1819 = vrot.slane %v1817, 4
      %v1820 = vshll.u32 %v1764, 16
      %v1822 = vrot.slane %v1820, 5
      %v1823 = vor.u32 %v1819, %v1822
      %v1824 = vrot.slane %v1823, 4
      %v1826 = vshll.u32 %v1765, 16
      %v1828 = vrot.slane %v1826, 5
      %v1829 = vsel %vm315, %v1824, %v1828
      %v1831 = vshrl.u32 %v1766, 16
      %v1833 = vrot.slane %v1831, 4
      %v1834 = vshll.u32 %v1766, 16
      %v1836 = vrot.slane %v1834, 5
      %v1837 = vor.u32 %v1833, %v1836
      %v1838 = vrot.slane %v1837, 4
      %v1840 = vshll.u32 %v1767, 16
      %v1842 = vrot.slane %v1840, 5
      %v1843 = vsel %vm315, %v1838, %v1842
      %v1845 = vshrl.u32 %v1768, 16
      %v1847 = vrot.slane %v1845, 4
      %v1848 = vshll.u32 %v1768, 16
      %v1850 = vrot.slane %v1848, 5
      %v1851 = vor.u32 %v1847, %v1850
      %v1852 = vrot.slane %v1851, 4
      %v1854 = vshll.u32 %v1769, 16
      %v1856 = vrot.slane %v1854, 5
      %v1857 = vsel %vm315, %v1852, %v1856
      %v1859 = vshrl.u32 %v1770, 16
      %v1861 = vrot.slane %v1859, 4
      %v1862 = vshll.u32 %v1770, 16
      %v1864 = vrot.slane %v1862, 5
      %v1865 = vor.u32 %v1861, %v1864
      %v1866 = vrot.slane %v1865, 4
      %v1868 = vshll.u32 %v1771, 16
      %v1870 = vrot.slane %v1868, 5
      %v1871 = vsel %vm315, %v1866, %v1870
      %v1873 = vshrl.u32 %v1772, 16
      %v1875 = vrot.slane %v1873, 4
      %v1876 = vshll.u32 %v1772, 16
      %v1878 = vrot.slane %v1876, 5
      %v1879 = vor.u32 %v1875, %v1878
      %v1880 = vrot.slane %v1879, 4
      %v1882 = vshll.u32 %v1773, 16
      %v1884 = vrot.slane %v1882, 5
      %v1885 = vsel %vm315, %v1880, %v1884
      %s1886 = scalar_lea.vmem %s260, 448
      %v1887 = vld [vmem:[%s1886] sm:$0xf]
      %v1888 = vld [vmem:[%s1886 + $0x4] sm:$0xf]
      %v1889 = vld [vmem:[%s1886 + $0x8] sm:$0xf]
      %v1890 = vld [vmem:[%s1886 + $0xc] sm:$0xf]
      %v1891 = vld [vmem:[%s1886 + $0x10] sm:$0xf]
      %v1892 = vld [vmem:[%s1886 + $0x14] sm:$0xf]
      %v1893 = vld [vmem:[%s1886 + $0x18] sm:$0xf]
      %v1894 = vld [vmem:[%s1886 + $0x1c] sm:$0xf]
      %v1895 = vld [vmem:[%s1886 + $0x20] sm:$0xf]
      %v1896 = vld [vmem:[%s1886 + $0x24] sm:$0xf]
      %v1897 = vld [vmem:[%s1886 + $0x28] sm:$0xf]
      %v1898 = vld [vmem:[%s1886 + $0x2c] sm:$0xf]
      %v1899 = vld [vmem:[%s1886 + $0x30] sm:$0xf]
      %v1900 = vld [vmem:[%s1886 + $0x34] sm:$0xf]
      %v1901 = vld [vmem:[%s1886 + $0x38] sm:$0xf]
      %v1902 = vld [vmem:[%s1886 + $0x3c] sm:$0xf]
      %v1903 = vunpack.c.l.b16 %v1787
      %v1904 = vunpack.c.l.b16 %v1801
      %v1905 = vunpack.c.l.b16 %v1815
      %v1906 = vunpack.c.l.b16 %v1829
      %v1907 = vunpack.c.l.b16 %v1843
      %v1908 = vunpack.c.l.b16 %v1857
      %v1909 = vunpack.c.l.b16 %v1871
      %v1910 = vunpack.c.l.b16 %v1885
      %v1911 = vpack.c.b16 %v1904, %v1903
      %v1912 = vpack.c.b16 %v1906, %v1905
      %v1913 = vpack.c.b16 %v1908, %v1907
      %v1914 = vpack.c.b16 %v1910, %v1909
      %v1935 = vunpack.c.l.b16 %v1887
      %v1936 = vunpack.c.l.b16 %v1888
      %v1937 = vunpack.c.l.b16 %v1889
      %v1938 = vunpack.c.l.b16 %v1890
      %v1939 = vunpack.c.l.b16 %v1891
      %v1940 = vunpack.c.l.b16 %v1892
      %v1941 = vunpack.c.l.b16 %v1893
      %v1942 = vunpack.c.l.b16 %v1894
      %v1943 = vunpack.c.l.b16 %v1895
      %v1944 = vunpack.c.l.b16 %v1896
      %v1945 = vunpack.c.l.b16 %v1897
      %v1946 = vunpack.c.l.b16 %v1898
      %v1947 = vunpack.c.l.b16 %v1899
      %v1948 = vunpack.c.l.b16 %v1900
      %v1949 = vunpack.c.l.b16 %v1901
      %v1950 = vunpack.c.l.b16 %v1902
      %v1951 = vpack.c.b16 %v1936, %v1935
      %v1952 = vpack.c.b16 %v1938, %v1937
      %v1953 = vpack.c.b16 %v1940, %v1939
      %v1954 = vpack.c.b16 %v1942, %v1941
      %v1955 = vpack.c.b16 %v1944, %v1943
      %v1956 = vpack.c.b16 %v1946, %v1945
      %v1957 = vpack.c.b16 %v1948, %v1947
      %v1958 = vpack.c.b16 %v1950, %v1949
      %1967 = vmatprep.subr.bf16.mxu0 0
      %1968 = vmatpush1.bf16.msra.mxu0 %v1951
      %1969 = vmatprep.subr.bf16.mxu0 0
      %1970 = vmatpush1.bf16.msra.mxu0 %v1952
      %1971 = vmatprep.subr.bf16.mxu0 0
      %1972 = vmatpush1.bf16.msra.mxu0 %v1953
      %1973 = vmatprep.subr.bf16.mxu0 0
      %1974 = vmatpush1.bf16.msra.mxu0 %v1954
      %1975 = vmatprep.subr.bf16.mxu0 0
      %1976 = vmatpush1.bf16.msra.mxu0 %v1955
      %1977 = vmatprep.subr.bf16.mxu0 0
      %1978 = vmatpush1.bf16.msra.mxu0 %v1956
      %1979 = vmatprep.subr.bf16.mxu0 0
      %1980 = vmatpush1.bf16.msra.mxu0 %v1957
      %1981 = vmatprep.subr.bf16.mxu0 0
      %1982 = vmatpush1.bf16.msra.mxu0 %v1958
      %1983 = vmatprep.subr.bf16.mxu0 0
      %1984 = vmatpush1.bf16.msra.mxu0 0
      %1985 = vmatprep.subr.bf16.mxu0 0
      %1986 = vmatpush1.bf16.msra.mxu0 0
      %1987 = vmatprep.subr.bf16.mxu0 0
      %1988 = vmatpush1.bf16.msra.mxu0 0
      %1989 = vmatprep.subr.bf16.mxu0 0
      %1990 = vmatpush1.bf16.msra.mxu0 0
      %1991 = vmatprep.subr.bf16.mxu0 0
      %1992 = vmatpush1.bf16.msra.mxu0 0
      %1993 = vmatprep.subr.bf16.mxu0 0
      %1994 = vmatpush1.bf16.msra.mxu0 0
      %1995 = vmatprep.subr.bf16.mxu0 0
      %1996 = vmatpush1.bf16.msra.mxu0 0
      %1997 = vmatprep.subr.bf16.mxu0 0
      %1998 = vmatpush1.bf16.msra.mxu0 0
      %1999 = vmatprep.mubr.bf16.mxu0 0
      %2000 = vmatmul.mubr.bf16.gmra.mrb[0].mxu0 %v1911
      %v2001 = vpop.f32.mrb[0].mxu0
      %v2002 = vadd.f32 0.0, %v2001
      %v2003 = vpop.f32.mrb[0].mxu0
      %v2004 = vpop.f32.mrb[0].mxu0
      %v2005 = vadd.f32 0.0, %v2004
      %v2006 = vpop.f32.mrb[0].mxu0
      %2007 = vmatprep.mubr.bf16.mxu0 0
      %2008 = vmatmul.mubr.bf16.gmra.mrb[0].mxu0 %v1912
      %v2009 = vpop.f32.mrb[0].mxu0
      %v2010 = vadd.f32 0.0, %v2009
      %v2011 = vpop.f32.mrb[0].mxu0
      %v2012 = vpop.f32.mrb[0].mxu0
      %v2013 = vadd.f32 0.0, %v2012
      %v2014 = vpop.f32.mrb[0].mxu0
      %2015 = vmatprep.mubr.bf16.mxu0 0
      %2016 = vmatmul.mubr.bf16.gmra.mrb[0].mxu0 %v1913
      %v2017 = vpop.f32.mrb[0].mxu0
      %v2018 = vadd.f32 0.0, %v2017
      %v2019 = vpop.f32.mrb[0].mxu0
      %v2020 = vpop.f32.mrb[0].mxu0
      %v2021 = vadd.f32 0.0, %v2020
      %v2022 = vpop.f32.mrb[0].mxu0
      %2023 = vmatprep.mubr.bf16.mxu0 0
      %2024 = vmatmul.mubr.bf16.gmra.mrb[0].mxu0 %v1914
      %v2025 = vpop.f32.mrb[0].mxu0
      %v2026 = vadd.f32 0.0, %v2025
      %v2027 = vpop.f32.mrb[0].mxu0
      %v2028 = vpop.f32.mrb[0].mxu0
      %v2029 = vadd.f32 0.0, %v2028
      %v2030 = vpop.f32.mrb[0].mxu0
      %2031 = vdwg.mxu0
      %v2032 = vadd.f32 %v1750, %v2002
      %v2033 = vadd.f32 %v1751, %v2005
      %v2034 = vadd.f32 %v1752, %v2010
      %v2035 = vadd.f32 %v1753, %v2013
      %v2036 = vadd.f32 %v1754, %v2018
      %v2037 = vadd.f32 %v1755, %v2021
      %v2038 = vadd.f32 %v1756, %v2026
      %v2039 = vadd.f32 %v1757, %v2029
      %v2040 = vld [vmem:[%s1587] sm:$0xe]
      %v2041 = vld [vmem:[%s1587 + $0x8] sm:$0xe]
      %v2042 = vld [vmem:[%s1587 + $0x10] sm:$0xe]
      %v2043 = vld [vmem:[%s1587 + $0x18] sm:$0xe]
      %v2044 = vld [vmem:[%s1587 + $0x20] sm:$0xe]
      %v2045 = vld [vmem:[%s1587 + $0x28] sm:$0xe]
      %v2046 = vld [vmem:[%s1587 + $0x30] sm:$0xe]
      %v2047 = vld [vmem:[%s1587 + $0x38] sm:$0xe]
      %v2064 = vrot.slane %v2040, 5
      %v2065 = vrot.slane %v2064, 4
      %v2066 = vrot.slane %v1759, 5
      %v2067 = vsel %vm737, %v2065, %v2066
      %v2068 = vrot.slane %v2041, 5
      %v2069 = vrot.slane %v2068, 4
      %v2070 = vrot.slane %v1761, 5
      %v2071 = vsel %vm737, %v2069, %v2070
      %v2072 = vrot.slane %v2042, 5
      %v2073 = vrot.slane %v2072, 4
      %v2074 = vrot.slane %v1763, 5
      %v2075 = vsel %vm737, %v2073, %v2074
      %v2076 = vrot.slane %v2043, 5
      %v2077 = vrot.slane %v2076, 4
      %v2078 = vrot.slane %v1765, 5
      %v2079 = vsel %vm737, %v2077, %v2078
      %v2080 = vrot.slane %v2044, 5
      %v2081 = vrot.slane %v2080, 4
      %v2082 = vrot.slane %v1767, 5
      %v2083 = vsel %vm737, %v2081, %v2082
      %v2084 = vrot.slane %v2045, 5
      %v2085 = vrot.slane %v2084, 4
      %v2086 = vrot.slane %v1769, 5
      %v2087 = vsel %vm737, %v2085, %v2086
      %v2088 = vrot.slane %v2046, 5
      %v2089 = vrot.slane %v2088, 4
      %v2090 = vrot.slane %v1771, 5
      %v2091 = vsel %vm737, %v2089, %v2090
      %v2092 = vrot.slane %v2047, 5
      %v2093 = vrot.slane %v2092, 4
      %v2094 = vrot.slane %v1773, 5
      %v2095 = vsel %vm737, %v2093, %v2094
      %s2096 = scalar_lea.vmem %s260, 512
      %v2097 = vld [vmem:[%s2096] sm:$0xf]
      %v2098 = vld [vmem:[%s2096 + $0x4] sm:$0xf]
      %v2099 = vld [vmem:[%s2096 + $0x8] sm:$0xf]
      %v2100 = vld [vmem:[%s2096 + $0xc] sm:$0xf]
      %v2101 = vld [vmem:[%s2096 + $0x10] sm:$0xf]
      %v2102 = vld [vmem:[%s2096 + $0x14] sm:$0xf]
      %v2103 = vld [vmem:[%s2096 + $0x18] sm:$0xf]
      %v2104 = vld [vmem:[%s2096 + $0x1c] sm:$0xf]
      %v2105 = vld [vmem:[%s2096 + $0x20] sm:$0xf]
      %v2106 = vld [vmem:[%s2096 + $0x24] sm:$0xf]
      %v2107 = vld [vmem:[%s2096 + $0x28] sm:$0xf]
      %v2108 = vld [vmem:[%s2096 + $0x2c] sm:$0xf]
      %v2109 = vld [vmem:[%s2096 + $0x30] sm:$0xf]
      %v2110 = vld [vmem:[%s2096 + $0x34] sm:$0xf]
      %v2111 = vld [vmem:[%s2096 + $0x38] sm:$0xf]
      %v2112 = vld [vmem:[%s2096 + $0x3c] sm:$0xf]
      %v2113 = vunpack.c.l.b16 %v2067
      %v2114 = vunpack.c.l.b16 %v2071
      %v2115 = vunpack.c.l.b16 %v2075
      %v2116 = vunpack.c.l.b16 %v2079
      %v2117 = vunpack.c.l.b16 %v2083
      %v2118 = vunpack.c.l.b16 %v2087
      %v2119 = vunpack.c.l.b16 %v2091
      %v2120 = vunpack.c.l.b16 %v2095
      %v2121 = vpack.c.b16 %v2114, %v2113
      %v2122 = vpack.c.b16 %v2116, %v2115
      %v2123 = vpack.c.b16 %v2118, %v2117
      %v2124 = vpack.c.b16 %v2120, %v2119
      %v2145 = vunpack.c.l.b16 %v2097
      %v2146 = vunpack.c.l.b16 %v2098
      %v2147 = vunpack.c.l.b16 %v2099
      %v2148 = vunpack.c.l.b16 %v2100
      %v2149 = vunpack.c.l.b16 %v2101
      %v2150 = vunpack.c.l.b16 %v2102
      %v2151 = vunpack.c.l.b16 %v2103
      %v2152 = vunpack.c.l.b16 %v2104
      %v2153 = vunpack.c.l.b16 %v2105
      %v2154 = vunpack.c.l.b16 %v2106
      %v2155 = vunpack.c.l.b16 %v2107
      %v2156 = vunpack.c.l.b16 %v2108
      %v2157 = vunpack.c.l.b16 %v2109
      %v2158 = vunpack.c.l.b16 %v2110
      %v2159 = vunpack.c.l.b16 %v2111
      %v2160 = vunpack.c.l.b16 %v2112
      %v2161 = vpack.c.b16 %v2146, %v2145
      %v2162 = vpack.c.b16 %v2148, %v2147
      %v2163 = vpack.c.b16 %v2150, %v2149
      %v2164 = vpack.c.b16 %v2152, %v2151
      %v2165 = vpack.c.b16 %v2154, %v2153
      %v2166 = vpack.c.b16 %v2156, %v2155
      %v2167 = vpack.c.b16 %v2158, %v2157
      %v2168 = vpack.c.b16 %v2160, %v2159
      %2177 = vmatprep.subr.bf16.mxu0 0
      %2178 = vmatpush1.bf16.msra.mxu0 %v2161
      %2179 = vmatprep.subr.bf16.mxu0 0
      %2180 = vmatpush1.bf16.msra.mxu0 %v2162
      %2181 = vmatprep.subr.bf16.mxu0 0
      %2182 = vmatpush1.bf16.msra.mxu0 %v2163
      %2183 = vmatprep.subr.bf16.mxu0 0
      %2184 = vmatpush1.bf16.msra.mxu0 %v2164
      %2185 = vmatprep.subr.bf16.mxu0 0
      %2186 = vmatpush1.bf16.msra.mxu0 %v2165
      %2187 = vmatprep.subr.bf16.mxu0 0
      %2188 = vmatpush1.bf16.msra.mxu0 %v2166
      %2189 = vmatprep.subr.bf16.mxu0 0
      %2190 = vmatpush1.bf16.msra.mxu0 %v2167
      %2191 = vmatprep.subr.bf16.mxu0 0
      %2192 = vmatpush1.bf16.msra.mxu0 %v2168
      %2193 = vmatprep.subr.bf16.mxu0 0
      %2194 = vmatpush1.bf16.msra.mxu0 0
      %2195 = vmatprep.subr.bf16.mxu0 0
      %2196 = vmatpush1.bf16.msra.mxu0 0
      %2197 = vmatprep.subr.bf16.mxu0 0
      %2198 = vmatpush1.bf16.msra.mxu0 0
      %2199 = vmatprep.subr.bf16.mxu0 0
      %2200 = vmatpush1.bf16.msra.mxu0 0
      %2201 = vmatprep.subr.bf16.mxu0 0
      %2202 = vmatpush1.bf16.msra.mxu0 0
      %2203 = vmatprep.subr.bf16.mxu0 0
      %2204 = vmatpush1.bf16.msra.mxu0 0
      %2205 = vmatprep.subr.bf16.mxu0 0
      %2206 = vmatpush1.bf16.msra.mxu0 0
      %2207 = vmatprep.subr.bf16.mxu0 0
      %2208 = vmatpush1.bf16.msra.mxu0 0
      %2209 = vmatprep.mubr.bf16.mxu0 0
      %2210 = vmatmul.mubr.bf16.gmra.mrb[0].mxu0 %v2121
      %v2211 = vpop.f32.mrb[0].mxu0
      %v2212 = vadd.f32 0.0, %v2211
      %v2213 = vpop.f32.mrb[0].mxu0
      %v2214 = vpop.f32.mrb[0].mxu0
      %v2215 = vadd.f32 0.0, %v2214
      %v2216 = vpop.f32.mrb[0].mxu0
      %2217 = vmatprep.mubr.bf16.mxu0 0
      %2218 = vmatmul.mubr.bf16.gmra.mrb[0].mxu0 %v2122
      %v2219 = vpop.f32.mrb[0].mxu0
      %v2220 = vadd.f32 0.0, %v2219
      %v2221 = vpop.f32.mrb[0].mxu0
      %v2222 = vpop.f32.mrb[0].mxu0
      %v2223 = vadd.f32 0.0, %v2222
      %v2224 = vpop.f32.mrb[0].mxu0
      %2225 = vmatprep.mubr.bf16.mxu0 0
      %2226 = vmatmul.mubr.bf16.gmra.mrb[0].mxu0 %v2123
      %v2227 = vpop.f32.mrb[0].mxu0
      %v2228 = vadd.f32 0.0, %v2227
      %v2229 = vpop.f32.mrb[0].mxu0
      %v2230 = vpop.f32.mrb[0].mxu0
      %v2231 = vadd.f32 0.0, %v2230
      %v2232 = vpop.f32.mrb[0].mxu0
      %2233 = vmatprep.mubr.bf16.mxu0 0
      %2234 = vmatmul.mubr.bf16.gmra.mrb[0].mxu0 %v2124
      %v2235 = vpop.f32.mrb[0].mxu0
      %v2236 = vadd.f32 0.0, %v2235
      %v2237 = vpop.f32.mrb[0].mxu0
      %v2238 = vpop.f32.mrb[0].mxu0
      %v2239 = vadd.f32 0.0, %v2238
      %v2240 = vpop.f32.mrb[0].mxu0
      %2241 = vdwg.mxu0
      %v2242 = vadd.f32 %v2032, %v2212
      %v2243 = vadd.f32 %v2033, %v2215
      %v2244 = vadd.f32 %v2034, %v2220
      %v2245 = vadd.f32 %v2035, %v2223
      %v2246 = vadd.f32 %v2036, %v2228
      %v2247 = vadd.f32 %v2037, %v2231
      %v2248 = vadd.f32 %v2038, %v2236
      %v2249 = vadd.f32 %v2039, %v2239
      %v2250 = vld [vmem:[%s263] sm:$0x1]
      %v2252 = vlaneseq
      %v2253 = vshrl.u32 %v2252, 7
      %v2254 = vsub.s32 0, %v2253
      %v2255 = vrot.slane %v2250, %v2254
      %v2257 = vadd.f32 %v2242, %v2255
      %v2258 = vadd.f32 %v2243, %v2255
      %v2259 = vadd.f32 %v2244, %v2255
      %v2260 = vadd.f32 %v2245, %v2255
      %v2261 = vadd.f32 %v2246, %v2255
      %v2262 = vadd.f32 %v2247, %v2255
      %v2263 = vadd.f32 %v2248, %v2255
      %v2264 = vadd.f32 %v2249, %v2255
      %v2265 = vld [vmem:[%s271] sm:$0xf]
      %v2266 = vld [vmem:[%s271 + $0x4] sm:$0xf]
      %v2267 = vld [vmem:[%s271 + $0x8] sm:$0xf]
      %v2268 = vld [vmem:[%s271 + $0xc] sm:$0xf]
      %v2269 = vld [vmem:[%s271 + $0x10] sm:$0xf]
      %v2270 = vld [vmem:[%s271 + $0x14] sm:$0xf]
      %v2271 = vld [vmem:[%s271 + $0x18] sm:$0xf]
      %v2272 = vld [vmem:[%s271 + $0x1c] sm:$0xf]
      %v2273 = vunpack.c.l.bf16 %v2265
      %v2274 = vunpack.c.l.bf16 %v2266
      %v2275 = vunpack.c.l.bf16 %v2267
      %v2276 = vunpack.c.l.bf16 %v2268
      %v2277 = vunpack.c.l.bf16 %v2269
      %v2278 = vunpack.c.l.bf16 %v2270
      %v2279 = vunpack.c.l.bf16 %v2271
      %v2280 = vunpack.c.l.bf16 %v2272
      %v2281 = vadd.f32 %v2257, %v2273
      %v2282 = vadd.f32 %v2258, %v2274
      %v2283 = vadd.f32 %v2259, %v2275
      %v2284 = vadd.f32 %v2260, %v2276
      %v2285 = vadd.f32 %v2261, %v2277
      %v2286 = vadd.f32 %v2262, %v2278
      %v2287 = vadd.f32 %v2263, %v2279
      %v2288 = vadd.f32 %v2264, %v2280
      %v2289 = vmax.f32 %v2281, 0.0
      %v2290 = vmax.f32 %v2282, 0.0
      %v2291 = vmax.f32 %v2283, 0.0
      %v2292 = vmax.f32 %v2284, 0.0
      %v2293 = vmax.f32 %v2285, 0.0
      %v2294 = vmax.f32 %v2286, 0.0
      %v2295 = vmax.f32 %v2287, 0.0
      %v2296 = vmax.f32 %v2288, 0.0
      %v2297 = vpack.c.bf16 %v2290, %v2289
      %v2298 = vpack.c.bf16 %v2292, %v2291
      %v2299 = vpack.c.bf16 %v2294, %v2293
      %v2300 = vpack.c.bf16 %v2296, %v2295
      %v2305 = vunpack.c.l.b16 %v2297
      %v2306 = vunpack.c.h.b16 %v2297
      %v2307 = vunpack.c.l.b16 %v2298
      %v2308 = vunpack.c.h.b16 %v2298
      %v2309 = vunpack.c.l.b16 %v2299
      %v2310 = vunpack.c.h.b16 %v2299
      %v2311 = vunpack.c.l.b16 %v2300
      %v2312 = vunpack.c.h.b16 %v2300
      %v2313 = vpack.c.b16 %v2305, %v2305
      %v2314 = vpack.c.b16 %v2306, %v2306
      %v2315 = vpack.c.b16 %v2307, %v2307
      %v2316 = vpack.c.b16 %v2308, %v2308
      %v2317 = vpack.c.b16 %v2309, %v2309
      %v2318 = vpack.c.b16 %v2310, %v2310
      %v2319 = vpack.c.b16 %v2311, %v2311
      %v2320 = vpack.c.b16 %v2312, %v2312
      %2329 = vst [vmem:[%s279] sm:$0xf] %v2313
      %2330 = vst [vmem:[%s279 + $0x4] sm:$0xf] %v2314
      %2331 = vst [vmem:[%s279 + $0x8] sm:$0xf] %v2315
      %2332 = vst [vmem:[%s279 + $0xc] sm:$0xf] %v2316
      %2333 = vst [vmem:[%s279 + $0x10] sm:$0xf] %v2317
      %2334 = vst [vmem:[%s279 + $0x14] sm:$0xf] %v2318
      %2335 = vst [vmem:[%s279 + $0x18] sm:$0xf] %v2319
      %2336 = vst [vmem:[%s279 + $0x1c] sm:$0xf] %v2320
      %p2337 = scmp.lt.s32.totalorder %s19, 1
      %s2338 = scalar_select %p2337, %s19, 1
      %p2339 = scmp.lt.s32.totalorder %s20, 0
      %s2340 = scalar_select %p2339, %s20, 0
      %s2341 = smul.addr %s2338, 8
      %s2342 = sadd.s32 %s2340, %s2341
      %s2343 = smul.addr %s2342, 4
      %s2344 = scalar_lea.vmem %s4, %s2343
      // Predicated region
      $region37: #{forward.7} parent=35 // pred_check
        %p2345 = pneg %p153
      $region38: #{forward.7} parent=35 // pred_check_branch
        %2347 = sbr.rel (%p2345) target = $region40
      $region39: #{forward.7} parent=35 // pred_region
        _
      $region40: #{forward.7} parent=35 // pred_fallthru
        _
    $region36: #{forward.7} parent=5 // pred_fallthru
      _
    %p2348 = scmp.le.s32.totalorder 2, %s10
    // Predicated region
    $region41: #{forward.7} parent=5 // pred_check
      %p2349 = pneg %p2348
    $region42: #{forward.7} parent=5 // pred_check_branch
      %2351 = sbr.rel (%p2349) target = $region44
    $region43: #{forward.7} parent=5 // pred_region
      %s2352 = ssub.s32 %s10, 2
      // Predicated region
      $region45: #{forward.7} parent=43 // pred_check
        %p2353 = pneg %p159
      $region46: #{forward.7} parent=43 // pred_check_branch
        %2355 = sbr.rel (%p2353) target = $region48
      $region47: #{forward.7} parent=43 // pred_region
        %p2356 = scmp.lt.s32.totalorder %s21, 1
        %s2357 = scalar_select %p2356, %s21, 1
        %p2358 = scmp.lt.s32.totalorder %s22, 0
        %s2359 = scalar_select %p2358, %s22, 0
        %s2360 = smul.addr %s2357, 8
        %s2361 = sadd.s32 %s2359, %s2360
        %s2362 = smul.addr %s2361, 4
        %s2363 = scalar_lea.vmem %s4, %s2362
      $region48: #{forward.7} parent=43 // pred_fallthru
        _
    $region44: #{forward.7} parent=5 // pred_fallthru
      _
  $region6: #{forward.7} parent=0 // loop_footer
    %s14 = sadd.s32 1, %s10
  $region7: #{forward.7} parent=0 // loop_footer_branch
    %9 = sbr.rel target = $region3
  $region8: #{forward.7} parent=0 // loop_exit
    _

</llo_original>
